<compile_context>
chip_gen: v6e
topology: v6e:2x2x1
jax: 0.10.0
libtpu: 0.0.40
codegen_flags: <defaults>
</compile_context>

<pallas_src>
import functools

import jax
import jax.numpy as jnp
from jax.experimental import pallas as pl
from jax.experimental.pallas import tpu as pltpu


def _layer_norm(x, gamma, beta, eps=1e-5):
    mean = jnp.mean(x, axis=-1, keepdims=True)
    xc = x - mean
    var = jnp.mean(xc * xc, axis=-1, keepdims=True)
    return xc * jax.lax.rsqrt(var + eps) * gamma + beta


def _gelu_tanh(x):
    c = 0.7978845608028654  # sqrt(2/pi)
    return 0.5 * x * (1.0 + jnp.tanh(c * (x + 0.044715 * x * x * x)))


def transformer_kernel(x_ref, ln1g_ref, ln1b_ref, wqkv_ref, wo_ref, bo_ref,
                       ln2g_ref, ln2b_ref, w1_ref, b1_ref, w2_ref, b2_ref,
                       o_ref, *, heads, dim_head, tokens, batch_block):
    bf16 = jnp.bfloat16
    inner = heads * dim_head
    N = tokens
    D = x_ref.shape[-1]

    x = x_ref[...]                                   # [M, D] f32, M = batch_block * N
    skip = x                                         # shortcut == Identity (dim_in == dim_out)

    # ---- norm1 + Attention1d -------------------------------------------------
    # Attention scale is pre-folded into the q columns of wqkv (wrapper-side).
    h = _layer_norm(x, ln1g_ref[...], ln1b_ref[...])
    qkv = jnp.dot(h.astype(bf16), wqkv_ref[...],
                  preferred_element_type=jnp.float32)          # [M, 3*inner] f32 acc
    q = qkv[:, 0 * inner:1 * inner]
    k = qkv[:, 1 * inner:2 * inner]
    v = qkv[:, 2 * inner:3 * inner]

    wo = wo_ref[...]                                 # [inner, D] bf16, loaded once

    # Per batch element (row slices of the flat block); each head's output is folded
    # directly into the output projection -- no lane-axis concat of head outputs.
    # NOTE: 64-wide head slices at odd offsets are lane-misaligned; minor at these N.
    outs = []
    for b in range(batch_block):
        rows = slice(b * N, (b + 1) * N)
        acc_b = jnp.zeros((N, D), jnp.float32)
        for hd in range(heads):                      # static unrolled loop over heads
            cols = slice(hd * dim_head, (hd + 1) * dim_head)
            qh = q[rows, cols].astype(bf16)
            kh = k[rows, cols].astype(bf16)
            vh = v[rows, cols].astype(bf16)
            dots = jax.lax.dot_general(              # q @ k^T, contract head dim
                qh, kh, (((1,), (1,)), ((), ())),
                preferred_element_type=jnp.float32)            # [N, N] f32
            dots = dots - jnp.max(dots, axis=-1, keepdims=True)
            p = jnp.exp(dots)
            attn = p * pl.reciprocal(jnp.sum(p, axis=-1, keepdims=True), approx=True)
            head_out = jnp.dot(attn.astype(bf16), vh,
                               preferred_element_type=jnp.float32)       # [N, dim_head]
            acc_b = acc_b + jnp.dot(head_out.astype(bf16), wo[cols, :],
                                    preferred_element_type=jnp.float32)  # [N, D]
        outs.append(acc_b)
    attn_out = jnp.concatenate(outs, axis=0) if batch_block > 1 else outs[0]  # row concat
    x1 = attn_out + bo_ref[...] + skip               # sd1 == Identity

    # ---- norm2 + FeedForward (GELU MLP) --------------------------------------
    h2 = _layer_norm(x1, ln2g_ref[...], ln2b_ref[...])
    f = jnp.dot(h2.astype(bf16), w1_ref[...],
                preferred_element_type=jnp.float32) + b1_ref[...]
    f = _gelu_tanh(f)
    f = jnp.dot(f.astype(bf16), w2_ref[...],
                preferred_element_type=jnp.float32) + b2_ref[...]
    o_ref[...] = (f + x1).astype(o_ref.dtype)        # sd2 == Identity


def prepare_params(params, *, heads=8, dim_head=64):
    """One-time param prep: fold the attention scale into the q columns of wqkv and
    cast matmul weights to bf16 (done once, outside the per-call path)."""
    ln1g, ln1b, wqkv, wo, bo, ln2g, ln2b, w1, b1, w2, b2 = params
    inner = heads * dim_head
    scale = dim_head ** -0.5
    wqkv_s = wqkv.at[:, :inner].multiply(scale)
    return (ln1g, ln1b,
            wqkv_s.astype(jnp.bfloat16), wo.astype(jnp.bfloat16), bo,
            ln2g, ln2b,
            w1.astype(jnp.bfloat16), b1, w2.astype(jnp.bfloat16), b2)


def transformer_block(x, prepared_params, *, heads=8, dim_head=64, batch_block=None):
    """x: [B, N, D] float32. prepared_params from prepare_params(). Returns [B, N, D]."""
    B, N, D = x.shape
    ln1g, ln1b, wqkv, wo, bo, ln2g, ln2b, w1, b1, w2, b2 = prepared_params

    if batch_block is None:
        # Fold batch into the token dim for taller matmuls, but keep >= 2 grid steps
        # when B permits so the second TensorCore on v7x stays busy.
        batch_block = B if B < 2 else max(1, B // 2)
    assert B % batch_block == 0, "batch_block must divide B"
    M = batch_block * N                              # rows per grid step

    # Free metadata reshape in the wrapper: the kernel sees a flat [M, D] token block.
    x2 = x.reshape(B * N, D)

    def resident(a):
        # Same block index every grid step -> DMA'd into VMEM once, stays resident.
        # TODO(synk): if weights grow, add pipeline_mode=pl.Buffered(1) to halve their
        # VMEM footprint (constant index -> double buffering is wasted).
        nd = a.ndim
        return pl.BlockSpec(a.shape, lambda i, _nd=nd: (0,) * _nd)

    grid_spec = pltpu.PrefetchScalarGridSpec(
        num_scalar_prefetch=0,
        grid=(B // batch_block,),
        in_specs=[
            pl.BlockSpec((M, D), lambda i: (i, 0)),  # x: batch_block*N tokens per step
            resident(ln1g), resident(ln1b),
            resident(wqkv), resident(wo), resident(bo),
            resident(ln2g), resident(ln2b),
            resident(w1), resident(b1),
            resident(w2), resident(b2),
        ],
        out_specs=pl.BlockSpec((M, D), lambda i: (i, 0)),
    )

    kernel = functools.partial(transformer_kernel, heads=heads, dim_head=dim_head,
                               tokens=N, batch_block=batch_block)
    out = pl.pallas_call(
        kernel,
        out_shape=jax.ShapeDtypeStruct((B * N, D), x.dtype),
        grid_spec=grid_spec,
        compiler_params=pltpu.CompilerParams(
            dimension_semantics=("parallel",),       # batch-block axis shardable across TCs
        ),
    )(x2, ln1g, ln1b, wqkv, wo, bo, ln2g, ln2b, w1, b1, w2, b2)
    return out.reshape(B, N, D)


def init_params(key, dim, heads, dim_head, dim_mlp):
    """PyTorch-style Linear init U(-1/sqrt(fan_in), 1/sqrt(fan_in)); LN gamma=1, beta=0.
    Weights stored as (in_features, out_features) so the kernel computes x @ W + b."""
    inner = heads * dim_head
    ks = jax.random.split(key, 7)

    def uniform(k, shape, fan_in):
        bound = 1.0 / (fan_in ** 0.5)
        return jax.random.uniform(k, shape, jnp.float32, -bound, bound)

    ln1g = jnp.ones((1, dim), jnp.float32)
    ln1b = jnp.zeros((1, dim), jnp.float32)
    ln2g = jnp.ones((1, dim), jnp.float32)
    ln2b = jnp.zeros((1, dim), jnp.float32)
    wqkv = uniform(ks[0], (dim, 3 * inner), dim)          # to_qkv (bias=False)
    wo = uniform(ks[1], (inner, dim), inner)              # to_out Linear
    bo = uniform(ks[2], (1, dim), inner)
    w1 = uniform(ks[3], (dim, dim_mlp), dim)              # ff Linear 1
    b1 = uniform(ks[4], (1, dim_mlp), dim)
    w2 = uniform(ks[5], (dim_mlp, dim), dim_mlp)          # ff Linear 2
    b2 = uniform(ks[6], (1, dim), dim_mlp)
    return (ln1g, ln1b, wqkv, wo, bo, ln2g, ln2b, w1, b1, w2, b2)


def transformer_ref(x, params, *, heads=8, dim_head=64):
    """Plain-JAX reference mirroring the kernel's numerics (bf16 MXU operands, f32
    accumulation, scale folded into wqkv, tanh GELU)."""
    ln1g, ln1b, wqkv, wo, bo, ln2g, ln2b, w1, b1, w2, b2 = params
    bf16 = jnp.bfloat16
    B, N, D = x.shape
    inner = heads * dim_head
    scale = dim_head ** -0.5

    wqkv_bf = wqkv.at[:, :inner].multiply(scale).astype(bf16)

    skip = x
    h = _layer_norm(x, ln1g, ln1b)
    qkv = jnp.dot(h.astype(bf16), wqkv_bf, preferred_element_type=jnp.float32)
    q, k, v = jnp.split(qkv, 3, axis=-1)
    q = q.reshape(B, N, heads, dim_head).transpose(0, 2, 1, 3)
    k = k.reshape(B, N, heads, dim_head).transpose(0, 2, 1, 3)
    v = v.reshape(B, N, heads, dim_head).transpose(0, 2, 1, 3)
    dots = jnp.einsum('bhid,bhjd->bhij', q.astype(bf16), k.astype(bf16),
                      preferred_element_type=jnp.float32)
    dots = dots - jnp.max(dots, axis=-1, keepdims=True)
    p = jnp.exp(dots)
    attn = p / jnp.sum(p, axis=-1, keepdims=True)
    out = jnp.einsum('bhij,bhjd->bhid', attn.astype(bf16), v.astype(bf16),
                     preferred_element_type=jnp.float32)
    out = out.transpose(0, 2, 1, 3).reshape(B, N, inner)
    out = jnp.dot(out.astype(bf16), wo.astype(bf16),
                  preferred_element_type=jnp.float32) + bo
    x1 = out + skip
    h2 = _layer_norm(x1, ln2g, ln2b)
    f = jnp.dot(h2.astype(bf16), w1.astype(bf16),
                preferred_element_type=jnp.float32) + b1
    f = _gelu_tanh(f)
    f = jnp.dot(f.astype(bf16), w2.astype(bf16),
                preferred_element_type=jnp.float32) + b2
    return f + x1


if __name__ == "__main__":
    key = jax.random.PRNGKey(0)
    kx, kp = jax.random.split(key)

    # Small shapes; D=128 keeps every activation / output store lane-dense, B=4/N=16
    # gives 2 parallel grid steps of M=32 rows each.
    B, N, D = 4, 16, 128
    heads, dim_head, dim_mlp = 8, 64, 1024    # Transformer defaults (inner_dim = 512)

    x = jax.random.normal(kx, (B, N, D), jnp.float32)
    params = init_params(kp, D, heads, dim_head, dim_mlp)
    prepared = prepare_params(params, heads=heads, dim_head=dim_head)  # one-time prep

    out = transformer_block(x, prepared, heads=heads, dim_head=dim_head)
    out = jax.block_until_ready(out)

    ref = transformer_ref(x, params, heads=heads, dim_head=dim_head)
    assert out.shape == (B, N, D)
    max_err = float(jnp.max(jnp.abs(out - ref)))
    # bf16 MXU operands + approx softmax reciprocal vs exact divide in the ref.
    assert jnp.allclose(out, ref, atol=2e-2, rtol=2e-2), f"max abs err = {max_err}"

    print("KERNEL_OK")
</pallas_src>

<mosaic_0001>
module attributes {stable_mosaic.version = 11 : i64} {
  func.func @transformer_kernel(%arg0: i32, %arg1: memref<32x128xf32, #tpu.memory_space<vmem>>, %arg2: memref<1x128xf32, #tpu.memory_space<vmem>>, %arg3: memref<1x128xf32, #tpu.memory_space<vmem>>, %arg4: memref<128x1536xbf16, #tpu.memory_space<vmem>>, %arg5: memref<512x128xbf16, #tpu.memory_space<vmem>>, %arg6: memref<1x128xf32, #tpu.memory_space<vmem>>, %arg7: memref<1x128xf32, #tpu.memory_space<vmem>>, %arg8: memref<1x128xf32, #tpu.memory_space<vmem>>, %arg9: memref<128x1024xbf16, #tpu.memory_space<vmem>>, %arg10: memref<1x1024xf32, #tpu.memory_space<vmem>>, %arg11: memref<1024x128xbf16, #tpu.memory_space<vmem>>, %arg12: memref<1x128xf32, #tpu.memory_space<vmem>>, %arg13: memref<32x128xf32, #tpu.memory_space<vmem>>) attributes {dimension_semantics = [#tpu.dimension_semantics<parallel>], iteration_bounds = array<i64: 2>, scalar_prefetch = 0 : i64, scratch_operands = 0 : i64, tpu.core_type = #tpu.core_type<tc>, window_params = [{transform_indices = @transform_0, window_bounds = array<i64: 32, 128>}, {pipeline_mode = #tpu.pipeline_mode<synchronous>, transform_indices = @transform_1, window_bounds = array<i64: 1, 128>}, {pipeline_mode = #tpu.pipeline_mode<synchronous>, transform_indices = @transform_2, window_bounds = array<i64: 1, 128>}, {pipeline_mode = #tpu.pipeline_mode<synchronous>, transform_indices = @transform_3, window_bounds = array<i64: 128, 1536>}, {pipeline_mode = #tpu.pipeline_mode<synchronous>, transform_indices = @transform_4, window_bounds = array<i64: 512, 128>}, {pipeline_mode = #tpu.pipeline_mode<synchronous>, transform_indices = @transform_5, window_bounds = array<i64: 1, 128>}, {pipeline_mode = #tpu.pipeline_mode<synchronous>, transform_indices = @transform_6, window_bounds = array<i64: 1, 128>}, {pipeline_mode = #tpu.pipeline_mode<synchronous>, transform_indices = @transform_7, window_bounds = array<i64: 1, 128>}, {pipeline_mode = #tpu.pipeline_mode<synchronous>, transform_indices = @transform_8, window_bounds = array<i64: 128, 1024>}, {pipeline_mode = #tpu.pipeline_mode<synchronous>, transform_indices = @transform_9, window_bounds = array<i64: 1, 1024>}, {pipeline_mode = #tpu.pipeline_mode<synchronous>, transform_indices = @transform_10, window_bounds = array<i64: 1024, 128>}, {pipeline_mode = #tpu.pipeline_mode<synchronous>, transform_indices = @transform_11, window_bounds = array<i64: 1, 128>}, {transform_indices = @transform_12, window_bounds = array<i64: 32, 128>}]} {
    %c0 = arith.constant 0 : index
    %c0_0 = arith.constant 0 : index
    %0 = vector.load %arg1[%c0, %c0_0] : memref<32x128xf32, #tpu.memory_space<vmem>>, vector<32x128xf32>
    %c0_1 = arith.constant 0 : index
    %c0_2 = arith.constant 0 : index
    %1 = vector.load %arg2[%c0_1, %c0_2] : memref<1x128xf32, #tpu.memory_space<vmem>>, vector<1x128xf32>
    %c0_3 = arith.constant 0 : index
    %c0_4 = arith.constant 0 : index
    %2 = vector.load %arg3[%c0_3, %c0_4] : memref<1x128xf32, #tpu.memory_space<vmem>>, vector<1x128xf32>
    %cst = arith.constant dense<0.000000e+00> : vector<32xf32>
    %3 = vector.multi_reduction <add>, %0, %cst [1] : vector<32x128xf32> to vector<32xf32>
    %4 = vector.shape_cast %3 : vector<32xf32> to vector<32x1xf32>
    %cst_5 = arith.constant 1.280000e+02 : f32
    %5 = vector.broadcast %cst_5 : f32 to vector<32x1xf32>
    %6 = arith.divf %4, %5 : vector<32x1xf32>
    %7 = vector.broadcast %6 : vector<32x1xf32> to vector<32x128xf32>
    %8 = arith.subf %0, %7 : vector<32x128xf32>
    %9 = arith.mulf %8, %8 : vector<32x128xf32>
    %cst_6 = arith.constant dense<0.000000e+00> : vector<32xf32>
    %10 = vector.multi_reduction <add>, %9, %cst_6 [1] : vector<32x128xf32> to vector<32xf32>
    %11 = vector.shape_cast %10 : vector<32xf32> to vector<32x1xf32>
    %cst_7 = arith.constant 1.280000e+02 : f32
    %12 = vector.broadcast %cst_7 : f32 to vector<32x1xf32>
    %13 = arith.divf %11, %12 : vector<32x1xf32>
    %cst_8 = arith.constant 9.99999974E-6 : f32
    %14 = vector.broadcast %cst_8 : f32 to vector<32x1xf32>
    %15 = arith.addf %13, %14 : vector<32x1xf32>
    %16 = math.rsqrt %15 : vector<32x1xf32>
    %17 = vector.broadcast %16 : vector<32x1xf32> to vector<32x128xf32>
    %18 = arith.mulf %8, %17 : vector<32x128xf32>
    %19 = vector.broadcast %1 : vector<1x128xf32> to vector<32x128xf32>
    %20 = arith.mulf %18, %19 : vector<32x128xf32>
    %21 = vector.broadcast %2 : vector<1x128xf32> to vector<32x128xf32>
    %22 = arith.addf %20, %21 : vector<32x128xf32>
    %23 = arith.truncf %22 : vector<32x128xf32> to vector<32x128xbf16>
    %c0_9 = arith.constant 0 : index
    %c0_10 = arith.constant 0 : index
    %24 = vector.load %arg4[%c0_9, %c0_10] : memref<128x1536xbf16, #tpu.memory_space<vmem>>, vector<128x1536xbf16>
    %cst_11 = arith.constant dense<0.000000e+00> : vector<32x1536xf32>
    %25 = tpu.matmul %23, %24, %cst_11 {dimension_numbers = #tpu.dot_dimension_numbers<[1], [0], [0], [1], [0, 0, 1, 1], [], []>} : vector<32x128xbf16>, vector<128x1536xbf16>, vector<32x1536xf32> -> vector<32x1536xf32>
    %26 = vector.extract_strided_slice %25 {offsets = [0, 0], sizes = [32, 512], strides = [1, 1]} : vector<32x1536xf32> to vector<32x512xf32>
    %27 = vector.extract_strided_slice %25 {offsets = [0, 512], sizes = [32, 512], strides = [1, 1]} : vector<32x1536xf32> to vector<32x512xf32>
    %28 = vector.extract_strided_slice %25 {offsets = [0, 1024], sizes = [32, 512], strides = [1, 1]} : vector<32x1536xf32> to vector<32x512xf32>
    %c0_12 = arith.constant 0 : index
    %c0_13 = arith.constant 0 : index
    %29 = vector.load %arg5[%c0_12, %c0_13] : memref<512x128xbf16, #tpu.memory_space<vmem>>, vector<512x128xbf16>
    %cst_14 = arith.constant 0.000000e+00 : f32
    %30 = vector.broadcast %cst_14 : f32 to vector<16x128xf32>
    %31 = vector.extract_strided_slice %26 {offsets = [0, 0], sizes = [16, 64], strides = [1, 1]} : vector<32x512xf32> to vector<16x64xf32>
    %32 = arith.truncf %31 : vector<16x64xf32> to vector<16x64xbf16>
    %33 = vector.extract_strided_slice %27 {offsets = [0, 0], sizes = [16, 64], strides = [1, 1]} : vector<32x512xf32> to vector<16x64xf32>
    %34 = arith.truncf %33 : vector<16x64xf32> to vector<16x64xbf16>
    %35 = vector.extract_strided_slice %28 {offsets = [0, 0], sizes = [16, 64], strides = [1, 1]} : vector<32x512xf32> to vector<16x64xf32>
    %36 = arith.truncf %35 : vector<16x64xf32> to vector<16x64xbf16>
    %cst_15 = arith.constant dense<0.000000e+00> : vector<16x16xf32>
    %37 = tpu.matmul %32, %34, %cst_15 {dimension_numbers = #tpu.dot_dimension_numbers<[1], [1], [0], [0], [0, 0, 1, 0], [], []>} : vector<16x64xbf16>, vector<16x64xbf16>, vector<16x16xf32> -> vector<16x16xf32>
    %cst_16 = arith.constant dense<0xFF800000> : vector<16xf32>
    %38 = vector.multi_reduction <maximumf>, %37, %cst_16 [1] : vector<16x16xf32> to vector<16xf32>
    %39 = vector.shape_cast %38 : vector<16xf32> to vector<16x1xf32>
    %40 = vector.broadcast %39 : vector<16x1xf32> to vector<16x16xf32>
    %41 = arith.subf %37, %40 : vector<16x16xf32>
    %42 = math.exp %41 : vector<16x16xf32>
    %cst_17 = arith.constant dense<0.000000e+00> : vector<16xf32>
    %43 = vector.multi_reduction <add>, %42, %cst_17 [1] : vector<16x16xf32> to vector<16xf32>
    %44 = vector.shape_cast %43 : vector<16xf32> to vector<16x1xf32>
    %45 = tpu.reciprocal %44 {approx = true} : vector<16x1xf32> -> vector<16x1xf32>
    %46 = vector.broadcast %45 : vector<16x1xf32> to vector<16x16xf32>
    %47 = arith.mulf %42, %46 : vector<16x16xf32>
    %48 = arith.truncf %47 : vector<16x16xf32> to vector<16x16xbf16>
    %cst_18 = arith.constant dense<0.000000e+00> : vector<16x64xf32>
    %49 = tpu.matmul %48, %36, %cst_18 {dimension_numbers = #tpu.dot_dimension_numbers<[1], [0], [0], [1], [0, 0, 1, 1], [], []>} : vector<16x16xbf16>, vector<16x64xbf16>, vector<16x64xf32> -> vector<16x64xf32>
    %50 = arith.truncf %49 : vector<16x64xf32> to vector<16x64xbf16>
    %51 = vector.extract_strided_slice %29 {offsets = [0, 0], sizes = [64, 128], strides = [1, 1]} : vector<512x128xbf16> to vector<64x128xbf16>
    %cst_19 = arith.constant dense<0.000000e+00> : vector<16x128xf32>
    %52 = tpu.matmul %50, %51, %cst_19 {dimension_numbers = #tpu.dot_dimension_numbers<[1], [0], [0], [1], [0, 0, 1, 1], [], []>} : vector<16x64xbf16>, vector<64x128xbf16>, vector<16x128xf32> -> vector<16x128xf32>
    %53 = arith.addf %30, %52 : vector<16x128xf32>
    %54 = vector.extract_strided_slice %26 {offsets = [0, 64], sizes = [16, 64], strides = [1, 1]} : vector<32x512xf32> to vector<16x64xf32>
    %55 = arith.truncf %54 : vector<16x64xf32> to vector<16x64xbf16>
    %56 = vector.extract_strided_slice %27 {offsets = [0, 64], sizes = [16, 64], strides = [1, 1]} : vector<32x512xf32> to vector<16x64xf32>
    %57 = arith.truncf %56 : vector<16x64xf32> to vector<16x64xbf16>
    %58 = vector.extract_strided_slice %28 {offsets = [0, 64], sizes = [16, 64], strides = [1, 1]} : vector<32x512xf32> to vector<16x64xf32>
    %59 = arith.truncf %58 : vector<16x64xf32> to vector<16x64xbf16>
    %cst_20 = arith.constant dense<0.000000e+00> : vector<16x16xf32>
    %60 = tpu.matmul %55, %57, %cst_20 {dimension_numbers = #tpu.dot_dimension_numbers<[1], [1], [0], [0], [0, 0, 1, 0], [], []>} : vector<16x64xbf16>, vector<16x64xbf16>, vector<16x16xf32> -> vector<16x16xf32>
    %cst_21 = arith.constant dense<0xFF800000> : vector<16xf32>
    %61 = vector.multi_reduction <maximumf>, %60, %cst_21 [1] : vector<16x16xf32> to vector<16xf32>
    %62 = vector.shape_cast %61 : vector<16xf32> to vector<16x1xf32>
    %63 = vector.broadcast %62 : vector<16x1xf32> to vector<16x16xf32>
    %64 = arith.subf %60, %63 : vector<16x16xf32>
    %65 = math.exp %64 : vector<16x16xf32>
    %cst_22 = arith.constant dense<0.000000e+00> : vector<16xf32>
    %66 = vector.multi_reduction <add>, %65, %cst_22 [1] : vector<16x16xf32> to vector<16xf32>
    %67 = vector.shape_cast %66 : vector<16xf32> to vector<16x1xf32>
    %68 = tpu.reciprocal %67 {approx = true} : vector<16x1xf32> -> vector<16x1xf32>
    %69 = vector.broadcast %68 : vector<16x1xf32> to vector<16x16xf32>
    %70 = arith.mulf %65, %69 : vector<16x16xf32>
    %71 = arith.truncf %70 : vector<16x16xf32> to vector<16x16xbf16>
    %cst_23 = arith.constant dense<0.000000e+00> : vector<16x64xf32>
    %72 = tpu.matmul %71, %59, %cst_23 {dimension_numbers = #tpu.dot_dimension_numbers<[1], [0], [0], [1], [0, 0, 1, 1], [], []>} : vector<16x16xbf16>, vector<16x64xbf16>, vector<16x64xf32> -> vector<16x64xf32>
    %73 = arith.truncf %72 : vector<16x64xf32> to vector<16x64xbf16>
    %74 = vector.extract_strided_slice %29 {offsets = [64, 0], sizes = [64, 128], strides = [1, 1]} : vector<512x128xbf16> to vector<64x128xbf16>
    %cst_24 = arith.constant dense<0.000000e+00> : vector<16x128xf32>
    %75 = tpu.matmul %73, %74, %cst_24 {dimension_numbers = #tpu.dot_dimension_numbers<[1], [0], [0], [1], [0, 0, 1, 1], [], []>} : vector<16x64xbf16>, vector<64x128xbf16>, vector<16x128xf32> -> vector<16x128xf32>
    %76 = arith.addf %53, %75 : vector<16x128xf32>
    %77 = vector.extract_strided_slice %26 {offsets = [0, 128], sizes = [16, 64], strides = [1, 1]} : vector<32x512xf32> to vector<16x64xf32>
    %78 = arith.truncf %77 : vector<16x64xf32> to vector<16x64xbf16>
    %79 = vector.extract_strided_slice %27 {offsets = [0, 128], sizes = [16, 64], strides = [1, 1]} : vector<32x512xf32> to vector<16x64xf32>
    %80 = arith.truncf %79 : vector<16x64xf32> to vector<16x64xbf16>
    %81 = vector.extract_strided_slice %28 {offsets = [0, 128], sizes = [16, 64], strides = [1, 1]} : vector<32x512xf32> to vector<16x64xf32>
    %82 = arith.truncf %81 : vector<16x64xf32> to vector<16x64xbf16>
    %cst_25 = arith.constant dense<0.000000e+00> : vector<16x16xf32>
    %83 = tpu.matmul %78, %80, %cst_25 {dimension_numbers = #tpu.dot_dimension_numbers<[1], [1], [0], [0], [0, 0, 1, 0], [], []>} : vector<16x64xbf16>, vector<16x64xbf16>, vector<16x16xf32> -> vector<16x16xf32>
    %cst_26 = arith.constant dense<0xFF800000> : vector<16xf32>
    %84 = vector.multi_reduction <maximumf>, %83, %cst_26 [1] : vector<16x16xf32> to vector<16xf32>
    %85 = vector.shape_cast %84 : vector<16xf32> to vector<16x1xf32>
    %86 = vector.broadcast %85 : vector<16x1xf32> to vector<16x16xf32>
    %87 = arith.subf %83, %86 : vector<16x16xf32>
    %88 = math.exp %87 : vector<16x16xf32>
    %cst_27 = arith.constant dense<0.000000e+00> : vector<16xf32>
    %89 = vector.multi_reduction <add>, %88, %cst_27 [1] : vector<16x16xf32> to vector<16xf32>
    %90 = vector.shape_cast %89 : vector<16xf32> to vector<16x1xf32>
    %91 = tpu.reciprocal %90 {approx = true} : vector<16x1xf32> -> vector<16x1xf32>
    %92 = vector.broadcast %91 : vector<16x1xf32> to vector<16x16xf32>
    %93 = arith.mulf %88, %92 : vector<16x16xf32>
    %94 = arith.truncf %93 : vector<16x16xf32> to vector<16x16xbf16>
    %cst_28 = arith.constant dense<0.000000e+00> : vector<16x64xf32>
    %95 = tpu.matmul %94, %82, %cst_28 {dimension_numbers = #tpu.dot_dimension_numbers<[1], [0], [0], [1], [0, 0, 1, 1], [], []>} : vector<16x16xbf16>, vector<16x64xbf16>, vector<16x64xf32> -> vector<16x64xf32>
    %96 = arith.truncf %95 : vector<16x64xf32> to vector<16x64xbf16>
    %97 = vector.extract_strided_slice %29 {offsets = [128, 0], sizes = [64, 128], strides = [1, 1]} : vector<512x128xbf16> to vector<64x128xbf16>
    %cst_29 = arith.constant dense<0.000000e+00> : vector<16x128xf32>
    %98 = tpu.matmul %96, %97, %cst_29 {dimension_numbers = #tpu.dot_dimension_numbers<[1], [0], [0], [1], [0, 0, 1, 1], [], []>} : vector<16x64xbf16>, vector<64x128xbf16>, vector<16x128xf32> -> vector<16x128xf32>
    %99 = arith.addf %76, %98 : vector<16x128xf32>
    %100 = vector.extract_strided_slice %26 {offsets = [0, 192], sizes = [16, 64], strides = [1, 1]} : vector<32x512xf32> to vector<16x64xf32>
    %101 = arith.truncf %100 : vector<16x64xf32> to vector<16x64xbf16>
    %102 = vector.extract_strided_slice %27 {offsets = [0, 192], sizes = [16, 64], strides = [1, 1]} : vector<32x512xf32> to vector<16x64xf32>
    %103 = arith.truncf %102 : vector<16x64xf32> to vector<16x64xbf16>
    %104 = vector.extract_strided_slice %28 {offsets = [0, 192], sizes = [16, 64], strides = [1, 1]} : vector<32x512xf32> to vector<16x64xf32>
    %105 = arith.truncf %104 : vector<16x64xf32> to vector<16x64xbf16>
    %cst_30 = arith.constant dense<0.000000e+00> : vector<16x16xf32>
    %106 = tpu.matmul %101, %103, %cst_30 {dimension_numbers = #tpu.dot_dimension_numbers<[1], [1], [0], [0], [0, 0, 1, 0], [], []>} : vector<16x64xbf16>, vector<16x64xbf16>, vector<16x16xf32> -> vector<16x16xf32>
    %cst_31 = arith.constant dense<0xFF800000> : vector<16xf32>
    %107 = vector.multi_reduction <maximumf>, %106, %cst_31 [1] : vector<16x16xf32> to vector<16xf32>
    %108 = vector.shape_cast %107 : vector<16xf32> to vector<16x1xf32>
    %109 = vector.broadcast %108 : vector<16x1xf32> to vector<16x16xf32>
    %110 = arith.subf %106, %109 : vector<16x16xf32>
    %111 = math.exp %110 : vector<16x16xf32>
    %cst_32 = arith.constant dense<0.000000e+00> : vector<16xf32>
    %112 = vector.multi_reduction <add>, %111, %cst_32 [1] : vector<16x16xf32> to vector<16xf32>
    %113 = vector.shape_cast %112 : vector<16xf32> to vector<16x1xf32>
    %114 = tpu.reciprocal %113 {approx = true} : vector<16x1xf32> -> vector<16x1xf32>
    %115 = vector.broadcast %114 : vector<16x1xf32> to vector<16x16xf32>
    %116 = arith.mulf %111, %115 : vector<16x16xf32>
    %117 = arith.truncf %116 : vector<16x16xf32> to vector<16x16xbf16>
    %cst_33 = arith.constant dense<0.000000e+00> : vector<16x64xf32>
    %118 = tpu.matmul %117, %105, %cst_33 {dimension_numbers = #tpu.dot_dimension_numbers<[1], [0], [0], [1], [0, 0, 1, 1], [], []>} : vector<16x16xbf16>, vector<16x64xbf16>, vector<16x64xf32> -> vector<16x64xf32>
    %119 = arith.truncf %118 : vector<16x64xf32> to vector<16x64xbf16>
    %120 = vector.extract_strided_slice %29 {offsets = [192, 0], sizes = [64, 128], strides = [1, 1]} : vector<512x128xbf16> to vector<64x128xbf16>
    %cst_34 = arith.constant dense<0.000000e+00> : vector<16x128xf32>
    %121 = tpu.matmul %119, %120, %cst_34 {dimension_numbers = #tpu.dot_dimension_numbers<[1], [0], [0], [1], [0, 0, 1, 1], [], []>} : vector<16x64xbf16>, vector<64x128xbf16>, vector<16x128xf32> -> vector<16x128xf32>
    %122 = arith.addf %99, %121 : vector<16x128xf32>
    %123 = vector.extract_strided_slice %26 {offsets = [0, 256], sizes = [16, 64], strides = [1, 1]} : vector<32x512xf32> to vector<16x64xf32>
    %124 = arith.truncf %123 : vector<16x64xf32> to vector<16x64xbf16>
    %125 = vector.extract_strided_slice %27 {offsets = [0, 256], sizes = [16, 64], strides = [1, 1]} : vector<32x512xf32> to vector<16x64xf32>
    %126 = arith.truncf %125 : vector<16x64xf32> to vector<16x64xbf16>
    %127 = vector.extract_strided_slice %28 {offsets = [0, 256], sizes = [16, 64], strides = [1, 1]} : vector<32x512xf32> to vector<16x64xf32>
    %128 = arith.truncf %127 : vector<16x64xf32> to vector<16x64xbf16>
    %cst_35 = arith.constant dense<0.000000e+00> : vector<16x16xf32>
    %129 = tpu.matmul %124, %126, %cst_35 {dimension_numbers = #tpu.dot_dimension_numbers<[1], [1], [0], [0], [0, 0, 1, 0], [], []>} : vector<16x64xbf16>, vector<16x64xbf16>, vector<16x16xf32> -> vector<16x16xf32>
    %cst_36 = arith.constant dense<0xFF800000> : vector<16xf32>
    %130 = vector.multi_reduction <maximumf>, %129, %cst_36 [1] : vector<16x16xf32> to vector<16xf32>
    %131 = vector.shape_cast %130 : vector<16xf32> to vector<16x1xf32>
    %132 = vector.broadcast %131 : vector<16x1xf32> to vector<16x16xf32>
    %133 = arith.subf %129, %132 : vector<16x16xf32>
    %134 = math.exp %133 : vector<16x16xf32>
    %cst_37 = arith.constant dense<0.000000e+00> : vector<16xf32>
    %135 = vector.multi_reduction <add>, %134, %cst_37 [1] : vector<16x16xf32> to vector<16xf32>
    %136 = vector.shape_cast %135 : vector<16xf32> to vector<16x1xf32>
    %137 = tpu.reciprocal %136 {approx = true} : vector<16x1xf32> -> vector<16x1xf32>
    %138 = vector.broadcast %137 : vector<16x1xf32> to vector<16x16xf32>
    %139 = arith.mulf %134, %138 : vector<16x16xf32>
    %140 = arith.truncf %139 : vector<16x16xf32> to vector<16x16xbf16>
    %cst_38 = arith.constant dense<0.000000e+00> : vector<16x64xf32>
    %141 = tpu.matmul %140, %128, %cst_38 {dimension_numbers = #tpu.dot_dimension_numbers<[1], [0], [0], [1], [0, 0, 1, 1], [], []>} : vector<16x16xbf16>, vector<16x64xbf16>, vector<16x64xf32> -> vector<16x64xf32>
    %142 = arith.truncf %141 : vector<16x64xf32> to vector<16x64xbf16>
    %143 = vector.extract_strided_slice %29 {offsets = [256, 0], sizes = [64, 128], strides = [1, 1]} : vector<512x128xbf16> to vector<64x128xbf16>
    %cst_39 = arith.constant dense<0.000000e+00> : vector<16x128xf32>
    %144 = tpu.matmul %142, %143, %cst_39 {dimension_numbers = #tpu.dot_dimension_numbers<[1], [0], [0], [1], [0, 0, 1, 1], [], []>} : vector<16x64xbf16>, vector<64x128xbf16>, vector<16x128xf32> -> vector<16x128xf32>
    %145 = arith.addf %122, %144 : vector<16x128xf32>
    %146 = vector.extract_strided_slice %26 {offsets = [0, 320], sizes = [16, 64], strides = [1, 1]} : vector<32x512xf32> to vector<16x64xf32>
    %147 = arith.truncf %146 : vector<16x64xf32> to vector<16x64xbf16>
    %148 = vector.extract_strided_slice %27 {offsets = [0, 320], sizes = [16, 64], strides = [1, 1]} : vector<32x512xf32> to vector<16x64xf32>
    %149 = arith.truncf %148 : vector<16x64xf32> to vector<16x64xbf16>
    %150 = vector.extract_strided_slice %28 {offsets = [0, 320], sizes = [16, 64], strides = [1, 1]} : vector<32x512xf32> to vector<16x64xf32>
    %151 = arith.truncf %150 : vector<16x64xf32> to vector<16x64xbf16>
    %cst_40 = arith.constant dense<0.000000e+00> : vector<16x16xf32>
    %152 = tpu.matmul %147, %149, %cst_40 {dimension_numbers = #tpu.dot_dimension_numbers<[1], [1], [0], [0], [0, 0, 1, 0], [], []>} : vector<16x64xbf16>, vector<16x64xbf16>, vector<16x16xf32> -> vector<16x16xf32>
    %cst_41 = arith.constant dense<0xFF800000> : vector<16xf32>
    %153 = vector.multi_reduction <maximumf>, %152, %cst_41 [1] : vector<16x16xf32> to vector<16xf32>
    %154 = vector.shape_cast %153 : vector<16xf32> to vector<16x1xf32>
    %155 = vector.broadcast %154 : vector<16x1xf32> to vector<16x16xf32>
    %156 = arith.subf %152, %155 : vector<16x16xf32>
    %157 = math.exp %156 : vector<16x16xf32>
    %cst_42 = arith.constant dense<0.000000e+00> : vector<16xf32>
    %158 = vector.multi_reduction <add>, %157, %cst_42 [1] : vector<16x16xf32> to vector<16xf32>
    %159 = vector.shape_cast %158 : vector<16xf32> to vector<16x1xf32>
    %160 = tpu.reciprocal %159 {approx = true} : vector<16x1xf32> -> vector<16x1xf32>
    %161 = vector.broadcast %160 : vector<16x1xf32> to vector<16x16xf32>
    %162 = arith.mulf %157, %161 : vector<16x16xf32>
    %163 = arith.truncf %162 : vector<16x16xf32> to vector<16x16xbf16>
    %cst_43 = arith.constant dense<0.000000e+00> : vector<16x64xf32>
    %164 = tpu.matmul %163, %151, %cst_43 {dimension_numbers = #tpu.dot_dimension_numbers<[1], [0], [0], [1], [0, 0, 1, 1], [], []>} : vector<16x16xbf16>, vector<16x64xbf16>, vector<16x64xf32> -> vector<16x64xf32>
    %165 = arith.truncf %164 : vector<16x64xf32> to vector<16x64xbf16>
    %166 = vector.extract_strided_slice %29 {offsets = [320, 0], sizes = [64, 128], strides = [1, 1]} : vector<512x128xbf16> to vector<64x128xbf16>
    %cst_44 = arith.constant dense<0.000000e+00> : vector<16x128xf32>
    %167 = tpu.matmul %165, %166, %cst_44 {dimension_numbers = #tpu.dot_dimension_numbers<[1], [0], [0], [1], [0, 0, 1, 1], [], []>} : vector<16x64xbf16>, vector<64x128xbf16>, vector<16x128xf32> -> vector<16x128xf32>
    %168 = arith.addf %145, %167 : vector<16x128xf32>
    %169 = vector.extract_strided_slice %26 {offsets = [0, 384], sizes = [16, 64], strides = [1, 1]} : vector<32x512xf32> to vector<16x64xf32>
    %170 = arith.truncf %169 : vector<16x64xf32> to vector<16x64xbf16>
    %171 = vector.extract_strided_slice %27 {offsets = [0, 384], sizes = [16, 64], strides = [1, 1]} : vector<32x512xf32> to vector<16x64xf32>
    %172 = arith.truncf %171 : vector<16x64xf32> to vector<16x64xbf16>
    %173 = vector.extract_strided_slice %28 {offsets = [0, 384], sizes = [16, 64], strides = [1, 1]} : vector<32x512xf32> to vector<16x64xf32>
    %174 = arith.truncf %173 : vector<16x64xf32> to vector<16x64xbf16>
    %cst_45 = arith.constant dense<0.000000e+00> : vector<16x16xf32>
    %175 = tpu.matmul %170, %172, %cst_45 {dimension_numbers = #tpu.dot_dimension_numbers<[1], [1], [0], [0], [0, 0, 1, 0], [], []>} : vector<16x64xbf16>, vector<16x64xbf16>, vector<16x16xf32> -> vector<16x16xf32>
    %cst_46 = arith.constant dense<0xFF800000> : vector<16xf32>
    %176 = vector.multi_reduction <maximumf>, %175, %cst_46 [1] : vector<16x16xf32> to vector<16xf32>
    %177 = vector.shape_cast %176 : vector<16xf32> to vector<16x1xf32>
    %178 = vector.broadcast %177 : vector<16x1xf32> to vector<16x16xf32>
    %179 = arith.subf %175, %178 : vector<16x16xf32>
    %180 = math.exp %179 : vector<16x16xf32>
    %cst_47 = arith.constant dense<0.000000e+00> : vector<16xf32>
    %181 = vector.multi_reduction <add>, %180, %cst_47 [1] : vector<16x16xf32> to vector<16xf32>
    %182 = vector.shape_cast %181 : vector<16xf32> to vector<16x1xf32>
    %183 = tpu.reciprocal %182 {approx = true} : vector<16x1xf32> -> vector<16x1xf32>
    %184 = vector.broadcast %183 : vector<16x1xf32> to vector<16x16xf32>
    %185 = arith.mulf %180, %184 : vector<16x16xf32>
    %186 = arith.truncf %185 : vector<16x16xf32> to vector<16x16xbf16>
    %cst_48 = arith.constant dense<0.000000e+00> : vector<16x64xf32>
    %187 = tpu.matmul %186, %174, %cst_48 {dimension_numbers = #tpu.dot_dimension_numbers<[1], [0], [0], [1], [0, 0, 1, 1], [], []>} : vector<16x16xbf16>, vector<16x64xbf16>, vector<16x64xf32> -> vector<16x64xf32>
    %188 = arith.truncf %187 : vector<16x64xf32> to vector<16x64xbf16>
    %189 = vector.extract_strided_slice %29 {offsets = [384, 0], sizes = [64, 128], strides = [1, 1]} : vector<512x128xbf16> to vector<64x128xbf16>
    %cst_49 = arith.constant dense<0.000000e+00> : vector<16x128xf32>
    %190 = tpu.matmul %188, %189, %cst_49 {dimension_numbers = #tpu.dot_dimension_numbers<[1], [0], [0], [1], [0, 0, 1, 1], [], []>} : vector<16x64xbf16>, vector<64x128xbf16>, vector<16x128xf32> -> vector<16x128xf32>
    %191 = arith.addf %168, %190 : vector<16x128xf32>
    %192 = vector.extract_strided_slice %26 {offsets = [0, 448], sizes = [16, 64], strides = [1, 1]} : vector<32x512xf32> to vector<16x64xf32>
    %193 = arith.truncf %192 : vector<16x64xf32> to vector<16x64xbf16>
    %194 = vector.extract_strided_slice %27 {offsets = [0, 448], sizes = [16, 64], strides = [1, 1]} : vector<32x512xf32> to vector<16x64xf32>
    %195 = arith.truncf %194 : vector<16x64xf32> to vector<16x64xbf16>
    %196 = vector.extract_strided_slice %28 {offsets = [0, 448], sizes = [16, 64], strides = [1, 1]} : vector<32x512xf32> to vector<16x64xf32>
    %197 = arith.truncf %196 : vector<16x64xf32> to vector<16x64xbf16>
    %cst_50 = arith.constant dense<0.000000e+00> : vector<16x16xf32>
    %198 = tpu.matmul %193, %195, %cst_50 {dimension_numbers = #tpu.dot_dimension_numbers<[1], [1], [0], [0], [0, 0, 1, 0], [], []>} : vector<16x64xbf16>, vector<16x64xbf16>, vector<16x16xf32> -> vector<16x16xf32>
    %cst_51 = arith.constant dense<0xFF800000> : vector<16xf32>
    %199 = vector.multi_reduction <maximumf>, %198, %cst_51 [1] : vector<16x16xf32> to vector<16xf32>
    %200 = vector.shape_cast %199 : vector<16xf32> to vector<16x1xf32>
    %201 = vector.broadcast %200 : vector<16x1xf32> to vector<16x16xf32>
    %202 = arith.subf %198, %201 : vector<16x16xf32>
    %203 = math.exp %202 : vector<16x16xf32>
    %cst_52 = arith.constant dense<0.000000e+00> : vector<16xf32>
    %204 = vector.multi_reduction <add>, %203, %cst_52 [1] : vector<16x16xf32> to vector<16xf32>
    %205 = vector.shape_cast %204 : vector<16xf32> to vector<16x1xf32>
    %206 = tpu.reciprocal %205 {approx = true} : vector<16x1xf32> -> vector<16x1xf32>
    %207 = vector.broadcast %206 : vector<16x1xf32> to vector<16x16xf32>
    %208 = arith.mulf %203, %207 : vector<16x16xf32>
    %209 = arith.truncf %208 : vector<16x16xf32> to vector<16x16xbf16>
    %cst_53 = arith.constant dense<0.000000e+00> : vector<16x64xf32>
    %210 = tpu.matmul %209, %197, %cst_53 {dimension_numbers = #tpu.dot_dimension_numbers<[1], [0], [0], [1], [0, 0, 1, 1], [], []>} : vector<16x16xbf16>, vector<16x64xbf16>, vector<16x64xf32> -> vector<16x64xf32>
    %211 = arith.truncf %210 : vector<16x64xf32> to vector<16x64xbf16>
    %212 = vector.extract_strided_slice %29 {offsets = [448, 0], sizes = [64, 128], strides = [1, 1]} : vector<512x128xbf16> to vector<64x128xbf16>
    %cst_54 = arith.constant dense<0.000000e+00> : vector<16x128xf32>
    %213 = tpu.matmul %211, %212, %cst_54 {dimension_numbers = #tpu.dot_dimension_numbers<[1], [0], [0], [1], [0, 0, 1, 1], [], []>} : vector<16x64xbf16>, vector<64x128xbf16>, vector<16x128xf32> -> vector<16x128xf32>
    %214 = arith.addf %191, %213 : vector<16x128xf32>
    %cst_55 = arith.constant 0.000000e+00 : f32
    %215 = vector.broadcast %cst_55 : f32 to vector<16x128xf32>
    %216 = vector.extract_strided_slice %26 {offsets = [16, 0], sizes = [16, 64], strides = [1, 1]} : vector<32x512xf32> to vector<16x64xf32>
    %217 = arith.truncf %216 : vector<16x64xf32> to vector<16x64xbf16>
    %218 = vector.extract_strided_slice %27 {offsets = [16, 0], sizes = [16, 64], strides = [1, 1]} : vector<32x512xf32> to vector<16x64xf32>
    %219 = arith.truncf %218 : vector<16x64xf32> to vector<16x64xbf16>
    %220 = vector.extract_strided_slice %28 {offsets = [16, 0], sizes = [16, 64], strides = [1, 1]} : vector<32x512xf32> to vector<16x64xf32>
    %221 = arith.truncf %220 : vector<16x64xf32> to vector<16x64xbf16>
    %cst_56 = arith.constant dense<0.000000e+00> : vector<16x16xf32>
    %222 = tpu.matmul %217, %219, %cst_56 {dimension_numbers = #tpu.dot_dimension_numbers<[1], [1], [0], [0], [0, 0, 1, 0], [], []>} : vector<16x64xbf16>, vector<16x64xbf16>, vector<16x16xf32> -> vector<16x16xf32>
    %cst_57 = arith.constant dense<0xFF800000> : vector<16xf32>
    %223 = vector.multi_reduction <maximumf>, %222, %cst_57 [1] : vector<16x16xf32> to vector<16xf32>
    %224 = vector.shape_cast %223 : vector<16xf32> to vector<16x1xf32>
    %225 = vector.broadcast %224 : vector<16x1xf32> to vector<16x16xf32>
    %226 = arith.subf %222, %225 : vector<16x16xf32>
    %227 = math.exp %226 : vector<16x16xf32>
    %cst_58 = arith.constant dense<0.000000e+00> : vector<16xf32>
    %228 = vector.multi_reduction <add>, %227, %cst_58 [1] : vector<16x16xf32> to vector<16xf32>
    %229 = vector.shape_cast %228 : vector<16xf32> to vector<16x1xf32>
    %230 = tpu.reciprocal %229 {approx = true} : vector<16x1xf32> -> vector<16x1xf32>
    %231 = vector.broadcast %230 : vector<16x1xf32> to vector<16x16xf32>
    %232 = arith.mulf %227, %231 : vector<16x16xf32>
    %233 = arith.truncf %232 : vector<16x16xf32> to vector<16x16xbf16>
    %cst_59 = arith.constant dense<0.000000e+00> : vector<16x64xf32>
    %234 = tpu.matmul %233, %221, %cst_59 {dimension_numbers = #tpu.dot_dimension_numbers<[1], [0], [0], [1], [0, 0, 1, 1], [], []>} : vector<16x16xbf16>, vector<16x64xbf16>, vector<16x64xf32> -> vector<16x64xf32>
    %235 = arith.truncf %234 : vector<16x64xf32> to vector<16x64xbf16>
    %236 = vector.extract_strided_slice %29 {offsets = [0, 0], sizes = [64, 128], strides = [1, 1]} : vector<512x128xbf16> to vector<64x128xbf16>
    %cst_60 = arith.constant dense<0.000000e+00> : vector<16x128xf32>
    %237 = tpu.matmul %235, %236, %cst_60 {dimension_numbers = #tpu.dot_dimension_numbers<[1], [0], [0], [1], [0, 0, 1, 1], [], []>} : vector<16x64xbf16>, vector<64x128xbf16>, vector<16x128xf32> -> vector<16x128xf32>
    %238 = arith.addf %215, %237 : vector<16x128xf32>
    %239 = vector.extract_strided_slice %26 {offsets = [16, 64], sizes = [16, 64], strides = [1, 1]} : vector<32x512xf32> to vector<16x64xf32>
    %240 = arith.truncf %239 : vector<16x64xf32> to vector<16x64xbf16>
    %241 = vector.extract_strided_slice %27 {offsets = [16, 64], sizes = [16, 64], strides = [1, 1]} : vector<32x512xf32> to vector<16x64xf32>
    %242 = arith.truncf %241 : vector<16x64xf32> to vector<16x64xbf16>
    %243 = vector.extract_strided_slice %28 {offsets = [16, 64], sizes = [16, 64], strides = [1, 1]} : vector<32x512xf32> to vector<16x64xf32>
    %244 = arith.truncf %243 : vector<16x64xf32> to vector<16x64xbf16>
    %cst_61 = arith.constant dense<0.000000e+00> : vector<16x16xf32>
    %245 = tpu.matmul %240, %242, %cst_61 {dimension_numbers = #tpu.dot_dimension_numbers<[1], [1], [0], [0], [0, 0, 1, 0], [], []>} : vector<16x64xbf16>, vector<16x64xbf16>, vector<16x16xf32> -> vector<16x16xf32>
    %cst_62 = arith.constant dense<0xFF800000> : vector<16xf32>
    %246 = vector.multi_reduction <maximumf>, %245, %cst_62 [1] : vector<16x16xf32> to vector<16xf32>
    %247 = vector.shape_cast %246 : vector<16xf32> to vector<16x1xf32>
    %248 = vector.broadcast %247 : vector<16x1xf32> to vector<16x16xf32>
    %249 = arith.subf %245, %248 : vector<16x16xf32>
    %250 = math.exp %249 : vector<16x16xf32>
    %cst_63 = arith.constant dense<0.000000e+00> : vector<16xf32>
    %251 = vector.multi_reduction <add>, %250, %cst_63 [1] : vector<16x16xf32> to vector<16xf32>
    %252 = vector.shape_cast %251 : vector<16xf32> to vector<16x1xf32>
    %253 = tpu.reciprocal %252 {approx = true} : vector<16x1xf32> -> vector<16x1xf32>
    %254 = vector.broadcast %253 : vector<16x1xf32> to vector<16x16xf32>
    %255 = arith.mulf %250, %254 : vector<16x16xf32>
    %256 = arith.truncf %255 : vector<16x16xf32> to vector<16x16xbf16>
    %cst_64 = arith.constant dense<0.000000e+00> : vector<16x64xf32>
    %257 = tpu.matmul %256, %244, %cst_64 {dimension_numbers = #tpu.dot_dimension_numbers<[1], [0], [0], [1], [0, 0, 1, 1], [], []>} : vector<16x16xbf16>, vector<16x64xbf16>, vector<16x64xf32> -> vector<16x64xf32>
    %258 = arith.truncf %257 : vector<16x64xf32> to vector<16x64xbf16>
    %259 = vector.extract_strided_slice %29 {offsets = [64, 0], sizes = [64, 128], strides = [1, 1]} : vector<512x128xbf16> to vector<64x128xbf16>
    %cst_65 = arith.constant dense<0.000000e+00> : vector<16x128xf32>
    %260 = tpu.matmul %258, %259, %cst_65 {dimension_numbers = #tpu.dot_dimension_numbers<[1], [0], [0], [1], [0, 0, 1, 1], [], []>} : vector<16x64xbf16>, vector<64x128xbf16>, vector<16x128xf32> -> vector<16x128xf32>
    %261 = arith.addf %238, %260 : vector<16x128xf32>
    %262 = vector.extract_strided_slice %26 {offsets = [16, 128], sizes = [16, 64], strides = [1, 1]} : vector<32x512xf32> to vector<16x64xf32>
    %263 = arith.truncf %262 : vector<16x64xf32> to vector<16x64xbf16>
    %264 = vector.extract_strided_slice %27 {offsets = [16, 128], sizes = [16, 64], strides = [1, 1]} : vector<32x512xf32> to vector<16x64xf32>
    %265 = arith.truncf %264 : vector<16x64xf32> to vector<16x64xbf16>
    %266 = vector.extract_strided_slice %28 {offsets = [16, 128], sizes = [16, 64], strides = [1, 1]} : vector<32x512xf32> to vector<16x64xf32>
    %267 = arith.truncf %266 : vector<16x64xf32> to vector<16x64xbf16>
    %cst_66 = arith.constant dense<0.000000e+00> : vector<16x16xf32>
    %268 = tpu.matmul %263, %265, %cst_66 {dimension_numbers = #tpu.dot_dimension_numbers<[1], [1], [0], [0], [0, 0, 1, 0], [], []>} : vector<16x64xbf16>, vector<16x64xbf16>, vector<16x16xf32> -> vector<16x16xf32>
    %cst_67 = arith.constant dense<0xFF800000> : vector<16xf32>
    %269 = vector.multi_reduction <maximumf>, %268, %cst_67 [1] : vector<16x16xf32> to vector<16xf32>
    %270 = vector.shape_cast %269 : vector<16xf32> to vector<16x1xf32>
    %271 = vector.broadcast %270 : vector<16x1xf32> to vector<16x16xf32>
    %272 = arith.subf %268, %271 : vector<16x16xf32>
    %273 = math.exp %272 : vector<16x16xf32>
    %cst_68 = arith.constant dense<0.000000e+00> : vector<16xf32>
    %274 = vector.multi_reduction <add>, %273, %cst_68 [1] : vector<16x16xf32> to vector<16xf32>
    %275 = vector.shape_cast %274 : vector<16xf32> to vector<16x1xf32>
    %276 = tpu.reciprocal %275 {approx = true} : vector<16x1xf32> -> vector<16x1xf32>
    %277 = vector.broadcast %276 : vector<16x1xf32> to vector<16x16xf32>
    %278 = arith.mulf %273, %277 : vector<16x16xf32>
    %279 = arith.truncf %278 : vector<16x16xf32> to vector<16x16xbf16>
    %cst_69 = arith.constant dense<0.000000e+00> : vector<16x64xf32>
    %280 = tpu.matmul %279, %267, %cst_69 {dimension_numbers = #tpu.dot_dimension_numbers<[1], [0], [0], [1], [0, 0, 1, 1], [], []>} : vector<16x16xbf16>, vector<16x64xbf16>, vector<16x64xf32> -> vector<16x64xf32>
    %281 = arith.truncf %280 : vector<16x64xf32> to vector<16x64xbf16>
    %282 = vector.extract_strided_slice %29 {offsets = [128, 0], sizes = [64, 128], strides = [1, 1]} : vector<512x128xbf16> to vector<64x128xbf16>
    %cst_70 = arith.constant dense<0.000000e+00> : vector<16x128xf32>
    %283 = tpu.matmul %281, %282, %cst_70 {dimension_numbers = #tpu.dot_dimension_numbers<[1], [0], [0], [1], [0, 0, 1, 1], [], []>} : vector<16x64xbf16>, vector<64x128xbf16>, vector<16x128xf32> -> vector<16x128xf32>
    %284 = arith.addf %261, %283 : vector<16x128xf32>
    %285 = vector.extract_strided_slice %26 {offsets = [16, 192], sizes = [16, 64], strides = [1, 1]} : vector<32x512xf32> to vector<16x64xf32>
    %286 = arith.truncf %285 : vector<16x64xf32> to vector<16x64xbf16>
    %287 = vector.extract_strided_slice %27 {offsets = [16, 192], sizes = [16, 64], strides = [1, 1]} : vector<32x512xf32> to vector<16x64xf32>
    %288 = arith.truncf %287 : vector<16x64xf32> to vector<16x64xbf16>
    %289 = vector.extract_strided_slice %28 {offsets = [16, 192], sizes = [16, 64], strides = [1, 1]} : vector<32x512xf32> to vector<16x64xf32>
    %290 = arith.truncf %289 : vector<16x64xf32> to vector<16x64xbf16>
    %cst_71 = arith.constant dense<0.000000e+00> : vector<16x16xf32>
    %291 = tpu.matmul %286, %288, %cst_71 {dimension_numbers = #tpu.dot_dimension_numbers<[1], [1], [0], [0], [0, 0, 1, 0], [], []>} : vector<16x64xbf16>, vector<16x64xbf16>, vector<16x16xf32> -> vector<16x16xf32>
    %cst_72 = arith.constant dense<0xFF800000> : vector<16xf32>
    %292 = vector.multi_reduction <maximumf>, %291, %cst_72 [1] : vector<16x16xf32> to vector<16xf32>
    %293 = vector.shape_cast %292 : vector<16xf32> to vector<16x1xf32>
    %294 = vector.broadcast %293 : vector<16x1xf32> to vector<16x16xf32>
    %295 = arith.subf %291, %294 : vector<16x16xf32>
    %296 = math.exp %295 : vector<16x16xf32>
    %cst_73 = arith.constant dense<0.000000e+00> : vector<16xf32>
    %297 = vector.multi_reduction <add>, %296, %cst_73 [1] : vector<16x16xf32> to vector<16xf32>
    %298 = vector.shape_cast %297 : vector<16xf32> to vector<16x1xf32>
    %299 = tpu.reciprocal %298 {approx = true} : vector<16x1xf32> -> vector<16x1xf32>
    %300 = vector.broadcast %299 : vector<16x1xf32> to vector<16x16xf32>
    %301 = arith.mulf %296, %300 : vector<16x16xf32>
    %302 = arith.truncf %301 : vector<16x16xf32> to vector<16x16xbf16>
    %cst_74 = arith.constant dense<0.000000e+00> : vector<16x64xf32>
    %303 = tpu.matmul %302, %290, %cst_74 {dimension_numbers = #tpu.dot_dimension_numbers<[1], [0], [0], [1], [0, 0, 1, 1], [], []>} : vector<16x16xbf16>, vector<16x64xbf16>, vector<16x64xf32> -> vector<16x64xf32>
    %304 = arith.truncf %303 : vector<16x64xf32> to vector<16x64xbf16>
    %305 = vector.extract_strided_slice %29 {offsets = [192, 0], sizes = [64, 128], strides = [1, 1]} : vector<512x128xbf16> to vector<64x128xbf16>
    %cst_75 = arith.constant dense<0.000000e+00> : vector<16x128xf32>
    %306 = tpu.matmul %304, %305, %cst_75 {dimension_numbers = #tpu.dot_dimension_numbers<[1], [0], [0], [1], [0, 0, 1, 1], [], []>} : vector<16x64xbf16>, vector<64x128xbf16>, vector<16x128xf32> -> vector<16x128xf32>
    %307 = arith.addf %284, %306 : vector<16x128xf32>
    %308 = vector.extract_strided_slice %26 {offsets = [16, 256], sizes = [16, 64], strides = [1, 1]} : vector<32x512xf32> to vector<16x64xf32>
    %309 = arith.truncf %308 : vector<16x64xf32> to vector<16x64xbf16>
    %310 = vector.extract_strided_slice %27 {offsets = [16, 256], sizes = [16, 64], strides = [1, 1]} : vector<32x512xf32> to vector<16x64xf32>
    %311 = arith.truncf %310 : vector<16x64xf32> to vector<16x64xbf16>
    %312 = vector.extract_strided_slice %28 {offsets = [16, 256], sizes = [16, 64], strides = [1, 1]} : vector<32x512xf32> to vector<16x64xf32>
    %313 = arith.truncf %312 : vector<16x64xf32> to vector<16x64xbf16>
    %cst_76 = arith.constant dense<0.000000e+00> : vector<16x16xf32>
    %314 = tpu.matmul %309, %311, %cst_76 {dimension_numbers = #tpu.dot_dimension_numbers<[1], [1], [0], [0], [0, 0, 1, 0], [], []>} : vector<16x64xbf16>, vector<16x64xbf16>, vector<16x16xf32> -> vector<16x16xf32>
    %cst_77 = arith.constant dense<0xFF800000> : vector<16xf32>
    %315 = vector.multi_reduction <maximumf>, %314, %cst_77 [1] : vector<16x16xf32> to vector<16xf32>
    %316 = vector.shape_cast %315 : vector<16xf32> to vector<16x1xf32>
    %317 = vector.broadcast %316 : vector<16x1xf32> to vector<16x16xf32>
    %318 = arith.subf %314, %317 : vector<16x16xf32>
    %319 = math.exp %318 : vector<16x16xf32>
    %cst_78 = arith.constant dense<0.000000e+00> : vector<16xf32>
    %320 = vector.multi_reduction <add>, %319, %cst_78 [1] : vector<16x16xf32> to vector<16xf32>
    %321 = vector.shape_cast %320 : vector<16xf32> to vector<16x1xf32>
    %322 = tpu.reciprocal %321 {approx = true} : vector<16x1xf32> -> vector<16x1xf32>
    %323 = vector.broadcast %322 : vector<16x1xf32> to vector<16x16xf32>
    %324 = arith.mulf %319, %323 : vector<16x16xf32>
    %325 = arith.truncf %324 : vector<16x16xf32> to vector<16x16xbf16>
    %cst_79 = arith.constant dense<0.000000e+00> : vector<16x64xf32>
    %326 = tpu.matmul %325, %313, %cst_79 {dimension_numbers = #tpu.dot_dimension_numbers<[1], [0], [0], [1], [0, 0, 1, 1], [], []>} : vector<16x16xbf16>, vector<16x64xbf16>, vector<16x64xf32> -> vector<16x64xf32>
    %327 = arith.truncf %326 : vector<16x64xf32> to vector<16x64xbf16>
    %328 = vector.extract_strided_slice %29 {offsets = [256, 0], sizes = [64, 128], strides = [1, 1]} : vector<512x128xbf16> to vector<64x128xbf16>
    %cst_80 = arith.constant dense<0.000000e+00> : vector<16x128xf32>
    %329 = tpu.matmul %327, %328, %cst_80 {dimension_numbers = #tpu.dot_dimension_numbers<[1], [0], [0], [1], [0, 0, 1, 1], [], []>} : vector<16x64xbf16>, vector<64x128xbf16>, vector<16x128xf32> -> vector<16x128xf32>
    %330 = arith.addf %307, %329 : vector<16x128xf32>
    %331 = vector.extract_strided_slice %26 {offsets = [16, 320], sizes = [16, 64], strides = [1, 1]} : vector<32x512xf32> to vector<16x64xf32>
    %332 = arith.truncf %331 : vector<16x64xf32> to vector<16x64xbf16>
    %333 = vector.extract_strided_slice %27 {offsets = [16, 320], sizes = [16, 64], strides = [1, 1]} : vector<32x512xf32> to vector<16x64xf32>
    %334 = arith.truncf %333 : vector<16x64xf32> to vector<16x64xbf16>
    %335 = vector.extract_strided_slice %28 {offsets = [16, 320], sizes = [16, 64], strides = [1, 1]} : vector<32x512xf32> to vector<16x64xf32>
    %336 = arith.truncf %335 : vector<16x64xf32> to vector<16x64xbf16>
    %cst_81 = arith.constant dense<0.000000e+00> : vector<16x16xf32>
    %337 = tpu.matmul %332, %334, %cst_81 {dimension_numbers = #tpu.dot_dimension_numbers<[1], [1], [0], [0], [0, 0, 1, 0], [], []>} : vector<16x64xbf16>, vector<16x64xbf16>, vector<16x16xf32> -> vector<16x16xf32>
    %cst_82 = arith.constant dense<0xFF800000> : vector<16xf32>
    %338 = vector.multi_reduction <maximumf>, %337, %cst_82 [1] : vector<16x16xf32> to vector<16xf32>
    %339 = vector.shape_cast %338 : vector<16xf32> to vector<16x1xf32>
    %340 = vector.broadcast %339 : vector<16x1xf32> to vector<16x16xf32>
    %341 = arith.subf %337, %340 : vector<16x16xf32>
    %342 = math.exp %341 : vector<16x16xf32>
    %cst_83 = arith.constant dense<0.000000e+00> : vector<16xf32>
    %343 = vector.multi_reduction <add>, %342, %cst_83 [1] : vector<16x16xf32> to vector<16xf32>
    %344 = vector.shape_cast %343 : vector<16xf32> to vector<16x1xf32>
    %345 = tpu.reciprocal %344 {approx = true} : vector<16x1xf32> -> vector<16x1xf32>
    %346 = vector.broadcast %345 : vector<16x1xf32> to vector<16x16xf32>
    %347 = arith.mulf %342, %346 : vector<16x16xf32>
    %348 = arith.truncf %347 : vector<16x16xf32> to vector<16x16xbf16>
    %cst_84 = arith.constant dense<0.000000e+00> : vector<16x64xf32>
    %349 = tpu.matmul %348, %336, %cst_84 {dimension_numbers = #tpu.dot_dimension_numbers<[1], [0], [0], [1], [0, 0, 1, 1], [], []>} : vector<16x16xbf16>, vector<16x64xbf16>, vector<16x64xf32> -> vector<16x64xf32>
    %350 = arith.truncf %349 : vector<16x64xf32> to vector<16x64xbf16>
    %351 = vector.extract_strided_slice %29 {offsets = [320, 0], sizes = [64, 128], strides = [1, 1]} : vector<512x128xbf16> to vector<64x128xbf16>
    %cst_85 = arith.constant dense<0.000000e+00> : vector<16x128xf32>
    %352 = tpu.matmul %350, %351, %cst_85 {dimension_numbers = #tpu.dot_dimension_numbers<[1], [0], [0], [1], [0, 0, 1, 1], [], []>} : vector<16x64xbf16>, vector<64x128xbf16>, vector<16x128xf32> -> vector<16x128xf32>
    %353 = arith.addf %330, %352 : vector<16x128xf32>
    %354 = vector.extract_strided_slice %26 {offsets = [16, 384], sizes = [16, 64], strides = [1, 1]} : vector<32x512xf32> to vector<16x64xf32>
    %355 = arith.truncf %354 : vector<16x64xf32> to vector<16x64xbf16>
    %356 = vector.extract_strided_slice %27 {offsets = [16, 384], sizes = [16, 64], strides = [1, 1]} : vector<32x512xf32> to vector<16x64xf32>
    %357 = arith.truncf %356 : vector<16x64xf32> to vector<16x64xbf16>
    %358 = vector.extract_strided_slice %28 {offsets = [16, 384], sizes = [16, 64], strides = [1, 1]} : vector<32x512xf32> to vector<16x64xf32>
    %359 = arith.truncf %358 : vector<16x64xf32> to vector<16x64xbf16>
    %cst_86 = arith.constant dense<0.000000e+00> : vector<16x16xf32>
    %360 = tpu.matmul %355, %357, %cst_86 {dimension_numbers = #tpu.dot_dimension_numbers<[1], [1], [0], [0], [0, 0, 1, 0], [], []>} : vector<16x64xbf16>, vector<16x64xbf16>, vector<16x16xf32> -> vector<16x16xf32>
    %cst_87 = arith.constant dense<0xFF800000> : vector<16xf32>
    %361 = vector.multi_reduction <maximumf>, %360, %cst_87 [1] : vector<16x16xf32> to vector<16xf32>
    %362 = vector.shape_cast %361 : vector<16xf32> to vector<16x1xf32>
    %363 = vector.broadcast %362 : vector<16x1xf32> to vector<16x16xf32>
    %364 = arith.subf %360, %363 : vector<16x16xf32>
    %365 = math.exp %364 : vector<16x16xf32>
    %cst_88 = arith.constant dense<0.000000e+00> : vector<16xf32>
    %366 = vector.multi_reduction <add>, %365, %cst_88 [1] : vector<16x16xf32> to vector<16xf32>
    %367 = vector.shape_cast %366 : vector<16xf32> to vector<16x1xf32>
    %368 = tpu.reciprocal %367 {approx = true} : vector<16x1xf32> -> vector<16x1xf32>
    %369 = vector.broadcast %368 : vector<16x1xf32> to vector<16x16xf32>
    %370 = arith.mulf %365, %369 : vector<16x16xf32>
    %371 = arith.truncf %370 : vector<16x16xf32> to vector<16x16xbf16>
    %cst_89 = arith.constant dense<0.000000e+00> : vector<16x64xf32>
    %372 = tpu.matmul %371, %359, %cst_89 {dimension_numbers = #tpu.dot_dimension_numbers<[1], [0], [0], [1], [0, 0, 1, 1], [], []>} : vector<16x16xbf16>, vector<16x64xbf16>, vector<16x64xf32> -> vector<16x64xf32>
    %373 = arith.truncf %372 : vector<16x64xf32> to vector<16x64xbf16>
    %374 = vector.extract_strided_slice %29 {offsets = [384, 0], sizes = [64, 128], strides = [1, 1]} : vector<512x128xbf16> to vector<64x128xbf16>
    %cst_90 = arith.constant dense<0.000000e+00> : vector<16x128xf32>
    %375 = tpu.matmul %373, %374, %cst_90 {dimension_numbers = #tpu.dot_dimension_numbers<[1], [0], [0], [1], [0, 0, 1, 1], [], []>} : vector<16x64xbf16>, vector<64x128xbf16>, vector<16x128xf32> -> vector<16x128xf32>
    %376 = arith.addf %353, %375 : vector<16x128xf32>
    %377 = vector.extract_strided_slice %26 {offsets = [16, 448], sizes = [16, 64], strides = [1, 1]} : vector<32x512xf32> to vector<16x64xf32>
    %378 = arith.truncf %377 : vector<16x64xf32> to vector<16x64xbf16>
    %379 = vector.extract_strided_slice %27 {offsets = [16, 448], sizes = [16, 64], strides = [1, 1]} : vector<32x512xf32> to vector<16x64xf32>
    %380 = arith.truncf %379 : vector<16x64xf32> to vector<16x64xbf16>
    %381 = vector.extract_strided_slice %28 {offsets = [16, 448], sizes = [16, 64], strides = [1, 1]} : vector<32x512xf32> to vector<16x64xf32>
    %382 = arith.truncf %381 : vector<16x64xf32> to vector<16x64xbf16>
    %cst_91 = arith.constant dense<0.000000e+00> : vector<16x16xf32>
    %383 = tpu.matmul %378, %380, %cst_91 {dimension_numbers = #tpu.dot_dimension_numbers<[1], [1], [0], [0], [0, 0, 1, 0], [], []>} : vector<16x64xbf16>, vector<16x64xbf16>, vector<16x16xf32> -> vector<16x16xf32>
    %cst_92 = arith.constant dense<0xFF800000> : vector<16xf32>
    %384 = vector.multi_reduction <maximumf>, %383, %cst_92 [1] : vector<16x16xf32> to vector<16xf32>
    %385 = vector.shape_cast %384 : vector<16xf32> to vector<16x1xf32>
    %386 = vector.broadcast %385 : vector<16x1xf32> to vector<16x16xf32>
    %387 = arith.subf %383, %386 : vector<16x16xf32>
    %388 = math.exp %387 : vector<16x16xf32>
    %cst_93 = arith.constant dense<0.000000e+00> : vector<16xf32>
    %389 = vector.multi_reduction <add>, %388, %cst_93 [1] : vector<16x16xf32> to vector<16xf32>
    %390 = vector.shape_cast %389 : vector<16xf32> to vector<16x1xf32>
    %391 = tpu.reciprocal %390 {approx = true} : vector<16x1xf32> -> vector<16x1xf32>
    %392 = vector.broadcast %391 : vector<16x1xf32> to vector<16x16xf32>
    %393 = arith.mulf %388, %392 : vector<16x16xf32>
    %394 = arith.truncf %393 : vector<16x16xf32> to vector<16x16xbf16>
    %cst_94 = arith.constant dense<0.000000e+00> : vector<16x64xf32>
    %395 = tpu.matmul %394, %382, %cst_94 {dimension_numbers = #tpu.dot_dimension_numbers<[1], [0], [0], [1], [0, 0, 1, 1], [], []>} : vector<16x16xbf16>, vector<16x64xbf16>, vector<16x64xf32> -> vector<16x64xf32>
    %396 = arith.truncf %395 : vector<16x64xf32> to vector<16x64xbf16>
    %397 = vector.extract_strided_slice %29 {offsets = [448, 0], sizes = [64, 128], strides = [1, 1]} : vector<512x128xbf16> to vector<64x128xbf16>
    %cst_95 = arith.constant dense<0.000000e+00> : vector<16x128xf32>
    %398 = tpu.matmul %396, %397, %cst_95 {dimension_numbers = #tpu.dot_dimension_numbers<[1], [0], [0], [1], [0, 0, 1, 1], [], []>} : vector<16x64xbf16>, vector<64x128xbf16>, vector<16x128xf32> -> vector<16x128xf32>
    %399 = arith.addf %376, %398 : vector<16x128xf32>
    %400 = tpu.concatenate %214, %399 in 0 : vector<16x128xf32>, vector<16x128xf32> -> vector<32x128xf32>
    %c0_96 = arith.constant 0 : index
    %c0_97 = arith.constant 0 : index
    %401 = vector.load %arg6[%c0_96, %c0_97] : memref<1x128xf32, #tpu.memory_space<vmem>>, vector<1x128xf32>
    %402 = vector.broadcast %401 : vector<1x128xf32> to vector<32x128xf32>
    %403 = arith.addf %400, %402 : vector<32x128xf32>
    %404 = arith.addf %403, %0 : vector<32x128xf32>
    %c0_98 = arith.constant 0 : index
    %c0_99 = arith.constant 0 : index
    %405 = vector.load %arg7[%c0_98, %c0_99] : memref<1x128xf32, #tpu.memory_space<vmem>>, vector<1x128xf32>
    %c0_100 = arith.constant 0 : index
    %c0_101 = arith.constant 0 : index
    %406 = vector.load %arg8[%c0_100, %c0_101] : memref<1x128xf32, #tpu.memory_space<vmem>>, vector<1x128xf32>
    %cst_102 = arith.constant dense<0.000000e+00> : vector<32xf32>
    %407 = vector.multi_reduction <add>, %404, %cst_102 [1] : vector<32x128xf32> to vector<32xf32>
    %408 = vector.shape_cast %407 : vector<32xf32> to vector<32x1xf32>
    %cst_103 = arith.constant 1.280000e+02 : f32
    %409 = vector.broadcast %cst_103 : f32 to vector<32x1xf32>
    %410 = arith.divf %408, %409 : vector<32x1xf32>
    %411 = vector.broadcast %410 : vector<32x1xf32> to vector<32x128xf32>
    %412 = arith.subf %404, %411 : vector<32x128xf32>
    %413 = arith.mulf %412, %412 : vector<32x128xf32>
    %cst_104 = arith.constant dense<0.000000e+00> : vector<32xf32>
    %414 = vector.multi_reduction <add>, %413, %cst_104 [1] : vector<32x128xf32> to vector<32xf32>
    %415 = vector.shape_cast %414 : vector<32xf32> to vector<32x1xf32>
    %cst_105 = arith.constant 1.280000e+02 : f32
    %416 = vector.broadcast %cst_105 : f32 to vector<32x1xf32>
    %417 = arith.divf %415, %416 : vector<32x1xf32>
    %cst_106 = arith.constant 9.99999974E-6 : f32
    %418 = vector.broadcast %cst_106 : f32 to vector<32x1xf32>
    %419 = arith.addf %417, %418 : vector<32x1xf32>
    %420 = math.rsqrt %419 : vector<32x1xf32>
    %421 = vector.broadcast %420 : vector<32x1xf32> to vector<32x128xf32>
    %422 = arith.mulf %412, %421 : vector<32x128xf32>
    %423 = vector.broadcast %405 : vector<1x128xf32> to vector<32x128xf32>
    %424 = arith.mulf %422, %423 : vector<32x128xf32>
    %425 = vector.broadcast %406 : vector<1x128xf32> to vector<32x128xf32>
    %426 = arith.addf %424, %425 : vector<32x128xf32>
    %427 = arith.truncf %426 : vector<32x128xf32> to vector<32x128xbf16>
    %c0_107 = arith.constant 0 : index
    %c0_108 = arith.constant 0 : index
    %428 = vector.load %arg9[%c0_107, %c0_108] : memref<128x1024xbf16, #tpu.memory_space<vmem>>, vector<128x1024xbf16>
    %cst_109 = arith.constant dense<0.000000e+00> : vector<32x1024xf32>
    %429 = tpu.matmul %427, %428, %cst_109 {dimension_numbers = #tpu.dot_dimension_numbers<[1], [0], [0], [1], [0, 0, 1, 1], [], []>} : vector<32x128xbf16>, vector<128x1024xbf16>, vector<32x1024xf32> -> vector<32x1024xf32>
    %c0_110 = arith.constant 0 : index
    %c0_111 = arith.constant 0 : index
    %430 = vector.load %arg10[%c0_110, %c0_111] : memref<1x1024xf32, #tpu.memory_space<vmem>>, vector<1x1024xf32>
    %431 = vector.broadcast %430 : vector<1x1024xf32> to vector<32x1024xf32>
    %432 = arith.addf %429, %431 : vector<32x1024xf32>
    %cst_112 = arith.constant 5.000000e-01 : f32
    %433 = vector.broadcast %cst_112 : f32 to vector<32x1024xf32>
    %434 = arith.mulf %433, %432 : vector<32x1024xf32>
    %cst_113 = arith.constant 4.471500e-02 : f32
    %435 = vector.broadcast %cst_113 : f32 to vector<32x1024xf32>
    %436 = arith.mulf %435, %432 : vector<32x1024xf32>
    %437 = arith.mulf %436, %432 : vector<32x1024xf32>
    %438 = arith.mulf %437, %432 : vector<32x1024xf32>
    %439 = arith.addf %432, %438 : vector<32x1024xf32>
    %cst_114 = arith.constant 0.797884583 : f32
    %440 = vector.broadcast %cst_114 : f32 to vector<32x1024xf32>
    %441 = arith.mulf %440, %439 : vector<32x1024xf32>
    %442 = math.tanh %441 : vector<32x1024xf32>
    %cst_115 = arith.constant 1.000000e+00 : f32
    %443 = vector.broadcast %cst_115 : f32 to vector<32x1024xf32>
    %444 = arith.addf %443, %442 : vector<32x1024xf32>
    %445 = arith.mulf %434, %444 : vector<32x1024xf32>
    %446 = arith.truncf %445 : vector<32x1024xf32> to vector<32x1024xbf16>
    %c0_116 = arith.constant 0 : index
    %c0_117 = arith.constant 0 : index
    %447 = vector.load %arg11[%c0_116, %c0_117] : memref<1024x128xbf16, #tpu.memory_space<vmem>>, vector<1024x128xbf16>
    %cst_118 = arith.constant dense<0.000000e+00> : vector<32x128xf32>
    %448 = tpu.matmul %446, %447, %cst_118 {dimension_numbers = #tpu.dot_dimension_numbers<[1], [0], [0], [1], [0, 0, 1, 1], [], []>} : vector<32x1024xbf16>, vector<1024x128xbf16>, vector<32x128xf32> -> vector<32x128xf32>
    %c0_119 = arith.constant 0 : index
    %c0_120 = arith.constant 0 : index
    %449 = vector.load %arg12[%c0_119, %c0_120] : memref<1x128xf32, #tpu.memory_space<vmem>>, vector<1x128xf32>
    %450 = vector.broadcast %449 : vector<1x128xf32> to vector<32x128xf32>
    %451 = arith.addf %448, %450 : vector<32x128xf32>
    %452 = arith.addf %451, %404 : vector<32x128xf32>
    %c0_121 = arith.constant 0 : index
    %c0_122 = arith.constant 0 : index
    %453 = vector.load %arg13[%c0_121, %c0_122] : memref<32x128xf32, #tpu.memory_space<vmem>>, vector<32x128xf32>
    tpu.vector_store %arg13[%c0_121, %c0_122], %452 {strides = array<i32>} : memref<32x128xf32, #tpu.memory_space<vmem>>, vector<32x128xf32>,
    return
  }
  func.func @transform_0(%arg0: i32) -> (i32, i32) {
    %c0_i32 = arith.constant 0 : i32
    %c0_i32_0 = arith.constant 0 : i32
    return %arg0, %c0_i32 : i32, i32
  }
  func.func @transform_1(%arg0: i32) -> (i32, i32) {
    %c0_i32 = arith.constant 0 : i32
    %c0_i32_0 = arith.constant 0 : i32
    %c0_i32_1 = arith.constant 0 : i32
    return %c0_i32, %c0_i32_0 : i32, i32
  }
  func.func @transform_2(%arg0: i32) -> (i32, i32) {
    %c0_i32 = arith.constant 0 : i32
    %c0_i32_0 = arith.constant 0 : i32
    %c0_i32_1 = arith.constant 0 : i32
    return %c0_i32, %c0_i32_0 : i32, i32
  }
  func.func @transform_3(%arg0: i32) -> (i32, i32) {
    %c0_i32 = arith.constant 0 : i32
    %c0_i32_0 = arith.constant 0 : i32
    %c0_i32_1 = arith.constant 0 : i32
    return %c0_i32, %c0_i32_0 : i32, i32
  }
  func.func @transform_4(%arg0: i32) -> (i32, i32) {
    %c0_i32 = arith.constant 0 : i32
    %c0_i32_0 = arith.constant 0 : i32
    %c0_i32_1 = arith.constant 0 : i32
    return %c0_i32, %c0_i32_0 : i32, i32
  }
  func.func @transform_5(%arg0: i32) -> (i32, i32) {
    %c0_i32 = arith.constant 0 : i32
    %c0_i32_0 = arith.constant 0 : i32
    %c0_i32_1 = arith.constant 0 : i32
    return %c0_i32, %c0_i32_0 : i32, i32
  }
  func.func @transform_6(%arg0: i32) -> (i32, i32) {
    %c0_i32 = arith.constant 0 : i32
    %c0_i32_0 = arith.constant 0 : i32
    %c0_i32_1 = arith.constant 0 : i32
    return %c0_i32, %c0_i32_0 : i32, i32
  }
  func.func @transform_7(%arg0: i32) -> (i32, i32) {
    %c0_i32 = arith.constant 0 : i32
    %c0_i32_0 = arith.constant 0 : i32
    %c0_i32_1 = arith.constant 0 : i32
    return %c0_i32, %c0_i32_0 : i32, i32
  }
  func.func @transform_8(%arg0: i32) -> (i32, i32) {
    %c0_i32 = arith.constant 0 : i32
    %c0_i32_0 = arith.constant 0 : i32
    %c0_i32_1 = arith.constant 0 : i32
    return %c0_i32, %c0_i32_0 : i32, i32
  }
  func.func @transform_9(%arg0: i32) -> (i32, i32) {
    %c0_i32 = arith.constant 0 : i32
    %c0_i32_0 = arith.constant 0 : i32
    %c0_i32_1 = arith.constant 0 : i32
    return %c0_i32, %c0_i32_0 : i32, i32
  }
  func.func @transform_10(%arg0: i32) -> (i32, i32) {
    %c0_i32 = arith.constant 0 : i32
    %c0_i32_0 = arith.constant 0 : i32
    %c0_i32_1 = arith.constant 0 : i32
    return %c0_i32, %c0_i32_0 : i32, i32
  }
  func.func @transform_11(%arg0: i32) -> (i32, i32) {
    %c0_i32 = arith.constant 0 : i32
    %c0_i32_0 = arith.constant 0 : i32
    %c0_i32_1 = arith.constant 0 : i32
    return %c0_i32, %c0_i32_0 : i32, i32
  }
  func.func @transform_12(%arg0: i32) -> (i32, i32) {
    %c0_i32 = arith.constant 0 : i32
    %c0_i32_0 = arith.constant 0 : i32
    return %arg0, %c0_i32 : i32, i32
  }
}

</mosaic_0001>

<llo_original>
// kernel: tpu_custom_call.1
$region0: #{tpu_custom_call.1}
  #allocation0 [shape = 'u32[]', space=smem, size = 0x4, offset = 0x4, fixed_abs, tag = 'smem constant byte address 0x4 - core index']
  #allocation1 [shape = 'u32[144,128]{1,0:T(1,128)}', space=vmem, size = 0x12000, scoped, tag = 'internal scratch']
  %s0 = inlined_call_operand.hbm [shape: f32[64,128], index: 0, kind: input, shape index: {}]
  %s1 = inlined_call_operand.vmem [shape: f32[1,128], index: 1, kind: input, shape index: {}]
  %s2 = inlined_call_operand.vmem [shape: f32[1,128], index: 2, kind: input, shape index: {}]
  %s3 = inlined_call_operand.hbm [shape: bf16[128,1536], index: 3, kind: input, shape index: {}]
  %s4 = inlined_call_operand.hbm [shape: bf16[512,128], index: 4, kind: input, shape index: {}]
  %s5 = inlined_call_operand.vmem [shape: f32[1,128], index: 5, kind: input, shape index: {}]
  %s6 = inlined_call_operand.vmem [shape: f32[1,128], index: 6, kind: input, shape index: {}]
  %s7 = inlined_call_operand.vmem [shape: f32[1,128], index: 7, kind: input, shape index: {}]
  %s8 = inlined_call_operand.hbm [shape: bf16[128,1024], index: 8, kind: input, shape index: {}]
  %s9 = inlined_call_operand.vmem [shape: f32[1,1024], index: 9, kind: input, shape index: {}]
  %s10 = inlined_call_operand.hbm [shape: bf16[1024,128], index: 10, kind: input, shape index: {}]
  %s11 = inlined_call_operand.vmem [shape: f32[1,128], index: 11, kind: input, shape index: {}]
  %s12 = inlined_call_operand.hbm [shape: f32[64,128], index: 12, kind: output, shape index: {}]
  %s13 = sld [smem:[#allocation0]]
  $region101: #{tpu_custom_call.1} parent=0
    _
  %s15 = ssub.s32 1, %s13
  %s16 = scalar_select 0, %s15, %s13
  $region1: #{tpu_custom_call.1} parent=0
    #allocation2 [shape = 'u8[32768]{0}', space=vmem, size = 0x8000, scoped, tag = 'input window, operand 0']
    #allocation3 [shape = 's32[2]{0}', space=sflag, size = 0x8, scoped, tag = 'scoped memory for tpu_custom_call.1']
    #allocation4 [shape = 's32[2]{0}', space=sflag, size = 0x8, scoped, tag = 'scoped memory for tpu_custom_call.1']
    #allocation5 [shape = 'u8[393216]{0}', space=vmem, size = 0x60000, scoped, tag = 'input window, operand 3, single buffered']
    #allocation6 [shape = 's32[1]{0}', space=sflag, size = 0x4, scoped, tag = 'scoped memory for tpu_custom_call.1']
    #allocation7 [shape = 'u8[131072]{0}', space=vmem, size = 0x20000, scoped, tag = 'input window, operand 4, single buffered']
    #allocation8 [shape = 'u8[262144]{0}', space=vmem, size = 0x40000, scoped, tag = 'input window, operand 8, single buffered']
    #allocation9 [shape = 's32[1]{0}', space=sflag, size = 0x4, scoped, tag = 'scoped memory for tpu_custom_call.1']
    #allocation10 [shape = 'u8[262144]{0}', space=vmem, size = 0x40000, scoped, tag = 'input window, operand 10, single buffered']
    #allocation11 [shape = 'u8[32768]{0}', space=vmem, size = 0x8000, scoped, tag = 'output window, operand 0']
    %17 = vsyncpa [#allocation3], 0
    %s18 = scalar_lea.sflag [#allocation3], 1
    %19 = vsyncpa %s18, 0
    %20 = vsyncpa [#allocation6], 0
    %21 = vsyncpa [#allocation9], 0
    %22 = vsyncpa [#allocation4], 0
    %s23 = scalar_lea.sflag [#allocation4], 1
    %24 = vsyncpa %s23, 0
    loop: start=0, step=1, limit=4
    $region2: #{tpu_custom_call.1} parent=1 // loop_pre_header
      _
    $region3: #{tpu_custom_call.1} parent=1 // loop_header
      %s26 = sphi 0, %s30
      %p27 = scmp.ge.s32.totalorder %s26, 4
      %s36 = sphi 0, %s38
      %s39 = sphi 0, %s36
      %s40 = sphi 0, %s39
      %s56 = sphi 0, %s40
      %s60 = sphi 0, %s60
      %s62 = sphi 0, %s60
      %s63 = sphi 0, %s62
      %s77 = sphi 0, %s63
      %s81 = sphi 0, %s81
      %s83 = sphi 0, %s81
      %s84 = sphi 0, %s83
      %s98 = sphi 0, %s84
      %s102 = sphi 0, %s102
      %s104 = sphi 0, %s102
      %s105 = sphi 0, %s104
      %s119 = sphi 0, %s105
      %s123 = sphi 0, %s123
      %s125 = sphi 0, %s123
      %s126 = sphi 0, %s125
      %s140 = sphi 0, %s126
      %s144 = sphi 0, %s144
      %s146 = sphi 0, %s144
      %s147 = sphi 0, %s146
      %s161 = sphi 0, %s147
      %s165 = sphi 0, %s165
      %s167 = sphi 0, %s165
      %s168 = sphi 0, %s167
      %s182 = sphi 0, %s168
      %s186 = sphi 0, %s186
      %s188 = sphi 0, %s186
      %s189 = sphi 0, %s188
      %s203 = sphi 0, %s189
      %s207 = sphi 0, %s207
      %s209 = sphi 0, %s207
      %s210 = sphi 0, %s209
      %s224 = sphi 0, %s210
      %s228 = sphi 0, %s228
      %s230 = sphi 0, %s228
      %s231 = sphi 0, %s230
      %s245 = sphi 0, %s231
      %s249 = sphi 0, %s249
      %s251 = sphi 0, %s249
      %s252 = sphi 0, %s251
      %s266 = sphi 0, %s252
      %s270 = sphi 0, %s270
      %s272 = sphi 0, %s270
      %s273 = sphi 0, %s272
      %s287 = sphi 0, %s273
      %s293 = sphi 0, %s295
      %s296 = sphi 0, %s293
      %s297 = sphi 0, %s296
      %s313 = sphi 0, %s297
    $region4: #{tpu_custom_call.1} parent=1 // loop_header_branch
      %29 = sbr.rel (%p27) target = $region8
    $region5: #{tpu_custom_call.1} parent=1 // loop_body
      %s31 = ssub.s32 %s26, 1
      %s32 = ssub.s32 %s26, 2
      %s33 = sadd.s32 %s26, 1
      %s34 = ssub.s32 %s26, %s33
      %p35 = scmp.eq.s32.totalorder %s34, 0
      %s37 = sadd.s32 %s36, 1
      %s38 = scalar_select %p35, %s36, %s37
      %p41 = pneg %p35
      %p42 = scmp.eq.s32.totalorder %s26, 1
      %p43 = por %p41, %p42
      %p44 = scmp.ne.s32.totalorder %s36, %s39
      %p45 = scmp.eq.s32.totalorder %s26, 0
      %p46 = por %p44, %p45
      %p47 = scmp.ne.s32.totalorder %s36, %s39
      %p48 = scmp.eq.s32.totalorder %s31, 1
      %p49 = por %p47, %p48
      %p50 = scmp.ne.s32.totalorder %s39, %s40
      %p51 = scmp.eq.s32.totalorder %s31, 0
      %p52 = por %p50, %p51
      %p53 = scmp.ne.s32.totalorder %s39, %s40
      %p54 = scmp.eq.s32.totalorder %s32, 1
      %p55 = por %p53, %p54
      %p57 = scmp.ne.s32.totalorder %s40, %s56
      %p58 = scmp.eq.s32.totalorder %s32, 0
      %p59 = por %p57, %p58
      %s61 = sadd.s32 %s60, 1
      %p64 = scmp.eq.s32.totalorder %s26, 1
      %p65 = scmp.ne.s32.totalorder %s60, %s62
      %p66 = scmp.eq.s32.totalorder %s26, 0
      %p67 = por %p65, %p66
      %p68 = scmp.ne.s32.totalorder %s60, %s62
      %p69 = scmp.eq.s32.totalorder %s31, 1
      %p70 = por %p68, %p69
      %p71 = scmp.ne.s32.totalorder %s62, %s63
      %p72 = scmp.eq.s32.totalorder %s31, 0
      %p73 = por %p71, %p72
      %p74 = scmp.ne.s32.totalorder %s62, %s63
      %p75 = scmp.eq.s32.totalorder %s32, 1
      %p76 = por %p74, %p75
      %p78 = scmp.ne.s32.totalorder %s63, %s77
      %p79 = scmp.eq.s32.totalorder %s32, 0
      %p80 = por %p78, %p79
      %s82 = sadd.s32 %s81, 1
      %p85 = scmp.eq.s32.totalorder %s26, 1
      %p86 = scmp.ne.s32.totalorder %s81, %s83
      %p87 = scmp.eq.s32.totalorder %s26, 0
      %p88 = por %p86, %p87
      %p89 = scmp.ne.s32.totalorder %s81, %s83
      %p90 = scmp.eq.s32.totalorder %s31, 1
      %p91 = por %p89, %p90
      %p92 = scmp.ne.s32.totalorder %s83, %s84
      %p93 = scmp.eq.s32.totalorder %s31, 0
      %p94 = por %p92, %p93
      %p95 = scmp.ne.s32.totalorder %s83, %s84
      %p96 = scmp.eq.s32.totalorder %s32, 1
      %p97 = por %p95, %p96
      %p99 = scmp.ne.s32.totalorder %s84, %s98
      %p100 = scmp.eq.s32.totalorder %s32, 0
      %p101 = por %p99, %p100
      %s103 = sadd.s32 %s102, 1
      %p106 = scmp.eq.s32.totalorder %s26, 1
      %p107 = scmp.ne.s32.totalorder %s102, %s104
      %p108 = scmp.eq.s32.totalorder %s26, 0
      %p109 = por %p107, %p108
      %p110 = scmp.ne.s32.totalorder %s102, %s104
      %p111 = scmp.eq.s32.totalorder %s31, 1
      %p112 = por %p110, %p111
      %p113 = scmp.ne.s32.totalorder %s104, %s105
      %p114 = scmp.eq.s32.totalorder %s31, 0
      %p115 = por %p113, %p114
      %p116 = scmp.ne.s32.totalorder %s104, %s105
      %p117 = scmp.eq.s32.totalorder %s32, 1
      %p118 = por %p116, %p117
      %p120 = scmp.ne.s32.totalorder %s105, %s119
      %p121 = scmp.eq.s32.totalorder %s32, 0
      %p122 = por %p120, %p121
      %s124 = sadd.s32 %s123, 1
      %p127 = scmp.eq.s32.totalorder %s26, 1
      %p128 = scmp.ne.s32.totalorder %s123, %s125
      %p129 = scmp.eq.s32.totalorder %s26, 0
      %p130 = por %p128, %p129
      %p131 = scmp.ne.s32.totalorder %s123, %s125
      %p132 = scmp.eq.s32.totalorder %s31, 1
      %p133 = por %p131, %p132
      %p134 = scmp.ne.s32.totalorder %s125, %s126
      %p135 = scmp.eq.s32.totalorder %s31, 0
      %p136 = por %p134, %p135
      %p137 = scmp.ne.s32.totalorder %s125, %s126
      %p138 = scmp.eq.s32.totalorder %s32, 1
      %p139 = por %p137, %p138
      %p141 = scmp.ne.s32.totalorder %s126, %s140
      %p142 = scmp.eq.s32.totalorder %s32, 0
      %p143 = por %p141, %p142
      %s145 = sadd.s32 %s144, 1
      %p148 = scmp.eq.s32.totalorder %s26, 1
      %p149 = scmp.ne.s32.totalorder %s144, %s146
      %p150 = scmp.eq.s32.totalorder %s26, 0
      %p151 = por %p149, %p150
      %p152 = scmp.ne.s32.totalorder %s144, %s146
      %p153 = scmp.eq.s32.totalorder %s31, 1
      %p154 = por %p152, %p153
      %p155 = scmp.ne.s32.totalorder %s146, %s147
      %p156 = scmp.eq.s32.totalorder %s31, 0
      %p157 = por %p155, %p156
      %p158 = scmp.ne.s32.totalorder %s146, %s147
      %p159 = scmp.eq.s32.totalorder %s32, 1
      %p160 = por %p158, %p159
      %p162 = scmp.ne.s32.totalorder %s147, %s161
      %p163 = scmp.eq.s32.totalorder %s32, 0
      %p164 = por %p162, %p163
      %s166 = sadd.s32 %s165, 1
      %p169 = scmp.eq.s32.totalorder %s26, 1
      %p170 = scmp.ne.s32.totalorder %s165, %s167
      %p171 = scmp.eq.s32.totalorder %s26, 0
      %p172 = por %p170, %p171
      %p173 = scmp.ne.s32.totalorder %s165, %s167
      %p174 = scmp.eq.s32.totalorder %s31, 1
      %p175 = por %p173, %p174
      %p176 = scmp.ne.s32.totalorder %s167, %s168
      %p177 = scmp.eq.s32.totalorder %s31, 0
      %p178 = por %p176, %p177
      %p179 = scmp.ne.s32.totalorder %s167, %s168
      %p180 = scmp.eq.s32.totalorder %s32, 1
      %p181 = por %p179, %p180
      %p183 = scmp.ne.s32.totalorder %s168, %s182
      %p184 = scmp.eq.s32.totalorder %s32, 0
      %p185 = por %p183, %p184
      %s187 = sadd.s32 %s186, 1
      %p190 = scmp.eq.s32.totalorder %s26, 1
      %p191 = scmp.ne.s32.totalorder %s186, %s188
      %p192 = scmp.eq.s32.totalorder %s26, 0
      %p193 = por %p191, %p192
      %p194 = scmp.ne.s32.totalorder %s186, %s188
      %p195 = scmp.eq.s32.totalorder %s31, 1
      %p196 = por %p194, %p195
      %p197 = scmp.ne.s32.totalorder %s188, %s189
      %p198 = scmp.eq.s32.totalorder %s31, 0
      %p199 = por %p197, %p198
      %p200 = scmp.ne.s32.totalorder %s188, %s189
      %p201 = scmp.eq.s32.totalorder %s32, 1
      %p202 = por %p200, %p201
      %p204 = scmp.ne.s32.totalorder %s189, %s203
      %p205 = scmp.eq.s32.totalorder %s32, 0
      %p206 = por %p204, %p205
      %s208 = sadd.s32 %s207, 1
      %p211 = scmp.eq.s32.totalorder %s26, 1
      %p212 = scmp.ne.s32.totalorder %s207, %s209
      %p213 = scmp.eq.s32.totalorder %s26, 0
      %p214 = por %p212, %p213
      %p215 = scmp.ne.s32.totalorder %s207, %s209
      %p216 = scmp.eq.s32.totalorder %s31, 1
      %p217 = por %p215, %p216
      %p218 = scmp.ne.s32.totalorder %s209, %s210
      %p219 = scmp.eq.s32.totalorder %s31, 0
      %p220 = por %p218, %p219
      %p221 = scmp.ne.s32.totalorder %s209, %s210
      %p222 = scmp.eq.s32.totalorder %s32, 1
      %p223 = por %p221, %p222
      %p225 = scmp.ne.s32.totalorder %s210, %s224
      %p226 = scmp.eq.s32.totalorder %s32, 0
      %p227 = por %p225, %p226
      %s229 = sadd.s32 %s228, 1
      %p232 = scmp.eq.s32.totalorder %s26, 1
      %p233 = scmp.ne.s32.totalorder %s228, %s230
      %p234 = scmp.eq.s32.totalorder %s26, 0
      %p235 = por %p233, %p234
      %p236 = scmp.ne.s32.totalorder %s228, %s230
      %p237 = scmp.eq.s32.totalorder %s31, 1
      %p238 = por %p236, %p237
      %p239 = scmp.ne.s32.totalorder %s230, %s231
      %p240 = scmp.eq.s32.totalorder %s31, 0
      %p241 = por %p239, %p240
      %p242 = scmp.ne.s32.totalorder %s230, %s231
      %p243 = scmp.eq.s32.totalorder %s32, 1
      %p244 = por %p242, %p243
      %p246 = scmp.ne.s32.totalorder %s231, %s245
      %p247 = scmp.eq.s32.totalorder %s32, 0
      %p248 = por %p246, %p247
      %s250 = sadd.s32 %s249, 1
      %p253 = scmp.eq.s32.totalorder %s26, 1
      %p254 = scmp.ne.s32.totalorder %s249, %s251
      %p255 = scmp.eq.s32.totalorder %s26, 0
      %p256 = por %p254, %p255
      %p257 = scmp.ne.s32.totalorder %s249, %s251
      %p258 = scmp.eq.s32.totalorder %s31, 1
      %p259 = por %p257, %p258
      %p260 = scmp.ne.s32.totalorder %s251, %s252
      %p261 = scmp.eq.s32.totalorder %s31, 0
      %p262 = por %p260, %p261
      %p263 = scmp.ne.s32.totalorder %s251, %s252
      %p264 = scmp.eq.s32.totalorder %s32, 1
      %p265 = por %p263, %p264
      %p267 = scmp.ne.s32.totalorder %s252, %s266
      %p268 = scmp.eq.s32.totalorder %s32, 0
      %p269 = por %p267, %p268
      %s271 = sadd.s32 %s270, 1
      %p274 = scmp.eq.s32.totalorder %s26, 1
      %p275 = scmp.ne.s32.totalorder %s270, %s272
      %p276 = scmp.eq.s32.totalorder %s26, 0
      %p277 = por %p275, %p276
      %p278 = scmp.ne.s32.totalorder %s270, %s272
      %p279 = scmp.eq.s32.totalorder %s31, 1
      %p280 = por %p278, %p279
      %p281 = scmp.ne.s32.totalorder %s272, %s273
      %p282 = scmp.eq.s32.totalorder %s31, 0
      %p283 = por %p281, %p282
      %p284 = scmp.ne.s32.totalorder %s272, %s273
      %p285 = scmp.eq.s32.totalorder %s32, 1
      %p286 = por %p284, %p285
      %p288 = scmp.ne.s32.totalorder %s273, %s287
      %p289 = scmp.eq.s32.totalorder %s32, 0
      %p290 = por %p288, %p289
      %s291 = ssub.s32 %s26, %s33
      %p292 = scmp.eq.s32.totalorder %s291, 0
      %s294 = sadd.s32 %s293, 1
      %s295 = scalar_select %p292, %s293, %s294
      %p298 = pneg %p292
      %p299 = scmp.eq.s32.totalorder %s26, 1
      %p300 = por %p298, %p299
      %p301 = scmp.ne.s32.totalorder %s293, %s296
      %p302 = scmp.eq.s32.totalorder %s26, 0
      %p303 = por %p301, %p302
      %p304 = scmp.ne.s32.totalorder %s293, %s296
      %p305 = scmp.eq.s32.totalorder %s31, 1
      %p306 = por %p304, %p305
      %p307 = scmp.ne.s32.totalorder %s296, %s297
      %p308 = scmp.eq.s32.totalorder %s31, 0
      %p309 = por %p307, %p308
      %p310 = scmp.ne.s32.totalorder %s296, %s297
      %p311 = scmp.eq.s32.totalorder %s32, 1
      %p312 = por %p310, %p311
      %p314 = scmp.ne.s32.totalorder %s297, %s313
      %p315 = scmp.eq.s32.totalorder %s32, 0
      %p316 = por %p314, %p315
      %p317 = scmp.le.s32.totalorder 1, %s26
      %p318 = scmp.lt.s32.totalorder %s26, 3
      %p319 = pnand %p317, %p318
      %p320 = pneg %p319
      // Predicated region
      $region9: #{tpu_custom_call.1} parent=5 // pred_check
        _
      $region10: #{tpu_custom_call.1} parent=5 // pred_check_branch
        %322 = sbr.rel (%p319) target = $region12
      $region11: #{tpu_custom_call.1} parent=5 // pred_region
        %s323 = ssub.s32 %s26, 1
        // Predicated region
        $region13: #{tpu_custom_call.1} parent=11 // pred_check
          %p324 = pneg %p73
        $region14: #{tpu_custom_call.1} parent=11 // pred_check_branch
          %326 = sbr.rel (%p324) target = $region16
        $region15: #{tpu_custom_call.1} parent=11 // pred_region
          _
        $region16: #{tpu_custom_call.1} parent=11 // pred_fallthru
          _
        // Predicated region
        $region17: #{tpu_custom_call.1} parent=11 // pred_check
          %p327 = pneg %p94
        $region18: #{tpu_custom_call.1} parent=11 // pred_check_branch
          %329 = sbr.rel (%p327) target = $region20
        $region19: #{tpu_custom_call.1} parent=11 // pred_region
          _
        $region20: #{tpu_custom_call.1} parent=11 // pred_fallthru
          _
        // Predicated region
        $region21: #{tpu_custom_call.1} parent=11 // pred_check
          %p330 = pneg %p115
        $region22: #{tpu_custom_call.1} parent=11 // pred_check_branch
          %332 = sbr.rel (%p330) target = $region24
        $region23: #{tpu_custom_call.1} parent=11 // pred_region
          %s334 = ssub.s32 12288, 12288
          %335 = vsyncadd [#allocation6], %s334
          %s336 = sshll.u32 [#allocation5], 4
          %s337 = int_to_ptr.vmem [resolvable:$true] %s336
          %342 = dma.hbm_to_vmem [thread:$0]  %s3, 12288, %s337, [#allocation6], 768, 768, 48
        $region24: #{tpu_custom_call.1} parent=11 // pred_fallthru
          _
        // Predicated region
        $region25: #{tpu_custom_call.1} parent=11 // pred_check
          %p343 = pneg %p136
        $region26: #{tpu_custom_call.1} parent=11 // pred_check_branch
          %345 = sbr.rel (%p343) target = $region28
        $region27: #{tpu_custom_call.1} parent=11 // pred_region
          %s347 = ssub.s32 4096, 4096
          %348 = vsyncadd [#allocation6], %s347
          %s349 = sshll.u32 [#allocation7], 4
          %s350 = int_to_ptr.vmem [resolvable:$true] %s349
          %355 = dma.hbm_to_vmem [thread:$0]  %s4, 4096, %s350, [#allocation6], 64, 64, 4
        $region28: #{tpu_custom_call.1} parent=11 // pred_fallthru
          _
        // Predicated region
        $region29: #{tpu_custom_call.1} parent=11 // pred_check
          %p356 = pneg %p157
        $region30: #{tpu_custom_call.1} parent=11 // pred_check_branch
          %358 = sbr.rel (%p356) target = $region32
        $region31: #{tpu_custom_call.1} parent=11 // pred_region
          _
        $region32: #{tpu_custom_call.1} parent=11 // pred_fallthru
          _
        // Predicated region
        $region33: #{tpu_custom_call.1} parent=11 // pred_check
          %p359 = pneg %p178
        $region34: #{tpu_custom_call.1} parent=11 // pred_check_branch
          %361 = sbr.rel (%p359) target = $region36
        $region35: #{tpu_custom_call.1} parent=11 // pred_region
          _
        $region36: #{tpu_custom_call.1} parent=11 // pred_fallthru
          _
        // Predicated region
        $region37: #{tpu_custom_call.1} parent=11 // pred_check
          %p362 = pneg %p199
        $region38: #{tpu_custom_call.1} parent=11 // pred_check_branch
          %364 = sbr.rel (%p362) target = $region40
        $region39: #{tpu_custom_call.1} parent=11 // pred_region
          _
        $region40: #{tpu_custom_call.1} parent=11 // pred_fallthru
          _
        // Predicated region
        $region41: #{tpu_custom_call.1} parent=11 // pred_check
          %p365 = pneg %p220
        $region42: #{tpu_custom_call.1} parent=11 // pred_check_branch
          %367 = sbr.rel (%p365) target = $region44
        $region43: #{tpu_custom_call.1} parent=11 // pred_region
          %s369 = ssub.s32 8192, 8192
          %370 = vsyncadd [#allocation9], %s369
          %s371 = sshll.u32 [#allocation8], 4
          %s372 = int_to_ptr.vmem [resolvable:$true] %s371
          %377 = dma.hbm_to_vmem [thread:$0]  %s8, 8192, %s372, [#allocation9], 512, 512, 32
        $region44: #{tpu_custom_call.1} parent=11 // pred_fallthru
          _
        // Predicated region
        $region45: #{tpu_custom_call.1} parent=11 // pred_check
          %p378 = pneg %p241
        $region46: #{tpu_custom_call.1} parent=11 // pred_check_branch
          %380 = sbr.rel (%p378) target = $region48
        $region47: #{tpu_custom_call.1} parent=11 // pred_region
          _
        $region48: #{tpu_custom_call.1} parent=11 // pred_fallthru
          _
        // Predicated region
        $region49: #{tpu_custom_call.1} parent=11 // pred_check
          %p381 = pneg %p262
        $region50: #{tpu_custom_call.1} parent=11 // pred_check_branch
          %383 = sbr.rel (%p381) target = $region52
        $region51: #{tpu_custom_call.1} parent=11 // pred_region
          %s385 = ssub.s32 8192, 8192
          %386 = vsyncadd [#allocation9], %s385
          %s387 = sshll.u32 [#allocation10], 4
          %s388 = int_to_ptr.vmem [resolvable:$true] %s387
          %393 = dma.hbm_to_vmem [thread:$0]  %s10, 8192, %s388, [#allocation9], 64, 64, 4
        $region52: #{tpu_custom_call.1} parent=11 // pred_fallthru
          _
        // Predicated region
        $region53: #{tpu_custom_call.1} parent=11 // pred_check
          %p394 = pneg %p283
        $region54: #{tpu_custom_call.1} parent=11 // pred_check_branch
          %396 = sbr.rel (%p394) target = $region56
        $region55: #{tpu_custom_call.1} parent=11 // pred_region
          _
        $region56: #{tpu_custom_call.1} parent=11 // pred_fallthru
          _
      $region12: #{tpu_custom_call.1} parent=5 // pred_fallthru
        _
      %p397 = scmp.lt.s32.totalorder %s26, 2
      // Predicated region
      $region57: #{tpu_custom_call.1} parent=5 // pred_check
        %p398 = pneg %p397
      $region58: #{tpu_custom_call.1} parent=5 // pred_check_branch
        %400 = sbr.rel (%p398) target = $region60
      $region59: #{tpu_custom_call.1} parent=5 // pred_region
        // Predicated region
        $region61: #{tpu_custom_call.1} parent=59 // pred_check
          %p401 = pneg %p46
        $region62: #{tpu_custom_call.1} parent=59 // pred_check_branch
          %403 = sbr.rel (%p401) target = $region64
        $region63: #{tpu_custom_call.1} parent=59 // pred_region
          %s404 = sand.u32 %s36, 1
          %s405 = scalar_lea.sflag [#allocation3], %s404
          %s406 = sand.u32 %s36, 1
          %s407 = smul.addr %s406, 32
          %s408 = scalar_lea.vmem [#allocation2], %s407
          %s409 = smul.u32 4, %s26
          %s411 = ssub.s32 512, 512
          %412 = vsyncadd %s405, %s411
          %s413 = smul.addr %s409, 128
          %s414 = scalar_lea.hbm %s0, %s413
          %s415 = sshll.u32 %s408, 4
          %s416 = int_to_ptr.vmem [resolvable:$true] %s415
          %421 = dma.hbm_to_vmem [thread:$0]  %s414, 512, %s416, %s405, 128, 128, 8
        $region64: #{tpu_custom_call.1} parent=59 // pred_fallthru
          _
      $region60: #{tpu_custom_call.1} parent=5 // pred_fallthru
        _
      %p422 = scmp.le.s32.totalorder 1, %s26
      %p423 = scmp.lt.s32.totalorder %s26, 3
      %p424 = pnand %p422, %p423
      %p425 = pneg %p424
      // Predicated region
      $region65: #{tpu_custom_call.1} parent=5 // pred_check
        _
      $region66: #{tpu_custom_call.1} parent=5 // pred_check_branch
        %427 = sbr.rel (%p424) target = $region68
      $region67: #{tpu_custom_call.1} parent=5 // pred_region
        %s428 = ssub.s32 %s26, 1
        %s429 = sand.u32 %s39, 1
        %s430 = scalar_lea.sflag [#allocation3], %s429
        %s431 = sand.u32 %s39, 1
        %s432 = smul.addr %s431, 32
        %s433 = scalar_lea.vmem [#allocation2], %s432
        // Predicated region
        $region69: #{tpu_custom_call.1} parent=67 // pred_check
          %p434 = pneg %p52
        $region70: #{tpu_custom_call.1} parent=67 // pred_check_branch
          %436 = sbr.rel (%p434) target = $region72
        $region71: #{tpu_custom_call.1} parent=67 // pred_region
          %437 = dma.done %s430, 512
        $region72: #{tpu_custom_call.1} parent=67 // pred_fallthru
          _
        // Predicated region
        $region73: #{tpu_custom_call.1} parent=67 // pred_check
          %p438 = pneg %p115
        $region74: #{tpu_custom_call.1} parent=67 // pred_check_branch
          %440 = sbr.rel (%p438) target = $region76
        $region75: #{tpu_custom_call.1} parent=67 // pred_region
          %441 = dma.done [#allocation6], 12288
        $region76: #{tpu_custom_call.1} parent=67 // pred_fallthru
          _
        // Predicated region
        $region77: #{tpu_custom_call.1} parent=67 // pred_check
          %p442 = pneg %p136
        $region78: #{tpu_custom_call.1} parent=67 // pred_check_branch
          %444 = sbr.rel (%p442) target = $region80
        $region79: #{tpu_custom_call.1} parent=67 // pred_region
          %445 = dma.done [#allocation6], 4096
        $region80: #{tpu_custom_call.1} parent=67 // pred_fallthru
          _
        // Predicated region
        $region81: #{tpu_custom_call.1} parent=67 // pred_check
          %p446 = pneg %p220
        $region82: #{tpu_custom_call.1} parent=67 // pred_check_branch
          %448 = sbr.rel (%p446) target = $region84
        $region83: #{tpu_custom_call.1} parent=67 // pred_region
          %449 = dma.done [#allocation9], 8192
        $region84: #{tpu_custom_call.1} parent=67 // pred_fallthru
          _
        // Predicated region
        $region85: #{tpu_custom_call.1} parent=67 // pred_check
          %p450 = pneg %p262
        $region86: #{tpu_custom_call.1} parent=67 // pred_check_branch
          %452 = sbr.rel (%p450) target = $region88
        $region87: #{tpu_custom_call.1} parent=67 // pred_region
          %453 = dma.done [#allocation9], 8192
        $region88: #{tpu_custom_call.1} parent=67 // pred_fallthru
          _
        %s454 = sand.u32 %s39, 1
        %s455 = scalar_lea.sflag [#allocation3], %s454
        %s456 = sand.u32 %s39, 1
        %s457 = smul.addr %s456, 32
        %s458 = scalar_lea.vmem [#allocation2], %s457
        %p459 = pneg %p52
        %p460 = pneg %p49
        %p461 = pneg %p73
        %p462 = pneg %p70
        %p463 = pneg %p94
        %p464 = pneg %p91
        %p465 = pneg %p115
        %p466 = pneg %p112
        %p467 = pneg %p136
        %p468 = pneg %p133
        %p469 = pneg %p157
        %p470 = pneg %p154
        %p471 = pneg %p178
        %p472 = pneg %p175
        %p473 = pneg %p199
        %p474 = pneg %p196
        %p475 = pneg %p220
        %p476 = pneg %p217
        %p477 = pneg %p241
        %p478 = pneg %p238
        %p479 = pneg %p262
        %p480 = pneg %p259
        %p481 = pneg %p283
        %p482 = pneg %p280
        %p483 = pneg %p309
        %p484 = pneg %p306
        %s485 = sand.u32 %s296, 1
        %s486 = scalar_lea.sflag [#allocation4], %s485
        %s487 = sand.u32 %s296, 1
        %s488 = smul.addr %s487, 32
        %s489 = scalar_lea.vmem [#allocation11], %s488
        %s490 = smul.u32 4, %s31
        %s491 = smul.u32 4, %s31
        %v493 = vld [vmem:[%s433] sm:$0xff]
        %v494 = vld [vmem:[%s433 + $0x8] sm:$0xff]
        %v495 = vld [vmem:[%s433 + $0x10] sm:$0xff]
        %v496 = vld [vmem:[%s433 + $0x18] sm:$0xff]
        %v497 = vld [vmem:[%s1] sm:$0x1]
        %v498 = vld [vmem:[%s2] sm:$0x1]
        %499 = vadd.xlane.f32.xlu0 %v493
        %v500 = vpop.xlane.xlu0 %499
        %501 = vadd.xlane.f32.xlu0 %v494
        %v502 = vpop.xlane.xlu0 %501
        %503 = vadd.xlane.f32.xlu0 %v495
        %v504 = vpop.xlane.xlu0 %503
        %505 = vadd.xlane.f32.xlu0 %v496
        %v506 = vpop.xlane.xlu0 %505
        %v507 = vrcp.pop 128.0
        %v508 = vmul.f32 %v500, %v507
        %v509 = vmul.f32 %v502, %v507
        %v510 = vmul.f32 %v504, %v507
        %v511 = vmul.f32 %v506, %v507
        %v512 = vsub.f32 %v493, %v508
        %v513 = vsub.f32 %v494, %v509
        %v514 = vsub.f32 %v495, %v510
        %v515 = vsub.f32 %v496, %v511
        %v516 = vmul.f32 %v512, %v512
        %v517 = vmul.f32 %v513, %v513
        %v518 = vmul.f32 %v514, %v514
        %v519 = vmul.f32 %v515, %v515
        %520 = vadd.xlane.f32.xlu0 %v516
        %v521 = vpop.xlane.xlu0 %520
        %522 = vadd.xlane.f32.xlu0 %v517
        %v523 = vpop.xlane.xlu0 %522
        %524 = vadd.xlane.f32.xlu0 %v518
        %v525 = vpop.xlane.xlu0 %524
        %526 = vadd.xlane.f32.xlu0 %v519
        %v527 = vpop.xlane.xlu0 %526
        %v528 = vmul.f32 %v521, %v507
        %v529 = vmul.f32 %v523, %v507
        %v530 = vmul.f32 %v525, %v507
        %v531 = vmul.f32 %v527, %v507
        %v532 = vadd.f32 %v528, 1e-05
        %v533 = vadd.f32 %v529, 1e-05
        %v534 = vadd.f32 %v530, 1e-05
        %v535 = vadd.f32 %v531, 1e-05
        %v536 = vrsqrt.pop %v532
        %v537 = vrsqrt.pop %v533
        %v538 = vrsqrt.pop %v534
        %v539 = vrsqrt.pop %v535
        %v540 = vmul.f32 %v512, %v536
        %v541 = vmul.f32 %v513, %v537
        %v542 = vmul.f32 %v514, %v538
        %v543 = vmul.f32 %v515, %v539
        %v545 = vlaneseq
        %v546 = vshrl.u32 %v545, 7
        %v547 = vsub.s32 0, %v546
        %v548 = vrot.slane %v497, %v547
        %v550 = vmul.f32 %v540, %v548
        %v551 = vmul.f32 %v541, %v548
        %v552 = vmul.f32 %v542, %v548
        %v553 = vmul.f32 %v543, %v548
        %v555 = vlaneseq
        %v556 = vshrl.u32 %v555, 7
        %v557 = vsub.s32 0, %v556
        %v558 = vrot.slane %v498, %v557
        %v560 = vadd.f32 %v550, %v558
        %v561 = vadd.f32 %v551, %v558
        %v562 = vadd.f32 %v552, %v558
        %v563 = vadd.f32 %v553, %v558
        %v564 = vpack.c.bf16 %v561, %v560
        %v565 = vpack.c.bf16 %v563, %v562
        %v566 = vld [vmem:[#allocation5] sm:$0xff]
        %v567 = vld [vmem:[#allocation5 + $0x8] sm:$0xff]
        %v568 = vld [vmem:[#allocation5 + $0x10] sm:$0xff]
        %v569 = vld [vmem:[#allocation5 + $0x18] sm:$0xff]
        %v570 = vld [vmem:[#allocation5 + $0x20] sm:$0xff]
        %v571 = vld [vmem:[#allocation5 + $0x28] sm:$0xff]
        %v572 = vld [vmem:[#allocation5 + $0x30] sm:$0xff]
        %v573 = vld [vmem:[#allocation5 + $0x38] sm:$0xff]
        %v574 = vld [vmem:[#allocation5 + $0x40] sm:$0xff]
        %v575 = vld [vmem:[#allocation5 + $0x48] sm:$0xff]
        %v576 = vld [vmem:[#allocation5 + $0x50] sm:$0xff]
        %v577 = vld [vmem:[#allocation5 + $0x58] sm:$0xff]
        %v578 = vld [vmem:[#allocation5 + $0x60] sm:$0xff]
        %v579 = vld [vmem:[#allocation5 + $0x68] sm:$0xff]
        %v580 = vld [vmem:[#allocation5 + $0x70] sm:$0xff]
        %v581 = vld [vmem:[#allocation5 + $0x78] sm:$0xff]
        %v582 = vld [vmem:[#allocation5 + $0x80] sm:$0xff]
        %v583 = vld [vmem:[#allocation5 + $0x88] sm:$0xff]
        %v584 = vld [vmem:[#allocation5 + $0x90] sm:$0xff]
        %v585 = vld [vmem:[#allocation5 + $0x98] sm:$0xff]
        %v586 = vld [vmem:[#allocation5 + $0xa0] sm:$0xff]
        %v587 = vld [vmem:[#allocation5 + $0xa8] sm:$0xff]
        %v588 = vld [vmem:[#allocation5 + $0xb0] sm:$0xff]
        %v589 = vld [vmem:[#allocation5 + $0xb8] sm:$0xff]
        %v590 = vld [vmem:[#allocation5 + $0xc0] sm:$0xff]
        %v591 = vld [vmem:[#allocation5 + $0xc8] sm:$0xff]
        %v592 = vld [vmem:[#allocation5 + $0xd0] sm:$0xff]
        %v593 = vld [vmem:[#allocation5 + $0xd8] sm:$0xff]
        %v594 = vld [vmem:[#allocation5 + $0xe0] sm:$0xff]
        %v595 = vld [vmem:[#allocation5 + $0xe8] sm:$0xff]
        %v596 = vld [vmem:[#allocation5 + $0xf0] sm:$0xff]
        %v597 = vld [vmem:[#allocation5 + $0xf8] sm:$0xff]
        %v598 = vld [vmem:[#allocation5 + $0x100] sm:$0xff]
        %v599 = vld [vmem:[#allocation5 + $0x108] sm:$0xff]
        %v600 = vld [vmem:[#allocation5 + $0x110] sm:$0xff]
        %v601 = vld [vmem:[#allocation5 + $0x118] sm:$0xff]
        %v602 = vld [vmem:[#allocation5 + $0x120] sm:$0xff]
        %v603 = vld [vmem:[#allocation5 + $0x128] sm:$0xff]
        %v604 = vld [vmem:[#allocation5 + $0x130] sm:$0xff]
        %v605 = vld [vmem:[#allocation5 + $0x138] sm:$0xff]
        %v606 = vld [vmem:[#allocation5 + $0x140] sm:$0xff]
        %v607 = vld [vmem:[#allocation5 + $0x148] sm:$0xff]
        %v608 = vld [vmem:[#allocation5 + $0x150] sm:$0xff]
        %v609 = vld [vmem:[#allocation5 + $0x158] sm:$0xff]
        %v610 = vld [vmem:[#allocation5 + $0x160] sm:$0xff]
        %v611 = vld [vmem:[#allocation5 + $0x168] sm:$0xff]
        %v612 = vld [vmem:[#allocation5 + $0x170] sm:$0xff]
        %v613 = vld [vmem:[#allocation5 + $0x178] sm:$0xff]
        %v614 = vld [vmem:[#allocation5 + $0x180] sm:$0xff]
        %v615 = vld [vmem:[#allocation5 + $0x188] sm:$0xff]
        %v616 = vld [vmem:[#allocation5 + $0x190] sm:$0xff]
        %v617 = vld [vmem:[#allocation5 + $0x198] sm:$0xff]
        %v618 = vld [vmem:[#allocation5 + $0x1a0] sm:$0xff]
        %v619 = vld [vmem:[#allocation5 + $0x1a8] sm:$0xff]
        %v620 = vld [vmem:[#allocation5 + $0x1b0] sm:$0xff]
        %v621 = vld [vmem:[#allocation5 + $0x1b8] sm:$0xff]
        %v622 = vld [vmem:[#allocation5 + $0x1c0] sm:$0xff]
        %v623 = vld [vmem:[#allocation5 + $0x1c8] sm:$0xff]
        %v624 = vld [vmem:[#allocation5 + $0x1d0] sm:$0xff]
        %v625 = vld [vmem:[#allocation5 + $0x1d8] sm:$0xff]
        %v626 = vld [vmem:[#allocation5 + $0x1e0] sm:$0xff]
        %v627 = vld [vmem:[#allocation5 + $0x1e8] sm:$0xff]
        %v628 = vld [vmem:[#allocation5 + $0x1f0] sm:$0xff]
        %v629 = vld [vmem:[#allocation5 + $0x1f8] sm:$0xff]
        %v630 = vld [vmem:[#allocation5 + $0x200] sm:$0xff]
        %v631 = vld [vmem:[#allocation5 + $0x208] sm:$0xff]
        %v632 = vld [vmem:[#allocation5 + $0x210] sm:$0xff]
        %v633 = vld [vmem:[#allocation5 + $0x218] sm:$0xff]
        %v634 = vld [vmem:[#allocation5 + $0x220] sm:$0xff]
        %v635 = vld [vmem:[#allocation5 + $0x228] sm:$0xff]
        %v636 = vld [vmem:[#allocation5 + $0x230] sm:$0xff]
        %v637 = vld [vmem:[#allocation5 + $0x238] sm:$0xff]
        %v638 = vld [vmem:[#allocation5 + $0x240] sm:$0xff]
        %v639 = vld [vmem:[#allocation5 + $0x248] sm:$0xff]
        %v640 = vld [vmem:[#allocation5 + $0x250] sm:$0xff]
        %v641 = vld [vmem:[#allocation5 + $0x258] sm:$0xff]
        %v642 = vld [vmem:[#allocation5 + $0x260] sm:$0xff]
        %v643 = vld [vmem:[#allocation5 + $0x268] sm:$0xff]
        %v644 = vld [vmem:[#allocation5 + $0x270] sm:$0xff]
        %v645 = vld [vmem:[#allocation5 + $0x278] sm:$0xff]
        %v646 = vld [vmem:[#allocation5 + $0x280] sm:$0xff]
        %v647 = vld [vmem:[#allocation5 + $0x288] sm:$0xff]
        %v648 = vld [vmem:[#allocation5 + $0x290] sm:$0xff]
        %v649 = vld [vmem:[#allocation5 + $0x298] sm:$0xff]
        %v650 = vld [vmem:[#allocation5 + $0x2a0] sm:$0xff]
        %v651 = vld [vmem:[#allocation5 + $0x2a8] sm:$0xff]
        %v652 = vld [vmem:[#allocation5 + $0x2b0] sm:$0xff]
        %v653 = vld [vmem:[#allocation5 + $0x2b8] sm:$0xff]
        %v654 = vld [vmem:[#allocation5 + $0x2c0] sm:$0xff]
        %v655 = vld [vmem:[#allocation5 + $0x2c8] sm:$0xff]
        %v656 = vld [vmem:[#allocation5 + $0x2d0] sm:$0xff]
        %v657 = vld [vmem:[#allocation5 + $0x2d8] sm:$0xff]
        %v658 = vld [vmem:[#allocation5 + $0x2e0] sm:$0xff]
        %v659 = vld [vmem:[#allocation5 + $0x2e8] sm:$0xff]
        %v660 = vld [vmem:[#allocation5 + $0x2f0] sm:$0xff]
        %v661 = vld [vmem:[#allocation5 + $0x2f8] sm:$0xff]
        %v758 = vunpack.c.l.b16 %v566
        %v759 = vunpack.c.h.b16 %v566
        %v760 = vunpack.c.l.b16 %v567
        %v761 = vunpack.c.h.b16 %v567
        %v762 = vunpack.c.l.b16 %v568
        %v763 = vunpack.c.h.b16 %v568
        %v764 = vunpack.c.l.b16 %v569
        %v765 = vunpack.c.h.b16 %v569
        %v766 = vunpack.c.l.b16 %v570
        %v767 = vunpack.c.h.b16 %v570
        %v768 = vunpack.c.l.b16 %v571
        %v769 = vunpack.c.h.b16 %v571
        %v770 = vunpack.c.l.b16 %v572
        %v771 = vunpack.c.h.b16 %v572
        %v772 = vunpack.c.l.b16 %v573
        %v773 = vunpack.c.h.b16 %v573
        %v774 = vunpack.c.l.b16 %v574
        %v775 = vunpack.c.h.b16 %v574
        %v776 = vunpack.c.l.b16 %v575
        %v777 = vunpack.c.h.b16 %v575
        %v778 = vunpack.c.l.b16 %v576
        %v779 = vunpack.c.h.b16 %v576
        %v780 = vunpack.c.l.b16 %v577
        %v781 = vunpack.c.h.b16 %v577
        %v782 = vunpack.c.l.b16 %v578
        %v783 = vunpack.c.h.b16 %v578
        %v784 = vunpack.c.l.b16 %v579
        %v785 = vunpack.c.h.b16 %v579
        %v786 = vunpack.c.l.b16 %v580
        %v787 = vunpack.c.h.b16 %v580
        %v788 = vunpack.c.l.b16 %v581
        %v789 = vunpack.c.h.b16 %v581
        %v790 = vunpack.c.l.b16 %v582
        %v791 = vunpack.c.h.b16 %v582
        %v792 = vunpack.c.l.b16 %v583
        %v793 = vunpack.c.h.b16 %v583
        %v794 = vunpack.c.l.b16 %v584
        %v795 = vunpack.c.h.b16 %v584
        %v796 = vunpack.c.l.b16 %v585
        %v797 = vunpack.c.h.b16 %v585
        %v798 = vunpack.c.l.b16 %v586
        %v799 = vunpack.c.h.b16 %v586
        %v800 = vunpack.c.l.b16 %v587
        %v801 = vunpack.c.h.b16 %v587
        %v802 = vunpack.c.l.b16 %v588
        %v803 = vunpack.c.h.b16 %v588
        %v804 = vunpack.c.l.b16 %v589
        %v805 = vunpack.c.h.b16 %v589
        %v806 = vunpack.c.l.b16 %v590
        %v807 = vunpack.c.h.b16 %v590
        %v808 = vunpack.c.l.b16 %v591
        %v809 = vunpack.c.h.b16 %v591
        %v810 = vunpack.c.l.b16 %v592
        %v811 = vunpack.c.h.b16 %v592
        %v812 = vunpack.c.l.b16 %v593
        %v813 = vunpack.c.h.b16 %v593
        %v814 = vunpack.c.l.b16 %v594
        %v815 = vunpack.c.h.b16 %v594
        %v816 = vunpack.c.l.b16 %v595
        %v817 = vunpack.c.h.b16 %v595
        %v818 = vunpack.c.l.b16 %v596
        %v819 = vunpack.c.h.b16 %v596
        %v820 = vunpack.c.l.b16 %v597
        %v821 = vunpack.c.h.b16 %v597
        %v822 = vunpack.c.l.b16 %v598
        %v823 = vunpack.c.h.b16 %v598
        %v824 = vunpack.c.l.b16 %v599
        %v825 = vunpack.c.h.b16 %v599
        %v826 = vunpack.c.l.b16 %v600
        %v827 = vunpack.c.h.b16 %v600
        %v828 = vunpack.c.l.b16 %v601
        %v829 = vunpack.c.h.b16 %v601
        %v830 = vunpack.c.l.b16 %v602
        %v831 = vunpack.c.h.b16 %v602
        %v832 = vunpack.c.l.b16 %v603
        %v833 = vunpack.c.h.b16 %v603
        %v834 = vunpack.c.l.b16 %v604
        %v835 = vunpack.c.h.b16 %v604
        %v836 = vunpack.c.l.b16 %v605
        %v837 = vunpack.c.h.b16 %v605
        %v838 = vunpack.c.l.b16 %v606
        %v839 = vunpack.c.h.b16 %v606
        %v840 = vunpack.c.l.b16 %v607
        %v841 = vunpack.c.h.b16 %v607
        %v842 = vunpack.c.l.b16 %v608
        %v843 = vunpack.c.h.b16 %v608
        %v844 = vunpack.c.l.b16 %v609
        %v845 = vunpack.c.h.b16 %v609
        %v846 = vunpack.c.l.b16 %v610
        %v847 = vunpack.c.h.b16 %v610
        %v848 = vunpack.c.l.b16 %v611
        %v849 = vunpack.c.h.b16 %v611
        %v850 = vunpack.c.l.b16 %v612
        %v851 = vunpack.c.h.b16 %v612
        %v852 = vunpack.c.l.b16 %v613
        %v853 = vunpack.c.h.b16 %v613
        %v854 = vunpack.c.l.b16 %v614
        %v855 = vunpack.c.h.b16 %v614
        %v856 = vunpack.c.l.b16 %v615
        %v857 = vunpack.c.h.b16 %v615
        %v858 = vunpack.c.l.b16 %v616
        %v859 = vunpack.c.h.b16 %v616
        %v860 = vunpack.c.l.b16 %v617
        %v861 = vunpack.c.h.b16 %v617
        %v862 = vunpack.c.l.b16 %v618
        %v863 = vunpack.c.h.b16 %v618
        %v864 = vunpack.c.l.b16 %v619
        %v865 = vunpack.c.h.b16 %v619
        %v866 = vunpack.c.l.b16 %v620
        %v867 = vunpack.c.h.b16 %v620
        %v868 = vunpack.c.l.b16 %v621
        %v869 = vunpack.c.h.b16 %v621
        %v870 = vunpack.c.l.b16 %v622
        %v871 = vunpack.c.h.b16 %v622
        %v872 = vunpack.c.l.b16 %v623
        %v873 = vunpack.c.h.b16 %v623
        %v874 = vunpack.c.l.b16 %v624
        %v875 = vunpack.c.h.b16 %v624
        %v876 = vunpack.c.l.b16 %v625
        %v877 = vunpack.c.h.b16 %v625
        %v878 = vunpack.c.l.b16 %v626
        %v879 = vunpack.c.h.b16 %v626
        %v880 = vunpack.c.l.b16 %v627
        %v881 = vunpack.c.h.b16 %v627
        %v882 = vunpack.c.l.b16 %v628
        %v883 = vunpack.c.h.b16 %v628
        %v884 = vunpack.c.l.b16 %v629
        %v885 = vunpack.c.h.b16 %v629
        %v886 = vunpack.c.l.b16 %v630
        %v887 = vunpack.c.h.b16 %v630
        %v888 = vunpack.c.l.b16 %v631
        %v889 = vunpack.c.h.b16 %v631
        %v890 = vunpack.c.l.b16 %v632
        %v891 = vunpack.c.h.b16 %v632
        %v892 = vunpack.c.l.b16 %v633
        %v893 = vunpack.c.h.b16 %v633
        %v894 = vunpack.c.l.b16 %v634
        %v895 = vunpack.c.h.b16 %v634
        %v896 = vunpack.c.l.b16 %v635
        %v897 = vunpack.c.h.b16 %v635
        %v898 = vunpack.c.l.b16 %v636
        %v899 = vunpack.c.h.b16 %v636
        %v900 = vunpack.c.l.b16 %v637
        %v901 = vunpack.c.h.b16 %v637
        %v902 = vunpack.c.l.b16 %v638
        %v903 = vunpack.c.h.b16 %v638
        %v904 = vunpack.c.l.b16 %v639
        %v905 = vunpack.c.h.b16 %v639
        %v906 = vunpack.c.l.b16 %v640
        %v907 = vunpack.c.h.b16 %v640
        %v908 = vunpack.c.l.b16 %v641
        %v909 = vunpack.c.h.b16 %v641
        %v910 = vunpack.c.l.b16 %v642
        %v911 = vunpack.c.h.b16 %v642
        %v912 = vunpack.c.l.b16 %v643
        %v913 = vunpack.c.h.b16 %v643
        %v914 = vunpack.c.l.b16 %v644
        %v915 = vunpack.c.h.b16 %v644
        %v916 = vunpack.c.l.b16 %v645
        %v917 = vunpack.c.h.b16 %v645
        %v918 = vunpack.c.l.b16 %v646
        %v919 = vunpack.c.h.b16 %v646
        %v920 = vunpack.c.l.b16 %v647
        %v921 = vunpack.c.h.b16 %v647
        %v922 = vunpack.c.l.b16 %v648
        %v923 = vunpack.c.h.b16 %v648
        %v924 = vunpack.c.l.b16 %v649
        %v925 = vunpack.c.h.b16 %v649
        %v926 = vunpack.c.l.b16 %v650
        %v927 = vunpack.c.h.b16 %v650
        %v928 = vunpack.c.l.b16 %v651
        %v929 = vunpack.c.h.b16 %v651
        %v930 = vunpack.c.l.b16 %v652
        %v931 = vunpack.c.h.b16 %v652
        %v932 = vunpack.c.l.b16 %v653
        %v933 = vunpack.c.h.b16 %v653
        %v934 = vunpack.c.l.b16 %v654
        %v935 = vunpack.c.h.b16 %v654
        %v936 = vunpack.c.l.b16 %v655
        %v937 = vunpack.c.h.b16 %v655
        %v938 = vunpack.c.l.b16 %v656
        %v939 = vunpack.c.h.b16 %v656
        %v940 = vunpack.c.l.b16 %v657
        %v941 = vunpack.c.h.b16 %v657
        %v942 = vunpack.c.l.b16 %v658
        %v943 = vunpack.c.h.b16 %v658
        %v944 = vunpack.c.l.b16 %v659
        %v945 = vunpack.c.h.b16 %v659
        %v946 = vunpack.c.l.b16 %v660
        %v947 = vunpack.c.h.b16 %v660
        %v948 = vunpack.c.l.b16 %v661
        %v949 = vunpack.c.h.b16 %v661
        %v950 = vpack.c.b16 %v770, %v758
        %v951 = vpack.c.b16 %v771, %v759
        %v952 = vpack.c.b16 %v772, %v760
        %v953 = vpack.c.b16 %v773, %v761
        %v954 = vpack.c.b16 %v774, %v762
        %v955 = vpack.c.b16 %v775, %v763
        %v956 = vpack.c.b16 %v776, %v764
        %v957 = vpack.c.b16 %v777, %v765
        %v958 = vpack.c.b16 %v778, %v766
        %v959 = vpack.c.b16 %v779, %v767
        %v960 = vpack.c.b16 %v780, %v768
        %v961 = vpack.c.b16 %v781, %v769
        %v962 = vpack.c.b16 %v794, %v782
        %v963 = vpack.c.b16 %v795, %v783
        %v964 = vpack.c.b16 %v796, %v784
        %v965 = vpack.c.b16 %v797, %v785
        %v966 = vpack.c.b16 %v798, %v786
        %v967 = vpack.c.b16 %v799, %v787
        %v968 = vpack.c.b16 %v800, %v788
        %v969 = vpack.c.b16 %v801, %v789
        %v970 = vpack.c.b16 %v802, %v790
        %v971 = vpack.c.b16 %v803, %v791
        %v972 = vpack.c.b16 %v804, %v792
        %v973 = vpack.c.b16 %v805, %v793
        %v974 = vpack.c.b16 %v818, %v806
        %v975 = vpack.c.b16 %v819, %v807
        %v976 = vpack.c.b16 %v820, %v808
        %v977 = vpack.c.b16 %v821, %v809
        %v978 = vpack.c.b16 %v822, %v810
        %v979 = vpack.c.b16 %v823, %v811
        %v980 = vpack.c.b16 %v824, %v812
        %v981 = vpack.c.b16 %v825, %v813
        %v982 = vpack.c.b16 %v826, %v814
        %v983 = vpack.c.b16 %v827, %v815
        %v984 = vpack.c.b16 %v828, %v816
        %v985 = vpack.c.b16 %v829, %v817
        %v986 = vpack.c.b16 %v842, %v830
        %v987 = vpack.c.b16 %v843, %v831
        %v988 = vpack.c.b16 %v844, %v832
        %v989 = vpack.c.b16 %v845, %v833
        %v990 = vpack.c.b16 %v846, %v834
        %v991 = vpack.c.b16 %v847, %v835
        %v992 = vpack.c.b16 %v848, %v836
        %v993 = vpack.c.b16 %v849, %v837
        %v994 = vpack.c.b16 %v850, %v838
        %v995 = vpack.c.b16 %v851, %v839
        %v996 = vpack.c.b16 %v852, %v840
        %v997 = vpack.c.b16 %v853, %v841
        %v998 = vpack.c.b16 %v866, %v854
        %v999 = vpack.c.b16 %v867, %v855
        %v1000 = vpack.c.b16 %v868, %v856
        %v1001 = vpack.c.b16 %v869, %v857
        %v1002 = vpack.c.b16 %v870, %v858
        %v1003 = vpack.c.b16 %v871, %v859
        %v1004 = vpack.c.b16 %v872, %v860
        %v1005 = vpack.c.b16 %v873, %v861
        %v1006 = vpack.c.b16 %v874, %v862
        %v1007 = vpack.c.b16 %v875, %v863
        %v1008 = vpack.c.b16 %v876, %v864
        %v1009 = vpack.c.b16 %v877, %v865
        %v1010 = vpack.c.b16 %v890, %v878
        %v1011 = vpack.c.b16 %v891, %v879
        %v1012 = vpack.c.b16 %v892, %v880
        %v1013 = vpack.c.b16 %v893, %v881
        %v1014 = vpack.c.b16 %v894, %v882
        %v1015 = vpack.c.b16 %v895, %v883
        %v1016 = vpack.c.b16 %v896, %v884
        %v1017 = vpack.c.b16 %v897, %v885
        %v1018 = vpack.c.b16 %v898, %v886
        %v1019 = vpack.c.b16 %v899, %v887
        %v1020 = vpack.c.b16 %v900, %v888
        %v1021 = vpack.c.b16 %v901, %v889
        %v1022 = vpack.c.b16 %v914, %v902
        %v1023 = vpack.c.b16 %v915, %v903
        %v1024 = vpack.c.b16 %v916, %v904
        %v1025 = vpack.c.b16 %v917, %v905
        %v1026 = vpack.c.b16 %v918, %v906
        %v1027 = vpack.c.b16 %v919, %v907
        %v1028 = vpack.c.b16 %v920, %v908
        %v1029 = vpack.c.b16 %v921, %v909
        %v1030 = vpack.c.b16 %v922, %v910
        %v1031 = vpack.c.b16 %v923, %v911
        %v1032 = vpack.c.b16 %v924, %v912
        %v1033 = vpack.c.b16 %v925, %v913
        %v1034 = vpack.c.b16 %v938, %v926
        %v1035 = vpack.c.b16 %v939, %v927
        %v1036 = vpack.c.b16 %v940, %v928
        %v1037 = vpack.c.b16 %v941, %v929
        %v1038 = vpack.c.b16 %v942, %v930
        %v1039 = vpack.c.b16 %v943, %v931
        %v1040 = vpack.c.b16 %v944, %v932
        %v1041 = vpack.c.b16 %v945, %v933
        %v1042 = vpack.c.b16 %v946, %v934
        %v1043 = vpack.c.b16 %v947, %v935
        %v1044 = vpack.c.b16 %v948, %v936
        %v1045 = vpack.c.b16 %v949, %v937
        %1142 = vmatprep.subr.bf16.mxu0 %v1035
        %1143 = vmatpush1.bf16.msra.mxu0 %v1034
        %1144 = vmatprep.subr.bf16.mxu0 %v1023
        %1145 = vmatpush1.bf16.msra.mxu0 %v1022
        %1146 = vmatprep.subr.bf16.mxu0 %v1011
        %1147 = vmatpush1.bf16.msra.mxu0 %v1010
        %1148 = vmatprep.subr.bf16.mxu0 %v999
        %1149 = vmatpush1.bf16.msra.mxu0 %v998
        %1150 = vmatprep.subr.bf16.mxu0 %v987
        %1151 = vmatpush1.bf16.msra.mxu0 %v986
        %1152 = vmatprep.subr.bf16.mxu0 %v975
        %1153 = vmatpush1.bf16.msra.mxu0 %v974
        %1154 = vmatprep.subr.bf16.mxu0 %v963
        %1155 = vmatpush1.bf16.msra.mxu0 %v962
        %1156 = vmatprep.subr.bf16.mxu0 %v951
        %1157 = vmatpush1.bf16.msra.mxu0 %v950
        %1158 = vmatprep.subr.bf16.mxu0 0
        %1159 = vmatpush2.bf16.msra.mxu0 0
        %1160 = vmatprep.subr.bf16.mxu0 0
        %1161 = vmatpush2.bf16.msra.mxu0 0
        %1162 = vmatprep.subr.bf16.mxu0 0
        %1163 = vmatpush2.bf16.msra.mxu0 0
        %1164 = vmatprep.subr.bf16.mxu0 0
        %1165 = vmatpush2.bf16.msra.mxu0 0
        %1166 = vmatprep.subr.bf16.mxu0 0
        %1167 = vmatpush2.bf16.msra.mxu0 0
        %1168 = vmatprep.subr.bf16.mxu0 0
        %1169 = vmatpush2.bf16.msra.mxu0 0
        %1170 = vmatprep.subr.bf16.mxu0 0
        %1171 = vmatpush2.bf16.msra.mxu0 0
        %1172 = vmatprep.subr.bf16.mxu0 0
        %1173 = vmatpush2.bf16.msra.mxu0 0
        %1174 = vmatprep.mubr.bf16.mxu0 0
        %1175 = vmatmul.mubr.bf16.gmra.mxu0 %v564
        %v1176 = vpop.f32.mrf.mxu0
        %v1177 = vadd.f32 0.0, %v1176
        %v1178 = vpop.f32.mrf.mxu0
        %v1179 = vadd.f32 0.0, %v1178
        %v1180 = vpop.f32.mrf.mxu0
        %v1181 = vadd.f32 0.0, %v1180
        %v1182 = vpop.f32.mrf.mxu0
        %v1183 = vadd.f32 0.0, %v1182
        %1184 = vmatprep.mubr.bf16.mxu0 0
        %1185 = vmatmul.mubr.bf16.gmra.mxu0 %v565
        %v1186 = vpop.f32.mrf.mxu0
        %v1187 = vadd.f32 0.0, %v1186
        %v1188 = vpop.f32.mrf.mxu0
        %v1189 = vadd.f32 0.0, %v1188
        %v1190 = vpop.f32.mrf.mxu0
        %v1191 = vadd.f32 0.0, %v1190
        %v1192 = vpop.f32.mrf.mxu0
        %v1193 = vadd.f32 0.0, %v1192
        %1194 = vdwg.mxu0
        %1195 = vmatprep.subr.bf16.mxu0 %v1037
        %1196 = vmatpush1.bf16.msra.mxu0 %v1036
        %1197 = vmatprep.subr.bf16.mxu0 %v1025
        %1198 = vmatpush1.bf16.msra.mxu0 %v1024
        %1199 = vmatprep.subr.bf16.mxu0 %v1013
        %1200 = vmatpush1.bf16.msra.mxu0 %v1012
        %1201 = vmatprep.subr.bf16.mxu0 %v1001
        %1202 = vmatpush1.bf16.msra.mxu0 %v1000
        %1203 = vmatprep.subr.bf16.mxu0 %v989
        %1204 = vmatpush1.bf16.msra.mxu0 %v988
        %1205 = vmatprep.subr.bf16.mxu0 %v977
        %1206 = vmatpush1.bf16.msra.mxu0 %v976
        %1207 = vmatprep.subr.bf16.mxu0 %v965
        %1208 = vmatpush1.bf16.msra.mxu0 %v964
        %1209 = vmatprep.subr.bf16.mxu0 %v953
        %1210 = vmatpush1.bf16.msra.mxu0 %v952
        %1211 = vmatprep.subr.bf16.mxu0 0
        %1212 = vmatpush2.bf16.msra.mxu0 0
        %1213 = vmatprep.subr.bf16.mxu0 0
        %1214 = vmatpush2.bf16.msra.mxu0 0
        %1215 = vmatprep.subr.bf16.mxu0 0
        %1216 = vmatpush2.bf16.msra.mxu0 0
        %1217 = vmatprep.subr.bf16.mxu0 0
        %1218 = vmatpush2.bf16.msra.mxu0 0
        %1219 = vmatprep.subr.bf16.mxu0 0
        %1220 = vmatpush2.bf16.msra.mxu0 0
        %1221 = vmatprep.subr.bf16.mxu0 0
        %1222 = vmatpush2.bf16.msra.mxu0 0
        %1223 = vmatprep.subr.bf16.mxu0 0
        %1224 = vmatpush2.bf16.msra.mxu0 0
        %1225 = vmatprep.subr.bf16.mxu0 0
        %1226 = vmatpush2.bf16.msra.mxu0 0
        %1227 = vmatprep.mubr.bf16.mxu0 0
        %1228 = vmatmul.mubr.bf16.gmra.mxu0 %v564
        %v1229 = vpop.f32.mrf.mxu0
        %v1230 = vadd.f32 0.0, %v1229
        %v1231 = vpop.f32.mrf.mxu0
        %v1232 = vadd.f32 0.0, %v1231
        %v1233 = vpop.f32.mrf.mxu0
        %v1234 = vadd.f32 0.0, %v1233
        %v1235 = vpop.f32.mrf.mxu0
        %v1236 = vadd.f32 0.0, %v1235
        %1237 = vmatprep.mubr.bf16.mxu0 0
        %1238 = vmatmul.mubr.bf16.gmra.mxu0 %v565
        %v1239 = vpop.f32.mrf.mxu0
        %v1240 = vadd.f32 0.0, %v1239
        %v1241 = vpop.f32.mrf.mxu0
        %v1242 = vadd.f32 0.0, %v1241
        %v1243 = vpop.f32.mrf.mxu0
        %v1244 = vadd.f32 0.0, %v1243
        %v1245 = vpop.f32.mrf.mxu0
        %v1246 = vadd.f32 0.0, %v1245
        %1247 = vdwg.mxu0
        %1248 = vmatprep.subr.bf16.mxu0 %v1039
        %1249 = vmatpush1.bf16.msra.mxu0 %v1038
        %1250 = vmatprep.subr.bf16.mxu0 %v1027
        %1251 = vmatpush1.bf16.msra.mxu0 %v1026
        %1252 = vmatprep.subr.bf16.mxu0 %v1015
        %1253 = vmatpush1.bf16.msra.mxu0 %v1014
        %1254 = vmatprep.subr.bf16.mxu0 %v1003
        %1255 = vmatpush1.bf16.msra.mxu0 %v1002
        %1256 = vmatprep.subr.bf16.mxu0 %v991
        %1257 = vmatpush1.bf16.msra.mxu0 %v990
        %1258 = vmatprep.subr.bf16.mxu0 %v979
        %1259 = vmatpush1.bf16.msra.mxu0 %v978
        %1260 = vmatprep.subr.bf16.mxu0 %v967
        %1261 = vmatpush1.bf16.msra.mxu0 %v966
        %1262 = vmatprep.subr.bf16.mxu0 %v955
        %1263 = vmatpush1.bf16.msra.mxu0 %v954
        %1264 = vmatprep.subr.bf16.mxu0 0
        %1265 = vmatpush2.bf16.msra.mxu0 0
        %1266 = vmatprep.subr.bf16.mxu0 0
        %1267 = vmatpush2.bf16.msra.mxu0 0
        %1268 = vmatprep.subr.bf16.mxu0 0
        %1269 = vmatpush2.bf16.msra.mxu0 0
        %1270 = vmatprep.subr.bf16.mxu0 0
        %1271 = vmatpush2.bf16.msra.mxu0 0
        %1272 = vmatprep.subr.bf16.mxu0 0
        %1273 = vmatpush2.bf16.msra.mxu0 0
        %1274 = vmatprep.subr.bf16.mxu0 0
        %1275 = vmatpush2.bf16.msra.mxu0 0
        %1276 = vmatprep.subr.bf16.mxu0 0
        %1277 = vmatpush2.bf16.msra.mxu0 0
        %1278 = vmatprep.subr.bf16.mxu0 0
        %1279 = vmatpush2.bf16.msra.mxu0 0
        %1280 = vmatprep.mubr.bf16.mxu0 0
        %1281 = vmatmul.mubr.bf16.gmra.mxu0 %v564
        %v1282 = vpop.f32.mrf.mxu0
        %v1283 = vadd.f32 0.0, %v1282
        %v1284 = vpop.f32.mrf.mxu0
        %v1285 = vadd.f32 0.0, %v1284
        %v1286 = vpop.f32.mrf.mxu0
        %v1287 = vadd.f32 0.0, %v1286
        %v1288 = vpop.f32.mrf.mxu0
        %v1289 = vadd.f32 0.0, %v1288
        %1290 = vmatprep.mubr.bf16.mxu0 0
        %1291 = vmatmul.mubr.bf16.gmra.mxu0 %v565
        %v1292 = vpop.f32.mrf.mxu0
        %v1293 = vadd.f32 0.0, %v1292
        %v1294 = vpop.f32.mrf.mxu0
        %v1295 = vadd.f32 0.0, %v1294
        %v1296 = vpop.f32.mrf.mxu0
        %v1297 = vadd.f32 0.0, %v1296
        %v1298 = vpop.f32.mrf.mxu0
        %v1299 = vadd.f32 0.0, %v1298
        %1300 = vdwg.mxu0
        %1301 = vmatprep.subr.bf16.mxu0 %v1041
        %1302 = vmatpush1.bf16.msra.mxu0 %v1040
        %1303 = vmatprep.subr.bf16.mxu0 %v1029
        %1304 = vmatpush1.bf16.msra.mxu0 %v1028
        %1305 = vmatprep.subr.bf16.mxu0 %v1017
        %1306 = vmatpush1.bf16.msra.mxu0 %v1016
        %1307 = vmatprep.subr.bf16.mxu0 %v1005
        %1308 = vmatpush1.bf16.msra.mxu0 %v1004
        %1309 = vmatprep.subr.bf16.mxu0 %v993
        %1310 = vmatpush1.bf16.msra.mxu0 %v992
        %1311 = vmatprep.subr.bf16.mxu0 %v981
        %1312 = vmatpush1.bf16.msra.mxu0 %v980
        %1313 = vmatprep.subr.bf16.mxu0 %v969
        %1314 = vmatpush1.bf16.msra.mxu0 %v968
        %1315 = vmatprep.subr.bf16.mxu0 %v957
        %1316 = vmatpush1.bf16.msra.mxu0 %v956
        %1317 = vmatprep.subr.bf16.mxu0 0
        %1318 = vmatpush2.bf16.msra.mxu0 0
        %1319 = vmatprep.subr.bf16.mxu0 0
        %1320 = vmatpush2.bf16.msra.mxu0 0
        %1321 = vmatprep.subr.bf16.mxu0 0
        %1322 = vmatpush2.bf16.msra.mxu0 0
        %1323 = vmatprep.subr.bf16.mxu0 0
        %1324 = vmatpush2.bf16.msra.mxu0 0
        %1325 = vmatprep.subr.bf16.mxu0 0
        %1326 = vmatpush2.bf16.msra.mxu0 0
        %1327 = vmatprep.subr.bf16.mxu0 0
        %1328 = vmatpush2.bf16.msra.mxu0 0
        %1329 = vmatprep.subr.bf16.mxu0 0
        %1330 = vmatpush2.bf16.msra.mxu0 0
        %1331 = vmatprep.subr.bf16.mxu0 0
        %1332 = vmatpush2.bf16.msra.mxu0 0
        %1333 = vmatprep.mubr.bf16.mxu0 0
        %1334 = vmatmul.mubr.bf16.gmra.mxu0 %v564
        %v1335 = vpop.f32.mrf.mxu0
        %v1336 = vadd.f32 0.0, %v1335
        %v1337 = vpop.f32.mrf.mxu0
        %v1338 = vadd.f32 0.0, %v1337
        %v1339 = vpop.f32.mrf.mxu0
        %v1340 = vadd.f32 0.0, %v1339
        %v1341 = vpop.f32.mrf.mxu0
        %v1342 = vadd.f32 0.0, %v1341
        %1343 = vmatprep.mubr.bf16.mxu0 0
        %1344 = vmatmul.mubr.bf16.gmra.mxu0 %v565
        %v1345 = vpop.f32.mrf.mxu0
        %v1346 = vadd.f32 0.0, %v1345
        %v1347 = vpop.f32.mrf.mxu0
        %v1348 = vadd.f32 0.0, %v1347
        %v1349 = vpop.f32.mrf.mxu0
        %v1350 = vadd.f32 0.0, %v1349
        %v1351 = vpop.f32.mrf.mxu0
        %v1352 = vadd.f32 0.0, %v1351
        %1353 = vdwg.mxu0
        %1354 = vmatprep.subr.bf16.mxu0 %v1043
        %1355 = vmatpush1.bf16.msra.mxu0 %v1042
        %1356 = vmatprep.subr.bf16.mxu0 %v1031
        %1357 = vmatpush1.bf16.msra.mxu0 %v1030
        %1358 = vmatprep.subr.bf16.mxu0 %v1019
        %1359 = vmatpush1.bf16.msra.mxu0 %v1018
        %1360 = vmatprep.subr.bf16.mxu0 %v1007
        %1361 = vmatpush1.bf16.msra.mxu0 %v1006
        %1362 = vmatprep.subr.bf16.mxu0 %v995
        %1363 = vmatpush1.bf16.msra.mxu0 %v994
        %1364 = vmatprep.subr.bf16.mxu0 %v983
        %1365 = vmatpush1.bf16.msra.mxu0 %v982
        %1366 = vmatprep.subr.bf16.mxu0 %v971
        %1367 = vmatpush1.bf16.msra.mxu0 %v970
        %1368 = vmatprep.subr.bf16.mxu0 %v959
        %1369 = vmatpush1.bf16.msra.mxu0 %v958
        %1370 = vmatprep.subr.bf16.mxu0 0
        %1371 = vmatpush2.bf16.msra.mxu0 0
        %1372 = vmatprep.subr.bf16.mxu0 0
        %1373 = vmatpush2.bf16.msra.mxu0 0
        %1374 = vmatprep.subr.bf16.mxu0 0
        %1375 = vmatpush2.bf16.msra.mxu0 0
        %1376 = vmatprep.subr.bf16.mxu0 0
        %1377 = vmatpush2.bf16.msra.mxu0 0
        %1378 = vmatprep.subr.bf16.mxu0 0
        %1379 = vmatpush2.bf16.msra.mxu0 0
        %1380 = vmatprep.subr.bf16.mxu0 0
        %1381 = vmatpush2.bf16.msra.mxu0 0
        %1382 = vmatprep.subr.bf16.mxu0 0
        %1383 = vmatpush2.bf16.msra.mxu0 0
        %1384 = vmatprep.subr.bf16.mxu0 0
        %1385 = vmatpush2.bf16.msra.mxu0 0
        %1386 = vmatprep.mubr.bf16.mxu0 0
        %1387 = vmatmul.mubr.bf16.gmra.mxu0 %v564
        %v1388 = vpop.f32.mrf.mxu0
        %v1389 = vadd.f32 0.0, %v1388
        %v1390 = vpop.f32.mrf.mxu0
        %v1391 = vadd.f32 0.0, %v1390
        %v1392 = vpop.f32.mrf.mxu0
        %v1393 = vadd.f32 0.0, %v1392
        %v1394 = vpop.f32.mrf.mxu0
        %v1395 = vadd.f32 0.0, %v1394
        %1396 = vmatprep.mubr.bf16.mxu0 0
        %1397 = vmatmul.mubr.bf16.gmra.mxu0 %v565
        %v1398 = vpop.f32.mrf.mxu0
        %v1399 = vadd.f32 0.0, %v1398
        %v1400 = vpop.f32.mrf.mxu0
        %v1401 = vadd.f32 0.0, %v1400
        %v1402 = vpop.f32.mrf.mxu0
        %v1403 = vadd.f32 0.0, %v1402
        %v1404 = vpop.f32.mrf.mxu0
        %v1405 = vadd.f32 0.0, %v1404
        %1406 = vdwg.mxu0
        %1407 = vmatprep.subr.bf16.mxu0 %v1045
        %1408 = vmatpush1.bf16.msra.mxu0 %v1044
        %1409 = vmatprep.subr.bf16.mxu0 %v1033
        %1410 = vmatpush1.bf16.msra.mxu0 %v1032
        %1411 = vmatprep.subr.bf16.mxu0 %v1021
        %1412 = vmatpush1.bf16.msra.mxu0 %v1020
        %1413 = vmatprep.subr.bf16.mxu0 %v1009
        %1414 = vmatpush1.bf16.msra.mxu0 %v1008
        %1415 = vmatprep.subr.bf16.mxu0 %v997
        %1416 = vmatpush1.bf16.msra.mxu0 %v996
        %1417 = vmatprep.subr.bf16.mxu0 %v985
        %1418 = vmatpush1.bf16.msra.mxu0 %v984
        %1419 = vmatprep.subr.bf16.mxu0 %v973
        %1420 = vmatpush1.bf16.msra.mxu0 %v972
        %1421 = vmatprep.subr.bf16.mxu0 %v961
        %1422 = vmatpush1.bf16.msra.mxu0 %v960
        %1423 = vmatprep.subr.bf16.mxu0 0
        %1424 = vmatpush2.bf16.msra.mxu0 0
        %1425 = vmatprep.subr.bf16.mxu0 0
        %1426 = vmatpush2.bf16.msra.mxu0 0
        %1427 = vmatprep.subr.bf16.mxu0 0
        %1428 = vmatpush2.bf16.msra.mxu0 0
        %1429 = vmatprep.subr.bf16.mxu0 0
        %1430 = vmatpush2.bf16.msra.mxu0 0
        %1431 = vmatprep.subr.bf16.mxu0 0
        %1432 = vmatpush2.bf16.msra.mxu0 0
        %1433 = vmatprep.subr.bf16.mxu0 0
        %1434 = vmatpush2.bf16.msra.mxu0 0
        %1435 = vmatprep.subr.bf16.mxu0 0
        %1436 = vmatpush2.bf16.msra.mxu0 0
        %1437 = vmatprep.subr.bf16.mxu0 0
        %1438 = vmatpush2.bf16.msra.mxu0 0
        %1439 = vmatprep.mubr.bf16.mxu0 0
        %1440 = vmatmul.mubr.bf16.gmra.mxu0 %v564
        %v1441 = vpop.f32.mrf.mxu0
        %v1442 = vadd.f32 0.0, %v1441
        %v1443 = vpop.f32.mrf.mxu0
        %v1444 = vadd.f32 0.0, %v1443
        %v1445 = vpop.f32.mrf.mxu0
        %v1446 = vadd.f32 0.0, %v1445
        %v1447 = vpop.f32.mrf.mxu0
        %v1448 = vadd.f32 0.0, %v1447
        %1449 = vmatprep.mubr.bf16.mxu0 0
        %1450 = vmatmul.mubr.bf16.gmra.mxu0 %v565
        %v1451 = vpop.f32.mrf.mxu0
        %v1452 = vadd.f32 0.0, %v1451
        %v1453 = vpop.f32.mrf.mxu0
        %v1454 = vadd.f32 0.0, %v1453
        %v1455 = vpop.f32.mrf.mxu0
        %v1456 = vadd.f32 0.0, %v1455
        %v1457 = vpop.f32.mrf.mxu0
        %v1458 = vadd.f32 0.0, %v1457
        %1459 = vdwg.mxu0
        %v1460 = vld [vmem:[#allocation7] sm:$0xf]
        %v1461 = vld [vmem:[#allocation7 + $0x4] sm:$0xf]
        %v1462 = vld [vmem:[#allocation7 + $0x8] sm:$0xf]
        %v1463 = vld [vmem:[#allocation7 + $0xc] sm:$0xf]
        %v1464 = vld [vmem:[#allocation7 + $0x10] sm:$0xf]
        %v1465 = vld [vmem:[#allocation7 + $0x14] sm:$0xf]
        %v1466 = vld [vmem:[#allocation7 + $0x18] sm:$0xf]
        %v1467 = vld [vmem:[#allocation7 + $0x1c] sm:$0xf]
        %v1468 = vld [vmem:[#allocation7 + $0x20] sm:$0xf]
        %v1469 = vld [vmem:[#allocation7 + $0x24] sm:$0xf]
        %v1470 = vld [vmem:[#allocation7 + $0x28] sm:$0xf]
        %v1471 = vld [vmem:[#allocation7 + $0x2c] sm:$0xf]
        %v1472 = vld [vmem:[#allocation7 + $0x30] sm:$0xf]
        %v1473 = vld [vmem:[#allocation7 + $0x34] sm:$0xf]
        %v1474 = vld [vmem:[#allocation7 + $0x38] sm:$0xf]
        %v1475 = vld [vmem:[#allocation7 + $0x3c] sm:$0xf]
        %v1476 = vld [vmem:[#allocation7 + $0x40] sm:$0xf]
        %v1477 = vld [vmem:[#allocation7 + $0x44] sm:$0xf]
        %v1478 = vld [vmem:[#allocation7 + $0x48] sm:$0xf]
        %v1479 = vld [vmem:[#allocation7 + $0x4c] sm:$0xf]
        %v1480 = vld [vmem:[#allocation7 + $0x50] sm:$0xf]
        %v1481 = vld [vmem:[#allocation7 + $0x54] sm:$0xf]
        %v1482 = vld [vmem:[#allocation7 + $0x58] sm:$0xf]
        %v1483 = vld [vmem:[#allocation7 + $0x5c] sm:$0xf]
        %v1484 = vld [vmem:[#allocation7 + $0x60] sm:$0xf]
        %v1485 = vld [vmem:[#allocation7 + $0x64] sm:$0xf]
        %v1486 = vld [vmem:[#allocation7 + $0x68] sm:$0xf]
        %v1487 = vld [vmem:[#allocation7 + $0x6c] sm:$0xf]
        %v1488 = vld [vmem:[#allocation7 + $0x70] sm:$0xf]
        %v1489 = vld [vmem:[#allocation7 + $0x74] sm:$0xf]
        %v1490 = vld [vmem:[#allocation7 + $0x78] sm:$0xf]
        %v1491 = vld [vmem:[#allocation7 + $0x7c] sm:$0xf]
        %v1492 = vld [vmem:[#allocation7 + $0x80] sm:$0xf]
        %v1493 = vld [vmem:[#allocation7 + $0x84] sm:$0xf]
        %v1494 = vld [vmem:[#allocation7 + $0x88] sm:$0xf]
        %v1495 = vld [vmem:[#allocation7 + $0x8c] sm:$0xf]
        %v1496 = vld [vmem:[#allocation7 + $0x90] sm:$0xf]
        %v1497 = vld [vmem:[#allocation7 + $0x94] sm:$0xf]
        %v1498 = vld [vmem:[#allocation7 + $0x98] sm:$0xf]
        %v1499 = vld [vmem:[#allocation7 + $0x9c] sm:$0xf]
        %v1500 = vld [vmem:[#allocation7 + $0xa0] sm:$0xf]
        %v1501 = vld [vmem:[#allocation7 + $0xa4] sm:$0xf]
        %v1502 = vld [vmem:[#allocation7 + $0xa8] sm:$0xf]
        %v1503 = vld [vmem:[#allocation7 + $0xac] sm:$0xf]
        %v1504 = vld [vmem:[#allocation7 + $0xb0] sm:$0xf]
        %v1505 = vld [vmem:[#allocation7 + $0xb4] sm:$0xf]
        %v1506 = vld [vmem:[#allocation7 + $0xb8] sm:$0xf]
        %v1507 = vld [vmem:[#allocation7 + $0xbc] sm:$0xf]
        %v1508 = vld [vmem:[#allocation7 + $0xc0] sm:$0xf]
        %v1509 = vld [vmem:[#allocation7 + $0xc4] sm:$0xf]
        %v1510 = vld [vmem:[#allocation7 + $0xc8] sm:$0xf]
        %v1511 = vld [vmem:[#allocation7 + $0xcc] sm:$0xf]
        %v1512 = vld [vmem:[#allocation7 + $0xd0] sm:$0xf]
        %v1513 = vld [vmem:[#allocation7 + $0xd4] sm:$0xf]
        %v1514 = vld [vmem:[#allocation7 + $0xd8] sm:$0xf]
        %v1515 = vld [vmem:[#allocation7 + $0xdc] sm:$0xf]
        %v1516 = vld [vmem:[#allocation7 + $0xe0] sm:$0xf]
        %v1517 = vld [vmem:[#allocation7 + $0xe4] sm:$0xf]
        %v1518 = vld [vmem:[#allocation7 + $0xe8] sm:$0xf]
        %v1519 = vld [vmem:[#allocation7 + $0xec] sm:$0xf]
        %v1520 = vld [vmem:[#allocation7 + $0xf0] sm:$0xf]
        %v1521 = vld [vmem:[#allocation7 + $0xf4] sm:$0xf]
        %v1522 = vld [vmem:[#allocation7 + $0xf8] sm:$0xf]
        %v1523 = vld [vmem:[#allocation7 + $0xfc] sm:$0xf]
        %v1524 = vpack.c.bf16 %v1181, %v1177
        %v1525 = vpack.c.bf16 %v1287, %v1283
        %v1526 = vpack.c.bf16 %v1393, %v1389
        %vm1527 = vcmask 523264
        %v1529 = vsel %vm1527, %v1524, 0
        %v1532 = vsel %vm1527, %v1525, 0
        %1534 = vmatprep.subr.bf16.mxu0 0
        %1535 = vmatpush1.bf16.xpose.msra.mxu0 0
        %1536 = vmatprep.subr.bf16.mxu0 0
        %1537 = vmatpush1.bf16.xpose.msra.mxu0 0
        %1538 = vmatprep.subr.bf16.mxu0 0
        %1539 = vmatpush1.bf16.xpose.msra.mxu0 0
        %1540 = vmatprep.subr.bf16.mxu0 0
        %1541 = vmatpush1.bf16.xpose.msra.mxu0 0
        %1542 = vmatprep.subr.bf16.mxu0 0
        %1543 = vmatpush1.bf16.xpose.msra.mxu0 0
        %1544 = vmatprep.subr.bf16.mxu0 0
        %1545 = vmatpush1.bf16.xpose.msra.mxu0 0
        %1546 = vmatprep.subr.bf16.mxu0 0
        %1547 = vmatpush1.bf16.xpose.msra.mxu0 0
        %1548 = vmatprep.subr.bf16.mxu0 0
        %1549 = vmatpush1.bf16.xpose.msra.mxu0 %v1532
        %1550 = vmatprep.subr.bf16.mxu0 0
        %1551 = vmatpush2.bf16.xpose.msra.mxu0 0
        %1552 = vmatprep.subr.bf16.mxu0 0
        %1553 = vmatpush2.bf16.xpose.msra.mxu0 0
        %1554 = vmatprep.subr.bf16.mxu0 0
        %1555 = vmatpush2.bf16.xpose.msra.mxu0 0
        %1556 = vmatprep.subr.bf16.mxu0 0
        %1557 = vmatpush2.bf16.xpose.msra.mxu0 0
        %1558 = vmatprep.subr.bf16.mxu0 0
        %1559 = vmatpush2.bf16.xpose.msra.mxu0 0
        %1560 = vmatprep.subr.bf16.mxu0 0
        %1561 = vmatpush2.bf16.xpose.msra.mxu0 0
        %1562 = vmatprep.subr.bf16.mxu0 0
        %1563 = vmatpush2.bf16.xpose.msra.mxu0 0
        %1564 = vmatprep.subr.bf16.mxu0 0
        %1565 = vmatpush2.bf16.xpose.msra.mxu0 0
        %1566 = vmatprep.mubr.bf16.mxu0 0
        %1567 = vmatmul.mubr.bf16.gmra.mxu0 %v1529
        %v1568 = vpop.f32.mrf.mxu0
        %v1569 = vadd.f32 0.0, %v1568
        %v1570 = vpop.f32.mrf.mxu0
        %v1571 = vpop.f32.mrf.mxu0
        %v1572 = vadd.f32 0.0, %v1571
        %v1573 = vpop.f32.mrf.mxu0
        %1574 = vdwg.mxu0
        %vm1575 = vcmask 130048
        %v1576 = vsel %vm1575, %v1569, -inf
        %1577 = vmax.xlane.f32.xlu0 %v1576
        %v1578 = vpop.xlane.xlu0 %1577
        %v1579 = vsel %vm1575, %v1572, -inf
        %1580 = vmax.xlane.f32.xlu0 %v1579
        %v1581 = vpop.xlane.xlu0 %1580
        %v1582 = vsub.f32 %v1569, %v1578
        %v1583 = vsub.f32 %v1572, %v1581
        %v1584 = vmul.f32 %v1582, 1.442695
        %v1585 = vpow.pop %v1584
        %v1586 = vmul.f32 %v1583, 1.442695
        %v1587 = vpow.pop %v1586
        %v1588 = vsel %vm1575, %v1585, 0.0
        %1589 = vadd.xlane.f32.xlu0 %v1588
        %v1590 = vpop.xlane.xlu0 %1589
        %v1591 = vsel %vm1575, %v1587, 0.0
        %1592 = vadd.xlane.f32.xlu0 %v1591
        %v1593 = vpop.xlane.xlu0 %1592
        %v1594 = vrcp.pop %v1590
        %v1595 = vrcp.pop %v1593
        %v1596 = vmul.f32 %v1585, %v1594
        %v1597 = vmul.f32 %v1587, %v1595
        %v1598 = vpack.c.bf16 %v1597, %v1596
        %v1600 = vsel %vm1575, %v1598, 0
        %1602 = vmatprep.subr.bf16.mxu0 0
        %1603 = vmatpush1.bf16.msra.mxu0 0
        %1604 = vmatprep.subr.bf16.mxu0 0
        %1605 = vmatpush1.bf16.msra.mxu0 0
        %1606 = vmatprep.subr.bf16.mxu0 0
        %1607 = vmatpush1.bf16.msra.mxu0 0
        %1608 = vmatprep.subr.bf16.mxu0 0
        %1609 = vmatpush1.bf16.msra.mxu0 0
        %1610 = vmatprep.subr.bf16.mxu0 0
        %1611 = vmatpush1.bf16.msra.mxu0 0
        %1612 = vmatprep.subr.bf16.mxu0 0
        %1613 = vmatpush1.bf16.msra.mxu0 0
        %1614 = vmatprep.subr.bf16.mxu0 0
        %1615 = vmatpush1.bf16.msra.mxu0 0
        %1616 = vmatprep.subr.bf16.mxu0 0
        %1617 = vmatpush1.bf16.msra.mxu0 %v1526
        %1618 = vmatprep.subr.bf16.mxu0 0
        %1619 = vmatpush2.bf16.msra.mxu0 0
        %1620 = vmatprep.subr.bf16.mxu0 0
        %1621 = vmatpush2.bf16.msra.mxu0 0
        %1622 = vmatprep.subr.bf16.mxu0 0
        %1623 = vmatpush2.bf16.msra.mxu0 0
        %1624 = vmatprep.subr.bf16.mxu0 0
        %1625 = vmatpush2.bf16.msra.mxu0 0
        %1626 = vmatprep.subr.bf16.mxu0 0
        %1627 = vmatpush2.bf16.msra.mxu0 0
        %1628 = vmatprep.subr.bf16.mxu0 0
        %1629 = vmatpush2.bf16.msra.mxu0 0
        %1630 = vmatprep.subr.bf16.mxu0 0
        %1631 = vmatpush2.bf16.msra.mxu0 0
        %1632 = vmatprep.subr.bf16.mxu0 0
        %1633 = vmatpush2.bf16.msra.mxu0 0
        %1634 = vmatprep.mubr.bf16.mxu0 0
        %1635 = vmatmul.mubr.bf16.gmra.mxu0 %v1600
        %v1636 = vpop.f32.mrf.mxu0
        %v1637 = vadd.f32 0.0, %v1636
        %v1638 = vpop.f32.mrf.mxu0
        %v1639 = vpop.f32.mrf.mxu0
        %v1640 = vadd.f32 0.0, %v1639
        %v1641 = vpop.f32.mrf.mxu0
        %1642 = vdwg.mxu0
        %v1643 = vpack.c.bf16 %v1640, %v1637
        %1645 = vrot.lane.b32.xlu0 %v1524, 64
        %v1646 = vpop.permute.xlu0 %1645
        %1648 = vrot.lane.b32.xlu0 %v1525, 64
        %v1649 = vpop.permute.xlu0 %1648
        %v1651 = vsel %vm1527, %v1646, 0
        %v1654 = vsel %vm1527, %v1649, 0
        %1656 = vmatprep.subr.bf16.mxu0 0
        %1657 = vmatpush1.bf16.xpose.msra.mxu0 0
        %1658 = vmatprep.subr.bf16.mxu0 0
        %1659 = vmatpush1.bf16.xpose.msra.mxu0 0
        %1660 = vmatprep.subr.bf16.mxu0 0
        %1661 = vmatpush1.bf16.xpose.msra.mxu0 0
        %1662 = vmatprep.subr.bf16.mxu0 0
        %1663 = vmatpush1.bf16.xpose.msra.mxu0 0
        %1664 = vmatprep.subr.bf16.mxu0 0
        %1665 = vmatpush1.bf16.xpose.msra.mxu0 0
        %1666 = vmatprep.subr.bf16.mxu0 0
        %1667 = vmatpush1.bf16.xpose.msra.mxu0 0
        %1668 = vmatprep.subr.bf16.mxu0 0
        %1669 = vmatpush1.bf16.xpose.msra.mxu0 0
        %1670 = vmatprep.subr.bf16.mxu0 0
        %1671 = vmatpush1.bf16.xpose.msra.mxu0 %v1654
        %1672 = vmatprep.subr.bf16.mxu0 0
        %1673 = vmatpush2.bf16.xpose.msra.mxu0 0
        %1674 = vmatprep.subr.bf16.mxu0 0
        %1675 = vmatpush2.bf16.xpose.msra.mxu0 0
        %1676 = vmatprep.subr.bf16.mxu0 0
        %1677 = vmatpush2.bf16.xpose.msra.mxu0 0
        %1678 = vmatprep.subr.bf16.mxu0 0
        %1679 = vmatpush2.bf16.xpose.msra.mxu0 0
        %1680 = vmatprep.subr.bf16.mxu0 0
        %1681 = vmatpush2.bf16.xpose.msra.mxu0 0
        %1682 = vmatprep.subr.bf16.mxu0 0
        %1683 = vmatpush2.bf16.xpose.msra.mxu0 0
        %1684 = vmatprep.subr.bf16.mxu0 0
        %1685 = vmatpush2.bf16.xpose.msra.mxu0 0
        %1686 = vmatprep.subr.bf16.mxu0 0
        %1687 = vmatpush2.bf16.xpose.msra.mxu0 0
        %1688 = vmatprep.mubr.bf16.mxu0 0
        %1689 = vmatmul.mubr.bf16.gmra.mxu0 %v1651
        %v1690 = vpop.f32.mrf.mxu0
        %v1691 = vadd.f32 0.0, %v1690
        %v1692 = vpop.f32.mrf.mxu0
        %v1693 = vpop.f32.mrf.mxu0
        %v1694 = vadd.f32 0.0, %v1693
        %v1695 = vpop.f32.mrf.mxu0
        %1696 = vdwg.mxu0
        %v1697 = vsel %vm1575, %v1691, -inf
        %1698 = vmax.xlane.f32.xlu0 %v1697
        %v1699 = vpop.xlane.xlu0 %1698
        %v1700 = vsel %vm1575, %v1694, -inf
        %1701 = vmax.xlane.f32.xlu0 %v1700
        %v1702 = vpop.xlane.xlu0 %1701
        %v1703 = vsub.f32 %v1691, %v1699
        %v1704 = vsub.f32 %v1694, %v1702
        %v1705 = vmul.f32 %v1703, 1.442695
        %v1706 = vpow.pop %v1705
        %v1707 = vmul.f32 %v1704, 1.442695
        %v1708 = vpow.pop %v1707
        %v1709 = vsel %vm1575, %v1706, 0.0
        %1710 = vadd.xlane.f32.xlu0 %v1709
        %v1711 = vpop.xlane.xlu0 %1710
        %v1712 = vsel %vm1575, %v1708, 0.0
        %1713 = vadd.xlane.f32.xlu0 %v1712
        %v1714 = vpop.xlane.xlu0 %1713
        %v1715 = vrcp.pop %v1711
        %v1716 = vrcp.pop %v1714
        %v1717 = vmul.f32 %v1706, %v1715
        %v1718 = vmul.f32 %v1708, %v1716
        %v1719 = vpack.c.bf16 %v1718, %v1717
        %1721 = vrot.lane.b32.xlu0 %v1526, 64
        %v1722 = vpop.permute.xlu0 %1721
        %v1725 = vsel %vm1575, %v1719, 0
        %1727 = vmatprep.subr.bf16.mxu0 0
        %1728 = vmatpush1.bf16.msra.mxu0 0
        %1729 = vmatprep.subr.bf16.mxu0 0
        %1730 = vmatpush1.bf16.msra.mxu0 0
        %1731 = vmatprep.subr.bf16.mxu0 0
        %1732 = vmatpush1.bf16.msra.mxu0 0
        %1733 = vmatprep.subr.bf16.mxu0 0
        %1734 = vmatpush1.bf16.msra.mxu0 0
        %1735 = vmatprep.subr.bf16.mxu0 0
        %1736 = vmatpush1.bf16.msra.mxu0 0
        %1737 = vmatprep.subr.bf16.mxu0 0
        %1738 = vmatpush1.bf16.msra.mxu0 0
        %1739 = vmatprep.subr.bf16.mxu0 0
        %1740 = vmatpush1.bf16.msra.mxu0 0
        %1741 = vmatprep.subr.bf16.mxu0 0
        %1742 = vmatpush1.bf16.msra.mxu0 %v1722
        %1743 = vmatprep.subr.bf16.mxu0 0
        %1744 = vmatpush2.bf16.msra.mxu0 0
        %1745 = vmatprep.subr.bf16.mxu0 0
        %1746 = vmatpush2.bf16.msra.mxu0 0
        %1747 = vmatprep.subr.bf16.mxu0 0
        %1748 = vmatpush2.bf16.msra.mxu0 0
        %1749 = vmatprep.subr.bf16.mxu0 0
        %1750 = vmatpush2.bf16.msra.mxu0 0
        %1751 = vmatprep.subr.bf16.mxu0 0
        %1752 = vmatpush2.bf16.msra.mxu0 0
        %1753 = vmatprep.subr.bf16.mxu0 0
        %1754 = vmatpush2.bf16.msra.mxu0 0
        %1755 = vmatprep.subr.bf16.mxu0 0
        %1756 = vmatpush2.bf16.msra.mxu0 0
        %1757 = vmatprep.subr.bf16.mxu0 0
        %1758 = vmatpush2.bf16.msra.mxu0 0
        %1759 = vmatprep.mubr.bf16.mxu0 0
        %1760 = vmatmul.mubr.bf16.gmra.mxu0 %v1725
        %v1761 = vpop.f32.mrf.mxu0
        %v1762 = vadd.f32 0.0, %v1761
        %v1763 = vpop.f32.mrf.mxu0
        %v1764 = vpop.f32.mrf.mxu0
        %v1765 = vadd.f32 0.0, %v1764
        %v1766 = vpop.f32.mrf.mxu0
        %1767 = vdwg.mxu0
        %v1768 = vpack.c.bf16 %v1765, %v1762
        %v1777 = vunpack.c.l.b16 %v1468
        %v1778 = vunpack.c.l.b16 %v1469
        %v1779 = vunpack.c.l.b16 %v1470
        %v1780 = vunpack.c.l.b16 %v1471
        %v1781 = vunpack.c.l.b16 %v1472
        %v1782 = vunpack.c.l.b16 %v1473
        %v1783 = vunpack.c.l.b16 %v1474
        %v1784 = vunpack.c.l.b16 %v1475
        %v1785 = vpack.c.b16 %v1778, %v1777
        %v1786 = vpack.c.b16 %v1780, %v1779
        %v1787 = vpack.c.b16 %v1782, %v1781
        %v1788 = vpack.c.b16 %v1784, %v1783
        %v1794 = vsel %vm1527, %v1768, 0
        %1796 = vmatprep.subr.bf16.mxu0 0
        %1797 = vmatpush1.bf16.msra.mxu0 0
        %1798 = vmatprep.subr.bf16.mxu0 0
        %1799 = vmatpush1.bf16.msra.mxu0 0
        %1800 = vmatprep.subr.bf16.mxu0 0
        %1801 = vmatpush1.bf16.msra.mxu0 0
        %1802 = vmatprep.subr.bf16.mxu0 0
        %1803 = vmatpush1.bf16.msra.mxu0 0
        %1804 = vmatprep.subr.bf16.mxu0 0
        %1805 = vmatpush1.bf16.msra.mxu0 %v1788
        %1806 = vmatprep.subr.bf16.mxu0 0
        %1807 = vmatpush1.bf16.msra.mxu0 %v1787
        %1808 = vmatprep.subr.bf16.mxu0 0
        %1809 = vmatpush1.bf16.msra.mxu0 %v1786
        %1810 = vmatprep.subr.bf16.mxu0 0
        %1811 = vmatpush1.bf16.msra.mxu0 %v1785
        %1812 = vmatprep.subr.bf16.mxu0 0
        %1813 = vmatpush2.bf16.msra.mxu0 0
        %1814 = vmatprep.subr.bf16.mxu0 0
        %1815 = vmatpush2.bf16.msra.mxu0 0
        %1816 = vmatprep.subr.bf16.mxu0 0
        %1817 = vmatpush2.bf16.msra.mxu0 0
        %1818 = vmatprep.subr.bf16.mxu0 0
        %1819 = vmatpush2.bf16.msra.mxu0 0
        %1820 = vmatprep.subr.bf16.mxu0 0
        %1821 = vmatpush2.bf16.msra.mxu0 0
        %1822 = vmatprep.subr.bf16.mxu0 0
        %1823 = vmatpush2.bf16.msra.mxu0 0
        %1824 = vmatprep.subr.bf16.mxu0 0
        %1825 = vmatpush2.bf16.msra.mxu0 0
        %1826 = vmatprep.subr.bf16.mxu0 0
        %1827 = vmatpush2.bf16.msra.mxu0 0
        %1828 = vmatprep.mubr.bf16.mxu0 0
        %1829 = vmatmul.mubr.bf16.gmra.mxu0 %v1794
        %v1830 = vpop.f32.mrf.mxu0
        %v1831 = vadd.f32 0.0, %v1830
        %v1832 = vpop.f32.mrf.mxu0
        %v1833 = vpop.f32.mrf.mxu0
        %v1834 = vadd.f32 0.0, %v1833
        %v1835 = vpop.f32.mrf.mxu0
        %1836 = vdwg.mxu0
        %v1845 = vunpack.c.l.b16 %v1460
        %v1846 = vunpack.c.l.b16 %v1461
        %v1847 = vunpack.c.l.b16 %v1462
        %v1848 = vunpack.c.l.b16 %v1463
        %v1849 = vunpack.c.l.b16 %v1464
        %v1850 = vunpack.c.l.b16 %v1465
        %v1851 = vunpack.c.l.b16 %v1466
        %v1852 = vunpack.c.l.b16 %v1467
        %v1853 = vpack.c.b16 %v1846, %v1845
        %v1854 = vpack.c.b16 %v1848, %v1847
        %v1855 = vpack.c.b16 %v1850, %v1849
        %v1856 = vpack.c.b16 %v1852, %v1851
        %v1862 = vsel %vm1527, %v1643, 0
        %1864 = vmatprep.subr.bf16.mxu0 0
        %1865 = vmatpush1.bf16.msra.mxu0 0
        %1866 = vmatprep.subr.bf16.mxu0 0
        %1867 = vmatpush1.bf16.msra.mxu0 0
        %1868 = vmatprep.subr.bf16.mxu0 0
        %1869 = vmatpush1.bf16.msra.mxu0 0
        %1870 = vmatprep.subr.bf16.mxu0 0
        %1871 = vmatpush1.bf16.msra.mxu0 0
        %1872 = vmatprep.subr.bf16.mxu0 0
        %1873 = vmatpush1.bf16.msra.mxu0 %v1856
        %1874 = vmatprep.subr.bf16.mxu0 0
        %1875 = vmatpush1.bf16.msra.mxu0 %v1855
        %1876 = vmatprep.subr.bf16.mxu0 0
        %1877 = vmatpush1.bf16.msra.mxu0 %v1854
        %1878 = vmatprep.subr.bf16.mxu0 0
        %1879 = vmatpush1.bf16.msra.mxu0 %v1853
        %1880 = vmatprep.subr.bf16.mxu0 0
        %1881 = vmatpush2.bf16.msra.mxu0 0
        %1882 = vmatprep.subr.bf16.mxu0 0
        %1883 = vmatpush2.bf16.msra.mxu0 0
        %1884 = vmatprep.subr.bf16.mxu0 0
        %1885 = vmatpush2.bf16.msra.mxu0 0
        %1886 = vmatprep.subr.bf16.mxu0 0
        %1887 = vmatpush2.bf16.msra.mxu0 0
        %1888 = vmatprep.subr.bf16.mxu0 0
        %1889 = vmatpush2.bf16.msra.mxu0 0
        %1890 = vmatprep.subr.bf16.mxu0 0
        %1891 = vmatpush2.bf16.msra.mxu0 0
        %1892 = vmatprep.subr.bf16.mxu0 0
        %1893 = vmatpush2.bf16.msra.mxu0 0
        %1894 = vmatprep.subr.bf16.mxu0 0
        %1895 = vmatpush2.bf16.msra.mxu0 0
        %1896 = vmatprep.mubr.bf16.mxu0 0
        %1897 = vmatmul.mubr.bf16.gmra.mxu0 %v1862
        %v1898 = vpop.f32.mrf.mxu0
        %v1899 = vadd.f32 %v1831, %v1898
        %v1900 = vpop.f32.mrf.mxu0
        %v1901 = vpop.f32.mrf.mxu0
        %v1902 = vadd.f32 %v1834, %v1901
        %v1903 = vpop.f32.mrf.mxu0
        %1904 = vdwg.mxu0
        %v1905 = vpack.c.bf16 %v1183, %v1179
        %v1906 = vpack.c.bf16 %v1289, %v1285
        %v1907 = vpack.c.bf16 %v1395, %v1391
        %v1909 = vsel %vm1527, %v1905, 0
        %v1912 = vsel %vm1527, %v1906, 0
        %1914 = vmatprep.subr.bf16.mxu0 0
        %1915 = vmatpush1.bf16.xpose.msra.mxu0 0
        %1916 = vmatprep.subr.bf16.mxu0 0
        %1917 = vmatpush1.bf16.xpose.msra.mxu0 0
        %1918 = vmatprep.subr.bf16.mxu0 0
        %1919 = vmatpush1.bf16.xpose.msra.mxu0 0
        %1920 = vmatprep.subr.bf16.mxu0 0
        %1921 = vmatpush1.bf16.xpose.msra.mxu0 0
        %1922 = vmatprep.subr.bf16.mxu0 0
        %1923 = vmatpush1.bf16.xpose.msra.mxu0 0
        %1924 = vmatprep.subr.bf16.mxu0 0
        %1925 = vmatpush1.bf16.xpose.msra.mxu0 0
        %1926 = vmatprep.subr.bf16.mxu0 0
        %1927 = vmatpush1.bf16.xpose.msra.mxu0 0
        %1928 = vmatprep.subr.bf16.mxu0 0
        %1929 = vmatpush1.bf16.xpose.msra.mxu0 %v1912
        %1930 = vmatprep.subr.bf16.mxu0 0
        %1931 = vmatpush2.bf16.xpose.msra.mxu0 0
        %1932 = vmatprep.subr.bf16.mxu0 0
        %1933 = vmatpush2.bf16.xpose.msra.mxu0 0
        %1934 = vmatprep.subr.bf16.mxu0 0
        %1935 = vmatpush2.bf16.xpose.msra.mxu0 0
        %1936 = vmatprep.subr.bf16.mxu0 0
        %1937 = vmatpush2.bf16.xpose.msra.mxu0 0
        %1938 = vmatprep.subr.bf16.mxu0 0
        %1939 = vmatpush2.bf16.xpose.msra.mxu0 0
        %1940 = vmatprep.subr.bf16.mxu0 0
        %1941 = vmatpush2.bf16.xpose.msra.mxu0 0
        %1942 = vmatprep.subr.bf16.mxu0 0
        %1943 = vmatpush2.bf16.xpose.msra.mxu0 0
        %1944 = vmatprep.subr.bf16.mxu0 0
        %1945 = vmatpush2.bf16.xpose.msra.mxu0 0
        %1946 = vmatprep.mubr.bf16.mxu0 0
        %1947 = vmatmul.mubr.bf16.gmra.mxu0 %v1909
        %v1948 = vpop.f32.mrf.mxu0
        %v1949 = vadd.f32 0.0, %v1948
        %v1950 = vpop.f32.mrf.mxu0
        %v1951 = vpop.f32.mrf.mxu0
        %v1952 = vadd.f32 0.0, %v1951
        %v1953 = vpop.f32.mrf.mxu0
        %1954 = vdwg.mxu0
        %v1955 = vsel %vm1575, %v1949, -inf
        %1956 = vmax.xlane.f32.xlu0 %v1955
        %v1957 = vpop.xlane.xlu0 %1956
        %v1958 = vsel %vm1575, %v1952, -inf
        %1959 = vmax.xlane.f32.xlu0 %v1958
        %v1960 = vpop.xlane.xlu0 %1959
        %v1961 = vsub.f32 %v1949, %v1957
        %v1962 = vsub.f32 %v1952, %v1960
        %v1963 = vmul.f32 %v1961, 1.442695
        %v1964 = vpow.pop %v1963
        %v1965 = vmul.f32 %v1962, 1.442695
        %v1966 = vpow.pop %v1965
        %v1967 = vsel %vm1575, %v1964, 0.0
        %1968 = vadd.xlane.f32.xlu0 %v1967
        %v1969 = vpop.xlane.xlu0 %1968
        %v1970 = vsel %vm1575, %v1966, 0.0
        %1971 = vadd.xlane.f32.xlu0 %v1970
        %v1972 = vpop.xlane.xlu0 %1971
        %v1973 = vrcp.pop %v1969
        %v1974 = vrcp.pop %v1972
        %v1975 = vmul.f32 %v1964, %v1973
        %v1976 = vmul.f32 %v1966, %v1974
        %v1977 = vpack.c.bf16 %v1976, %v1975
        %v1979 = vsel %vm1575, %v1977, 0
        %1981 = vmatprep.subr.bf16.mxu0 0
        %1982 = vmatpush1.bf16.msra.mxu0 0
        %1983 = vmatprep.subr.bf16.mxu0 0
        %1984 = vmatpush1.bf16.msra.mxu0 0
        %1985 = vmatprep.subr.bf16.mxu0 0
        %1986 = vmatpush1.bf16.msra.mxu0 0
        %1987 = vmatprep.subr.bf16.mxu0 0
        %1988 = vmatpush1.bf16.msra.mxu0 0
        %1989 = vmatprep.subr.bf16.mxu0 0
        %1990 = vmatpush1.bf16.msra.mxu0 0
        %1991 = vmatprep.subr.bf16.mxu0 0
        %1992 = vmatpush1.bf16.msra.mxu0 0
        %1993 = vmatprep.subr.bf16.mxu0 0
        %1994 = vmatpush1.bf16.msra.mxu0 0
        %1995 = vmatprep.subr.bf16.mxu0 0
        %1996 = vmatpush1.bf16.msra.mxu0 %v1907
        %1997 = vmatprep.subr.bf16.mxu0 0
        %1998 = vmatpush2.bf16.msra.mxu0 0
        %1999 = vmatprep.subr.bf16.mxu0 0
        %2000 = vmatpush2.bf16.msra.mxu0 0
        %2001 = vmatprep.subr.bf16.mxu0 0
        %2002 = vmatpush2.bf16.msra.mxu0 0
        %2003 = vmatprep.subr.bf16.mxu0 0
        %2004 = vmatpush2.bf16.msra.mxu0 0
        %2005 = vmatprep.subr.bf16.mxu0 0
        %2006 = vmatpush2.bf16.msra.mxu0 0
        %2007 = vmatprep.subr.bf16.mxu0 0
        %2008 = vmatpush2.bf16.msra.mxu0 0
        %2009 = vmatprep.subr.bf16.mxu0 0
        %2010 = vmatpush2.bf16.msra.mxu0 0
        %2011 = vmatprep.subr.bf16.mxu0 0
        %2012 = vmatpush2.bf16.msra.mxu0 0
        %2013 = vmatprep.mubr.bf16.mxu0 0
        %2014 = vmatmul.mubr.bf16.gmra.mxu0 %v1979
        %v2015 = vpop.f32.mrf.mxu0
        %v2016 = vadd.f32 0.0, %v2015
        %v2017 = vpop.f32.mrf.mxu0
        %v2018 = vpop.f32.mrf.mxu0
        %v2019 = vadd.f32 0.0, %v2018
        %v2020 = vpop.f32.mrf.mxu0
        %2021 = vdwg.mxu0
        %v2022 = vpack.c.bf16 %v2019, %v2016
        %v2031 = vunpack.c.l.b16 %v1476
        %v2032 = vunpack.c.l.b16 %v1477
        %v2033 = vunpack.c.l.b16 %v1478
        %v2034 = vunpack.c.l.b16 %v1479
        %v2035 = vunpack.c.l.b16 %v1480
        %v2036 = vunpack.c.l.b16 %v1481
        %v2037 = vunpack.c.l.b16 %v1482
        %v2038 = vunpack.c.l.b16 %v1483
        %v2039 = vpack.c.b16 %v2032, %v2031
        %v2040 = vpack.c.b16 %v2034, %v2033
        %v2041 = vpack.c.b16 %v2036, %v2035
        %v2042 = vpack.c.b16 %v2038, %v2037
        %v2048 = vsel %vm1527, %v2022, 0
        %2050 = vmatprep.subr.bf16.mxu0 0
        %2051 = vmatpush1.bf16.msra.mxu0 0
        %2052 = vmatprep.subr.bf16.mxu0 0
        %2053 = vmatpush1.bf16.msra.mxu0 0
        %2054 = vmatprep.subr.bf16.mxu0 0
        %2055 = vmatpush1.bf16.msra.mxu0 0
        %2056 = vmatprep.subr.bf16.mxu0 0
        %2057 = vmatpush1.bf16.msra.mxu0 0
        %2058 = vmatprep.subr.bf16.mxu0 0
        %2059 = vmatpush1.bf16.msra.mxu0 %v2042
        %2060 = vmatprep.subr.bf16.mxu0 0
        %2061 = vmatpush1.bf16.msra.mxu0 %v2041
        %2062 = vmatprep.subr.bf16.mxu0 0
        %2063 = vmatpush1.bf16.msra.mxu0 %v2040
        %2064 = vmatprep.subr.bf16.mxu0 0
        %2065 = vmatpush1.bf16.msra.mxu0 %v2039
        %2066 = vmatprep.subr.bf16.mxu0 0
        %2067 = vmatpush2.bf16.msra.mxu0 0
        %2068 = vmatprep.subr.bf16.mxu0 0
        %2069 = vmatpush2.bf16.msra.mxu0 0
        %2070 = vmatprep.subr.bf16.mxu0 0
        %2071 = vmatpush2.bf16.msra.mxu0 0
        %2072 = vmatprep.subr.bf16.mxu0 0
        %2073 = vmatpush2.bf16.msra.mxu0 0
        %2074 = vmatprep.subr.bf16.mxu0 0
        %2075 = vmatpush2.bf16.msra.mxu0 0
        %2076 = vmatprep.subr.bf16.mxu0 0
        %2077 = vmatpush2.bf16.msra.mxu0 0
        %2078 = vmatprep.subr.bf16.mxu0 0
        %2079 = vmatpush2.bf16.msra.mxu0 0
        %2080 = vmatprep.subr.bf16.mxu0 0
        %2081 = vmatpush2.bf16.msra.mxu0 0
        %2082 = vmatprep.mubr.bf16.mxu0 0
        %2083 = vmatmul.mubr.bf16.gmra.mxu0 %v2048
        %v2084 = vpop.f32.mrf.mxu0
        %v2085 = vadd.f32 0.0, %v2084
        %v2086 = vpop.f32.mrf.mxu0
        %v2087 = vpop.f32.mrf.mxu0
        %v2088 = vadd.f32 0.0, %v2087
        %v2089 = vpop.f32.mrf.mxu0
        %2090 = vdwg.mxu0
        %v2091 = vadd.f32 %v1899, %v2085
        %v2092 = vadd.f32 %v1902, %v2088
        %2094 = vrot.lane.b32.xlu0 %v1905, 64
        %v2095 = vpop.permute.xlu0 %2094
        %2097 = vrot.lane.b32.xlu0 %v1906, 64
        %v2098 = vpop.permute.xlu0 %2097
        %v2100 = vsel %vm1527, %v2095, 0
        %v2103 = vsel %vm1527, %v2098, 0
        %2105 = vmatprep.subr.bf16.mxu0 0
        %2106 = vmatpush1.bf16.xpose.msra.mxu0 0
        %2107 = vmatprep.subr.bf16.mxu0 0
        %2108 = vmatpush1.bf16.xpose.msra.mxu0 0
        %2109 = vmatprep.subr.bf16.mxu0 0
        %2110 = vmatpush1.bf16.xpose.msra.mxu0 0
        %2111 = vmatprep.subr.bf16.mxu0 0
        %2112 = vmatpush1.bf16.xpose.msra.mxu0 0
        %2113 = vmatprep.subr.bf16.mxu0 0
        %2114 = vmatpush1.bf16.xpose.msra.mxu0 0
        %2115 = vmatprep.subr.bf16.mxu0 0
        %2116 = vmatpush1.bf16.xpose.msra.mxu0 0
        %2117 = vmatprep.subr.bf16.mxu0 0
        %2118 = vmatpush1.bf16.xpose.msra.mxu0 0
        %2119 = vmatprep.subr.bf16.mxu0 0
        %2120 = vmatpush1.bf16.xpose.msra.mxu0 %v2103
        %2121 = vmatprep.subr.bf16.mxu0 0
        %2122 = vmatpush2.bf16.xpose.msra.mxu0 0
        %2123 = vmatprep.subr.bf16.mxu0 0
        %2124 = vmatpush2.bf16.xpose.msra.mxu0 0
        %2125 = vmatprep.subr.bf16.mxu0 0
        %2126 = vmatpush2.bf16.xpose.msra.mxu0 0
        %2127 = vmatprep.subr.bf16.mxu0 0
        %2128 = vmatpush2.bf16.xpose.msra.mxu0 0
        %2129 = vmatprep.subr.bf16.mxu0 0
        %2130 = vmatpush2.bf16.xpose.msra.mxu0 0
        %2131 = vmatprep.subr.bf16.mxu0 0
        %2132 = vmatpush2.bf16.xpose.msra.mxu0 0
        %2133 = vmatprep.subr.bf16.mxu0 0
        %2134 = vmatpush2.bf16.xpose.msra.mxu0 0
        %2135 = vmatprep.subr.bf16.mxu0 0
        %2136 = vmatpush2.bf16.xpose.msra.mxu0 0
        %2137 = vmatprep.mubr.bf16.mxu0 0
        %2138 = vmatmul.mubr.bf16.gmra.mxu0 %v2100
        %v2139 = vpop.f32.mrf.mxu0
        %v2140 = vadd.f32 0.0, %v2139
        %v2141 = vpop.f32.mrf.mxu0
        %v2142 = vpop.f32.mrf.mxu0
        %v2143 = vadd.f32 0.0, %v2142
        %v2144 = vpop.f32.mrf.mxu0
        %2145 = vdwg.mxu0
        %v2146 = vsel %vm1575, %v2140, -inf
        %2147 = vmax.xlane.f32.xlu0 %v2146
        %v2148 = vpop.xlane.xlu0 %2147
        %v2149 = vsel %vm1575, %v2143, -inf
        %2150 = vmax.xlane.f32.xlu0 %v2149
        %v2151 = vpop.xlane.xlu0 %2150
        %v2152 = vsub.f32 %v2140, %v2148
        %v2153 = vsub.f32 %v2143, %v2151
        %v2154 = vmul.f32 %v2152, 1.442695
        %v2155 = vpow.pop %v2154
        %v2156 = vmul.f32 %v2153, 1.442695
        %v2157 = vpow.pop %v2156
        %v2158 = vsel %vm1575, %v2155, 0.0
        %2159 = vadd.xlane.f32.xlu0 %v2158
        %v2160 = vpop.xlane.xlu0 %2159
        %v2161 = vsel %vm1575, %v2157, 0.0
        %2162 = vadd.xlane.f32.xlu0 %v2161
        %v2163 = vpop.xlane.xlu0 %2162
        %v2164 = vrcp.pop %v2160
        %v2165 = vrcp.pop %v2163
        %v2166 = vmul.f32 %v2155, %v2164
        %v2167 = vmul.f32 %v2157, %v2165
        %v2168 = vpack.c.bf16 %v2167, %v2166
        %2170 = vrot.lane.b32.xlu0 %v1907, 64
        %v2171 = vpop.permute.xlu0 %2170
        %v2174 = vsel %vm1575, %v2168, 0
        %2176 = vmatprep.subr.bf16.mxu0 0
        %2177 = vmatpush1.bf16.msra.mxu0 0
        %2178 = vmatprep.subr.bf16.mxu0 0
        %2179 = vmatpush1.bf16.msra.mxu0 0
        %2180 = vmatprep.subr.bf16.mxu0 0
        %2181 = vmatpush1.bf16.msra.mxu0 0
        %2182 = vmatprep.subr.bf16.mxu0 0
        %2183 = vmatpush1.bf16.msra.mxu0 0
        %2184 = vmatprep.subr.bf16.mxu0 0
        %2185 = vmatpush1.bf16.msra.mxu0 0
        %2186 = vmatprep.subr.bf16.mxu0 0
        %2187 = vmatpush1.bf16.msra.mxu0 0
        %2188 = vmatprep.subr.bf16.mxu0 0
        %2189 = vmatpush1.bf16.msra.mxu0 0
        %2190 = vmatprep.subr.bf16.mxu0 0
        %2191 = vmatpush1.bf16.msra.mxu0 %v2171
        %2192 = vmatprep.subr.bf16.mxu0 0
        %2193 = vmatpush2.bf16.msra.mxu0 0
        %2194 = vmatprep.subr.bf16.mxu0 0
        %2195 = vmatpush2.bf16.msra.mxu0 0
        %2196 = vmatprep.subr.bf16.mxu0 0
        %2197 = vmatpush2.bf16.msra.mxu0 0
        %2198 = vmatprep.subr.bf16.mxu0 0
        %2199 = vmatpush2.bf16.msra.mxu0 0
        %2200 = vmatprep.subr.bf16.mxu0 0
        %2201 = vmatpush2.bf16.msra.mxu0 0
        %2202 = vmatprep.subr.bf16.mxu0 0
        %2203 = vmatpush2.bf16.msra.mxu0 0
        %2204 = vmatprep.subr.bf16.mxu0 0
        %2205 = vmatpush2.bf16.msra.mxu0 0
        %2206 = vmatprep.subr.bf16.mxu0 0
        %2207 = vmatpush2.bf16.msra.mxu0 0
        %2208 = vmatprep.mubr.bf16.mxu0 0
        %2209 = vmatmul.mubr.bf16.gmra.mxu0 %v2174
        %v2210 = vpop.f32.mrf.mxu0
        %v2211 = vadd.f32 0.0, %v2210
        %v2212 = vpop.f32.mrf.mxu0
        %v2213 = vpop.f32.mrf.mxu0
        %v2214 = vadd.f32 0.0, %v2213
        %v2215 = vpop.f32.mrf.mxu0
        %2216 = vdwg.mxu0
        %v2217 = vpack.c.bf16 %v2214, %v2211
        %v2226 = vunpack.c.l.b16 %v1484
        %v2227 = vunpack.c.l.b16 %v1485
        %v2228 = vunpack.c.l.b16 %v1486
        %v2229 = vunpack.c.l.b16 %v1487
        %v2230 = vunpack.c.l.b16 %v1488
        %v2231 = vunpack.c.l.b16 %v1489
        %v2232 = vunpack.c.l.b16 %v1490
        %v2233 = vunpack.c.l.b16 %v1491
        %v2234 = vpack.c.b16 %v2227, %v2226
        %v2235 = vpack.c.b16 %v2229, %v2228
        %v2236 = vpack.c.b16 %v2231, %v2230
        %v2237 = vpack.c.b16 %v2233, %v2232
        %v2243 = vsel %vm1527, %v2217, 0
        %2245 = vmatprep.subr.bf16.mxu0 0
        %2246 = vmatpush1.bf16.msra.mxu0 0
        %2247 = vmatprep.subr.bf16.mxu0 0
        %2248 = vmatpush1.bf16.msra.mxu0 0
        %2249 = vmatprep.subr.bf16.mxu0 0
        %2250 = vmatpush1.bf16.msra.mxu0 0
        %2251 = vmatprep.subr.bf16.mxu0 0
        %2252 = vmatpush1.bf16.msra.mxu0 0
        %2253 = vmatprep.subr.bf16.mxu0 0
        %2254 = vmatpush1.bf16.msra.mxu0 %v2237
        %2255 = vmatprep.subr.bf16.mxu0 0
        %2256 = vmatpush1.bf16.msra.mxu0 %v2236
        %2257 = vmatprep.subr.bf16.mxu0 0
        %2258 = vmatpush1.bf16.msra.mxu0 %v2235
        %2259 = vmatprep.subr.bf16.mxu0 0
        %2260 = vmatpush1.bf16.msra.mxu0 %v2234
        %2261 = vmatprep.subr.bf16.mxu0 0
        %2262 = vmatpush2.bf16.msra.mxu0 0
        %2263 = vmatprep.subr.bf16.mxu0 0
        %2264 = vmatpush2.bf16.msra.mxu0 0
        %2265 = vmatprep.subr.bf16.mxu0 0
        %2266 = vmatpush2.bf16.msra.mxu0 0
        %2267 = vmatprep.subr.bf16.mxu0 0
        %2268 = vmatpush2.bf16.msra.mxu0 0
        %2269 = vmatprep.subr.bf16.mxu0 0
        %2270 = vmatpush2.bf16.msra.mxu0 0
        %2271 = vmatprep.subr.bf16.mxu0 0
        %2272 = vmatpush2.bf16.msra.mxu0 0
        %2273 = vmatprep.subr.bf16.mxu0 0
        %2274 = vmatpush2.bf16.msra.mxu0 0
        %2275 = vmatprep.subr.bf16.mxu0 0
        %2276 = vmatpush2.bf16.msra.mxu0 0
        %2277 = vmatprep.mubr.bf16.mxu0 0
        %2278 = vmatmul.mubr.bf16.gmra.mxu0 %v2243
        %v2279 = vpop.f32.mrf.mxu0
        %v2280 = vadd.f32 0.0, %v2279
        %v2281 = vpop.f32.mrf.mxu0
        %v2282 = vpop.f32.mrf.mxu0
        %v2283 = vadd.f32 0.0, %v2282
        %v2284 = vpop.f32.mrf.mxu0
        %2285 = vdwg.mxu0
        %v2286 = vadd.f32 %v2091, %v2280
        %v2287 = vadd.f32 %v2092, %v2283
        %v2288 = vpack.c.bf16 %v1234, %v1230
        %v2289 = vpack.c.bf16 %v1340, %v1336
        %v2290 = vpack.c.bf16 %v1446, %v1442
        %v2292 = vsel %vm1527, %v2288, 0
        %v2295 = vsel %vm1527, %v2289, 0
        %2297 = vmatprep.subr.bf16.mxu0 0
        %2298 = vmatpush1.bf16.xpose.msra.mxu0 0
        %2299 = vmatprep.subr.bf16.mxu0 0
        %2300 = vmatpush1.bf16.xpose.msra.mxu0 0
        %2301 = vmatprep.subr.bf16.mxu0 0
        %2302 = vmatpush1.bf16.xpose.msra.mxu0 0
        %2303 = vmatprep.subr.bf16.mxu0 0
        %2304 = vmatpush1.bf16.xpose.msra.mxu0 0
        %2305 = vmatprep.subr.bf16.mxu0 0
        %2306 = vmatpush1.bf16.xpose.msra.mxu0 0
        %2307 = vmatprep.subr.bf16.mxu0 0
        %2308 = vmatpush1.bf16.xpose.msra.mxu0 0
        %2309 = vmatprep.subr.bf16.mxu0 0
        %2310 = vmatpush1.bf16.xpose.msra.mxu0 0
        %2311 = vmatprep.subr.bf16.mxu0 0
        %2312 = vmatpush1.bf16.xpose.msra.mxu0 %v2295
        %2313 = vmatprep.subr.bf16.mxu0 0
        %2314 = vmatpush2.bf16.xpose.msra.mxu0 0
        %2315 = vmatprep.subr.bf16.mxu0 0
        %2316 = vmatpush2.bf16.xpose.msra.mxu0 0
        %2317 = vmatprep.subr.bf16.mxu0 0
        %2318 = vmatpush2.bf16.xpose.msra.mxu0 0
        %2319 = vmatprep.subr.bf16.mxu0 0
        %2320 = vmatpush2.bf16.xpose.msra.mxu0 0
        %2321 = vmatprep.subr.bf16.mxu0 0
        %2322 = vmatpush2.bf16.xpose.msra.mxu0 0
        %2323 = vmatprep.subr.bf16.mxu0 0
        %2324 = vmatpush2.bf16.xpose.msra.mxu0 0
        %2325 = vmatprep.subr.bf16.mxu0 0
        %2326 = vmatpush2.bf16.xpose.msra.mxu0 0
        %2327 = vmatprep.subr.bf16.mxu0 0
        %2328 = vmatpush2.bf16.xpose.msra.mxu0 0
        %2329 = vmatprep.mubr.bf16.mxu0 0
        %2330 = vmatmul.mubr.bf16.gmra.mxu0 %v2292
        %v2331 = vpop.f32.mrf.mxu0
        %v2332 = vadd.f32 0.0, %v2331
        %v2333 = vpop.f32.mrf.mxu0
        %v2334 = vpop.f32.mrf.mxu0
        %v2335 = vadd.f32 0.0, %v2334
        %v2336 = vpop.f32.mrf.mxu0
        %2337 = vdwg.mxu0
        %v2338 = vsel %vm1575, %v2332, -inf
        %2339 = vmax.xlane.f32.xlu0 %v2338
        %v2340 = vpop.xlane.xlu0 %2339
        %v2341 = vsel %vm1575, %v2335, -inf
        %2342 = vmax.xlane.f32.xlu0 %v2341
        %v2343 = vpop.xlane.xlu0 %2342
        %v2344 = vsub.f32 %v2332, %v2340
        %v2345 = vsub.f32 %v2335, %v2343
        %v2346 = vmul.f32 %v2344, 1.442695
        %v2347 = vpow.pop %v2346
        %v2348 = vmul.f32 %v2345, 1.442695
        %v2349 = vpow.pop %v2348
        %v2350 = vsel %vm1575, %v2347, 0.0
        %2351 = vadd.xlane.f32.xlu0 %v2350
        %v2352 = vpop.xlane.xlu0 %2351
        %v2353 = vsel %vm1575, %v2349, 0.0
        %2354 = vadd.xlane.f32.xlu0 %v2353
        %v2355 = vpop.xlane.xlu0 %2354
        %v2356 = vrcp.pop %v2352
        %v2357 = vrcp.pop %v2355
        %v2358 = vmul.f32 %v2347, %v2356
        %v2359 = vmul.f32 %v2349, %v2357
        %v2360 = vpack.c.bf16 %v2359, %v2358
        %v2362 = vsel %vm1575, %v2360, 0
        %2364 = vmatprep.subr.bf16.mxu0 0
        %2365 = vmatpush1.bf16.msra.mxu0 0
        %2366 = vmatprep.subr.bf16.mxu0 0
        %2367 = vmatpush1.bf16.msra.mxu0 0
        %2368 = vmatprep.subr.bf16.mxu0 0
        %2369 = vmatpush1.bf16.msra.mxu0 0
        %2370 = vmatprep.subr.bf16.mxu0 0
        %2371 = vmatpush1.bf16.msra.mxu0 0
        %2372 = vmatprep.subr.bf16.mxu0 0
        %2373 = vmatpush1.bf16.msra.mxu0 0
        %2374 = vmatprep.subr.bf16.mxu0 0
        %2375 = vmatpush1.bf16.msra.mxu0 0
        %2376 = vmatprep.subr.bf16.mxu0 0
        %2377 = vmatpush1.bf16.msra.mxu0 0
        %2378 = vmatprep.subr.bf16.mxu0 0
        %2379 = vmatpush1.bf16.msra.mxu0 %v2290
        %2380 = vmatprep.subr.bf16.mxu0 0
        %2381 = vmatpush2.bf16.msra.mxu0 0
        %2382 = vmatprep.subr.bf16.mxu0 0
        %2383 = vmatpush2.bf16.msra.mxu0 0
        %2384 = vmatprep.subr.bf16.mxu0 0
        %2385 = vmatpush2.bf16.msra.mxu0 0
        %2386 = vmatprep.subr.bf16.mxu0 0
        %2387 = vmatpush2.bf16.msra.mxu0 0
        %2388 = vmatprep.subr.bf16.mxu0 0
        %2389 = vmatpush2.bf16.msra.mxu0 0
        %2390 = vmatprep.subr.bf16.mxu0 0
        %2391 = vmatpush2.bf16.msra.mxu0 0
        %2392 = vmatprep.subr.bf16.mxu0 0
        %2393 = vmatpush2.bf16.msra.mxu0 0
        %2394 = vmatprep.subr.bf16.mxu0 0
        %2395 = vmatpush2.bf16.msra.mxu0 0
        %2396 = vmatprep.mubr.bf16.mxu0 0
        %2397 = vmatmul.mubr.bf16.gmra.mxu0 %v2362
        %v2398 = vpop.f32.mrf.mxu0
        %v2399 = vadd.f32 0.0, %v2398
        %v2400 = vpop.f32.mrf.mxu0
        %v2401 = vpop.f32.mrf.mxu0
        %v2402 = vadd.f32 0.0, %v2401
        %v2403 = vpop.f32.mrf.mxu0
        %2404 = vdwg.mxu0
        %v2405 = vpack.c.bf16 %v2402, %v2399
        %v2414 = vunpack.c.l.b16 %v1492
        %v2415 = vunpack.c.l.b16 %v1493
        %v2416 = vunpack.c.l.b16 %v1494
        %v2417 = vunpack.c.l.b16 %v1495
        %v2418 = vunpack.c.l.b16 %v1496
        %v2419 = vunpack.c.l.b16 %v1497
        %v2420 = vunpack.c.l.b16 %v1498
        %v2421 = vunpack.c.l.b16 %v1499
        %v2422 = vpack.c.b16 %v2415, %v2414
        %v2423 = vpack.c.b16 %v2417, %v2416
        %v2424 = vpack.c.b16 %v2419, %v2418
        %v2425 = vpack.c.b16 %v2421, %v2420
        %v2431 = vsel %vm1527, %v2405, 0
        %2433 = vmatprep.subr.bf16.mxu0 0
        %2434 = vmatpush1.bf16.msra.mxu0 0
        %2435 = vmatprep.subr.bf16.mxu0 0
        %2436 = vmatpush1.bf16.msra.mxu0 0
        %2437 = vmatprep.subr.bf16.mxu0 0
        %2438 = vmatpush1.bf16.msra.mxu0 0
        %2439 = vmatprep.subr.bf16.mxu0 0
        %2440 = vmatpush1.bf16.msra.mxu0 0
        %2441 = vmatprep.subr.bf16.mxu0 0
        %2442 = vmatpush1.bf16.msra.mxu0 %v2425
        %2443 = vmatprep.subr.bf16.mxu0 0
        %2444 = vmatpush1.bf16.msra.mxu0 %v2424
        %2445 = vmatprep.subr.bf16.mxu0 0
        %2446 = vmatpush1.bf16.msra.mxu0 %v2423
        %2447 = vmatprep.subr.bf16.mxu0 0
        %2448 = vmatpush1.bf16.msra.mxu0 %v2422
        %2449 = vmatprep.subr.bf16.mxu0 0
        %2450 = vmatpush2.bf16.msra.mxu0 0
        %2451 = vmatprep.subr.bf16.mxu0 0
        %2452 = vmatpush2.bf16.msra.mxu0 0
        %2453 = vmatprep.subr.bf16.mxu0 0
        %2454 = vmatpush2.bf16.msra.mxu0 0
        %2455 = vmatprep.subr.bf16.mxu0 0
        %2456 = vmatpush2.bf16.msra.mxu0 0
        %2457 = vmatprep.subr.bf16.mxu0 0
        %2458 = vmatpush2.bf16.msra.mxu0 0
        %2459 = vmatprep.subr.bf16.mxu0 0
        %2460 = vmatpush2.bf16.msra.mxu0 0
        %2461 = vmatprep.subr.bf16.mxu0 0
        %2462 = vmatpush2.bf16.msra.mxu0 0
        %2463 = vmatprep.subr.bf16.mxu0 0
        %2464 = vmatpush2.bf16.msra.mxu0 0
        %2465 = vmatprep.mubr.bf16.mxu0 0
        %2466 = vmatmul.mubr.bf16.gmra.mxu0 %v2431
        %v2467 = vpop.f32.mrf.mxu0
        %v2468 = vadd.f32 0.0, %v2467
        %v2469 = vpop.f32.mrf.mxu0
        %v2470 = vpop.f32.mrf.mxu0
        %v2471 = vadd.f32 0.0, %v2470
        %v2472 = vpop.f32.mrf.mxu0
        %2473 = vdwg.mxu0
        %v2474 = vadd.f32 %v2286, %v2468
        %v2475 = vadd.f32 %v2287, %v2471
        %2477 = vrot.lane.b32.xlu0 %v2288, 64
        %v2478 = vpop.permute.xlu0 %2477
        %2480 = vrot.lane.b32.xlu0 %v2289, 64
        %v2481 = vpop.permute.xlu0 %2480
        %v2483 = vsel %vm1527, %v2478, 0
        %v2486 = vsel %vm1527, %v2481, 0
        %2488 = vmatprep.subr.bf16.mxu0 0
        %2489 = vmatpush1.bf16.xpose.msra.mxu0 0
        %2490 = vmatprep.subr.bf16.mxu0 0
        %2491 = vmatpush1.bf16.xpose.msra.mxu0 0
        %2492 = vmatprep.subr.bf16.mxu0 0
        %2493 = vmatpush1.bf16.xpose.msra.mxu0 0
        %2494 = vmatprep.subr.bf16.mxu0 0
        %2495 = vmatpush1.bf16.xpose.msra.mxu0 0
        %2496 = vmatprep.subr.bf16.mxu0 0
        %2497 = vmatpush1.bf16.xpose.msra.mxu0 0
        %2498 = vmatprep.subr.bf16.mxu0 0
        %2499 = vmatpush1.bf16.xpose.msra.mxu0 0
        %2500 = vmatprep.subr.bf16.mxu0 0
        %2501 = vmatpush1.bf16.xpose.msra.mxu0 0
        %2502 = vmatprep.subr.bf16.mxu0 0
        %2503 = vmatpush1.bf16.xpose.msra.mxu0 %v2486
        %2504 = vmatprep.subr.bf16.mxu0 0
        %2505 = vmatpush2.bf16.xpose.msra.mxu0 0
        %2506 = vmatprep.subr.bf16.mxu0 0
        %2507 = vmatpush2.bf16.xpose.msra.mxu0 0
        %2508 = vmatprep.subr.bf16.mxu0 0
        %2509 = vmatpush2.bf16.xpose.msra.mxu0 0
        %2510 = vmatprep.subr.bf16.mxu0 0
        %2511 = vmatpush2.bf16.xpose.msra.mxu0 0
        %2512 = vmatprep.subr.bf16.mxu0 0
        %2513 = vmatpush2.bf16.xpose.msra.mxu0 0
        %2514 = vmatprep.subr.bf16.mxu0 0
        %2515 = vmatpush2.bf16.xpose.msra.mxu0 0
        %2516 = vmatprep.subr.bf16.mxu0 0
        %2517 = vmatpush2.bf16.xpose.msra.mxu0 0
        %2518 = vmatprep.subr.bf16.mxu0 0
        %2519 = vmatpush2.bf16.xpose.msra.mxu0 0
        %2520 = vmatprep.mubr.bf16.mxu0 0
        %2521 = vmatmul.mubr.bf16.gmra.mxu0 %v2483
        %v2522 = vpop.f32.mrf.mxu0
        %v2523 = vadd.f32 0.0, %v2522
        %v2524 = vpop.f32.mrf.mxu0
        %v2525 = vpop.f32.mrf.mxu0
        %v2526 = vadd.f32 0.0, %v2525
        %v2527 = vpop.f32.mrf.mxu0
        %2528 = vdwg.mxu0
        %v2529 = vsel %vm1575, %v2523, -inf
        %2530 = vmax.xlane.f32.xlu0 %v2529
        %v2531 = vpop.xlane.xlu0 %2530
        %v2532 = vsel %vm1575, %v2526, -inf
        %2533 = vmax.xlane.f32.xlu0 %v2532
        %v2534 = vpop.xlane.xlu0 %2533
        %v2535 = vsub.f32 %v2523, %v2531
        %v2536 = vsub.f32 %v2526, %v2534
        %v2537 = vmul.f32 %v2535, 1.442695
        %v2538 = vpow.pop %v2537
        %v2539 = vmul.f32 %v2536, 1.442695
        %v2540 = vpow.pop %v2539
        %v2541 = vsel %vm1575, %v2538, 0.0
        %2542 = vadd.xlane.f32.xlu0 %v2541
        %v2543 = vpop.xlane.xlu0 %2542
        %v2544 = vsel %vm1575, %v2540, 0.0
        %2545 = vadd.xlane.f32.xlu0 %v2544
        %v2546 = vpop.xlane.xlu0 %2545
        %v2547 = vrcp.pop %v2543
        %v2548 = vrcp.pop %v2546
        %v2549 = vmul.f32 %v2538, %v2547
        %v2550 = vmul.f32 %v2540, %v2548
        %v2551 = vpack.c.bf16 %v2550, %v2549
        %2553 = vrot.lane.b32.xlu0 %v2290, 64
        %v2554 = vpop.permute.xlu0 %2553
        %v2557 = vsel %vm1575, %v2551, 0
        %2559 = vmatprep.subr.bf16.mxu0 0
        %2560 = vmatpush1.bf16.msra.mxu0 0
        %2561 = vmatprep.subr.bf16.mxu0 0
        %2562 = vmatpush1.bf16.msra.mxu0 0
        %2563 = vmatprep.subr.bf16.mxu0 0
        %2564 = vmatpush1.bf16.msra.mxu0 0
        %2565 = vmatprep.subr.bf16.mxu0 0
        %2566 = vmatpush1.bf16.msra.mxu0 0
        %2567 = vmatprep.subr.bf16.mxu0 0
        %2568 = vmatpush1.bf16.msra.mxu0 0
        %2569 = vmatprep.subr.bf16.mxu0 0
        %2570 = vmatpush1.bf16.msra.mxu0 0
        %2571 = vmatprep.subr.bf16.mxu0 0
        %2572 = vmatpush1.bf16.msra.mxu0 0
        %2573 = vmatprep.subr.bf16.mxu0 0
        %2574 = vmatpush1.bf16.msra.mxu0 %v2554
        %2575 = vmatprep.subr.bf16.mxu0 0
        %2576 = vmatpush2.bf16.msra.mxu0 0
        %2577 = vmatprep.subr.bf16.mxu0 0
        %2578 = vmatpush2.bf16.msra.mxu0 0
        %2579 = vmatprep.subr.bf16.mxu0 0
        %2580 = vmatpush2.bf16.msra.mxu0 0
        %2581 = vmatprep.subr.bf16.mxu0 0
        %2582 = vmatpush2.bf16.msra.mxu0 0
        %2583 = vmatprep.subr.bf16.mxu0 0
        %2584 = vmatpush2.bf16.msra.mxu0 0
        %2585 = vmatprep.subr.bf16.mxu0 0
        %2586 = vmatpush2.bf16.msra.mxu0 0
        %2587 = vmatprep.subr.bf16.mxu0 0
        %2588 = vmatpush2.bf16.msra.mxu0 0
        %2589 = vmatprep.subr.bf16.mxu0 0
        %2590 = vmatpush2.bf16.msra.mxu0 0
        %2591 = vmatprep.mubr.bf16.mxu0 0
        %2592 = vmatmul.mubr.bf16.gmra.mxu0 %v2557
        %v2593 = vpop.f32.mrf.mxu0
        %v2594 = vadd.f32 0.0, %v2593
        %v2595 = vpop.f32.mrf.mxu0
        %v2596 = vpop.f32.mrf.mxu0
        %v2597 = vadd.f32 0.0, %v2596
        %v2598 = vpop.f32.mrf.mxu0
        %2599 = vdwg.mxu0
        %v2600 = vpack.c.bf16 %v2597, %v2594
        %v2609 = vunpack.c.l.b16 %v1500
        %v2610 = vunpack.c.l.b16 %v1501
        %v2611 = vunpack.c.l.b16 %v1502
        %v2612 = vunpack.c.l.b16 %v1503
        %v2613 = vunpack.c.l.b16 %v1504
        %v2614 = vunpack.c.l.b16 %v1505
        %v2615 = vunpack.c.l.b16 %v1506
        %v2616 = vunpack.c.l.b16 %v1507
        %v2617 = vpack.c.b16 %v2610, %v2609
        %v2618 = vpack.c.b16 %v2612, %v2611
        %v2619 = vpack.c.b16 %v2614, %v2613
        %v2620 = vpack.c.b16 %v2616, %v2615
        %v2626 = vsel %vm1527, %v2600, 0
        %2628 = vmatprep.subr.bf16.mxu0 0
        %2629 = vmatpush1.bf16.msra.mxu0 0
        %2630 = vmatprep.subr.bf16.mxu0 0
        %2631 = vmatpush1.bf16.msra.mxu0 0
        %2632 = vmatprep.subr.bf16.mxu0 0
        %2633 = vmatpush1.bf16.msra.mxu0 0
        %2634 = vmatprep.subr.bf16.mxu0 0
        %2635 = vmatpush1.bf16.msra.mxu0 0
        %2636 = vmatprep.subr.bf16.mxu0 0
        %2637 = vmatpush1.bf16.msra.mxu0 %v2620
        %2638 = vmatprep.subr.bf16.mxu0 0
        %2639 = vmatpush1.bf16.msra.mxu0 %v2619
        %2640 = vmatprep.subr.bf16.mxu0 0
        %2641 = vmatpush1.bf16.msra.mxu0 %v2618
        %2642 = vmatprep.subr.bf16.mxu0 0
        %2643 = vmatpush1.bf16.msra.mxu0 %v2617
        %2644 = vmatprep.subr.bf16.mxu0 0
        %2645 = vmatpush2.bf16.msra.mxu0 0
        %2646 = vmatprep.subr.bf16.mxu0 0
        %2647 = vmatpush2.bf16.msra.mxu0 0
        %2648 = vmatprep.subr.bf16.mxu0 0
        %2649 = vmatpush2.bf16.msra.mxu0 0
        %2650 = vmatprep.subr.bf16.mxu0 0
        %2651 = vmatpush2.bf16.msra.mxu0 0
        %2652 = vmatprep.subr.bf16.mxu0 0
        %2653 = vmatpush2.bf16.msra.mxu0 0
        %2654 = vmatprep.subr.bf16.mxu0 0
        %2655 = vmatpush2.bf16.msra.mxu0 0
        %2656 = vmatprep.subr.bf16.mxu0 0
        %2657 = vmatpush2.bf16.msra.mxu0 0
        %2658 = vmatprep.subr.bf16.mxu0 0
        %2659 = vmatpush2.bf16.msra.mxu0 0
        %2660 = vmatprep.mubr.bf16.mxu0 0
        %2661 = vmatmul.mubr.bf16.gmra.mxu0 %v2626
        %v2662 = vpop.f32.mrf.mxu0
        %v2663 = vadd.f32 0.0, %v2662
        %v2664 = vpop.f32.mrf.mxu0
        %v2665 = vpop.f32.mrf.mxu0
        %v2666 = vadd.f32 0.0, %v2665
        %v2667 = vpop.f32.mrf.mxu0
        %2668 = vdwg.mxu0
        %v2669 = vadd.f32 %v2474, %v2663
        %v2670 = vadd.f32 %v2475, %v2666
        %v2671 = vpack.c.bf16 %v1236, %v1232
        %v2672 = vpack.c.bf16 %v1342, %v1338
        %v2673 = vpack.c.bf16 %v1448, %v1444
        %v2675 = vsel %vm1527, %v2671, 0
        %v2678 = vsel %vm1527, %v2672, 0
        %2680 = vmatprep.subr.bf16.mxu0 0
        %2681 = vmatpush1.bf16.xpose.msra.mxu0 0
        %2682 = vmatprep.subr.bf16.mxu0 0
        %2683 = vmatpush1.bf16.xpose.msra.mxu0 0
        %2684 = vmatprep.subr.bf16.mxu0 0
        %2685 = vmatpush1.bf16.xpose.msra.mxu0 0
        %2686 = vmatprep.subr.bf16.mxu0 0
        %2687 = vmatpush1.bf16.xpose.msra.mxu0 0
        %2688 = vmatprep.subr.bf16.mxu0 0
        %2689 = vmatpush1.bf16.xpose.msra.mxu0 0
        %2690 = vmatprep.subr.bf16.mxu0 0
        %2691 = vmatpush1.bf16.xpose.msra.mxu0 0
        %2692 = vmatprep.subr.bf16.mxu0 0
        %2693 = vmatpush1.bf16.xpose.msra.mxu0 0
        %2694 = vmatprep.subr.bf16.mxu0 0
        %2695 = vmatpush1.bf16.xpose.msra.mxu0 %v2678
        %2696 = vmatprep.subr.bf16.mxu0 0
        %2697 = vmatpush2.bf16.xpose.msra.mxu0 0
        %2698 = vmatprep.subr.bf16.mxu0 0
        %2699 = vmatpush2.bf16.xpose.msra.mxu0 0
        %2700 = vmatprep.subr.bf16.mxu0 0
        %2701 = vmatpush2.bf16.xpose.msra.mxu0 0
        %2702 = vmatprep.subr.bf16.mxu0 0
        %2703 = vmatpush2.bf16.xpose.msra.mxu0 0
        %2704 = vmatprep.subr.bf16.mxu0 0
        %2705 = vmatpush2.bf16.xpose.msra.mxu0 0
        %2706 = vmatprep.subr.bf16.mxu0 0
        %2707 = vmatpush2.bf16.xpose.msra.mxu0 0
        %2708 = vmatprep.subr.bf16.mxu0 0
        %2709 = vmatpush2.bf16.xpose.msra.mxu0 0
        %2710 = vmatprep.subr.bf16.mxu0 0
        %2711 = vmatpush2.bf16.xpose.msra.mxu0 0
        %2712 = vmatprep.mubr.bf16.mxu0 0
        %2713 = vmatmul.mubr.bf16.gmra.mxu0 %v2675
        %v2714 = vpop.f32.mrf.mxu0
        %v2715 = vadd.f32 0.0, %v2714
        %v2716 = vpop.f32.mrf.mxu0
        %v2717 = vpop.f32.mrf.mxu0
        %v2718 = vadd.f32 0.0, %v2717
        %v2719 = vpop.f32.mrf.mxu0
        %2720 = vdwg.mxu0
        %v2721 = vsel %vm1575, %v2715, -inf
        %2722 = vmax.xlane.f32.xlu0 %v2721
        %v2723 = vpop.xlane.xlu0 %2722
        %v2724 = vsel %vm1575, %v2718, -inf
        %2725 = vmax.xlane.f32.xlu0 %v2724
        %v2726 = vpop.xlane.xlu0 %2725
        %v2727 = vsub.f32 %v2715, %v2723
        %v2728 = vsub.f32 %v2718, %v2726
        %v2729 = vmul.f32 %v2727, 1.442695
        %v2730 = vpow.pop %v2729
        %v2731 = vmul.f32 %v2728, 1.442695
        %v2732 = vpow.pop %v2731
        %v2733 = vsel %vm1575, %v2730, 0.0
        %2734 = vadd.xlane.f32.xlu0 %v2733
        %v2735 = vpop.xlane.xlu0 %2734
        %v2736 = vsel %vm1575, %v2732, 0.0
        %2737 = vadd.xlane.f32.xlu0 %v2736
        %v2738 = vpop.xlane.xlu0 %2737
        %v2739 = vrcp.pop %v2735
        %v2740 = vrcp.pop %v2738
        %v2741 = vmul.f32 %v2730, %v2739
        %v2742 = vmul.f32 %v2732, %v2740
        %v2743 = vpack.c.bf16 %v2742, %v2741
        %v2745 = vsel %vm1575, %v2743, 0
        %2747 = vmatprep.subr.bf16.mxu0 0
        %2748 = vmatpush1.bf16.msra.mxu0 0
        %2749 = vmatprep.subr.bf16.mxu0 0
        %2750 = vmatpush1.bf16.msra.mxu0 0
        %2751 = vmatprep.subr.bf16.mxu0 0
        %2752 = vmatpush1.bf16.msra.mxu0 0
        %2753 = vmatprep.subr.bf16.mxu0 0
        %2754 = vmatpush1.bf16.msra.mxu0 0
        %2755 = vmatprep.subr.bf16.mxu0 0
        %2756 = vmatpush1.bf16.msra.mxu0 0
        %2757 = vmatprep.subr.bf16.mxu0 0
        %2758 = vmatpush1.bf16.msra.mxu0 0
        %2759 = vmatprep.subr.bf16.mxu0 0
        %2760 = vmatpush1.bf16.msra.mxu0 0
        %2761 = vmatprep.subr.bf16.mxu0 0
        %2762 = vmatpush1.bf16.msra.mxu0 %v2673
        %2763 = vmatprep.subr.bf16.mxu0 0
        %2764 = vmatpush2.bf16.msra.mxu0 0
        %2765 = vmatprep.subr.bf16.mxu0 0
        %2766 = vmatpush2.bf16.msra.mxu0 0
        %2767 = vmatprep.subr.bf16.mxu0 0
        %2768 = vmatpush2.bf16.msra.mxu0 0
        %2769 = vmatprep.subr.bf16.mxu0 0
        %2770 = vmatpush2.bf16.msra.mxu0 0
        %2771 = vmatprep.subr.bf16.mxu0 0
        %2772 = vmatpush2.bf16.msra.mxu0 0
        %2773 = vmatprep.subr.bf16.mxu0 0
        %2774 = vmatpush2.bf16.msra.mxu0 0
        %2775 = vmatprep.subr.bf16.mxu0 0
        %2776 = vmatpush2.bf16.msra.mxu0 0
        %2777 = vmatprep.subr.bf16.mxu0 0
        %2778 = vmatpush2.bf16.msra.mxu0 0
        %2779 = vmatprep.mubr.bf16.mxu0 0
        %2780 = vmatmul.mubr.bf16.gmra.mxu0 %v2745
        %v2781 = vpop.f32.mrf.mxu0
        %v2782 = vadd.f32 0.0, %v2781
        %v2783 = vpop.f32.mrf.mxu0
        %v2784 = vpop.f32.mrf.mxu0
        %v2785 = vadd.f32 0.0, %v2784
        %v2786 = vpop.f32.mrf.mxu0
        %2787 = vdwg.mxu0
        %v2788 = vpack.c.bf16 %v2785, %v2782
        %v2797 = vunpack.c.l.b16 %v1508
        %v2798 = vunpack.c.l.b16 %v1509
        %v2799 = vunpack.c.l.b16 %v1510
        %v2800 = vunpack.c.l.b16 %v1511
        %v2801 = vunpack.c.l.b16 %v1512
        %v2802 = vunpack.c.l.b16 %v1513
        %v2803 = vunpack.c.l.b16 %v1514
        %v2804 = vunpack.c.l.b16 %v1515
        %v2805 = vpack.c.b16 %v2798, %v2797
        %v2806 = vpack.c.b16 %v2800, %v2799
        %v2807 = vpack.c.b16 %v2802, %v2801
        %v2808 = vpack.c.b16 %v2804, %v2803
        %v2814 = vsel %vm1527, %v2788, 0
        %2816 = vmatprep.subr.bf16.mxu0 0
        %2817 = vmatpush1.bf16.msra.mxu0 0
        %2818 = vmatprep.subr.bf16.mxu0 0
        %2819 = vmatpush1.bf16.msra.mxu0 0
        %2820 = vmatprep.subr.bf16.mxu0 0
        %2821 = vmatpush1.bf16.msra.mxu0 0
        %2822 = vmatprep.subr.bf16.mxu0 0
        %2823 = vmatpush1.bf16.msra.mxu0 0
        %2824 = vmatprep.subr.bf16.mxu0 0
        %2825 = vmatpush1.bf16.msra.mxu0 %v2808
        %2826 = vmatprep.subr.bf16.mxu0 0
        %2827 = vmatpush1.bf16.msra.mxu0 %v2807
        %2828 = vmatprep.subr.bf16.mxu0 0
        %2829 = vmatpush1.bf16.msra.mxu0 %v2806
        %2830 = vmatprep.subr.bf16.mxu0 0
        %2831 = vmatpush1.bf16.msra.mxu0 %v2805
        %2832 = vmatprep.subr.bf16.mxu0 0
        %2833 = vmatpush2.bf16.msra.mxu0 0
        %2834 = vmatprep.subr.bf16.mxu0 0
        %2835 = vmatpush2.bf16.msra.mxu0 0
        %2836 = vmatprep.subr.bf16.mxu0 0
        %2837 = vmatpush2.bf16.msra.mxu0 0
        %2838 = vmatprep.subr.bf16.mxu0 0
        %2839 = vmatpush2.bf16.msra.mxu0 0
        %2840 = vmatprep.subr.bf16.mxu0 0
        %2841 = vmatpush2.bf16.msra.mxu0 0
        %2842 = vmatprep.subr.bf16.mxu0 0
        %2843 = vmatpush2.bf16.msra.mxu0 0
        %2844 = vmatprep.subr.bf16.mxu0 0
        %2845 = vmatpush2.bf16.msra.mxu0 0
        %2846 = vmatprep.subr.bf16.mxu0 0
        %2847 = vmatpush2.bf16.msra.mxu0 0
        %2848 = vmatprep.mubr.bf16.mxu0 0
        %2849 = vmatmul.mubr.bf16.gmra.mxu0 %v2814
        %v2850 = vpop.f32.mrf.mxu0
        %v2851 = vadd.f32 0.0, %v2850
        %v2852 = vpop.f32.mrf.mxu0
        %v2853 = vpop.f32.mrf.mxu0
        %v2854 = vadd.f32 0.0, %v2853
        %v2855 = vpop.f32.mrf.mxu0
        %2856 = vdwg.mxu0
        %v2857 = vadd.f32 %v2669, %v2851
        %v2858 = vadd.f32 %v2670, %v2854
        %2860 = vrot.lane.b32.xlu0 %v2671, 64
        %v2861 = vpop.permute.xlu0 %2860
        %2863 = vrot.lane.b32.xlu0 %v2672, 64
        %v2864 = vpop.permute.xlu0 %2863
        %v2866 = vsel %vm1527, %v2861, 0
        %v2869 = vsel %vm1527, %v2864, 0
        %2871 = vmatprep.subr.bf16.mxu0 0
        %2872 = vmatpush1.bf16.xpose.msra.mxu0 0
        %2873 = vmatprep.subr.bf16.mxu0 0
        %2874 = vmatpush1.bf16.xpose.msra.mxu0 0
        %2875 = vmatprep.subr.bf16.mxu0 0
        %2876 = vmatpush1.bf16.xpose.msra.mxu0 0
        %2877 = vmatprep.subr.bf16.mxu0 0
        %2878 = vmatpush1.bf16.xpose.msra.mxu0 0
        %2879 = vmatprep.subr.bf16.mxu0 0
        %2880 = vmatpush1.bf16.xpose.msra.mxu0 0
        %2881 = vmatprep.subr.bf16.mxu0 0
        %2882 = vmatpush1.bf16.xpose.msra.mxu0 0
        %2883 = vmatprep.subr.bf16.mxu0 0
        %2884 = vmatpush1.bf16.xpose.msra.mxu0 0
        %2885 = vmatprep.subr.bf16.mxu0 0
        %2886 = vmatpush1.bf16.xpose.msra.mxu0 %v2869
        %2887 = vmatprep.subr.bf16.mxu0 0
        %2888 = vmatpush2.bf16.xpose.msra.mxu0 0
        %2889 = vmatprep.subr.bf16.mxu0 0
        %2890 = vmatpush2.bf16.xpose.msra.mxu0 0
        %2891 = vmatprep.subr.bf16.mxu0 0
        %2892 = vmatpush2.bf16.xpose.msra.mxu0 0
        %2893 = vmatprep.subr.bf16.mxu0 0
        %2894 = vmatpush2.bf16.xpose.msra.mxu0 0
        %2895 = vmatprep.subr.bf16.mxu0 0
        %2896 = vmatpush2.bf16.xpose.msra.mxu0 0
        %2897 = vmatprep.subr.bf16.mxu0 0
        %2898 = vmatpush2.bf16.xpose.msra.mxu0 0
        %2899 = vmatprep.subr.bf16.mxu0 0
        %2900 = vmatpush2.bf16.xpose.msra.mxu0 0
        %2901 = vmatprep.subr.bf16.mxu0 0
        %2902 = vmatpush2.bf16.xpose.msra.mxu0 0
        %2903 = vmatprep.mubr.bf16.mxu0 0
        %2904 = vmatmul.mubr.bf16.gmra.mxu0 %v2866
        %v2905 = vpop.f32.mrf.mxu0
        %v2906 = vadd.f32 0.0, %v2905
        %v2907 = vpop.f32.mrf.mxu0
        %v2908 = vpop.f32.mrf.mxu0
        %v2909 = vadd.f32 0.0, %v2908
        %v2910 = vpop.f32.mrf.mxu0
        %2911 = vdwg.mxu0
        %v2912 = vsel %vm1575, %v2906, -inf
        %2913 = vmax.xlane.f32.xlu0 %v2912
        %v2914 = vpop.xlane.xlu0 %2913
        %v2915 = vsel %vm1575, %v2909, -inf
        %2916 = vmax.xlane.f32.xlu0 %v2915
        %v2917 = vpop.xlane.xlu0 %2916
        %v2918 = vsub.f32 %v2906, %v2914
        %v2919 = vsub.f32 %v2909, %v2917
        %v2920 = vmul.f32 %v2918, 1.442695
        %v2921 = vpow.pop %v2920
        %v2922 = vmul.f32 %v2919, 1.442695
        %v2923 = vpow.pop %v2922
        %v2924 = vsel %vm1575, %v2921, 0.0
        %2925 = vadd.xlane.f32.xlu0 %v2924
        %v2926 = vpop.xlane.xlu0 %2925
        %v2927 = vsel %vm1575, %v2923, 0.0
        %2928 = vadd.xlane.f32.xlu0 %v2927
        %v2929 = vpop.xlane.xlu0 %2928
        %v2930 = vrcp.pop %v2926
        %v2931 = vrcp.pop %v2929
        %v2932 = vmul.f32 %v2921, %v2930
        %v2933 = vmul.f32 %v2923, %v2931
        %v2934 = vpack.c.bf16 %v2933, %v2932
        %2936 = vrot.lane.b32.xlu0 %v2673, 64
        %v2937 = vpop.permute.xlu0 %2936
        %v2940 = vsel %vm1575, %v2934, 0
        %2942 = vmatprep.subr.bf16.mxu0 0
        %2943 = vmatpush1.bf16.msra.mxu0 0
        %2944 = vmatprep.subr.bf16.mxu0 0
        %2945 = vmatpush1.bf16.msra.mxu0 0
        %2946 = vmatprep.subr.bf16.mxu0 0
        %2947 = vmatpush1.bf16.msra.mxu0 0
        %2948 = vmatprep.subr.bf16.mxu0 0
        %2949 = vmatpush1.bf16.msra.mxu0 0
        %2950 = vmatprep.subr.bf16.mxu0 0
        %2951 = vmatpush1.bf16.msra.mxu0 0
        %2952 = vmatprep.subr.bf16.mxu0 0
        %2953 = vmatpush1.bf16.msra.mxu0 0
        %2954 = vmatprep.subr.bf16.mxu0 0
        %2955 = vmatpush1.bf16.msra.mxu0 0
        %2956 = vmatprep.subr.bf16.mxu0 0
        %2957 = vmatpush1.bf16.msra.mxu0 %v2937
        %2958 = vmatprep.subr.bf16.mxu0 0
        %2959 = vmatpush2.bf16.msra.mxu0 0
        %2960 = vmatprep.subr.bf16.mxu0 0
        %2961 = vmatpush2.bf16.msra.mxu0 0
        %2962 = vmatprep.subr.bf16.mxu0 0
        %2963 = vmatpush2.bf16.msra.mxu0 0
        %2964 = vmatprep.subr.bf16.mxu0 0
        %2965 = vmatpush2.bf16.msra.mxu0 0
        %2966 = vmatprep.subr.bf16.mxu0 0
        %2967 = vmatpush2.bf16.msra.mxu0 0
        %2968 = vmatprep.subr.bf16.mxu0 0
        %2969 = vmatpush2.bf16.msra.mxu0 0
        %2970 = vmatprep.subr.bf16.mxu0 0
        %2971 = vmatpush2.bf16.msra.mxu0 0
        %2972 = vmatprep.subr.bf16.mxu0 0
        %2973 = vmatpush2.bf16.msra.mxu0 0
        %2974 = vmatprep.mubr.bf16.mxu0 0
        %2975 = vmatmul.mubr.bf16.gmra.mxu0 %v2940
        %v2976 = vpop.f32.mrf.mxu0
        %v2977 = vadd.f32 0.0, %v2976
        %v2978 = vpop.f32.mrf.mxu0
        %v2979 = vpop.f32.mrf.mxu0
        %v2980 = vadd.f32 0.0, %v2979
        %v2981 = vpop.f32.mrf.mxu0
        %2982 = vdwg.mxu0
        %v2983 = vpack.c.bf16 %v2980, %v2977
        %v2992 = vunpack.c.l.b16 %v1516
        %v2993 = vunpack.c.l.b16 %v1517
        %v2994 = vunpack.c.l.b16 %v1518
        %v2995 = vunpack.c.l.b16 %v1519
        %v2996 = vunpack.c.l.b16 %v1520
        %v2997 = vunpack.c.l.b16 %v1521
        %v2998 = vunpack.c.l.b16 %v1522
        %v2999 = vunpack.c.l.b16 %v1523
        %v3000 = vpack.c.b16 %v2993, %v2992
        %v3001 = vpack.c.b16 %v2995, %v2994
        %v3002 = vpack.c.b16 %v2997, %v2996
        %v3003 = vpack.c.b16 %v2999, %v2998
        %v3009 = vsel %vm1527, %v2983, 0
        %3011 = vmatprep.subr.bf16.mxu0 0
        %3012 = vmatpush1.bf16.msra.mxu0 0
        %3013 = vmatprep.subr.bf16.mxu0 0
        %3014 = vmatpush1.bf16.msra.mxu0 0
        %3015 = vmatprep.subr.bf16.mxu0 0
        %3016 = vmatpush1.bf16.msra.mxu0 0
        %3017 = vmatprep.subr.bf16.mxu0 0
        %3018 = vmatpush1.bf16.msra.mxu0 0
        %3019 = vmatprep.subr.bf16.mxu0 0
        %3020 = vmatpush1.bf16.msra.mxu0 %v3003
        %3021 = vmatprep.subr.bf16.mxu0 0
        %3022 = vmatpush1.bf16.msra.mxu0 %v3002
        %3023 = vmatprep.subr.bf16.mxu0 0
        %3024 = vmatpush1.bf16.msra.mxu0 %v3001
        %3025 = vmatprep.subr.bf16.mxu0 0
        %3026 = vmatpush1.bf16.msra.mxu0 %v3000
        %3027 = vmatprep.subr.bf16.mxu0 0
        %3028 = vmatpush2.bf16.msra.mxu0 0
        %3029 = vmatprep.subr.bf16.mxu0 0
        %3030 = vmatpush2.bf16.msra.mxu0 0
        %3031 = vmatprep.subr.bf16.mxu0 0
        %3032 = vmatpush2.bf16.msra.mxu0 0
        %3033 = vmatprep.subr.bf16.mxu0 0
        %3034 = vmatpush2.bf16.msra.mxu0 0
        %3035 = vmatprep.subr.bf16.mxu0 0
        %3036 = vmatpush2.bf16.msra.mxu0 0
        %3037 = vmatprep.subr.bf16.mxu0 0
        %3038 = vmatpush2.bf16.msra.mxu0 0
        %3039 = vmatprep.subr.bf16.mxu0 0
        %3040 = vmatpush2.bf16.msra.mxu0 0
        %3041 = vmatprep.subr.bf16.mxu0 0
        %3042 = vmatpush2.bf16.msra.mxu0 0
        %3043 = vmatprep.mubr.bf16.mxu0 0
        %3044 = vmatmul.mubr.bf16.gmra.mxu0 %v3009
        %v3045 = vpop.f32.mrf.mxu0
        %v3046 = vadd.f32 0.0, %v3045
        %v3047 = vpop.f32.mrf.mxu0
        %v3048 = vpop.f32.mrf.mxu0
        %v3049 = vadd.f32 0.0, %v3048
        %v3050 = vpop.f32.mrf.mxu0
        %3051 = vdwg.mxu0
        %v3052 = vadd.f32 %v2857, %v3046
        %v3053 = vadd.f32 %v2858, %v3049
        %v3054 = vpack.c.bf16 %v1191, %v1187
        %v3055 = vpack.c.bf16 %v1297, %v1293
        %v3056 = vpack.c.bf16 %v1403, %v1399
        %v3058 = vsel %vm1527, %v3054, 0
        %v3061 = vsel %vm1527, %v3055, 0
        %3063 = vmatprep.subr.bf16.mxu0 0
        %3064 = vmatpush1.bf16.xpose.msra.mxu0 0
        %3065 = vmatprep.subr.bf16.mxu0 0
        %3066 = vmatpush1.bf16.xpose.msra.mxu0 0
        %3067 = vmatprep.subr.bf16.mxu0 0
        %3068 = vmatpush1.bf16.xpose.msra.mxu0 0
        %3069 = vmatprep.subr.bf16.mxu0 0
        %3070 = vmatpush1.bf16.xpose.msra.mxu0 0
        %3071 = vmatprep.subr.bf16.mxu0 0
        %3072 = vmatpush1.bf16.xpose.msra.mxu0 0
        %3073 = vmatprep.subr.bf16.mxu0 0
        %3074 = vmatpush1.bf16.xpose.msra.mxu0 0
        %3075 = vmatprep.subr.bf16.mxu0 0
        %3076 = vmatpush1.bf16.xpose.msra.mxu0 0
        %3077 = vmatprep.subr.bf16.mxu0 0
        %3078 = vmatpush1.bf16.xpose.msra.mxu0 %v3061
        %3079 = vmatprep.subr.bf16.mxu0 0
        %3080 = vmatpush2.bf16.xpose.msra.mxu0 0
        %3081 = vmatprep.subr.bf16.mxu0 0
        %3082 = vmatpush2.bf16.xpose.msra.mxu0 0
        %3083 = vmatprep.subr.bf16.mxu0 0
        %3084 = vmatpush2.bf16.xpose.msra.mxu0 0
        %3085 = vmatprep.subr.bf16.mxu0 0
        %3086 = vmatpush2.bf16.xpose.msra.mxu0 0
        %3087 = vmatprep.subr.bf16.mxu0 0
        %3088 = vmatpush2.bf16.xpose.msra.mxu0 0
        %3089 = vmatprep.subr.bf16.mxu0 0
        %3090 = vmatpush2.bf16.xpose.msra.mxu0 0
        %3091 = vmatprep.subr.bf16.mxu0 0
        %3092 = vmatpush2.bf16.xpose.msra.mxu0 0
        %3093 = vmatprep.subr.bf16.mxu0 0
        %3094 = vmatpush2.bf16.xpose.msra.mxu0 0
        %3095 = vmatprep.mubr.bf16.mxu0 0
        %3096 = vmatmul.mubr.bf16.gmra.mxu0 %v3058
        %v3097 = vpop.f32.mrf.mxu0
        %v3098 = vadd.f32 0.0, %v3097
        %v3099 = vpop.f32.mrf.mxu0
        %v3100 = vpop.f32.mrf.mxu0
        %v3101 = vadd.f32 0.0, %v3100
        %v3102 = vpop.f32.mrf.mxu0
        %3103 = vdwg.mxu0
        %v3104 = vsel %vm1575, %v3098, -inf
        %3105 = vmax.xlane.f32.xlu0 %v3104
        %v3106 = vpop.xlane.xlu0 %3105
        %v3107 = vsel %vm1575, %v3101, -inf
        %3108 = vmax.xlane.f32.xlu0 %v3107
        %v3109 = vpop.xlane.xlu0 %3108
        %v3110 = vsub.f32 %v3098, %v3106
        %v3111 = vsub.f32 %v3101, %v3109
        %v3112 = vmul.f32 %v3110, 1.442695
        %v3113 = vpow.pop %v3112
        %v3114 = vmul.f32 %v3111, 1.442695
        %v3115 = vpow.pop %v3114
        %v3116 = vsel %vm1575, %v3113, 0.0
        %3117 = vadd.xlane.f32.xlu0 %v3116
        %v3118 = vpop.xlane.xlu0 %3117
        %v3119 = vsel %vm1575, %v3115, 0.0
        %3120 = vadd.xlane.f32.xlu0 %v3119
        %v3121 = vpop.xlane.xlu0 %3120
        %v3122 = vrcp.pop %v3118
        %v3123 = vrcp.pop %v3121
        %v3124 = vmul.f32 %v3113, %v3122
        %v3125 = vmul.f32 %v3115, %v3123
        %v3126 = vpack.c.bf16 %v3125, %v3124
        %v3128 = vsel %vm1575, %v3126, 0
        %3130 = vmatprep.subr.bf16.mxu0 0
        %3131 = vmatpush1.bf16.msra.mxu0 0
        %3132 = vmatprep.subr.bf16.mxu0 0
        %3133 = vmatpush1.bf16.msra.mxu0 0
        %3134 = vmatprep.subr.bf16.mxu0 0
        %3135 = vmatpush1.bf16.msra.mxu0 0
        %3136 = vmatprep.subr.bf16.mxu0 0
        %3137 = vmatpush1.bf16.msra.mxu0 0
        %3138 = vmatprep.subr.bf16.mxu0 0
        %3139 = vmatpush1.bf16.msra.mxu0 0
        %3140 = vmatprep.subr.bf16.mxu0 0
        %3141 = vmatpush1.bf16.msra.mxu0 0
        %3142 = vmatprep.subr.bf16.mxu0 0
        %3143 = vmatpush1.bf16.msra.mxu0 0
        %3144 = vmatprep.subr.bf16.mxu0 0
        %3145 = vmatpush1.bf16.msra.mxu0 %v3056
        %3146 = vmatprep.subr.bf16.mxu0 0
        %3147 = vmatpush2.bf16.msra.mxu0 0
        %3148 = vmatprep.subr.bf16.mxu0 0
        %3149 = vmatpush2.bf16.msra.mxu0 0
        %3150 = vmatprep.subr.bf16.mxu0 0
        %3151 = vmatpush2.bf16.msra.mxu0 0
        %3152 = vmatprep.subr.bf16.mxu0 0
        %3153 = vmatpush2.bf16.msra.mxu0 0
        %3154 = vmatprep.subr.bf16.mxu0 0
        %3155 = vmatpush2.bf16.msra.mxu0 0
        %3156 = vmatprep.subr.bf16.mxu0 0
        %3157 = vmatpush2.bf16.msra.mxu0 0
        %3158 = vmatprep.subr.bf16.mxu0 0
        %3159 = vmatpush2.bf16.msra.mxu0 0
        %3160 = vmatprep.subr.bf16.mxu0 0
        %3161 = vmatpush2.bf16.msra.mxu0 0
        %3162 = vmatprep.mubr.bf16.mxu0 0
        %3163 = vmatmul.mubr.bf16.gmra.mxu0 %v3128
        %v3164 = vpop.f32.mrf.mxu0
        %v3165 = vadd.f32 0.0, %v3164
        %v3166 = vpop.f32.mrf.mxu0
        %v3167 = vpop.f32.mrf.mxu0
        %v3168 = vadd.f32 0.0, %v3167
        %v3169 = vpop.f32.mrf.mxu0
        %3170 = vdwg.mxu0
        %v3171 = vpack.c.bf16 %v3168, %v3165
        %3173 = vrot.lane.b32.xlu0 %v3054, 64
        %v3174 = vpop.permute.xlu0 %3173
        %3176 = vrot.lane.b32.xlu0 %v3055, 64
        %v3177 = vpop.permute.xlu0 %3176
        %v3179 = vsel %vm1527, %v3174, 0
        %v3182 = vsel %vm1527, %v3177, 0
        %3184 = vmatprep.subr.bf16.mxu0 0
        %3185 = vmatpush1.bf16.xpose.msra.mxu0 0
        %3186 = vmatprep.subr.bf16.mxu0 0
        %3187 = vmatpush1.bf16.xpose.msra.mxu0 0
        %3188 = vmatprep.subr.bf16.mxu0 0
        %3189 = vmatpush1.bf16.xpose.msra.mxu0 0
        %3190 = vmatprep.subr.bf16.mxu0 0
        %3191 = vmatpush1.bf16.xpose.msra.mxu0 0
        %3192 = vmatprep.subr.bf16.mxu0 0
        %3193 = vmatpush1.bf16.xpose.msra.mxu0 0
        %3194 = vmatprep.subr.bf16.mxu0 0
        %3195 = vmatpush1.bf16.xpose.msra.mxu0 0
        %3196 = vmatprep.subr.bf16.mxu0 0
        %3197 = vmatpush1.bf16.xpose.msra.mxu0 0
        %3198 = vmatprep.subr.bf16.mxu0 0
        %3199 = vmatpush1.bf16.xpose.msra.mxu0 %v3182
        %3200 = vmatprep.subr.bf16.mxu0 0
        %3201 = vmatpush2.bf16.xpose.msra.mxu0 0
        %3202 = vmatprep.subr.bf16.mxu0 0
        %3203 = vmatpush2.bf16.xpose.msra.mxu0 0
        %3204 = vmatprep.subr.bf16.mxu0 0
        %3205 = vmatpush2.bf16.xpose.msra.mxu0 0
        %3206 = vmatprep.subr.bf16.mxu0 0
        %3207 = vmatpush2.bf16.xpose.msra.mxu0 0
        %3208 = vmatprep.subr.bf16.mxu0 0
        %3209 = vmatpush2.bf16.xpose.msra.mxu0 0
        %3210 = vmatprep.subr.bf16.mxu0 0
        %3211 = vmatpush2.bf16.xpose.msra.mxu0 0
        %3212 = vmatprep.subr.bf16.mxu0 0
        %3213 = vmatpush2.bf16.xpose.msra.mxu0 0
        %3214 = vmatprep.subr.bf16.mxu0 0
        %3215 = vmatpush2.bf16.xpose.msra.mxu0 0
        %3216 = vmatprep.mubr.bf16.mxu0 0
        %3217 = vmatmul.mubr.bf16.gmra.mxu0 %v3179
        %v3218 = vpop.f32.mrf.mxu0
        %v3219 = vadd.f32 0.0, %v3218
        %v3220 = vpop.f32.mrf.mxu0
        %v3221 = vpop.f32.mrf.mxu0
        %v3222 = vadd.f32 0.0, %v3221
        %v3223 = vpop.f32.mrf.mxu0
        %3224 = vdwg.mxu0
        %v3225 = vsel %vm1575, %v3219, -inf
        %3226 = vmax.xlane.f32.xlu0 %v3225
        %v3227 = vpop.xlane.xlu0 %3226
        %v3228 = vsel %vm1575, %v3222, -inf
        %3229 = vmax.xlane.f32.xlu0 %v3228
        %v3230 = vpop.xlane.xlu0 %3229
        %v3231 = vsub.f32 %v3219, %v3227
        %v3232 = vsub.f32 %v3222, %v3230
        %v3233 = vmul.f32 %v3231, 1.442695
        %v3234 = vpow.pop %v3233
        %v3235 = vmul.f32 %v3232, 1.442695
        %v3236 = vpow.pop %v3235
        %v3237 = vsel %vm1575, %v3234, 0.0
        %3238 = vadd.xlane.f32.xlu0 %v3237
        %v3239 = vpop.xlane.xlu0 %3238
        %v3240 = vsel %vm1575, %v3236, 0.0
        %3241 = vadd.xlane.f32.xlu0 %v3240
        %v3242 = vpop.xlane.xlu0 %3241
        %v3243 = vrcp.pop %v3239
        %v3244 = vrcp.pop %v3242
        %v3245 = vmul.f32 %v3234, %v3243
        %v3246 = vmul.f32 %v3236, %v3244
        %v3247 = vpack.c.bf16 %v3246, %v3245
        %3249 = vrot.lane.b32.xlu0 %v3056, 64
        %v3250 = vpop.permute.xlu0 %3249
        %v3253 = vsel %vm1575, %v3247, 0
        %3255 = vmatprep.subr.bf16.mxu0 0
        %3256 = vmatpush1.bf16.msra.mxu0 0
        %3257 = vmatprep.subr.bf16.mxu0 0
        %3258 = vmatpush1.bf16.msra.mxu0 0
        %3259 = vmatprep.subr.bf16.mxu0 0
        %3260 = vmatpush1.bf16.msra.mxu0 0
        %3261 = vmatprep.subr.bf16.mxu0 0
        %3262 = vmatpush1.bf16.msra.mxu0 0
        %3263 = vmatprep.subr.bf16.mxu0 0
        %3264 = vmatpush1.bf16.msra.mxu0 0
        %3265 = vmatprep.subr.bf16.mxu0 0
        %3266 = vmatpush1.bf16.msra.mxu0 0
        %3267 = vmatprep.subr.bf16.mxu0 0
        %3268 = vmatpush1.bf16.msra.mxu0 0
        %3269 = vmatprep.subr.bf16.mxu0 0
        %3270 = vmatpush1.bf16.msra.mxu0 %v3250
        %3271 = vmatprep.subr.bf16.mxu0 0
        %3272 = vmatpush2.bf16.msra.mxu0 0
        %3273 = vmatprep.subr.bf16.mxu0 0
        %3274 = vmatpush2.bf16.msra.mxu0 0
        %3275 = vmatprep.subr.bf16.mxu0 0
        %3276 = vmatpush2.bf16.msra.mxu0 0
        %3277 = vmatprep.subr.bf16.mxu0 0
        %3278 = vmatpush2.bf16.msra.mxu0 0
        %3279 = vmatprep.subr.bf16.mxu0 0
        %3280 = vmatpush2.bf16.msra.mxu0 0
        %3281 = vmatprep.subr.bf16.mxu0 0
        %3282 = vmatpush2.bf16.msra.mxu0 0
        %3283 = vmatprep.subr.bf16.mxu0 0
        %3284 = vmatpush2.bf16.msra.mxu0 0
        %3285 = vmatprep.subr.bf16.mxu0 0
        %3286 = vmatpush2.bf16.msra.mxu0 0
        %3287 = vmatprep.mubr.bf16.mxu0 0
        %3288 = vmatmul.mubr.bf16.gmra.mxu0 %v3253
        %v3289 = vpop.f32.mrf.mxu0
        %v3290 = vadd.f32 0.0, %v3289
        %v3291 = vpop.f32.mrf.mxu0
        %v3292 = vpop.f32.mrf.mxu0
        %v3293 = vadd.f32 0.0, %v3292
        %v3294 = vpop.f32.mrf.mxu0
        %3295 = vdwg.mxu0
        %v3296 = vpack.c.bf16 %v3293, %v3290
        %v3298 = vsel %vm1527, %v3296, 0
        %3300 = vmatprep.subr.bf16.mxu0 0
        %3301 = vmatpush1.bf16.msra.mxu0 0
        %3302 = vmatprep.subr.bf16.mxu0 0
        %3303 = vmatpush1.bf16.msra.mxu0 0
        %3304 = vmatprep.subr.bf16.mxu0 0
        %3305 = vmatpush1.bf16.msra.mxu0 0
        %3306 = vmatprep.subr.bf16.mxu0 0
        %3307 = vmatpush1.bf16.msra.mxu0 0
        %3308 = vmatprep.subr.bf16.mxu0 0
        %3309 = vmatpush1.bf16.msra.mxu0 %v1788
        %3310 = vmatprep.subr.bf16.mxu0 0
        %3311 = vmatpush1.bf16.msra.mxu0 %v1787
        %3312 = vmatprep.subr.bf16.mxu0 0
        %3313 = vmatpush1.bf16.msra.mxu0 %v1786
        %3314 = vmatprep.subr.bf16.mxu0 0
        %3315 = vmatpush1.bf16.msra.mxu0 %v1785
        %3316 = vmatprep.subr.bf16.mxu0 0
        %3317 = vmatpush2.bf16.msra.mxu0 0
        %3318 = vmatprep.subr.bf16.mxu0 0
        %3319 = vmatpush2.bf16.msra.mxu0 0
        %3320 = vmatprep.subr.bf16.mxu0 0
        %3321 = vmatpush2.bf16.msra.mxu0 0
        %3322 = vmatprep.subr.bf16.mxu0 0
        %3323 = vmatpush2.bf16.msra.mxu0 0
        %3324 = vmatprep.subr.bf16.mxu0 0
        %3325 = vmatpush2.bf16.msra.mxu0 0
        %3326 = vmatprep.subr.bf16.mxu0 0
        %3327 = vmatpush2.bf16.msra.mxu0 0
        %3328 = vmatprep.subr.bf16.mxu0 0
        %3329 = vmatpush2.bf16.msra.mxu0 0
        %3330 = vmatprep.subr.bf16.mxu0 0
        %3331 = vmatpush2.bf16.msra.mxu0 0
        %3332 = vmatprep.mubr.bf16.mxu0 0
        %3333 = vmatmul.mubr.bf16.gmra.mxu0 %v3298
        %v3334 = vpop.f32.mrf.mxu0
        %v3335 = vadd.f32 0.0, %v3334
        %v3336 = vpop.f32.mrf.mxu0
        %v3337 = vpop.f32.mrf.mxu0
        %v3338 = vadd.f32 0.0, %v3337
        %v3339 = vpop.f32.mrf.mxu0
        %3340 = vdwg.mxu0
        %v3342 = vsel %vm1527, %v3171, 0
        %3344 = vmatprep.subr.bf16.mxu0 0
        %3345 = vmatpush1.bf16.msra.mxu0 0
        %3346 = vmatprep.subr.bf16.mxu0 0
        %3347 = vmatpush1.bf16.msra.mxu0 0
        %3348 = vmatprep.subr.bf16.mxu0 0
        %3349 = vmatpush1.bf16.msra.mxu0 0
        %3350 = vmatprep.subr.bf16.mxu0 0
        %3351 = vmatpush1.bf16.msra.mxu0 0
        %3352 = vmatprep.subr.bf16.mxu0 0
        %3353 = vmatpush1.bf16.msra.mxu0 %v1856
        %3354 = vmatprep.subr.bf16.mxu0 0
        %3355 = vmatpush1.bf16.msra.mxu0 %v1855
        %3356 = vmatprep.subr.bf16.mxu0 0
        %3357 = vmatpush1.bf16.msra.mxu0 %v1854
        %3358 = vmatprep.subr.bf16.mxu0 0
        %3359 = vmatpush1.bf16.msra.mxu0 %v1853
        %3360 = vmatprep.subr.bf16.mxu0 0
        %3361 = vmatpush2.bf16.msra.mxu0 0
        %3362 = vmatprep.subr.bf16.mxu0 0
        %3363 = vmatpush2.bf16.msra.mxu0 0
        %3364 = vmatprep.subr.bf16.mxu0 0
        %3365 = vmatpush2.bf16.msra.mxu0 0
        %3366 = vmatprep.subr.bf16.mxu0 0
        %3367 = vmatpush2.bf16.msra.mxu0 0
        %3368 = vmatprep.subr.bf16.mxu0 0
        %3369 = vmatpush2.bf16.msra.mxu0 0
        %3370 = vmatprep.subr.bf16.mxu0 0
        %3371 = vmatpush2.bf16.msra.mxu0 0
        %3372 = vmatprep.subr.bf16.mxu0 0
        %3373 = vmatpush2.bf16.msra.mxu0 0
        %3374 = vmatprep.subr.bf16.mxu0 0
        %3375 = vmatpush2.bf16.msra.mxu0 0
        %3376 = vmatprep.mubr.bf16.mxu0 0
        %3377 = vmatmul.mubr.bf16.gmra.mxu0 %v3342
        %v3378 = vpop.f32.mrf.mxu0
        %v3379 = vadd.f32 %v3335, %v3378
        %v3380 = vpop.f32.mrf.mxu0
        %v3381 = vpop.f32.mrf.mxu0
        %v3382 = vadd.f32 %v3338, %v3381
        %v3383 = vpop.f32.mrf.mxu0
        %3384 = vdwg.mxu0
        %v3385 = vpack.c.bf16 %v1193, %v1189
        %v3386 = vpack.c.bf16 %v1299, %v1295
        %v3387 = vpack.c.bf16 %v1405, %v1401
        %v3389 = vsel %vm1527, %v3385, 0
        %v3392 = vsel %vm1527, %v3386, 0
        %3394 = vmatprep.subr.bf16.mxu0 0
        %3395 = vmatpush1.bf16.xpose.msra.mxu0 0
        %3396 = vmatprep.subr.bf16.mxu0 0
        %3397 = vmatpush1.bf16.xpose.msra.mxu0 0
        %3398 = vmatprep.subr.bf16.mxu0 0
        %3399 = vmatpush1.bf16.xpose.msra.mxu0 0
        %3400 = vmatprep.subr.bf16.mxu0 0
        %3401 = vmatpush1.bf16.xpose.msra.mxu0 0
        %3402 = vmatprep.subr.bf16.mxu0 0
        %3403 = vmatpush1.bf16.xpose.msra.mxu0 0
        %3404 = vmatprep.subr.bf16.mxu0 0
        %3405 = vmatpush1.bf16.xpose.msra.mxu0 0
        %3406 = vmatprep.subr.bf16.mxu0 0
        %3407 = vmatpush1.bf16.xpose.msra.mxu0 0
        %3408 = vmatprep.subr.bf16.mxu0 0
        %3409 = vmatpush1.bf16.xpose.msra.mxu0 %v3392
        %3410 = vmatprep.subr.bf16.mxu0 0
        %3411 = vmatpush2.bf16.xpose.msra.mxu0 0
        %3412 = vmatprep.subr.bf16.mxu0 0
        %3413 = vmatpush2.bf16.xpose.msra.mxu0 0
        %3414 = vmatprep.subr.bf16.mxu0 0
        %3415 = vmatpush2.bf16.xpose.msra.mxu0 0
        %3416 = vmatprep.subr.bf16.mxu0 0
        %3417 = vmatpush2.bf16.xpose.msra.mxu0 0
        %3418 = vmatprep.subr.bf16.mxu0 0
        %3419 = vmatpush2.bf16.xpose.msra.mxu0 0
        %3420 = vmatprep.subr.bf16.mxu0 0
        %3421 = vmatpush2.bf16.xpose.msra.mxu0 0
        %3422 = vmatprep.subr.bf16.mxu0 0
        %3423 = vmatpush2.bf16.xpose.msra.mxu0 0
        %3424 = vmatprep.subr.bf16.mxu0 0
        %3425 = vmatpush2.bf16.xpose.msra.mxu0 0
        %3426 = vmatprep.mubr.bf16.mxu0 0
        %3427 = vmatmul.mubr.bf16.gmra.mxu0 %v3389
        %v3428 = vpop.f32.mrf.mxu0
        %v3429 = vadd.f32 0.0, %v3428
        %v3430 = vpop.f32.mrf.mxu0
        %v3431 = vpop.f32.mrf.mxu0
        %v3432 = vadd.f32 0.0, %v3431
        %v3433 = vpop.f32.mrf.mxu0
        %3434 = vdwg.mxu0
        %v3435 = vsel %vm1575, %v3429, -inf
        %3436 = vmax.xlane.f32.xlu0 %v3435
        %v3437 = vpop.xlane.xlu0 %3436
        %v3438 = vsel %vm1575, %v3432, -inf
        %3439 = vmax.xlane.f32.xlu0 %v3438
        %v3440 = vpop.xlane.xlu0 %3439
        %v3441 = vsub.f32 %v3429, %v3437
        %v3442 = vsub.f32 %v3432, %v3440
        %v3443 = vmul.f32 %v3441, 1.442695
        %v3444 = vpow.pop %v3443
        %v3445 = vmul.f32 %v3442, 1.442695
        %v3446 = vpow.pop %v3445
        %v3447 = vsel %vm1575, %v3444, 0.0
        %3448 = vadd.xlane.f32.xlu0 %v3447
        %v3449 = vpop.xlane.xlu0 %3448
        %v3450 = vsel %vm1575, %v3446, 0.0
        %3451 = vadd.xlane.f32.xlu0 %v3450
        %v3452 = vpop.xlane.xlu0 %3451
        %v3453 = vrcp.pop %v3449
        %v3454 = vrcp.pop %v3452
        %v3455 = vmul.f32 %v3444, %v3453
        %v3456 = vmul.f32 %v3446, %v3454
        %v3457 = vpack.c.bf16 %v3456, %v3455
        %v3459 = vsel %vm1575, %v3457, 0
        %3461 = vmatprep.subr.bf16.mxu0 0
        %3462 = vmatpush1.bf16.msra.mxu0 0
        %3463 = vmatprep.subr.bf16.mxu0 0
        %3464 = vmatpush1.bf16.msra.mxu0 0
        %3465 = vmatprep.subr.bf16.mxu0 0
        %3466 = vmatpush1.bf16.msra.mxu0 0
        %3467 = vmatprep.subr.bf16.mxu0 0
        %3468 = vmatpush1.bf16.msra.mxu0 0
        %3469 = vmatprep.subr.bf16.mxu0 0
        %3470 = vmatpush1.bf16.msra.mxu0 0
        %3471 = vmatprep.subr.bf16.mxu0 0
        %3472 = vmatpush1.bf16.msra.mxu0 0
        %3473 = vmatprep.subr.bf16.mxu0 0
        %3474 = vmatpush1.bf16.msra.mxu0 0
        %3475 = vmatprep.subr.bf16.mxu0 0
        %3476 = vmatpush1.bf16.msra.mxu0 %v3387
        %3477 = vmatprep.subr.bf16.mxu0 0
        %3478 = vmatpush2.bf16.msra.mxu0 0
        %3479 = vmatprep.subr.bf16.mxu0 0
        %3480 = vmatpush2.bf16.msra.mxu0 0
        %3481 = vmatprep.subr.bf16.mxu0 0
        %3482 = vmatpush2.bf16.msra.mxu0 0
        %3483 = vmatprep.subr.bf16.mxu0 0
        %3484 = vmatpush2.bf16.msra.mxu0 0
        %3485 = vmatprep.subr.bf16.mxu0 0
        %3486 = vmatpush2.bf16.msra.mxu0 0
        %3487 = vmatprep.subr.bf16.mxu0 0
        %3488 = vmatpush2.bf16.msra.mxu0 0
        %3489 = vmatprep.subr.bf16.mxu0 0
        %3490 = vmatpush2.bf16.msra.mxu0 0
        %3491 = vmatprep.subr.bf16.mxu0 0
        %3492 = vmatpush2.bf16.msra.mxu0 0
        %3493 = vmatprep.mubr.bf16.mxu0 0
        %3494 = vmatmul.mubr.bf16.gmra.mxu0 %v3459
        %v3495 = vpop.f32.mrf.mxu0
        %v3496 = vadd.f32 0.0, %v3495
        %v3497 = vpop.f32.mrf.mxu0
        %v3498 = vpop.f32.mrf.mxu0
        %v3499 = vadd.f32 0.0, %v3498
        %v3500 = vpop.f32.mrf.mxu0
        %3501 = vdwg.mxu0
        %v3502 = vpack.c.bf16 %v3499, %v3496
        %v3504 = vsel %vm1527, %v3502, 0
        %3506 = vmatprep.subr.bf16.mxu0 0
        %3507 = vmatpush1.bf16.msra.mxu0 0
        %3508 = vmatprep.subr.bf16.mxu0 0
        %3509 = vmatpush1.bf16.msra.mxu0 0
        %3510 = vmatprep.subr.bf16.mxu0 0
        %3511 = vmatpush1.bf16.msra.mxu0 0
        %3512 = vmatprep.subr.bf16.mxu0 0
        %3513 = vmatpush1.bf16.msra.mxu0 0
        %3514 = vmatprep.subr.bf16.mxu0 0
        %3515 = vmatpush1.bf16.msra.mxu0 %v2042
        %3516 = vmatprep.subr.bf16.mxu0 0
        %3517 = vmatpush1.bf16.msra.mxu0 %v2041
        %3518 = vmatprep.subr.bf16.mxu0 0
        %3519 = vmatpush1.bf16.msra.mxu0 %v2040
        %3520 = vmatprep.subr.bf16.mxu0 0
        %3521 = vmatpush1.bf16.msra.mxu0 %v2039
        %3522 = vmatprep.subr.bf16.mxu0 0
        %3523 = vmatpush2.bf16.msra.mxu0 0
        %3524 = vmatprep.subr.bf16.mxu0 0
        %3525 = vmatpush2.bf16.msra.mxu0 0
        %3526 = vmatprep.subr.bf16.mxu0 0
        %3527 = vmatpush2.bf16.msra.mxu0 0
        %3528 = vmatprep.subr.bf16.mxu0 0
        %3529 = vmatpush2.bf16.msra.mxu0 0
        %3530 = vmatprep.subr.bf16.mxu0 0
        %3531 = vmatpush2.bf16.msra.mxu0 0
        %3532 = vmatprep.subr.bf16.mxu0 0
        %3533 = vmatpush2.bf16.msra.mxu0 0
        %3534 = vmatprep.subr.bf16.mxu0 0
        %3535 = vmatpush2.bf16.msra.mxu0 0
        %3536 = vmatprep.subr.bf16.mxu0 0
        %3537 = vmatpush2.bf16.msra.mxu0 0
        %3538 = vmatprep.mubr.bf16.mxu0 0
        %3539 = vmatmul.mubr.bf16.gmra.mxu0 %v3504
        %v3540 = vpop.f32.mrf.mxu0
        %v3541 = vadd.f32 0.0, %v3540
        %v3542 = vpop.f32.mrf.mxu0
        %v3543 = vpop.f32.mrf.mxu0
        %v3544 = vadd.f32 0.0, %v3543
        %v3545 = vpop.f32.mrf.mxu0
        %3546 = vdwg.mxu0
        %v3547 = vadd.f32 %v3379, %v3541
        %v3548 = vadd.f32 %v3382, %v3544
        %3550 = vrot.lane.b32.xlu0 %v3385, 64
        %v3551 = vpop.permute.xlu0 %3550
        %3553 = vrot.lane.b32.xlu0 %v3386, 64
        %v3554 = vpop.permute.xlu0 %3553
        %v3556 = vsel %vm1527, %v3551, 0
        %v3559 = vsel %vm1527, %v3554, 0
        %3561 = vmatprep.subr.bf16.mxu0 0
        %3562 = vmatpush1.bf16.xpose.msra.mxu0 0
        %3563 = vmatprep.subr.bf16.mxu0 0
        %3564 = vmatpush1.bf16.xpose.msra.mxu0 0
        %3565 = vmatprep.subr.bf16.mxu0 0
        %3566 = vmatpush1.bf16.xpose.msra.mxu0 0
        %3567 = vmatprep.subr.bf16.mxu0 0
        %3568 = vmatpush1.bf16.xpose.msra.mxu0 0
        %3569 = vmatprep.subr.bf16.mxu0 0
        %3570 = vmatpush1.bf16.xpose.msra.mxu0 0
        %3571 = vmatprep.subr.bf16.mxu0 0
        %3572 = vmatpush1.bf16.xpose.msra.mxu0 0
        %3573 = vmatprep.subr.bf16.mxu0 0
        %3574 = vmatpush1.bf16.xpose.msra.mxu0 0
        %3575 = vmatprep.subr.bf16.mxu0 0
        %3576 = vmatpush1.bf16.xpose.msra.mxu0 %v3559
        %3577 = vmatprep.subr.bf16.mxu0 0
        %3578 = vmatpush2.bf16.xpose.msra.mxu0 0
        %3579 = vmatprep.subr.bf16.mxu0 0
        %3580 = vmatpush2.bf16.xpose.msra.mxu0 0
        %3581 = vmatprep.subr.bf16.mxu0 0
        %3582 = vmatpush2.bf16.xpose.msra.mxu0 0
        %3583 = vmatprep.subr.bf16.mxu0 0
        %3584 = vmatpush2.bf16.xpose.msra.mxu0 0
        %3585 = vmatprep.subr.bf16.mxu0 0
        %3586 = vmatpush2.bf16.xpose.msra.mxu0 0
        %3587 = vmatprep.subr.bf16.mxu0 0
        %3588 = vmatpush2.bf16.xpose.msra.mxu0 0
        %3589 = vmatprep.subr.bf16.mxu0 0
        %3590 = vmatpush2.bf16.xpose.msra.mxu0 0
        %3591 = vmatprep.subr.bf16.mxu0 0
        %3592 = vmatpush2.bf16.xpose.msra.mxu0 0
        %3593 = vmatprep.mubr.bf16.mxu0 0
        %3594 = vmatmul.mubr.bf16.gmra.mxu0 %v3556
        %v3595 = vpop.f32.mrf.mxu0
        %v3596 = vadd.f32 0.0, %v3595
        %v3597 = vpop.f32.mrf.mxu0
        %v3598 = vpop.f32.mrf.mxu0
        %v3599 = vadd.f32 0.0, %v3598
        %v3600 = vpop.f32.mrf.mxu0
        %3601 = vdwg.mxu0
        %v3602 = vsel %vm1575, %v3596, -inf
        %3603 = vmax.xlane.f32.xlu0 %v3602
        %v3604 = vpop.xlane.xlu0 %3603
        %v3605 = vsel %vm1575, %v3599, -inf
        %3606 = vmax.xlane.f32.xlu0 %v3605
        %v3607 = vpop.xlane.xlu0 %3606
        %v3608 = vsub.f32 %v3596, %v3604
        %v3609 = vsub.f32 %v3599, %v3607
        %v3610 = vmul.f32 %v3608, 1.442695
        %v3611 = vpow.pop %v3610
        %v3612 = vmul.f32 %v3609, 1.442695
        %v3613 = vpow.pop %v3612
        %v3614 = vsel %vm1575, %v3611, 0.0
        %3615 = vadd.xlane.f32.xlu0 %v3614
        %v3616 = vpop.xlane.xlu0 %3615
        %v3617 = vsel %vm1575, %v3613, 0.0
        %3618 = vadd.xlane.f32.xlu0 %v3617
        %v3619 = vpop.xlane.xlu0 %3618
        %v3620 = vrcp.pop %v3616
        %v3621 = vrcp.pop %v3619
        %v3622 = vmul.f32 %v3611, %v3620
        %v3623 = vmul.f32 %v3613, %v3621
        %v3624 = vpack.c.bf16 %v3623, %v3622
        %3626 = vrot.lane.b32.xlu0 %v3387, 64
        %v3627 = vpop.permute.xlu0 %3626
        %v3630 = vsel %vm1575, %v3624, 0
        %3632 = vmatprep.subr.bf16.mxu0 0
        %3633 = vmatpush1.bf16.msra.mxu0 0
        %3634 = vmatprep.subr.bf16.mxu0 0
        %3635 = vmatpush1.bf16.msra.mxu0 0
        %3636 = vmatprep.subr.bf16.mxu0 0
        %3637 = vmatpush1.bf16.msra.mxu0 0
        %3638 = vmatprep.subr.bf16.mxu0 0
        %3639 = vmatpush1.bf16.msra.mxu0 0
        %3640 = vmatprep.subr.bf16.mxu0 0
        %3641 = vmatpush1.bf16.msra.mxu0 0
        %3642 = vmatprep.subr.bf16.mxu0 0
        %3643 = vmatpush1.bf16.msra.mxu0 0
        %3644 = vmatprep.subr.bf16.mxu0 0
        %3645 = vmatpush1.bf16.msra.mxu0 0
        %3646 = vmatprep.subr.bf16.mxu0 0
        %3647 = vmatpush1.bf16.msra.mxu0 %v3627
        %3648 = vmatprep.subr.bf16.mxu0 0
        %3649 = vmatpush2.bf16.msra.mxu0 0
        %3650 = vmatprep.subr.bf16.mxu0 0
        %3651 = vmatpush2.bf16.msra.mxu0 0
        %3652 = vmatprep.subr.bf16.mxu0 0
        %3653 = vmatpush2.bf16.msra.mxu0 0
        %3654 = vmatprep.subr.bf16.mxu0 0
        %3655 = vmatpush2.bf16.msra.mxu0 0
        %3656 = vmatprep.subr.bf16.mxu0 0
        %3657 = vmatpush2.bf16.msra.mxu0 0
        %3658 = vmatprep.subr.bf16.mxu0 0
        %3659 = vmatpush2.bf16.msra.mxu0 0
        %3660 = vmatprep.subr.bf16.mxu0 0
        %3661 = vmatpush2.bf16.msra.mxu0 0
        %3662 = vmatprep.subr.bf16.mxu0 0
        %3663 = vmatpush2.bf16.msra.mxu0 0
        %3664 = vmatprep.mubr.bf16.mxu0 0
        %3665 = vmatmul.mubr.bf16.gmra.mxu0 %v3630
        %v3666 = vpop.f32.mrf.mxu0
        %v3667 = vadd.f32 0.0, %v3666
        %v3668 = vpop.f32.mrf.mxu0
        %v3669 = vpop.f32.mrf.mxu0
        %v3670 = vadd.f32 0.0, %v3669
        %v3671 = vpop.f32.mrf.mxu0
        %3672 = vdwg.mxu0
        %v3673 = vpack.c.bf16 %v3670, %v3667
        %v3675 = vsel %vm1527, %v3673, 0
        %3677 = vmatprep.subr.bf16.mxu0 0
        %3678 = vmatpush1.bf16.msra.mxu0 0
        %3679 = vmatprep.subr.bf16.mxu0 0
        %3680 = vmatpush1.bf16.msra.mxu0 0
        %3681 = vmatprep.subr.bf16.mxu0 0
        %3682 = vmatpush1.bf16.msra.mxu0 0
        %3683 = vmatprep.subr.bf16.mxu0 0
        %3684 = vmatpush1.bf16.msra.mxu0 0
        %3685 = vmatprep.subr.bf16.mxu0 0
        %3686 = vmatpush1.bf16.msra.mxu0 %v2237
        %3687 = vmatprep.subr.bf16.mxu0 0
        %3688 = vmatpush1.bf16.msra.mxu0 %v2236
        %3689 = vmatprep.subr.bf16.mxu0 0
        %3690 = vmatpush1.bf16.msra.mxu0 %v2235
        %3691 = vmatprep.subr.bf16.mxu0 0
        %3692 = vmatpush1.bf16.msra.mxu0 %v2234
        %3693 = vmatprep.subr.bf16.mxu0 0
        %3694 = vmatpush2.bf16.msra.mxu0 0
        %3695 = vmatprep.subr.bf16.mxu0 0
        %3696 = vmatpush2.bf16.msra.mxu0 0
        %3697 = vmatprep.subr.bf16.mxu0 0
        %3698 = vmatpush2.bf16.msra.mxu0 0
        %3699 = vmatprep.subr.bf16.mxu0 0
        %3700 = vmatpush2.bf16.msra.mxu0 0
        %3701 = vmatprep.subr.bf16.mxu0 0
        %3702 = vmatpush2.bf16.msra.mxu0 0
        %3703 = vmatprep.subr.bf16.mxu0 0
        %3704 = vmatpush2.bf16.msra.mxu0 0
        %3705 = vmatprep.subr.bf16.mxu0 0
        %3706 = vmatpush2.bf16.msra.mxu0 0
        %3707 = vmatprep.subr.bf16.mxu0 0
        %3708 = vmatpush2.bf16.msra.mxu0 0
        %3709 = vmatprep.mubr.bf16.mxu0 0
        %3710 = vmatmul.mubr.bf16.gmra.mxu0 %v3675
        %v3711 = vpop.f32.mrf.mxu0
        %v3712 = vadd.f32 0.0, %v3711
        %v3713 = vpop.f32.mrf.mxu0
        %v3714 = vpop.f32.mrf.mxu0
        %v3715 = vadd.f32 0.0, %v3714
        %v3716 = vpop.f32.mrf.mxu0
        %3717 = vdwg.mxu0
        %v3718 = vadd.f32 %v3547, %v3712
        %v3719 = vadd.f32 %v3548, %v3715
        %v3720 = vpack.c.bf16 %v1244, %v1240
        %v3721 = vpack.c.bf16 %v1350, %v1346
        %v3722 = vpack.c.bf16 %v1456, %v1452
        %v3724 = vsel %vm1527, %v3720, 0
        %v3727 = vsel %vm1527, %v3721, 0
        %3729 = vmatprep.subr.bf16.mxu0 0
        %3730 = vmatpush1.bf16.xpose.msra.mxu0 0
        %3731 = vmatprep.subr.bf16.mxu0 0
        %3732 = vmatpush1.bf16.xpose.msra.mxu0 0
        %3733 = vmatprep.subr.bf16.mxu0 0
        %3734 = vmatpush1.bf16.xpose.msra.mxu0 0
        %3735 = vmatprep.subr.bf16.mxu0 0
        %3736 = vmatpush1.bf16.xpose.msra.mxu0 0
        %3737 = vmatprep.subr.bf16.mxu0 0
        %3738 = vmatpush1.bf16.xpose.msra.mxu0 0
        %3739 = vmatprep.subr.bf16.mxu0 0
        %3740 = vmatpush1.bf16.xpose.msra.mxu0 0
        %3741 = vmatprep.subr.bf16.mxu0 0
        %3742 = vmatpush1.bf16.xpose.msra.mxu0 0
        %3743 = vmatprep.subr.bf16.mxu0 0
        %3744 = vmatpush1.bf16.xpose.msra.mxu0 %v3727
        %3745 = vmatprep.subr.bf16.mxu0 0
        %3746 = vmatpush2.bf16.xpose.msra.mxu0 0
        %3747 = vmatprep.subr.bf16.mxu0 0
        %3748 = vmatpush2.bf16.xpose.msra.mxu0 0
        %3749 = vmatprep.subr.bf16.mxu0 0
        %3750 = vmatpush2.bf16.xpose.msra.mxu0 0
        %3751 = vmatprep.subr.bf16.mxu0 0
        %3752 = vmatpush2.bf16.xpose.msra.mxu0 0
        %3753 = vmatprep.subr.bf16.mxu0 0
        %3754 = vmatpush2.bf16.xpose.msra.mxu0 0
        %3755 = vmatprep.subr.bf16.mxu0 0
        %3756 = vmatpush2.bf16.xpose.msra.mxu0 0
        %3757 = vmatprep.subr.bf16.mxu0 0
        %3758 = vmatpush2.bf16.xpose.msra.mxu0 0
        %3759 = vmatprep.subr.bf16.mxu0 0
        %3760 = vmatpush2.bf16.xpose.msra.mxu0 0
        %3761 = vmatprep.mubr.bf16.mxu0 0
        %3762 = vmatmul.mubr.bf16.gmra.mxu0 %v3724
        %v3763 = vpop.f32.mrf.mxu0
        %v3764 = vadd.f32 0.0, %v3763
        %v3765 = vpop.f32.mrf.mxu0
        %v3766 = vpop.f32.mrf.mxu0
        %v3767 = vadd.f32 0.0, %v3766
        %v3768 = vpop.f32.mrf.mxu0
        %3769 = vdwg.mxu0
        %v3770 = vsel %vm1575, %v3764, -inf
        %3771 = vmax.xlane.f32.xlu0 %v3770
        %v3772 = vpop.xlane.xlu0 %3771
        %v3773 = vsel %vm1575, %v3767, -inf
        %3774 = vmax.xlane.f32.xlu0 %v3773
        %v3775 = vpop.xlane.xlu0 %3774
        %v3776 = vsub.f32 %v3764, %v3772
        %v3777 = vsub.f32 %v3767, %v3775
        %v3778 = vmul.f32 %v3776, 1.442695
        %v3779 = vpow.pop %v3778
        %v3780 = vmul.f32 %v3777, 1.442695
        %v3781 = vpow.pop %v3780
        %v3782 = vsel %vm1575, %v3779, 0.0
        %3783 = vadd.xlane.f32.xlu0 %v3782
        %v3784 = vpop.xlane.xlu0 %3783
        %v3785 = vsel %vm1575, %v3781, 0.0
        %3786 = vadd.xlane.f32.xlu0 %v3785
        %v3787 = vpop.xlane.xlu0 %3786
        %v3788 = vrcp.pop %v3784
        %v3789 = vrcp.pop %v3787
        %v3790 = vmul.f32 %v3779, %v3788
        %v3791 = vmul.f32 %v3781, %v3789
        %v3792 = vpack.c.bf16 %v3791, %v3790
        %v3794 = vsel %vm1575, %v3792, 0
        %3796 = vmatprep.subr.bf16.mxu0 0
        %3797 = vmatpush1.bf16.msra.mxu0 0
        %3798 = vmatprep.subr.bf16.mxu0 0
        %3799 = vmatpush1.bf16.msra.mxu0 0
        %3800 = vmatprep.subr.bf16.mxu0 0
        %3801 = vmatpush1.bf16.msra.mxu0 0
        %3802 = vmatprep.subr.bf16.mxu0 0
        %3803 = vmatpush1.bf16.msra.mxu0 0
        %3804 = vmatprep.subr.bf16.mxu0 0
        %3805 = vmatpush1.bf16.msra.mxu0 0
        %3806 = vmatprep.subr.bf16.mxu0 0
        %3807 = vmatpush1.bf16.msra.mxu0 0
        %3808 = vmatprep.subr.bf16.mxu0 0
        %3809 = vmatpush1.bf16.msra.mxu0 0
        %3810 = vmatprep.subr.bf16.mxu0 0
        %3811 = vmatpush1.bf16.msra.mxu0 %v3722
        %3812 = vmatprep.subr.bf16.mxu0 0
        %3813 = vmatpush2.bf16.msra.mxu0 0
        %3814 = vmatprep.subr.bf16.mxu0 0
        %3815 = vmatpush2.bf16.msra.mxu0 0
        %3816 = vmatprep.subr.bf16.mxu0 0
        %3817 = vmatpush2.bf16.msra.mxu0 0
        %3818 = vmatprep.subr.bf16.mxu0 0
        %3819 = vmatpush2.bf16.msra.mxu0 0
        %3820 = vmatprep.subr.bf16.mxu0 0
        %3821 = vmatpush2.bf16.msra.mxu0 0
        %3822 = vmatprep.subr.bf16.mxu0 0
        %3823 = vmatpush2.bf16.msra.mxu0 0
        %3824 = vmatprep.subr.bf16.mxu0 0
        %3825 = vmatpush2.bf16.msra.mxu0 0
        %3826 = vmatprep.subr.bf16.mxu0 0
        %3827 = vmatpush2.bf16.msra.mxu0 0
        %3828 = vmatprep.mubr.bf16.mxu0 0
        %3829 = vmatmul.mubr.bf16.gmra.mxu0 %v3794
        %v3830 = vpop.f32.mrf.mxu0
        %v3831 = vadd.f32 0.0, %v3830
        %v3832 = vpop.f32.mrf.mxu0
        %v3833 = vpop.f32.mrf.mxu0
        %v3834 = vadd.f32 0.0, %v3833
        %v3835 = vpop.f32.mrf.mxu0
        %3836 = vdwg.mxu0
        %v3837 = vpack.c.bf16 %v3834, %v3831
        %v3839 = vsel %vm1527, %v3837, 0
        %3841 = vmatprep.subr.bf16.mxu0 0
        %3842 = vmatpush1.bf16.msra.mxu0 0
        %3843 = vmatprep.subr.bf16.mxu0 0
        %3844 = vmatpush1.bf16.msra.mxu0 0
        %3845 = vmatprep.subr.bf16.mxu0 0
        %3846 = vmatpush1.bf16.msra.mxu0 0
        %3847 = vmatprep.subr.bf16.mxu0 0
        %3848 = vmatpush1.bf16.msra.mxu0 0
        %3849 = vmatprep.subr.bf16.mxu0 0
        %3850 = vmatpush1.bf16.msra.mxu0 %v2425
        %3851 = vmatprep.subr.bf16.mxu0 0
        %3852 = vmatpush1.bf16.msra.mxu0 %v2424
        %3853 = vmatprep.subr.bf16.mxu0 0
        %3854 = vmatpush1.bf16.msra.mxu0 %v2423
        %3855 = vmatprep.subr.bf16.mxu0 0
        %3856 = vmatpush1.bf16.msra.mxu0 %v2422
        %3857 = vmatprep.subr.bf16.mxu0 0
        %3858 = vmatpush2.bf16.msra.mxu0 0
        %3859 = vmatprep.subr.bf16.mxu0 0
        %3860 = vmatpush2.bf16.msra.mxu0 0
        %3861 = vmatprep.subr.bf16.mxu0 0
        %3862 = vmatpush2.bf16.msra.mxu0 0
        %3863 = vmatprep.subr.bf16.mxu0 0
        %3864 = vmatpush2.bf16.msra.mxu0 0
        %3865 = vmatprep.subr.bf16.mxu0 0
        %3866 = vmatpush2.bf16.msra.mxu0 0
        %3867 = vmatprep.subr.bf16.mxu0 0
        %3868 = vmatpush2.bf16.msra.mxu0 0
        %3869 = vmatprep.subr.bf16.mxu0 0
        %3870 = vmatpush2.bf16.msra.mxu0 0
        %3871 = vmatprep.subr.bf16.mxu0 0
        %3872 = vmatpush2.bf16.msra.mxu0 0
        %3873 = vmatprep.mubr.bf16.mxu0 0
        %3874 = vmatmul.mubr.bf16.gmra.mxu0 %v3839
        %v3875 = vpop.f32.mrf.mxu0
        %v3876 = vadd.f32 0.0, %v3875
        %v3877 = vpop.f32.mrf.mxu0
        %v3878 = vpop.f32.mrf.mxu0
        %v3879 = vadd.f32 0.0, %v3878
        %v3880 = vpop.f32.mrf.mxu0
        %3881 = vdwg.mxu0
        %v3882 = vadd.f32 %v3718, %v3876
        %v3883 = vadd.f32 %v3719, %v3879
        %3885 = vrot.lane.b32.xlu0 %v3720, 64
        %v3886 = vpop.permute.xlu0 %3885
        %3888 = vrot.lane.b32.xlu0 %v3721, 64
        %v3889 = vpop.permute.xlu0 %3888
        %v3891 = vsel %vm1527, %v3886, 0
        %v3894 = vsel %vm1527, %v3889, 0
        %3896 = vmatprep.subr.bf16.mxu0 0
        %3897 = vmatpush1.bf16.xpose.msra.mxu0 0
        %3898 = vmatprep.subr.bf16.mxu0 0
        %3899 = vmatpush1.bf16.xpose.msra.mxu0 0
        %3900 = vmatprep.subr.bf16.mxu0 0
        %3901 = vmatpush1.bf16.xpose.msra.mxu0 0
        %3902 = vmatprep.subr.bf16.mxu0 0
        %3903 = vmatpush1.bf16.xpose.msra.mxu0 0
        %3904 = vmatprep.subr.bf16.mxu0 0
        %3905 = vmatpush1.bf16.xpose.msra.mxu0 0
        %3906 = vmatprep.subr.bf16.mxu0 0
        %3907 = vmatpush1.bf16.xpose.msra.mxu0 0
        %3908 = vmatprep.subr.bf16.mxu0 0
        %3909 = vmatpush1.bf16.xpose.msra.mxu0 0
        %3910 = vmatprep.subr.bf16.mxu0 0
        %3911 = vmatpush1.bf16.xpose.msra.mxu0 %v3894
        %3912 = vmatprep.subr.bf16.mxu0 0
        %3913 = vmatpush2.bf16.xpose.msra.mxu0 0
        %3914 = vmatprep.subr.bf16.mxu0 0
        %3915 = vmatpush2.bf16.xpose.msra.mxu0 0
        %3916 = vmatprep.subr.bf16.mxu0 0
        %3917 = vmatpush2.bf16.xpose.msra.mxu0 0
        %3918 = vmatprep.subr.bf16.mxu0 0
        %3919 = vmatpush2.bf16.xpose.msra.mxu0 0
        %3920 = vmatprep.subr.bf16.mxu0 0
        %3921 = vmatpush2.bf16.xpose.msra.mxu0 0
        %3922 = vmatprep.subr.bf16.mxu0 0
        %3923 = vmatpush2.bf16.xpose.msra.mxu0 0
        %3924 = vmatprep.subr.bf16.mxu0 0
        %3925 = vmatpush2.bf16.xpose.msra.mxu0 0
        %3926 = vmatprep.subr.bf16.mxu0 0
        %3927 = vmatpush2.bf16.xpose.msra.mxu0 0
        %3928 = vmatprep.mubr.bf16.mxu0 0
        %3929 = vmatmul.mubr.bf16.gmra.mxu0 %v3891
        %v3930 = vpop.f32.mrf.mxu0
        %v3931 = vadd.f32 0.0, %v3930
        %v3932 = vpop.f32.mrf.mxu0
        %v3933 = vpop.f32.mrf.mxu0
        %v3934 = vadd.f32 0.0, %v3933
        %v3935 = vpop.f32.mrf.mxu0
        %3936 = vdwg.mxu0
        %v3937 = vsel %vm1575, %v3931, -inf
        %3938 = vmax.xlane.f32.xlu0 %v3937
        %v3939 = vpop.xlane.xlu0 %3938
        %v3940 = vsel %vm1575, %v3934, -inf
        %3941 = vmax.xlane.f32.xlu0 %v3940
        %v3942 = vpop.xlane.xlu0 %3941
        %v3943 = vsub.f32 %v3931, %v3939
        %v3944 = vsub.f32 %v3934, %v3942
        %v3945 = vmul.f32 %v3943, 1.442695
        %v3946 = vpow.pop %v3945
        %v3947 = vmul.f32 %v3944, 1.442695
        %v3948 = vpow.pop %v3947
        %v3949 = vsel %vm1575, %v3946, 0.0
        %3950 = vadd.xlane.f32.xlu0 %v3949
        %v3951 = vpop.xlane.xlu0 %3950
        %v3952 = vsel %vm1575, %v3948, 0.0
        %3953 = vadd.xlane.f32.xlu0 %v3952
        %v3954 = vpop.xlane.xlu0 %3953
        %v3955 = vrcp.pop %v3951
        %v3956 = vrcp.pop %v3954
        %v3957 = vmul.f32 %v3946, %v3955
        %v3958 = vmul.f32 %v3948, %v3956
        %v3959 = vpack.c.bf16 %v3958, %v3957
        %3961 = vrot.lane.b32.xlu0 %v3722, 64
        %v3962 = vpop.permute.xlu0 %3961
        %v3965 = vsel %vm1575, %v3959, 0
        %3967 = vmatprep.subr.bf16.mxu0 0
        %3968 = vmatpush1.bf16.msra.mxu0 0
        %3969 = vmatprep.subr.bf16.mxu0 0
        %3970 = vmatpush1.bf16.msra.mxu0 0
        %3971 = vmatprep.subr.bf16.mxu0 0
        %3972 = vmatpush1.bf16.msra.mxu0 0
        %3973 = vmatprep.subr.bf16.mxu0 0
        %3974 = vmatpush1.bf16.msra.mxu0 0
        %3975 = vmatprep.subr.bf16.mxu0 0
        %3976 = vmatpush1.bf16.msra.mxu0 0
        %3977 = vmatprep.subr.bf16.mxu0 0
        %3978 = vmatpush1.bf16.msra.mxu0 0
        %3979 = vmatprep.subr.bf16.mxu0 0
        %3980 = vmatpush1.bf16.msra.mxu0 0
        %3981 = vmatprep.subr.bf16.mxu0 0
        %3982 = vmatpush1.bf16.msra.mxu0 %v3962
        %3983 = vmatprep.subr.bf16.mxu0 0
        %3984 = vmatpush2.bf16.msra.mxu0 0
        %3985 = vmatprep.subr.bf16.mxu0 0
        %3986 = vmatpush2.bf16.msra.mxu0 0
        %3987 = vmatprep.subr.bf16.mxu0 0
        %3988 = vmatpush2.bf16.msra.mxu0 0
        %3989 = vmatprep.subr.bf16.mxu0 0
        %3990 = vmatpush2.bf16.msra.mxu0 0
        %3991 = vmatprep.subr.bf16.mxu0 0
        %3992 = vmatpush2.bf16.msra.mxu0 0
        %3993 = vmatprep.subr.bf16.mxu0 0
        %3994 = vmatpush2.bf16.msra.mxu0 0
        %3995 = vmatprep.subr.bf16.mxu0 0
        %3996 = vmatpush2.bf16.msra.mxu0 0
        %3997 = vmatprep.subr.bf16.mxu0 0
        %3998 = vmatpush2.bf16.msra.mxu0 0
        %3999 = vmatprep.mubr.bf16.mxu0 0
        %4000 = vmatmul.mubr.bf16.gmra.mxu0 %v3965
        %v4001 = vpop.f32.mrf.mxu0
        %v4002 = vadd.f32 0.0, %v4001
        %v4003 = vpop.f32.mrf.mxu0
        %v4004 = vpop.f32.mrf.mxu0
        %v4005 = vadd.f32 0.0, %v4004
        %v4006 = vpop.f32.mrf.mxu0
        %4007 = vdwg.mxu0
        %v4008 = vpack.c.bf16 %v4005, %v4002
        %v4010 = vsel %vm1527, %v4008, 0
        %4012 = vmatprep.subr.bf16.mxu0 0
        %4013 = vmatpush1.bf16.msra.mxu0 0
        %4014 = vmatprep.subr.bf16.mxu0 0
        %4015 = vmatpush1.bf16.msra.mxu0 0
        %4016 = vmatprep.subr.bf16.mxu0 0
        %4017 = vmatpush1.bf16.msra.mxu0 0
        %4018 = vmatprep.subr.bf16.mxu0 0
        %4019 = vmatpush1.bf16.msra.mxu0 0
        %4020 = vmatprep.subr.bf16.mxu0 0
        %4021 = vmatpush1.bf16.msra.mxu0 %v2620
        %4022 = vmatprep.subr.bf16.mxu0 0
        %4023 = vmatpush1.bf16.msra.mxu0 %v2619
        %4024 = vmatprep.subr.bf16.mxu0 0
        %4025 = vmatpush1.bf16.msra.mxu0 %v2618
        %4026 = vmatprep.subr.bf16.mxu0 0
        %4027 = vmatpush1.bf16.msra.mxu0 %v2617
        %4028 = vmatprep.subr.bf16.mxu0 0
        %4029 = vmatpush2.bf16.msra.mxu0 0
        %4030 = vmatprep.subr.bf16.mxu0 0
        %4031 = vmatpush2.bf16.msra.mxu0 0
        %4032 = vmatprep.subr.bf16.mxu0 0
        %4033 = vmatpush2.bf16.msra.mxu0 0
        %4034 = vmatprep.subr.bf16.mxu0 0
        %4035 = vmatpush2.bf16.msra.mxu0 0
        %4036 = vmatprep.subr.bf16.mxu0 0
        %4037 = vmatpush2.bf16.msra.mxu0 0
        %4038 = vmatprep.subr.bf16.mxu0 0
        %4039 = vmatpush2.bf16.msra.mxu0 0
        %4040 = vmatprep.subr.bf16.mxu0 0
        %4041 = vmatpush2.bf16.msra.mxu0 0
        %4042 = vmatprep.subr.bf16.mxu0 0
        %4043 = vmatpush2.bf16.msra.mxu0 0
        %4044 = vmatprep.mubr.bf16.mxu0 0
        %4045 = vmatmul.mubr.bf16.gmra.mxu0 %v4010
        %v4046 = vpop.f32.mrf.mxu0
        %v4047 = vadd.f32 0.0, %v4046
        %v4048 = vpop.f32.mrf.mxu0
        %v4049 = vpop.f32.mrf.mxu0
        %v4050 = vadd.f32 0.0, %v4049
        %v4051 = vpop.f32.mrf.mxu0
        %4052 = vdwg.mxu0
        %v4053 = vadd.f32 %v3882, %v4047
        %v4054 = vadd.f32 %v3883, %v4050
        %v4055 = vpack.c.bf16 %v1246, %v1242
        %v4056 = vpack.c.bf16 %v1352, %v1348
        %v4057 = vpack.c.bf16 %v1458, %v1454
        %v4059 = vsel %vm1527, %v4055, 0
        %v4062 = vsel %vm1527, %v4056, 0
        %4064 = vmatprep.subr.bf16.mxu0 0
        %4065 = vmatpush1.bf16.xpose.msra.mxu0 0
        %4066 = vmatprep.subr.bf16.mxu0 0
        %4067 = vmatpush1.bf16.xpose.msra.mxu0 0
        %4068 = vmatprep.subr.bf16.mxu0 0
        %4069 = vmatpush1.bf16.xpose.msra.mxu0 0
        %4070 = vmatprep.subr.bf16.mxu0 0
        %4071 = vmatpush1.bf16.xpose.msra.mxu0 0
        %4072 = vmatprep.subr.bf16.mxu0 0
        %4073 = vmatpush1.bf16.xpose.msra.mxu0 0
        %4074 = vmatprep.subr.bf16.mxu0 0
        %4075 = vmatpush1.bf16.xpose.msra.mxu0 0
        %4076 = vmatprep.subr.bf16.mxu0 0
        %4077 = vmatpush1.bf16.xpose.msra.mxu0 0
        %4078 = vmatprep.subr.bf16.mxu0 0
        %4079 = vmatpush1.bf16.xpose.msra.mxu0 %v4062
        %4080 = vmatprep.subr.bf16.mxu0 0
        %4081 = vmatpush2.bf16.xpose.msra.mxu0 0
        %4082 = vmatprep.subr.bf16.mxu0 0
        %4083 = vmatpush2.bf16.xpose.msra.mxu0 0
        %4084 = vmatprep.subr.bf16.mxu0 0
        %4085 = vmatpush2.bf16.xpose.msra.mxu0 0
        %4086 = vmatprep.subr.bf16.mxu0 0
        %4087 = vmatpush2.bf16.xpose.msra.mxu0 0
        %4088 = vmatprep.subr.bf16.mxu0 0
        %4089 = vmatpush2.bf16.xpose.msra.mxu0 0
        %4090 = vmatprep.subr.bf16.mxu0 0
        %4091 = vmatpush2.bf16.xpose.msra.mxu0 0
        %4092 = vmatprep.subr.bf16.mxu0 0
        %4093 = vmatpush2.bf16.xpose.msra.mxu0 0
        %4094 = vmatprep.subr.bf16.mxu0 0
        %4095 = vmatpush2.bf16.xpose.msra.mxu0 0
        %4096 = vmatprep.mubr.bf16.mxu0 0
        %4097 = vmatmul.mubr.bf16.gmra.mxu0 %v4059
        %v4098 = vpop.f32.mrf.mxu0
        %v4099 = vadd.f32 0.0, %v4098
        %v4100 = vpop.f32.mrf.mxu0
        %v4101 = vpop.f32.mrf.mxu0
        %v4102 = vadd.f32 0.0, %v4101
        %v4103 = vpop.f32.mrf.mxu0
        %4104 = vdwg.mxu0
        %v4105 = vsel %vm1575, %v4099, -inf
        %4106 = vmax.xlane.f32.xlu0 %v4105
        %v4107 = vpop.xlane.xlu0 %4106
        %v4108 = vsel %vm1575, %v4102, -inf
        %4109 = vmax.xlane.f32.xlu0 %v4108
        %v4110 = vpop.xlane.xlu0 %4109
        %v4111 = vsub.f32 %v4099, %v4107
        %v4112 = vsub.f32 %v4102, %v4110
        %v4113 = vmul.f32 %v4111, 1.442695
        %v4114 = vpow.pop %v4113
        %v4115 = vmul.f32 %v4112, 1.442695
        %v4116 = vpow.pop %v4115
        %v4117 = vsel %vm1575, %v4114, 0.0
        %4118 = vadd.xlane.f32.xlu0 %v4117
        %v4119 = vpop.xlane.xlu0 %4118
        %v4120 = vsel %vm1575, %v4116, 0.0
        %4121 = vadd.xlane.f32.xlu0 %v4120
        %v4122 = vpop.xlane.xlu0 %4121
        %v4123 = vrcp.pop %v4119
        %v4124 = vrcp.pop %v4122
        %v4125 = vmul.f32 %v4114, %v4123
        %v4126 = vmul.f32 %v4116, %v4124
        %v4127 = vpack.c.bf16 %v4126, %v4125
        %v4129 = vsel %vm1575, %v4127, 0
        %4131 = vmatprep.subr.bf16.mxu0 0
        %4132 = vmatpush1.bf16.msra.mxu0 0
        %4133 = vmatprep.subr.bf16.mxu0 0
        %4134 = vmatpush1.bf16.msra.mxu0 0
        %4135 = vmatprep.subr.bf16.mxu0 0
        %4136 = vmatpush1.bf16.msra.mxu0 0
        %4137 = vmatprep.subr.bf16.mxu0 0
        %4138 = vmatpush1.bf16.msra.mxu0 0
        %4139 = vmatprep.subr.bf16.mxu0 0
        %4140 = vmatpush1.bf16.msra.mxu0 0
        %4141 = vmatprep.subr.bf16.mxu0 0
        %4142 = vmatpush1.bf16.msra.mxu0 0
        %4143 = vmatprep.subr.bf16.mxu0 0
        %4144 = vmatpush1.bf16.msra.mxu0 0
        %4145 = vmatprep.subr.bf16.mxu0 0
        %4146 = vmatpush1.bf16.msra.mxu0 %v4057
        %4147 = vmatprep.subr.bf16.mxu0 0
        %4148 = vmatpush2.bf16.msra.mxu0 0
        %4149 = vmatprep.subr.bf16.mxu0 0
        %4150 = vmatpush2.bf16.msra.mxu0 0
        %4151 = vmatprep.subr.bf16.mxu0 0
        %4152 = vmatpush2.bf16.msra.mxu0 0
        %4153 = vmatprep.subr.bf16.mxu0 0
        %4154 = vmatpush2.bf16.msra.mxu0 0
        %4155 = vmatprep.subr.bf16.mxu0 0
        %4156 = vmatpush2.bf16.msra.mxu0 0
        %4157 = vmatprep.subr.bf16.mxu0 0
        %4158 = vmatpush2.bf16.msra.mxu0 0
        %4159 = vmatprep.subr.bf16.mxu0 0
        %4160 = vmatpush2.bf16.msra.mxu0 0
        %4161 = vmatprep.subr.bf16.mxu0 0
        %4162 = vmatpush2.bf16.msra.mxu0 0
        %4163 = vmatprep.mubr.bf16.mxu0 0
        %4164 = vmatmul.mubr.bf16.gmra.mxu0 %v4129
        %v4165 = vpop.f32.mrf.mxu0
        %v4166 = vadd.f32 0.0, %v4165
        %v4167 = vpop.f32.mrf.mxu0
        %v4168 = vpop.f32.mrf.mxu0
        %v4169 = vadd.f32 0.0, %v4168
        %v4170 = vpop.f32.mrf.mxu0
        %4171 = vdwg.mxu0
        %v4172 = vpack.c.bf16 %v4169, %v4166
        %v4174 = vsel %vm1527, %v4172, 0
        %4176 = vmatprep.subr.bf16.mxu0 0
        %4177 = vmatpush1.bf16.msra.mxu0 0
        %4178 = vmatprep.subr.bf16.mxu0 0
        %4179 = vmatpush1.bf16.msra.mxu0 0
        %4180 = vmatprep.subr.bf16.mxu0 0
        %4181 = vmatpush1.bf16.msra.mxu0 0
        %4182 = vmatprep.subr.bf16.mxu0 0
        %4183 = vmatpush1.bf16.msra.mxu0 0
        %4184 = vmatprep.subr.bf16.mxu0 0
        %4185 = vmatpush1.bf16.msra.mxu0 %v2808
        %4186 = vmatprep.subr.bf16.mxu0 0
        %4187 = vmatpush1.bf16.msra.mxu0 %v2807
        %4188 = vmatprep.subr.bf16.mxu0 0
        %4189 = vmatpush1.bf16.msra.mxu0 %v2806
        %4190 = vmatprep.subr.bf16.mxu0 0
        %4191 = vmatpush1.bf16.msra.mxu0 %v2805
        %4192 = vmatprep.subr.bf16.mxu0 0
        %4193 = vmatpush2.bf16.msra.mxu0 0
        %4194 = vmatprep.subr.bf16.mxu0 0
        %4195 = vmatpush2.bf16.msra.mxu0 0
        %4196 = vmatprep.subr.bf16.mxu0 0
        %4197 = vmatpush2.bf16.msra.mxu0 0
        %4198 = vmatprep.subr.bf16.mxu0 0
        %4199 = vmatpush2.bf16.msra.mxu0 0
        %4200 = vmatprep.subr.bf16.mxu0 0
        %4201 = vmatpush2.bf16.msra.mxu0 0
        %4202 = vmatprep.subr.bf16.mxu0 0
        %4203 = vmatpush2.bf16.msra.mxu0 0
        %4204 = vmatprep.subr.bf16.mxu0 0
        %4205 = vmatpush2.bf16.msra.mxu0 0
        %4206 = vmatprep.subr.bf16.mxu0 0
        %4207 = vmatpush2.bf16.msra.mxu0 0
        %4208 = vmatprep.mubr.bf16.mxu0 0
        %4209 = vmatmul.mubr.bf16.gmra.mxu0 %v4174
        %v4210 = vpop.f32.mrf.mxu0
        %v4211 = vadd.f32 0.0, %v4210
        %v4212 = vpop.f32.mrf.mxu0
        %v4213 = vpop.f32.mrf.mxu0
        %v4214 = vadd.f32 0.0, %v4213
        %v4215 = vpop.f32.mrf.mxu0
        %4216 = vdwg.mxu0
        %v4217 = vadd.f32 %v4053, %v4211
        %v4218 = vadd.f32 %v4054, %v4214
        %4220 = vrot.lane.b32.xlu0 %v4055, 64
        %v4221 = vpop.permute.xlu0 %4220
        %4223 = vrot.lane.b32.xlu0 %v4056, 64
        %v4224 = vpop.permute.xlu0 %4223
        %v4226 = vsel %vm1527, %v4221, 0
        %v4229 = vsel %vm1527, %v4224, 0
        %4231 = vmatprep.subr.bf16.mxu0 0
        %4232 = vmatpush1.bf16.xpose.msra.mxu0 0
        %4233 = vmatprep.subr.bf16.mxu0 0
        %4234 = vmatpush1.bf16.xpose.msra.mxu0 0
        %4235 = vmatprep.subr.bf16.mxu0 0
        %4236 = vmatpush1.bf16.xpose.msra.mxu0 0
        %4237 = vmatprep.subr.bf16.mxu0 0
        %4238 = vmatpush1.bf16.xpose.msra.mxu0 0
        %4239 = vmatprep.subr.bf16.mxu0 0
        %4240 = vmatpush1.bf16.xpose.msra.mxu0 0
        %4241 = vmatprep.subr.bf16.mxu0 0
        %4242 = vmatpush1.bf16.xpose.msra.mxu0 0
        %4243 = vmatprep.subr.bf16.mxu0 0
        %4244 = vmatpush1.bf16.xpose.msra.mxu0 0
        %4245 = vmatprep.subr.bf16.mxu0 0
        %4246 = vmatpush1.bf16.xpose.msra.mxu0 %v4229
        %4247 = vmatprep.subr.bf16.mxu0 0
        %4248 = vmatpush2.bf16.xpose.msra.mxu0 0
        %4249 = vmatprep.subr.bf16.mxu0 0
        %4250 = vmatpush2.bf16.xpose.msra.mxu0 0
        %4251 = vmatprep.subr.bf16.mxu0 0
        %4252 = vmatpush2.bf16.xpose.msra.mxu0 0
        %4253 = vmatprep.subr.bf16.mxu0 0
        %4254 = vmatpush2.bf16.xpose.msra.mxu0 0
        %4255 = vmatprep.subr.bf16.mxu0 0
        %4256 = vmatpush2.bf16.xpose.msra.mxu0 0
        %4257 = vmatprep.subr.bf16.mxu0 0
        %4258 = vmatpush2.bf16.xpose.msra.mxu0 0
        %4259 = vmatprep.subr.bf16.mxu0 0
        %4260 = vmatpush2.bf16.xpose.msra.mxu0 0
        %4261 = vmatprep.subr.bf16.mxu0 0
        %4262 = vmatpush2.bf16.xpose.msra.mxu0 0
        %4263 = vmatprep.mubr.bf16.mxu0 0
        %4264 = vmatmul.mubr.bf16.gmra.mxu0 %v4226
        %v4265 = vpop.f32.mrf.mxu0
        %v4266 = vadd.f32 0.0, %v4265
        %v4267 = vpop.f32.mrf.mxu0
        %v4268 = vpop.f32.mrf.mxu0
        %v4269 = vadd.f32 0.0, %v4268
        %v4270 = vpop.f32.mrf.mxu0
        %4271 = vdwg.mxu0
        %v4272 = vsel %vm1575, %v4266, -inf
        %4273 = vmax.xlane.f32.xlu0 %v4272
        %v4274 = vpop.xlane.xlu0 %4273
        %v4275 = vsel %vm1575, %v4269, -inf
        %4276 = vmax.xlane.f32.xlu0 %v4275
        %v4277 = vpop.xlane.xlu0 %4276
        %v4278 = vsub.f32 %v4266, %v4274
        %v4279 = vsub.f32 %v4269, %v4277
        %v4280 = vmul.f32 %v4278, 1.442695
        %v4281 = vpow.pop %v4280
        %v4282 = vmul.f32 %v4279, 1.442695
        %v4283 = vpow.pop %v4282
        %v4284 = vsel %vm1575, %v4281, 0.0
        %4285 = vadd.xlane.f32.xlu0 %v4284
        %v4286 = vpop.xlane.xlu0 %4285
        %v4287 = vsel %vm1575, %v4283, 0.0
        %4288 = vadd.xlane.f32.xlu0 %v4287
        %v4289 = vpop.xlane.xlu0 %4288
        %v4290 = vrcp.pop %v4286
        %v4291 = vrcp.pop %v4289
        %v4292 = vmul.f32 %v4281, %v4290
        %v4293 = vmul.f32 %v4283, %v4291
        %v4294 = vpack.c.bf16 %v4293, %v4292
        %4296 = vrot.lane.b32.xlu0 %v4057, 64
        %v4297 = vpop.permute.xlu0 %4296
        %v4300 = vsel %vm1575, %v4294, 0
        %4302 = vmatprep.subr.bf16.mxu0 0
        %4303 = vmatpush1.bf16.msra.mxu0 0
        %4304 = vmatprep.subr.bf16.mxu0 0
        %4305 = vmatpush1.bf16.msra.mxu0 0
        %4306 = vmatprep.subr.bf16.mxu0 0
        %4307 = vmatpush1.bf16.msra.mxu0 0
        %4308 = vmatprep.subr.bf16.mxu0 0
        %4309 = vmatpush1.bf16.msra.mxu0 0
        %4310 = vmatprep.subr.bf16.mxu0 0
        %4311 = vmatpush1.bf16.msra.mxu0 0
        %4312 = vmatprep.subr.bf16.mxu0 0
        %4313 = vmatpush1.bf16.msra.mxu0 0
        %4314 = vmatprep.subr.bf16.mxu0 0
        %4315 = vmatpush1.bf16.msra.mxu0 0
        %4316 = vmatprep.subr.bf16.mxu0 0
        %4317 = vmatpush1.bf16.msra.mxu0 %v4297
        %4318 = vmatprep.subr.bf16.mxu0 0
        %4319 = vmatpush2.bf16.msra.mxu0 0
        %4320 = vmatprep.subr.bf16.mxu0 0
        %4321 = vmatpush2.bf16.msra.mxu0 0
        %4322 = vmatprep.subr.bf16.mxu0 0
        %4323 = vmatpush2.bf16.msra.mxu0 0
        %4324 = vmatprep.subr.bf16.mxu0 0
        %4325 = vmatpush2.bf16.msra.mxu0 0
        %4326 = vmatprep.subr.bf16.mxu0 0
        %4327 = vmatpush2.bf16.msra.mxu0 0
        %4328 = vmatprep.subr.bf16.mxu0 0
        %4329 = vmatpush2.bf16.msra.mxu0 0
        %4330 = vmatprep.subr.bf16.mxu0 0
        %4331 = vmatpush2.bf16.msra.mxu0 0
        %4332 = vmatprep.subr.bf16.mxu0 0
        %4333 = vmatpush2.bf16.msra.mxu0 0
        %4334 = vmatprep.mubr.bf16.mxu0 0
        %4335 = vmatmul.mubr.bf16.gmra.mxu0 %v4300
        %v4336 = vpop.f32.mrf.mxu0
        %v4337 = vadd.f32 0.0, %v4336
        %v4338 = vpop.f32.mrf.mxu0
        %v4339 = vpop.f32.mrf.mxu0
        %v4340 = vadd.f32 0.0, %v4339
        %v4341 = vpop.f32.mrf.mxu0
        %4342 = vdwg.mxu0
        %v4343 = vpack.c.bf16 %v4340, %v4337
        %v4345 = vsel %vm1527, %v4343, 0
        %4347 = vmatprep.subr.bf16.mxu0 0
        %4348 = vmatpush1.bf16.msra.mxu0 0
        %4349 = vmatprep.subr.bf16.mxu0 0
        %4350 = vmatpush1.bf16.msra.mxu0 0
        %4351 = vmatprep.subr.bf16.mxu0 0
        %4352 = vmatpush1.bf16.msra.mxu0 0
        %4353 = vmatprep.subr.bf16.mxu0 0
        %4354 = vmatpush1.bf16.msra.mxu0 0
        %4355 = vmatprep.subr.bf16.mxu0 0
        %4356 = vmatpush1.bf16.msra.mxu0 %v3003
        %4357 = vmatprep.subr.bf16.mxu0 0
        %4358 = vmatpush1.bf16.msra.mxu0 %v3002
        %4359 = vmatprep.subr.bf16.mxu0 0
        %4360 = vmatpush1.bf16.msra.mxu0 %v3001
        %4361 = vmatprep.subr.bf16.mxu0 0
        %4362 = vmatpush1.bf16.msra.mxu0 %v3000
        %4363 = vmatprep.subr.bf16.mxu0 0
        %4364 = vmatpush2.bf16.msra.mxu0 0
        %4365 = vmatprep.subr.bf16.mxu0 0
        %4366 = vmatpush2.bf16.msra.mxu0 0
        %4367 = vmatprep.subr.bf16.mxu0 0
        %4368 = vmatpush2.bf16.msra.mxu0 0
        %4369 = vmatprep.subr.bf16.mxu0 0
        %4370 = vmatpush2.bf16.msra.mxu0 0
        %4371 = vmatprep.subr.bf16.mxu0 0
        %4372 = vmatpush2.bf16.msra.mxu0 0
        %4373 = vmatprep.subr.bf16.mxu0 0
        %4374 = vmatpush2.bf16.msra.mxu0 0
        %4375 = vmatprep.subr.bf16.mxu0 0
        %4376 = vmatpush2.bf16.msra.mxu0 0
        %4377 = vmatprep.subr.bf16.mxu0 0
        %4378 = vmatpush2.bf16.msra.mxu0 0
        %4379 = vmatprep.mubr.bf16.mxu0 0
        %4380 = vmatmul.mubr.bf16.gmra.mxu0 %v4345
        %v4381 = vpop.f32.mrf.mxu0
        %v4382 = vadd.f32 0.0, %v4381
        %v4383 = vpop.f32.mrf.mxu0
        %v4384 = vpop.f32.mrf.mxu0
        %v4385 = vadd.f32 0.0, %v4384
        %v4386 = vpop.f32.mrf.mxu0
        %4387 = vdwg.mxu0
        %v4388 = vadd.f32 %v4217, %v4382
        %v4389 = vadd.f32 %v4218, %v4385
        %v4390 = vld [vmem:[%s5] sm:$0x1]
        %v4392 = vlaneseq
        %v4393 = vshrl.u32 %v4392, 7
        %v4394 = vsub.s32 0, %v4393
        %v4395 = vrot.slane %v4390, %v4394
        %v4397 = vadd.f32 %v3052, %v4395
        %v4398 = vadd.f32 %v3053, %v4395
        %v4399 = vadd.f32 %v4388, %v4395
        %v4400 = vadd.f32 %v4389, %v4395
        %v4401 = vadd.f32 %v4397, %v493
        %v4402 = vadd.f32 %v4398, %v494
        %v4403 = vadd.f32 %v4399, %v495
        %v4404 = vadd.f32 %v4400, %v496
        %v4405 = vld [vmem:[%s6] sm:$0x1]
        %v4406 = vld [vmem:[%s7] sm:$0x1]
        %4407 = vadd.xlane.f32.xlu0 %v4401
        %v4408 = vpop.xlane.xlu0 %4407
        %4409 = vadd.xlane.f32.xlu0 %v4402
        %v4410 = vpop.xlane.xlu0 %4409
        %4411 = vadd.xlane.f32.xlu0 %v4403
        %v4412 = vpop.xlane.xlu0 %4411
        %4413 = vadd.xlane.f32.xlu0 %v4404
        %v4414 = vpop.xlane.xlu0 %4413
        %v4415 = vmul.f32 %v4408, %v507
        %v4416 = vmul.f32 %v4410, %v507
        %v4417 = vmul.f32 %v4412, %v507
        %v4418 = vmul.f32 %v4414, %v507
        %v4419 = vsub.f32 %v4401, %v4415
        %v4420 = vsub.f32 %v4402, %v4416
        %v4421 = vsub.f32 %v4403, %v4417
        %v4422 = vsub.f32 %v4404, %v4418
        %v4423 = vmul.f32 %v4419, %v4419
        %v4424 = vmul.f32 %v4420, %v4420
        %v4425 = vmul.f32 %v4421, %v4421
        %v4426 = vmul.f32 %v4422, %v4422
        %4427 = vadd.xlane.f32.xlu0 %v4423
        %v4428 = vpop.xlane.xlu0 %4427
        %4429 = vadd.xlane.f32.xlu0 %v4424
        %v4430 = vpop.xlane.xlu0 %4429
        %4431 = vadd.xlane.f32.xlu0 %v4425
        %v4432 = vpop.xlane.xlu0 %4431
        %4433 = vadd.xlane.f32.xlu0 %v4426
        %v4434 = vpop.xlane.xlu0 %4433
        %v4435 = vmul.f32 %v4428, %v507
        %v4436 = vmul.f32 %v4430, %v507
        %v4437 = vmul.f32 %v4432, %v507
        %v4438 = vmul.f32 %v4434, %v507
        %v4439 = vadd.f32 %v4435, 1e-05
        %v4440 = vadd.f32 %v4436, 1e-05
        %v4441 = vadd.f32 %v4437, 1e-05
        %v4442 = vadd.f32 %v4438, 1e-05
        %v4443 = vrsqrt.pop %v4439
        %v4444 = vrsqrt.pop %v4440
        %v4445 = vrsqrt.pop %v4441
        %v4446 = vrsqrt.pop %v4442
        %v4447 = vmul.f32 %v4419, %v4443
        %v4448 = vmul.f32 %v4420, %v4444
        %v4449 = vmul.f32 %v4421, %v4445
        %v4450 = vmul.f32 %v4422, %v4446
        %v4452 = vlaneseq
        %v4453 = vshrl.u32 %v4452, 7
        %v4454 = vsub.s32 0, %v4453
        %v4455 = vrot.slane %v4405, %v4454
        %v4457 = vmul.f32 %v4447, %v4455
        %v4458 = vmul.f32 %v4448, %v4455
        %v4459 = vmul.f32 %v4449, %v4455
        %v4460 = vmul.f32 %v4450, %v4455
        %v4462 = vlaneseq
        %v4463 = vshrl.u32 %v4462, 7
        %v4464 = vsub.s32 0, %v4463
        %v4465 = vrot.slane %v4406, %v4464
        %v4467 = vadd.f32 %v4457, %v4465
        %v4468 = vadd.f32 %v4458, %v4465
        %v4469 = vadd.f32 %v4459, %v4465
        %v4470 = vadd.f32 %v4460, %v4465
        %v4471 = vpack.c.bf16 %v4468, %v4467
        %v4472 = vpack.c.bf16 %v4470, %v4469
        %v4473 = vld [vmem:[#allocation8] sm:$0xff]
        %v4474 = vld [vmem:[#allocation8 + $0x8] sm:$0xff]
        %v4475 = vld [vmem:[#allocation8 + $0x10] sm:$0xff]
        %v4476 = vld [vmem:[#allocation8 + $0x18] sm:$0xff]
        %v4477 = vld [vmem:[#allocation8 + $0x20] sm:$0xff]
        %v4478 = vld [vmem:[#allocation8 + $0x28] sm:$0xff]
        %v4479 = vld [vmem:[#allocation8 + $0x30] sm:$0xff]
        %v4480 = vld [vmem:[#allocation8 + $0x38] sm:$0xff]
        %v4481 = vld [vmem:[#allocation8 + $0x40] sm:$0xff]
        %v4482 = vld [vmem:[#allocation8 + $0x48] sm:$0xff]
        %v4483 = vld [vmem:[#allocation8 + $0x50] sm:$0xff]
        %v4484 = vld [vmem:[#allocation8 + $0x58] sm:$0xff]
        %v4485 = vld [vmem:[#allocation8 + $0x60] sm:$0xff]
        %v4486 = vld [vmem:[#allocation8 + $0x68] sm:$0xff]
        %v4487 = vld [vmem:[#allocation8 + $0x70] sm:$0xff]
        %v4488 = vld [vmem:[#allocation8 + $0x78] sm:$0xff]
        %v4489 = vld [vmem:[#allocation8 + $0x80] sm:$0xff]
        %v4490 = vld [vmem:[#allocation8 + $0x88] sm:$0xff]
        %v4491 = vld [vmem:[#allocation8 + $0x90] sm:$0xff]
        %v4492 = vld [vmem:[#allocation8 + $0x98] sm:$0xff]
        %v4493 = vld [vmem:[#allocation8 + $0xa0] sm:$0xff]
        %v4494 = vld [vmem:[#allocation8 + $0xa8] sm:$0xff]
        %v4495 = vld [vmem:[#allocation8 + $0xb0] sm:$0xff]
        %v4496 = vld [vmem:[#allocation8 + $0xb8] sm:$0xff]
        %v4497 = vld [vmem:[#allocation8 + $0xc0] sm:$0xff]
        %v4498 = vld [vmem:[#allocation8 + $0xc8] sm:$0xff]
        %v4499 = vld [vmem:[#allocation8 + $0xd0] sm:$0xff]
        %v4500 = vld [vmem:[#allocation8 + $0xd8] sm:$0xff]
        %v4501 = vld [vmem:[#allocation8 + $0xe0] sm:$0xff]
        %v4502 = vld [vmem:[#allocation8 + $0xe8] sm:$0xff]
        %v4503 = vld [vmem:[#allocation8 + $0xf0] sm:$0xff]
        %v4504 = vld [vmem:[#allocation8 + $0xf8] sm:$0xff]
        %v4505 = vld [vmem:[#allocation8 + $0x100] sm:$0xff]
        %v4506 = vld [vmem:[#allocation8 + $0x108] sm:$0xff]
        %v4507 = vld [vmem:[#allocation8 + $0x110] sm:$0xff]
        %v4508 = vld [vmem:[#allocation8 + $0x118] sm:$0xff]
        %v4509 = vld [vmem:[#allocation8 + $0x120] sm:$0xff]
        %v4510 = vld [vmem:[#allocation8 + $0x128] sm:$0xff]
        %v4511 = vld [vmem:[#allocation8 + $0x130] sm:$0xff]
        %v4512 = vld [vmem:[#allocation8 + $0x138] sm:$0xff]
        %v4513 = vld [vmem:[#allocation8 + $0x140] sm:$0xff]
        %v4514 = vld [vmem:[#allocation8 + $0x148] sm:$0xff]
        %v4515 = vld [vmem:[#allocation8 + $0x150] sm:$0xff]
        %v4516 = vld [vmem:[#allocation8 + $0x158] sm:$0xff]
        %v4517 = vld [vmem:[#allocation8 + $0x160] sm:$0xff]
        %v4518 = vld [vmem:[#allocation8 + $0x168] sm:$0xff]
        %v4519 = vld [vmem:[#allocation8 + $0x170] sm:$0xff]
        %v4520 = vld [vmem:[#allocation8 + $0x178] sm:$0xff]
        %v4521 = vld [vmem:[#allocation8 + $0x180] sm:$0xff]
        %v4522 = vld [vmem:[#allocation8 + $0x188] sm:$0xff]
        %v4523 = vld [vmem:[#allocation8 + $0x190] sm:$0xff]
        %v4524 = vld [vmem:[#allocation8 + $0x198] sm:$0xff]
        %v4525 = vld [vmem:[#allocation8 + $0x1a0] sm:$0xff]
        %v4526 = vld [vmem:[#allocation8 + $0x1a8] sm:$0xff]
        %v4527 = vld [vmem:[#allocation8 + $0x1b0] sm:$0xff]
        %v4528 = vld [vmem:[#allocation8 + $0x1b8] sm:$0xff]
        %v4529 = vld [vmem:[#allocation8 + $0x1c0] sm:$0xff]
        %v4530 = vld [vmem:[#allocation8 + $0x1c8] sm:$0xff]
        %v4531 = vld [vmem:[#allocation8 + $0x1d0] sm:$0xff]
        %v4532 = vld [vmem:[#allocation8 + $0x1d8] sm:$0xff]
        %v4533 = vld [vmem:[#allocation8 + $0x1e0] sm:$0xff]
        %v4534 = vld [vmem:[#allocation8 + $0x1e8] sm:$0xff]
        %v4535 = vld [vmem:[#allocation8 + $0x1f0] sm:$0xff]
        %v4536 = vld [vmem:[#allocation8 + $0x1f8] sm:$0xff]
        %v4537 = vld [vmem:[%s9] sm:$0xff]
        %v4539 = vlaneseq
        %v4540 = vshrl.u32 %v4539, 7
        %v4541 = vsub.s32 0, %v4540
        %v4542 = vrot.slane %v4537, %v4541
        %v4543 = vlaneseq
        %v4544 = vshrl.u32 %v4543, 7
        %v4545 = vsub.s32 1, %v4544
        %v4546 = vrot.slane %v4537, %v4545
        %v4547 = vlaneseq
        %v4548 = vshrl.u32 %v4547, 7
        %v4549 = vsub.s32 2, %v4548
        %v4550 = vrot.slane %v4537, %v4549
        %v4551 = vlaneseq
        %v4552 = vshrl.u32 %v4551, 7
        %v4553 = vsub.s32 3, %v4552
        %v4554 = vrot.slane %v4537, %v4553
        %v4555 = vlaneseq
        %v4556 = vshrl.u32 %v4555, 7
        %v4557 = vsub.s32 4, %v4556
        %v4558 = vrot.slane %v4537, %v4557
        %v4559 = vlaneseq
        %v4560 = vshrl.u32 %v4559, 7
        %v4561 = vsub.s32 5, %v4560
        %v4562 = vrot.slane %v4537, %v4561
        %v4563 = vlaneseq
        %v4564 = vshrl.u32 %v4563, 7
        %v4565 = vsub.s32 6, %v4564
        %v4566 = vrot.slane %v4537, %v4565
        %v4567 = vlaneseq
        %v4568 = vshrl.u32 %v4567, 7
        %v4569 = vsub.s32 7, %v4568
        %v4570 = vrot.slane %v4537, %v4569
        %v4643 = vunpack.c.l.b16 %v4473
        %v4644 = vunpack.c.h.b16 %v4473
        %v4645 = vunpack.c.l.b16 %v4474
        %v4646 = vunpack.c.h.b16 %v4474
        %v4647 = vunpack.c.l.b16 %v4475
        %v4648 = vunpack.c.h.b16 %v4475
        %v4649 = vunpack.c.l.b16 %v4476
        %v4650 = vunpack.c.h.b16 %v4476
        %v4651 = vunpack.c.l.b16 %v4477
        %v4652 = vunpack.c.h.b16 %v4477
        %v4653 = vunpack.c.l.b16 %v4478
        %v4654 = vunpack.c.h.b16 %v4478
        %v4655 = vunpack.c.l.b16 %v4479
        %v4656 = vunpack.c.h.b16 %v4479
        %v4657 = vunpack.c.l.b16 %v4480
        %v4658 = vunpack.c.h.b16 %v4480
        %v4659 = vunpack.c.l.b16 %v4481
        %v4660 = vunpack.c.h.b16 %v4481
        %v4661 = vunpack.c.l.b16 %v4482
        %v4662 = vunpack.c.h.b16 %v4482
        %v4663 = vunpack.c.l.b16 %v4483
        %v4664 = vunpack.c.h.b16 %v4483
        %v4665 = vunpack.c.l.b16 %v4484
        %v4666 = vunpack.c.h.b16 %v4484
        %v4667 = vunpack.c.l.b16 %v4485
        %v4668 = vunpack.c.h.b16 %v4485
        %v4669 = vunpack.c.l.b16 %v4486
        %v4670 = vunpack.c.h.b16 %v4486
        %v4671 = vunpack.c.l.b16 %v4487
        %v4672 = vunpack.c.h.b16 %v4487
        %v4673 = vunpack.c.l.b16 %v4488
        %v4674 = vunpack.c.h.b16 %v4488
        %v4675 = vunpack.c.l.b16 %v4489
        %v4676 = vunpack.c.h.b16 %v4489
        %v4677 = vunpack.c.l.b16 %v4490
        %v4678 = vunpack.c.h.b16 %v4490
        %v4679 = vunpack.c.l.b16 %v4491
        %v4680 = vunpack.c.h.b16 %v4491
        %v4681 = vunpack.c.l.b16 %v4492
        %v4682 = vunpack.c.h.b16 %v4492
        %v4683 = vunpack.c.l.b16 %v4493
        %v4684 = vunpack.c.h.b16 %v4493
        %v4685 = vunpack.c.l.b16 %v4494
        %v4686 = vunpack.c.h.b16 %v4494
        %v4687 = vunpack.c.l.b16 %v4495
        %v4688 = vunpack.c.h.b16 %v4495
        %v4689 = vunpack.c.l.b16 %v4496
        %v4690 = vunpack.c.h.b16 %v4496
        %v4691 = vunpack.c.l.b16 %v4497
        %v4692 = vunpack.c.h.b16 %v4497
        %v4693 = vunpack.c.l.b16 %v4498
        %v4694 = vunpack.c.h.b16 %v4498
        %v4695 = vunpack.c.l.b16 %v4499
        %v4696 = vunpack.c.h.b16 %v4499
        %v4697 = vunpack.c.l.b16 %v4500
        %v4698 = vunpack.c.h.b16 %v4500
        %v4699 = vunpack.c.l.b16 %v4501
        %v4700 = vunpack.c.h.b16 %v4501
        %v4701 = vunpack.c.l.b16 %v4502
        %v4702 = vunpack.c.h.b16 %v4502
        %v4703 = vunpack.c.l.b16 %v4503
        %v4704 = vunpack.c.h.b16 %v4503
        %v4705 = vunpack.c.l.b16 %v4504
        %v4706 = vunpack.c.h.b16 %v4504
        %v4707 = vunpack.c.l.b16 %v4505
        %v4708 = vunpack.c.h.b16 %v4505
        %v4709 = vunpack.c.l.b16 %v4506
        %v4710 = vunpack.c.h.b16 %v4506
        %v4711 = vunpack.c.l.b16 %v4507
        %v4712 = vunpack.c.h.b16 %v4507
        %v4713 = vunpack.c.l.b16 %v4508
        %v4714 = vunpack.c.h.b16 %v4508
        %v4715 = vunpack.c.l.b16 %v4509
        %v4716 = vunpack.c.h.b16 %v4509
        %v4717 = vunpack.c.l.b16 %v4510
        %v4718 = vunpack.c.h.b16 %v4510
        %v4719 = vunpack.c.l.b16 %v4511
        %v4720 = vunpack.c.h.b16 %v4511
        %v4721 = vunpack.c.l.b16 %v4512
        %v4722 = vunpack.c.h.b16 %v4512
        %v4723 = vunpack.c.l.b16 %v4513
        %v4724 = vunpack.c.h.b16 %v4513
        %v4725 = vunpack.c.l.b16 %v4514
        %v4726 = vunpack.c.h.b16 %v4514
        %v4727 = vunpack.c.l.b16 %v4515
        %v4728 = vunpack.c.h.b16 %v4515
        %v4729 = vunpack.c.l.b16 %v4516
        %v4730 = vunpack.c.h.b16 %v4516
        %v4731 = vunpack.c.l.b16 %v4517
        %v4732 = vunpack.c.h.b16 %v4517
        %v4733 = vunpack.c.l.b16 %v4518
        %v4734 = vunpack.c.h.b16 %v4518
        %v4735 = vunpack.c.l.b16 %v4519
        %v4736 = vunpack.c.h.b16 %v4519
        %v4737 = vunpack.c.l.b16 %v4520
        %v4738 = vunpack.c.h.b16 %v4520
        %v4739 = vunpack.c.l.b16 %v4521
        %v4740 = vunpack.c.h.b16 %v4521
        %v4741 = vunpack.c.l.b16 %v4522
        %v4742 = vunpack.c.h.b16 %v4522
        %v4743 = vunpack.c.l.b16 %v4523
        %v4744 = vunpack.c.h.b16 %v4523
        %v4745 = vunpack.c.l.b16 %v4524
        %v4746 = vunpack.c.h.b16 %v4524
        %v4747 = vunpack.c.l.b16 %v4525
        %v4748 = vunpack.c.h.b16 %v4525
        %v4749 = vunpack.c.l.b16 %v4526
        %v4750 = vunpack.c.h.b16 %v4526
        %v4751 = vunpack.c.l.b16 %v4527
        %v4752 = vunpack.c.h.b16 %v4527
        %v4753 = vunpack.c.l.b16 %v4528
        %v4754 = vunpack.c.h.b16 %v4528
        %v4755 = vunpack.c.l.b16 %v4529
        %v4756 = vunpack.c.h.b16 %v4529
        %v4757 = vunpack.c.l.b16 %v4530
        %v4758 = vunpack.c.h.b16 %v4530
        %v4759 = vunpack.c.l.b16 %v4531
        %v4760 = vunpack.c.h.b16 %v4531
        %v4761 = vunpack.c.l.b16 %v4532
        %v4762 = vunpack.c.h.b16 %v4532
        %v4763 = vunpack.c.l.b16 %v4533
        %v4764 = vunpack.c.h.b16 %v4533
        %v4765 = vunpack.c.l.b16 %v4534
        %v4766 = vunpack.c.h.b16 %v4534
        %v4767 = vunpack.c.l.b16 %v4535
        %v4768 = vunpack.c.h.b16 %v4535
        %v4769 = vunpack.c.l.b16 %v4536
        %v4770 = vunpack.c.h.b16 %v4536
        %v4771 = vpack.c.b16 %v4651, %v4643
        %v4772 = vpack.c.b16 %v4652, %v4644
        %v4773 = vpack.c.b16 %v4653, %v4645
        %v4774 = vpack.c.b16 %v4654, %v4646
        %v4775 = vpack.c.b16 %v4655, %v4647
        %v4776 = vpack.c.b16 %v4656, %v4648
        %v4777 = vpack.c.b16 %v4657, %v4649
        %v4778 = vpack.c.b16 %v4658, %v4650
        %v4779 = vpack.c.b16 %v4667, %v4659
        %v4780 = vpack.c.b16 %v4668, %v4660
        %v4781 = vpack.c.b16 %v4669, %v4661
        %v4782 = vpack.c.b16 %v4670, %v4662
        %v4783 = vpack.c.b16 %v4671, %v4663
        %v4784 = vpack.c.b16 %v4672, %v4664
        %v4785 = vpack.c.b16 %v4673, %v4665
        %v4786 = vpack.c.b16 %v4674, %v4666
        %v4787 = vpack.c.b16 %v4683, %v4675
        %v4788 = vpack.c.b16 %v4684, %v4676
        %v4789 = vpack.c.b16 %v4685, %v4677
        %v4790 = vpack.c.b16 %v4686, %v4678
        %v4791 = vpack.c.b16 %v4687, %v4679
        %v4792 = vpack.c.b16 %v4688, %v4680
        %v4793 = vpack.c.b16 %v4689, %v4681
        %v4794 = vpack.c.b16 %v4690, %v4682
        %v4795 = vpack.c.b16 %v4699, %v4691
        %v4796 = vpack.c.b16 %v4700, %v4692
        %v4797 = vpack.c.b16 %v4701, %v4693
        %v4798 = vpack.c.b16 %v4702, %v4694
        %v4799 = vpack.c.b16 %v4703, %v4695
        %v4800 = vpack.c.b16 %v4704, %v4696
        %v4801 = vpack.c.b16 %v4705, %v4697
        %v4802 = vpack.c.b16 %v4706, %v4698
        %v4803 = vpack.c.b16 %v4715, %v4707
        %v4804 = vpack.c.b16 %v4716, %v4708
        %v4805 = vpack.c.b16 %v4717, %v4709
        %v4806 = vpack.c.b16 %v4718, %v4710
        %v4807 = vpack.c.b16 %v4719, %v4711
        %v4808 = vpack.c.b16 %v4720, %v4712
        %v4809 = vpack.c.b16 %v4721, %v4713
        %v4810 = vpack.c.b16 %v4722, %v4714
        %v4811 = vpack.c.b16 %v4731, %v4723
        %v4812 = vpack.c.b16 %v4732, %v4724
        %v4813 = vpack.c.b16 %v4733, %v4725
        %v4814 = vpack.c.b16 %v4734, %v4726
        %v4815 = vpack.c.b16 %v4735, %v4727
        %v4816 = vpack.c.b16 %v4736, %v4728
        %v4817 = vpack.c.b16 %v4737, %v4729
        %v4818 = vpack.c.b16 %v4738, %v4730
        %v4819 = vpack.c.b16 %v4747, %v4739
        %v4820 = vpack.c.b16 %v4748, %v4740
        %v4821 = vpack.c.b16 %v4749, %v4741
        %v4822 = vpack.c.b16 %v4750, %v4742
        %v4823 = vpack.c.b16 %v4751, %v4743
        %v4824 = vpack.c.b16 %v4752, %v4744
        %v4825 = vpack.c.b16 %v4753, %v4745
        %v4826 = vpack.c.b16 %v4754, %v4746
        %v4827 = vpack.c.b16 %v4763, %v4755
        %v4828 = vpack.c.b16 %v4764, %v4756
        %v4829 = vpack.c.b16 %v4765, %v4757
        %v4830 = vpack.c.b16 %v4766, %v4758
        %v4831 = vpack.c.b16 %v4767, %v4759
        %v4832 = vpack.c.b16 %v4768, %v4760
        %v4833 = vpack.c.b16 %v4769, %v4761
        %v4834 = vpack.c.b16 %v4770, %v4762
        %4899 = vmatprep.subr.bf16.mxu0 %v4828
        %4900 = vmatpush1.bf16.msra.mxu0 %v4827
        %4901 = vmatprep.subr.bf16.mxu0 %v4820
        %4902 = vmatpush1.bf16.msra.mxu0 %v4819
        %4903 = vmatprep.subr.bf16.mxu0 %v4812
        %4904 = vmatpush1.bf16.msra.mxu0 %v4811
        %4905 = vmatprep.subr.bf16.mxu0 %v4804
        %4906 = vmatpush1.bf16.msra.mxu0 %v4803
        %4907 = vmatprep.subr.bf16.mxu0 %v4796
        %4908 = vmatpush1.bf16.msra.mxu0 %v4795
        %4909 = vmatprep.subr.bf16.mxu0 %v4788
        %4910 = vmatpush1.bf16.msra.mxu0 %v4787
        %4911 = vmatprep.subr.bf16.mxu0 %v4780
        %4912 = vmatpush1.bf16.msra.mxu0 %v4779
        %4913 = vmatprep.subr.bf16.mxu0 %v4772
        %4914 = vmatpush1.bf16.msra.mxu0 %v4771
        %4915 = vmatprep.subr.bf16.mxu0 0
        %4916 = vmatpush2.bf16.msra.mxu0 0
        %4917 = vmatprep.subr.bf16.mxu0 0
        %4918 = vmatpush2.bf16.msra.mxu0 0
        %4919 = vmatprep.subr.bf16.mxu0 0
        %4920 = vmatpush2.bf16.msra.mxu0 0
        %4921 = vmatprep.subr.bf16.mxu0 0
        %4922 = vmatpush2.bf16.msra.mxu0 0
        %4923 = vmatprep.subr.bf16.mxu0 0
        %4924 = vmatpush2.bf16.msra.mxu0 0
        %4925 = vmatprep.subr.bf16.mxu0 0
        %4926 = vmatpush2.bf16.msra.mxu0 0
        %4927 = vmatprep.subr.bf16.mxu0 0
        %4928 = vmatpush2.bf16.msra.mxu0 0
        %4929 = vmatprep.subr.bf16.mxu0 0
        %4930 = vmatpush2.bf16.msra.mxu0 0
        %4931 = vmatprep.mubr.bf16.mxu0 0
        %4932 = vmatmul.mubr.bf16.gmra.mxu0 %v4471
        %v4933 = vpop.f32.mrf.mxu0
        %v4934 = vadd.f32 %v4542, %v4933
        %v4935 = vpop.f32.mrf.mxu0
        %v4936 = vadd.f32 %v4546, %v4935
        %v4937 = vpop.f32.mrf.mxu0
        %v4938 = vadd.f32 %v4542, %v4937
        %v4939 = vpop.f32.mrf.mxu0
        %v4940 = vadd.f32 %v4546, %v4939
        %4941 = vmatprep.mubr.bf16.mxu0 0
        %4942 = vmatmul.mubr.bf16.gmra.mxu0 %v4472
        %v4943 = vpop.f32.mrf.mxu0
        %v4944 = vadd.f32 %v4542, %v4943
        %v4945 = vpop.f32.mrf.mxu0
        %v4946 = vadd.f32 %v4546, %v4945
        %v4947 = vpop.f32.mrf.mxu0
        %v4948 = vadd.f32 %v4542, %v4947
        %v4949 = vpop.f32.mrf.mxu0
        %v4950 = vadd.f32 %v4546, %v4949
        %4951 = vdwg.mxu0
        %4952 = vmatprep.subr.bf16.mxu0 %v4830
        %4953 = vmatpush1.bf16.msra.mxu0 %v4829
        %4954 = vmatprep.subr.bf16.mxu0 %v4822
        %4955 = vmatpush1.bf16.msra.mxu0 %v4821
        %4956 = vmatprep.subr.bf16.mxu0 %v4814
        %4957 = vmatpush1.bf16.msra.mxu0 %v4813
        %4958 = vmatprep.subr.bf16.mxu0 %v4806
        %4959 = vmatpush1.bf16.msra.mxu0 %v4805
        %4960 = vmatprep.subr.bf16.mxu0 %v4798
        %4961 = vmatpush1.bf16.msra.mxu0 %v4797
        %4962 = vmatprep.subr.bf16.mxu0 %v4790
        %4963 = vmatpush1.bf16.msra.mxu0 %v4789
        %4964 = vmatprep.subr.bf16.mxu0 %v4782
        %4965 = vmatpush1.bf16.msra.mxu0 %v4781
        %4966 = vmatprep.subr.bf16.mxu0 %v4774
        %4967 = vmatpush1.bf16.msra.mxu0 %v4773
        %4968 = vmatprep.subr.bf16.mxu0 0
        %4969 = vmatpush2.bf16.msra.mxu0 0
        %4970 = vmatprep.subr.bf16.mxu0 0
        %4971 = vmatpush2.bf16.msra.mxu0 0
        %4972 = vmatprep.subr.bf16.mxu0 0
        %4973 = vmatpush2.bf16.msra.mxu0 0
        %4974 = vmatprep.subr.bf16.mxu0 0
        %4975 = vmatpush2.bf16.msra.mxu0 0
        %4976 = vmatprep.subr.bf16.mxu0 0
        %4977 = vmatpush2.bf16.msra.mxu0 0
        %4978 = vmatprep.subr.bf16.mxu0 0
        %4979 = vmatpush2.bf16.msra.mxu0 0
        %4980 = vmatprep.subr.bf16.mxu0 0
        %4981 = vmatpush2.bf16.msra.mxu0 0
        %4982 = vmatprep.subr.bf16.mxu0 0
        %4983 = vmatpush2.bf16.msra.mxu0 0
        %4984 = vmatprep.mubr.bf16.mxu0 0
        %4985 = vmatmul.mubr.bf16.gmra.mxu0 %v4471
        %v4986 = vpop.f32.mrf.mxu0
        %v4987 = vadd.f32 %v4550, %v4986
        %v4988 = vpop.f32.mrf.mxu0
        %v4989 = vadd.f32 %v4554, %v4988
        %v4990 = vpop.f32.mrf.mxu0
        %v4991 = vadd.f32 %v4550, %v4990
        %v4992 = vpop.f32.mrf.mxu0
        %v4993 = vadd.f32 %v4554, %v4992
        %4994 = vmatprep.mubr.bf16.mxu0 0
        %4995 = vmatmul.mubr.bf16.gmra.mxu0 %v4472
        %v4996 = vpop.f32.mrf.mxu0
        %v4997 = vadd.f32 %v4550, %v4996
        %v4998 = vpop.f32.mrf.mxu0
        %v4999 = vadd.f32 %v4554, %v4998
        %v5000 = vpop.f32.mrf.mxu0
        %v5001 = vadd.f32 %v4550, %v5000
        %v5002 = vpop.f32.mrf.mxu0
        %v5003 = vadd.f32 %v4554, %v5002
        %5004 = vdwg.mxu0
        %5005 = vmatprep.subr.bf16.mxu0 %v4832
        %5006 = vmatpush1.bf16.msra.mxu0 %v4831
        %5007 = vmatprep.subr.bf16.mxu0 %v4824
        %5008 = vmatpush1.bf16.msra.mxu0 %v4823
        %5009 = vmatprep.subr.bf16.mxu0 %v4816
        %5010 = vmatpush1.bf16.msra.mxu0 %v4815
        %5011 = vmatprep.subr.bf16.mxu0 %v4808
        %5012 = vmatpush1.bf16.msra.mxu0 %v4807
        %5013 = vmatprep.subr.bf16.mxu0 %v4800
        %5014 = vmatpush1.bf16.msra.mxu0 %v4799
        %5015 = vmatprep.subr.bf16.mxu0 %v4792
        %5016 = vmatpush1.bf16.msra.mxu0 %v4791
        %5017 = vmatprep.subr.bf16.mxu0 %v4784
        %5018 = vmatpush1.bf16.msra.mxu0 %v4783
        %5019 = vmatprep.subr.bf16.mxu0 %v4776
        %5020 = vmatpush1.bf16.msra.mxu0 %v4775
        %5021 = vmatprep.subr.bf16.mxu0 0
        %5022 = vmatpush2.bf16.msra.mxu0 0
        %5023 = vmatprep.subr.bf16.mxu0 0
        %5024 = vmatpush2.bf16.msra.mxu0 0
        %5025 = vmatprep.subr.bf16.mxu0 0
        %5026 = vmatpush2.bf16.msra.mxu0 0
        %5027 = vmatprep.subr.bf16.mxu0 0
        %5028 = vmatpush2.bf16.msra.mxu0 0
        %5029 = vmatprep.subr.bf16.mxu0 0
        %5030 = vmatpush2.bf16.msra.mxu0 0
        %5031 = vmatprep.subr.bf16.mxu0 0
        %5032 = vmatpush2.bf16.msra.mxu0 0
        %5033 = vmatprep.subr.bf16.mxu0 0
        %5034 = vmatpush2.bf16.msra.mxu0 0
        %5035 = vmatprep.subr.bf16.mxu0 0
        %5036 = vmatpush2.bf16.msra.mxu0 0
        %5037 = vmatprep.mubr.bf16.mxu0 0
        %5038 = vmatmul.mubr.bf16.gmra.mxu0 %v4471
        %v5039 = vpop.f32.mrf.mxu0
        %v5040 = vadd.f32 %v4558, %v5039
        %v5041 = vpop.f32.mrf.mxu0
        %v5042 = vadd.f32 %v4562, %v5041
        %v5043 = vpop.f32.mrf.mxu0
        %v5044 = vadd.f32 %v4558, %v5043
        %v5045 = vpop.f32.mrf.mxu0
        %v5046 = vadd.f32 %v4562, %v5045
        %5047 = vmatprep.mubr.bf16.mxu0 0
        %5048 = vmatmul.mubr.bf16.gmra.mxu0 %v4472
        %v5049 = vpop.f32.mrf.mxu0
        %v5050 = vadd.f32 %v4558, %v5049
        %v5051 = vpop.f32.mrf.mxu0
        %v5052 = vadd.f32 %v4562, %v5051
        %v5053 = vpop.f32.mrf.mxu0
        %v5054 = vadd.f32 %v4558, %v5053
        %v5055 = vpop.f32.mrf.mxu0
        %v5056 = vadd.f32 %v4562, %v5055
        %5057 = vdwg.mxu0
        %5058 = vmatprep.subr.bf16.mxu0 %v4834
        %5059 = vmatpush1.bf16.msra.mxu0 %v4833
        %5060 = vmatprep.subr.bf16.mxu0 %v4826
        %5061 = vmatpush1.bf16.msra.mxu0 %v4825
        %5062 = vmatprep.subr.bf16.mxu0 %v4818
        %5063 = vmatpush1.bf16.msra.mxu0 %v4817
        %5064 = vmatprep.subr.bf16.mxu0 %v4810
        %5065 = vmatpush1.bf16.msra.mxu0 %v4809
        %5066 = vmatprep.subr.bf16.mxu0 %v4802
        %5067 = vmatpush1.bf16.msra.mxu0 %v4801
        %5068 = vmatprep.subr.bf16.mxu0 %v4794
        %5069 = vmatpush1.bf16.msra.mxu0 %v4793
        %5070 = vmatprep.subr.bf16.mxu0 %v4786
        %5071 = vmatpush1.bf16.msra.mxu0 %v4785
        %5072 = vmatprep.subr.bf16.mxu0 %v4778
        %5073 = vmatpush1.bf16.msra.mxu0 %v4777
        %5074 = vmatprep.subr.bf16.mxu0 0
        %5075 = vmatpush2.bf16.msra.mxu0 0
        %5076 = vmatprep.subr.bf16.mxu0 0
        %5077 = vmatpush2.bf16.msra.mxu0 0
        %5078 = vmatprep.subr.bf16.mxu0 0
        %5079 = vmatpush2.bf16.msra.mxu0 0
        %5080 = vmatprep.subr.bf16.mxu0 0
        %5081 = vmatpush2.bf16.msra.mxu0 0
        %5082 = vmatprep.subr.bf16.mxu0 0
        %5083 = vmatpush2.bf16.msra.mxu0 0
        %5084 = vmatprep.subr.bf16.mxu0 0
        %5085 = vmatpush2.bf16.msra.mxu0 0
        %5086 = vmatprep.subr.bf16.mxu0 0
        %5087 = vmatpush2.bf16.msra.mxu0 0
        %5088 = vmatprep.subr.bf16.mxu0 0
        %5089 = vmatpush2.bf16.msra.mxu0 0
        %5090 = vmatprep.mubr.bf16.mxu0 0
        %5091 = vmatmul.mubr.bf16.gmra.mxu0 %v4471
        %v5092 = vpop.f32.mrf.mxu0
        %v5093 = vadd.f32 %v4566, %v5092
        %v5094 = vpop.f32.mrf.mxu0
        %v5095 = vadd.f32 %v4570, %v5094
        %v5096 = vpop.f32.mrf.mxu0
        %v5097 = vadd.f32 %v4566, %v5096
        %v5098 = vpop.f32.mrf.mxu0
        %v5099 = vadd.f32 %v4570, %v5098
        %5100 = vmatprep.mubr.bf16.mxu0 0
        %5101 = vmatmul.mubr.bf16.gmra.mxu0 %v4472
        %v5102 = vpop.f32.mrf.mxu0
        %v5103 = vadd.f32 %v4566, %v5102
        %v5104 = vpop.f32.mrf.mxu0
        %v5105 = vadd.f32 %v4570, %v5104
        %v5106 = vpop.f32.mrf.mxu0
        %v5107 = vadd.f32 %v4566, %v5106
        %v5108 = vpop.f32.mrf.mxu0
        %v5109 = vadd.f32 %v4570, %v5108
        %5110 = vdwg.mxu0
        %v5111 = vmul.f32 %v4934, 0.5
        %v5112 = vmul.f32 %v4936, 0.5
        %v5113 = vmul.f32 %v4987, 0.5
        %v5114 = vmul.f32 %v4989, 0.5
        %v5115 = vmul.f32 %v5040, 0.5
        %v5116 = vmul.f32 %v5042, 0.5
        %v5117 = vmul.f32 %v5093, 0.5
        %v5118 = vmul.f32 %v5095, 0.5
        %v5119 = vmul.f32 %v4938, 0.5
        %v5120 = vmul.f32 %v4940, 0.5
        %v5121 = vmul.f32 %v4991, 0.5
        %v5122 = vmul.f32 %v4993, 0.5
        %v5123 = vmul.f32 %v5044, 0.5
        %v5124 = vmul.f32 %v5046, 0.5
        %v5125 = vmul.f32 %v5097, 0.5
        %v5126 = vmul.f32 %v5099, 0.5
        %v5127 = vmul.f32 %v4944, 0.5
        %v5128 = vmul.f32 %v4946, 0.5
        %v5129 = vmul.f32 %v4997, 0.5
        %v5130 = vmul.f32 %v4999, 0.5
        %v5131 = vmul.f32 %v5050, 0.5
        %v5132 = vmul.f32 %v5052, 0.5
        %v5133 = vmul.f32 %v5103, 0.5
        %v5134 = vmul.f32 %v5105, 0.5
        %v5135 = vmul.f32 %v4948, 0.5
        %v5136 = vmul.f32 %v4950, 0.5
        %v5137 = vmul.f32 %v5001, 0.5
        %v5138 = vmul.f32 %v5003, 0.5
        %v5139 = vmul.f32 %v5054, 0.5
        %v5140 = vmul.f32 %v5056, 0.5
        %v5141 = vmul.f32 %v5107, 0.5
        %v5142 = vmul.f32 %v5109, 0.5
        %v5143 = vmul.f32 %v4934, 0.044715
        %v5144 = vmul.f32 %v4936, 0.044715
        %v5145 = vmul.f32 %v4987, 0.044715
        %v5146 = vmul.f32 %v4989, 0.044715
        %v5147 = vmul.f32 %v5040, 0.044715
        %v5148 = vmul.f32 %v5042, 0.044715
        %v5149 = vmul.f32 %v5093, 0.044715
        %v5150 = vmul.f32 %v5095, 0.044715
        %v5151 = vmul.f32 %v4938, 0.044715
        %v5152 = vmul.f32 %v4940, 0.044715
        %v5153 = vmul.f32 %v4991, 0.044715
        %v5154 = vmul.f32 %v4993, 0.044715
        %v5155 = vmul.f32 %v5044, 0.044715
        %v5156 = vmul.f32 %v5046, 0.044715
        %v5157 = vmul.f32 %v5097, 0.044715
        %v5158 = vmul.f32 %v5099, 0.044715
        %v5159 = vmul.f32 %v4944, 0.044715
        %v5160 = vmul.f32 %v4946, 0.044715
        %v5161 = vmul.f32 %v4997, 0.044715
        %v5162 = vmul.f32 %v4999, 0.044715
        %v5163 = vmul.f32 %v5050, 0.044715
        %v5164 = vmul.f32 %v5052, 0.044715
        %v5165 = vmul.f32 %v5103, 0.044715
        %v5166 = vmul.f32 %v5105, 0.044715
        %v5167 = vmul.f32 %v4948, 0.044715
        %v5168 = vmul.f32 %v4950, 0.044715
        %v5169 = vmul.f32 %v5001, 0.044715
        %v5170 = vmul.f32 %v5003, 0.044715
        %v5171 = vmul.f32 %v5054, 0.044715
        %v5172 = vmul.f32 %v5056, 0.044715
        %v5173 = vmul.f32 %v5107, 0.044715
        %v5174 = vmul.f32 %v5109, 0.044715
        %v5175 = vmul.f32 %v5143, %v4934
        %v5176 = vmul.f32 %v5144, %v4936
        %v5177 = vmul.f32 %v5145, %v4987
        %v5178 = vmul.f32 %v5146, %v4989
        %v5179 = vmul.f32 %v5147, %v5040
        %v5180 = vmul.f32 %v5148, %v5042
        %v5181 = vmul.f32 %v5149, %v5093
        %v5182 = vmul.f32 %v5150, %v5095
        %v5183 = vmul.f32 %v5151, %v4938
        %v5184 = vmul.f32 %v5152, %v4940
        %v5185 = vmul.f32 %v5153, %v4991
        %v5186 = vmul.f32 %v5154, %v4993
        %v5187 = vmul.f32 %v5155, %v5044
        %v5188 = vmul.f32 %v5156, %v5046
        %v5189 = vmul.f32 %v5157, %v5097
        %v5190 = vmul.f32 %v5158, %v5099
        %v5191 = vmul.f32 %v5159, %v4944
        %v5192 = vmul.f32 %v5160, %v4946
        %v5193 = vmul.f32 %v5161, %v4997
        %v5194 = vmul.f32 %v5162, %v4999
        %v5195 = vmul.f32 %v5163, %v5050
        %v5196 = vmul.f32 %v5164, %v5052
        %v5197 = vmul.f32 %v5165, %v5103
        %v5198 = vmul.f32 %v5166, %v5105
        %v5199 = vmul.f32 %v5167, %v4948
        %v5200 = vmul.f32 %v5168, %v4950
        %v5201 = vmul.f32 %v5169, %v5001
        %v5202 = vmul.f32 %v5170, %v5003
        %v5203 = vmul.f32 %v5171, %v5054
        %v5204 = vmul.f32 %v5172, %v5056
        %v5205 = vmul.f32 %v5173, %v5107
        %v5206 = vmul.f32 %v5174, %v5109
        %v5207 = vmul.f32 %v5175, %v4934
        %v5208 = vmul.f32 %v5176, %v4936
        %v5209 = vmul.f32 %v5177, %v4987
        %v5210 = vmul.f32 %v5178, %v4989
        %v5211 = vmul.f32 %v5179, %v5040
        %v5212 = vmul.f32 %v5180, %v5042
        %v5213 = vmul.f32 %v5181, %v5093
        %v5214 = vmul.f32 %v5182, %v5095
        %v5215 = vmul.f32 %v5183, %v4938
        %v5216 = vmul.f32 %v5184, %v4940
        %v5217 = vmul.f32 %v5185, %v4991
        %v5218 = vmul.f32 %v5186, %v4993
        %v5219 = vmul.f32 %v5187, %v5044
        %v5220 = vmul.f32 %v5188, %v5046
        %v5221 = vmul.f32 %v5189, %v5097
        %v5222 = vmul.f32 %v5190, %v5099
        %v5223 = vmul.f32 %v5191, %v4944
        %v5224 = vmul.f32 %v5192, %v4946
        %v5225 = vmul.f32 %v5193, %v4997
        %v5226 = vmul.f32 %v5194, %v4999
        %v5227 = vmul.f32 %v5195, %v5050
        %v5228 = vmul.f32 %v5196, %v5052
        %v5229 = vmul.f32 %v5197, %v5103
        %v5230 = vmul.f32 %v5198, %v5105
        %v5231 = vmul.f32 %v5199, %v4948
        %v5232 = vmul.f32 %v5200, %v4950
        %v5233 = vmul.f32 %v5201, %v5001
        %v5234 = vmul.f32 %v5202, %v5003
        %v5235 = vmul.f32 %v5203, %v5054
        %v5236 = vmul.f32 %v5204, %v5056
        %v5237 = vmul.f32 %v5205, %v5107
        %v5238 = vmul.f32 %v5206, %v5109
        %v5239 = vadd.f32 %v4934, %v5207
        %v5240 = vadd.f32 %v4936, %v5208
        %v5241 = vadd.f32 %v4987, %v5209
        %v5242 = vadd.f32 %v4989, %v5210
        %v5243 = vadd.f32 %v5040, %v5211
        %v5244 = vadd.f32 %v5042, %v5212
        %v5245 = vadd.f32 %v5093, %v5213
        %v5246 = vadd.f32 %v5095, %v5214
        %v5247 = vadd.f32 %v4938, %v5215
        %v5248 = vadd.f32 %v4940, %v5216
        %v5249 = vadd.f32 %v4991, %v5217
        %v5250 = vadd.f32 %v4993, %v5218
        %v5251 = vadd.f32 %v5044, %v5219
        %v5252 = vadd.f32 %v5046, %v5220
        %v5253 = vadd.f32 %v5097, %v5221
        %v5254 = vadd.f32 %v5099, %v5222
        %v5255 = vadd.f32 %v4944, %v5223
        %v5256 = vadd.f32 %v4946, %v5224
        %v5257 = vadd.f32 %v4997, %v5225
        %v5258 = vadd.f32 %v4999, %v5226
        %v5259 = vadd.f32 %v5050, %v5227
        %v5260 = vadd.f32 %v5052, %v5228
        %v5261 = vadd.f32 %v5103, %v5229
        %v5262 = vadd.f32 %v5105, %v5230
        %v5263 = vadd.f32 %v4948, %v5231
        %v5264 = vadd.f32 %v4950, %v5232
        %v5265 = vadd.f32 %v5001, %v5233
        %v5266 = vadd.f32 %v5003, %v5234
        %v5267 = vadd.f32 %v5054, %v5235
        %v5268 = vadd.f32 %v5056, %v5236
        %v5269 = vadd.f32 %v5107, %v5237
        %v5270 = vadd.f32 %v5109, %v5238
        %v5271 = vmul.f32 %v5239, 0.7978846
        %v5272 = vmul.f32 %v5240, 0.7978846
        %v5273 = vmul.f32 %v5241, 0.7978846
        %v5274 = vmul.f32 %v5242, 0.7978846
        %v5275 = vmul.f32 %v5243, 0.7978846
        %v5276 = vmul.f32 %v5244, 0.7978846
        %v5277 = vmul.f32 %v5245, 0.7978846
        %v5278 = vmul.f32 %v5246, 0.7978846
        %v5279 = vmul.f32 %v5247, 0.7978846
        %v5280 = vmul.f32 %v5248, 0.7978846
        %v5281 = vmul.f32 %v5249, 0.7978846
        %v5282 = vmul.f32 %v5250, 0.7978846
        %v5283 = vmul.f32 %v5251, 0.7978846
        %v5284 = vmul.f32 %v5252, 0.7978846
        %v5285 = vmul.f32 %v5253, 0.7978846
        %v5286 = vmul.f32 %v5254, 0.7978846
        %v5287 = vmul.f32 %v5255, 0.7978846
        %v5288 = vmul.f32 %v5256, 0.7978846
        %v5289 = vmul.f32 %v5257, 0.7978846
        %v5290 = vmul.f32 %v5258, 0.7978846
        %v5291 = vmul.f32 %v5259, 0.7978846
        %v5292 = vmul.f32 %v5260, 0.7978846
        %v5293 = vmul.f32 %v5261, 0.7978846
        %v5294 = vmul.f32 %v5262, 0.7978846
        %v5295 = vmul.f32 %v5263, 0.7978846
        %v5296 = vmul.f32 %v5264, 0.7978846
        %v5297 = vmul.f32 %v5265, 0.7978846
        %v5298 = vmul.f32 %v5266, 0.7978846
        %v5299 = vmul.f32 %v5267, 0.7978846
        %v5300 = vmul.f32 %v5268, 0.7978846
        %v5301 = vmul.f32 %v5269, 0.7978846
        %v5302 = vmul.f32 %v5270, 0.7978846
        %v5303 = vtanh.pop %v5271
        %v5304 = vtanh.pop %v5272
        %v5305 = vtanh.pop %v5273
        %v5306 = vtanh.pop %v5274
        %v5307 = vtanh.pop %v5275
        %v5308 = vtanh.pop %v5276
        %v5309 = vtanh.pop %v5277
        %v5310 = vtanh.pop %v5278
        %v5311 = vtanh.pop %v5279
        %v5312 = vtanh.pop %v5280
        %v5313 = vtanh.pop %v5281
        %v5314 = vtanh.pop %v5282
        %v5315 = vtanh.pop %v5283
        %v5316 = vtanh.pop %v5284
        %v5317 = vtanh.pop %v5285
        %v5318 = vtanh.pop %v5286
        %v5319 = vtanh.pop %v5287
        %v5320 = vtanh.pop %v5288
        %v5321 = vtanh.pop %v5289
        %v5322 = vtanh.pop %v5290
        %v5323 = vtanh.pop %v5291
        %v5324 = vtanh.pop %v5292
        %v5325 = vtanh.pop %v5293
        %v5326 = vtanh.pop %v5294
        %v5327 = vtanh.pop %v5295
        %v5328 = vtanh.pop %v5296
        %v5329 = vtanh.pop %v5297
        %v5330 = vtanh.pop %v5298
        %v5331 = vtanh.pop %v5299
        %v5332 = vtanh.pop %v5300
        %v5333 = vtanh.pop %v5301
        %v5334 = vtanh.pop %v5302
        %v5335 = vadd.f32 %v5303, 1.0
        %v5336 = vadd.f32 %v5304, 1.0
        %v5337 = vadd.f32 %v5305, 1.0
        %v5338 = vadd.f32 %v5306, 1.0
        %v5339 = vadd.f32 %v5307, 1.0
        %v5340 = vadd.f32 %v5308, 1.0
        %v5341 = vadd.f32 %v5309, 1.0
        %v5342 = vadd.f32 %v5310, 1.0
        %v5343 = vadd.f32 %v5311, 1.0
        %v5344 = vadd.f32 %v5312, 1.0
        %v5345 = vadd.f32 %v5313, 1.0
        %v5346 = vadd.f32 %v5314, 1.0
        %v5347 = vadd.f32 %v5315, 1.0
        %v5348 = vadd.f32 %v5316, 1.0
        %v5349 = vadd.f32 %v5317, 1.0
        %v5350 = vadd.f32 %v5318, 1.0
        %v5351 = vadd.f32 %v5319, 1.0
        %v5352 = vadd.f32 %v5320, 1.0
        %v5353 = vadd.f32 %v5321, 1.0
        %v5354 = vadd.f32 %v5322, 1.0
        %v5355 = vadd.f32 %v5323, 1.0
        %v5356 = vadd.f32 %v5324, 1.0
        %v5357 = vadd.f32 %v5325, 1.0
        %v5358 = vadd.f32 %v5326, 1.0
        %v5359 = vadd.f32 %v5327, 1.0
        %v5360 = vadd.f32 %v5328, 1.0
        %v5361 = vadd.f32 %v5329, 1.0
        %v5362 = vadd.f32 %v5330, 1.0
        %v5363 = vadd.f32 %v5331, 1.0
        %v5364 = vadd.f32 %v5332, 1.0
        %v5365 = vadd.f32 %v5333, 1.0
        %v5366 = vadd.f32 %v5334, 1.0
        %v5367 = vmul.f32 %v5111, %v5335
        %v5368 = vmul.f32 %v5112, %v5336
        %v5369 = vmul.f32 %v5113, %v5337
        %v5370 = vmul.f32 %v5114, %v5338
        %v5371 = vmul.f32 %v5115, %v5339
        %v5372 = vmul.f32 %v5116, %v5340
        %v5373 = vmul.f32 %v5117, %v5341
        %v5374 = vmul.f32 %v5118, %v5342
        %v5375 = vmul.f32 %v5119, %v5343
        %v5376 = vmul.f32 %v5120, %v5344
        %v5377 = vmul.f32 %v5121, %v5345
        %v5378 = vmul.f32 %v5122, %v5346
        %v5379 = vmul.f32 %v5123, %v5347
        %v5380 = vmul.f32 %v5124, %v5348
        %v5381 = vmul.f32 %v5125, %v5349
        %v5382 = vmul.f32 %v5126, %v5350
        %v5383 = vmul.f32 %v5127, %v5351
        %v5384 = vmul.f32 %v5128, %v5352
        %v5385 = vmul.f32 %v5129, %v5353
        %v5386 = vmul.f32 %v5130, %v5354
        %v5387 = vmul.f32 %v5131, %v5355
        %v5388 = vmul.f32 %v5132, %v5356
        %v5389 = vmul.f32 %v5133, %v5357
        %v5390 = vmul.f32 %v5134, %v5358
        %v5391 = vmul.f32 %v5135, %v5359
        %v5392 = vmul.f32 %v5136, %v5360
        %v5393 = vmul.f32 %v5137, %v5361
        %v5394 = vmul.f32 %v5138, %v5362
        %v5395 = vmul.f32 %v5139, %v5363
        %v5396 = vmul.f32 %v5140, %v5364
        %v5397 = vmul.f32 %v5141, %v5365
        %v5398 = vmul.f32 %v5142, %v5366
        %v5399 = vpack.c.bf16 %v5375, %v5367
        %v5400 = vpack.c.bf16 %v5376, %v5368
        %v5401 = vpack.c.bf16 %v5377, %v5369
        %v5402 = vpack.c.bf16 %v5378, %v5370
        %v5403 = vpack.c.bf16 %v5379, %v5371
        %v5404 = vpack.c.bf16 %v5380, %v5372
        %v5405 = vpack.c.bf16 %v5381, %v5373
        %v5406 = vpack.c.bf16 %v5382, %v5374
        %v5407 = vpack.c.bf16 %v5391, %v5383
        %v5408 = vpack.c.bf16 %v5392, %v5384
        %v5409 = vpack.c.bf16 %v5393, %v5385
        %v5410 = vpack.c.bf16 %v5394, %v5386
        %v5411 = vpack.c.bf16 %v5395, %v5387
        %v5412 = vpack.c.bf16 %v5396, %v5388
        %v5413 = vpack.c.bf16 %v5397, %v5389
        %v5414 = vpack.c.bf16 %v5398, %v5390
        %v5415 = vld [vmem:[#allocation10] sm:$0xf]
        %v5416 = vld [vmem:[#allocation10 + $0x4] sm:$0xf]
        %v5417 = vld [vmem:[#allocation10 + $0x8] sm:$0xf]
        %v5418 = vld [vmem:[#allocation10 + $0xc] sm:$0xf]
        %v5419 = vld [vmem:[#allocation10 + $0x10] sm:$0xf]
        %v5420 = vld [vmem:[#allocation10 + $0x14] sm:$0xf]
        %v5421 = vld [vmem:[#allocation10 + $0x18] sm:$0xf]
        %v5422 = vld [vmem:[#allocation10 + $0x1c] sm:$0xf]
        %v5423 = vld [vmem:[#allocation10 + $0x20] sm:$0xf]
        %v5424 = vld [vmem:[#allocation10 + $0x24] sm:$0xf]
        %v5425 = vld [vmem:[#allocation10 + $0x28] sm:$0xf]
        %v5426 = vld [vmem:[#allocation10 + $0x2c] sm:$0xf]
        %v5427 = vld [vmem:[#allocation10 + $0x30] sm:$0xf]
        %v5428 = vld [vmem:[#allocation10 + $0x34] sm:$0xf]
        %v5429 = vld [vmem:[#allocation10 + $0x38] sm:$0xf]
        %v5430 = vld [vmem:[#allocation10 + $0x3c] sm:$0xf]
        %v5431 = vld [vmem:[#allocation10 + $0x40] sm:$0xf]
        %v5432 = vld [vmem:[#allocation10 + $0x44] sm:$0xf]
        %v5433 = vld [vmem:[#allocation10 + $0x48] sm:$0xf]
        %v5434 = vld [vmem:[#allocation10 + $0x4c] sm:$0xf]
        %v5435 = vld [vmem:[#allocation10 + $0x50] sm:$0xf]
        %v5436 = vld [vmem:[#allocation10 + $0x54] sm:$0xf]
        %v5437 = vld [vmem:[#allocation10 + $0x58] sm:$0xf]
        %v5438 = vld [vmem:[#allocation10 + $0x5c] sm:$0xf]
        %v5439 = vld [vmem:[#allocation10 + $0x60] sm:$0xf]
        %v5440 = vld [vmem:[#allocation10 + $0x64] sm:$0xf]
        %v5441 = vld [vmem:[#allocation10 + $0x68] sm:$0xf]
        %v5442 = vld [vmem:[#allocation10 + $0x6c] sm:$0xf]
        %v5443 = vld [vmem:[#allocation10 + $0x70] sm:$0xf]
        %v5444 = vld [vmem:[#allocation10 + $0x74] sm:$0xf]
        %v5445 = vld [vmem:[#allocation10 + $0x78] sm:$0xf]
        %v5446 = vld [vmem:[#allocation10 + $0x7c] sm:$0xf]
        %v5447 = vld [vmem:[#allocation10 + $0x80] sm:$0xf]
        %v5448 = vld [vmem:[#allocation10 + $0x84] sm:$0xf]
        %v5449 = vld [vmem:[#allocation10 + $0x88] sm:$0xf]
        %v5450 = vld [vmem:[#allocation10 + $0x8c] sm:$0xf]
        %v5451 = vld [vmem:[#allocation10 + $0x90] sm:$0xf]
        %v5452 = vld [vmem:[#allocation10 + $0x94] sm:$0xf]
        %v5453 = vld [vmem:[#allocation10 + $0x98] sm:$0xf]
        %v5454 = vld [vmem:[#allocation10 + $0x9c] sm:$0xf]
        %v5455 = vld [vmem:[#allocation10 + $0xa0] sm:$0xf]
        %v5456 = vld [vmem:[#allocation10 + $0xa4] sm:$0xf]
        %v5457 = vld [vmem:[#allocation10 + $0xa8] sm:$0xf]
        %v5458 = vld [vmem:[#allocation10 + $0xac] sm:$0xf]
        %v5459 = vld [vmem:[#allocation10 + $0xb0] sm:$0xf]
        %v5460 = vld [vmem:[#allocation10 + $0xb4] sm:$0xf]
        %v5461 = vld [vmem:[#allocation10 + $0xb8] sm:$0xf]
        %v5462 = vld [vmem:[#allocation10 + $0xbc] sm:$0xf]
        %v5463 = vld [vmem:[#allocation10 + $0xc0] sm:$0xf]
        %v5464 = vld [vmem:[#allocation10 + $0xc4] sm:$0xf]
        %v5465 = vld [vmem:[#allocation10 + $0xc8] sm:$0xf]
        %v5466 = vld [vmem:[#allocation10 + $0xcc] sm:$0xf]
        %v5467 = vld [vmem:[#allocation10 + $0xd0] sm:$0xf]
        %v5468 = vld [vmem:[#allocation10 + $0xd4] sm:$0xf]
        %v5469 = vld [vmem:[#allocation10 + $0xd8] sm:$0xf]
        %v5470 = vld [vmem:[#allocation10 + $0xdc] sm:$0xf]
        %v5471 = vld [vmem:[#allocation10 + $0xe0] sm:$0xf]
        %v5472 = vld [vmem:[#allocation10 + $0xe4] sm:$0xf]
        %v5473 = vld [vmem:[#allocation10 + $0xe8] sm:$0xf]
        %v5474 = vld [vmem:[#allocation10 + $0xec] sm:$0xf]
        %v5475 = vld [vmem:[#allocation10 + $0xf0] sm:$0xf]
        %v5476 = vld [vmem:[#allocation10 + $0xf4] sm:$0xf]
        %v5477 = vld [vmem:[#allocation10 + $0xf8] sm:$0xf]
        %v5478 = vld [vmem:[#allocation10 + $0xfc] sm:$0xf]
        %v5479 = vld [vmem:[#allocation10 + $0x100] sm:$0xf]
        %v5480 = vld [vmem:[#allocation10 + $0x104] sm:$0xf]
        %v5481 = vld [vmem:[#allocation10 + $0x108] sm:$0xf]
        %v5482 = vld [vmem:[#allocation10 + $0x10c] sm:$0xf]
        %v5483 = vld [vmem:[#allocation10 + $0x110] sm:$0xf]
        %v5484 = vld [vmem:[#allocation10 + $0x114] sm:$0xf]
        %v5485 = vld [vmem:[#allocation10 + $0x118] sm:$0xf]
        %v5486 = vld [vmem:[#allocation10 + $0x11c] sm:$0xf]
        %v5487 = vld [vmem:[#allocation10 + $0x120] sm:$0xf]
        %v5488 = vld [vmem:[#allocation10 + $0x124] sm:$0xf]
        %v5489 = vld [vmem:[#allocation10 + $0x128] sm:$0xf]
        %v5490 = vld [vmem:[#allocation10 + $0x12c] sm:$0xf]
        %v5491 = vld [vmem:[#allocation10 + $0x130] sm:$0xf]
        %v5492 = vld [vmem:[#allocation10 + $0x134] sm:$0xf]
        %v5493 = vld [vmem:[#allocation10 + $0x138] sm:$0xf]
        %v5494 = vld [vmem:[#allocation10 + $0x13c] sm:$0xf]
        %v5495 = vld [vmem:[#allocation10 + $0x140] sm:$0xf]
        %v5496 = vld [vmem:[#allocation10 + $0x144] sm:$0xf]
        %v5497 = vld [vmem:[#allocation10 + $0x148] sm:$0xf]
        %v5498 = vld [vmem:[#allocation10 + $0x14c] sm:$0xf]
        %v5499 = vld [vmem:[#allocation10 + $0x150] sm:$0xf]
        %v5500 = vld [vmem:[#allocation10 + $0x154] sm:$0xf]
        %v5501 = vld [vmem:[#allocation10 + $0x158] sm:$0xf]
        %v5502 = vld [vmem:[#allocation10 + $0x15c] sm:$0xf]
        %v5503 = vld [vmem:[#allocation10 + $0x160] sm:$0xf]
        %v5504 = vld [vmem:[#allocation10 + $0x164] sm:$0xf]
        %v5505 = vld [vmem:[#allocation10 + $0x168] sm:$0xf]
        %v5506 = vld [vmem:[#allocation10 + $0x16c] sm:$0xf]
        %v5507 = vld [vmem:[#allocation10 + $0x170] sm:$0xf]
        %v5508 = vld [vmem:[#allocation10 + $0x174] sm:$0xf]
        %v5509 = vld [vmem:[#allocation10 + $0x178] sm:$0xf]
        %v5510 = vld [vmem:[#allocation10 + $0x17c] sm:$0xf]
        %v5511 = vld [vmem:[#allocation10 + $0x180] sm:$0xf]
        %v5512 = vld [vmem:[#allocation10 + $0x184] sm:$0xf]
        %v5513 = vld [vmem:[#allocation10 + $0x188] sm:$0xf]
        %v5514 = vld [vmem:[#allocation10 + $0x18c] sm:$0xf]
        %v5515 = vld [vmem:[#allocation10 + $0x190] sm:$0xf]
        %v5516 = vld [vmem:[#allocation10 + $0x194] sm:$0xf]
        %v5517 = vld [vmem:[#allocation10 + $0x198] sm:$0xf]
        %v5518 = vld [vmem:[#allocation10 + $0x19c] sm:$0xf]
        %v5519 = vld [vmem:[#allocation10 + $0x1a0] sm:$0xf]
        %v5520 = vld [vmem:[#allocation10 + $0x1a4] sm:$0xf]
        %v5521 = vld [vmem:[#allocation10 + $0x1a8] sm:$0xf]
        %v5522 = vld [vmem:[#allocation10 + $0x1ac] sm:$0xf]
        %v5523 = vld [vmem:[#allocation10 + $0x1b0] sm:$0xf]
        %v5524 = vld [vmem:[#allocation10 + $0x1b4] sm:$0xf]
        %v5525 = vld [vmem:[#allocation10 + $0x1b8] sm:$0xf]
        %v5526 = vld [vmem:[#allocation10 + $0x1bc] sm:$0xf]
        %v5527 = vld [vmem:[#allocation10 + $0x1c0] sm:$0xf]
        %v5528 = vld [vmem:[#allocation10 + $0x1c4] sm:$0xf]
        %v5529 = vld [vmem:[#allocation10 + $0x1c8] sm:$0xf]
        %v5530 = vld [vmem:[#allocation10 + $0x1cc] sm:$0xf]
        %v5531 = vld [vmem:[#allocation10 + $0x1d0] sm:$0xf]
        %v5532 = vld [vmem:[#allocation10 + $0x1d4] sm:$0xf]
        %v5533 = vld [vmem:[#allocation10 + $0x1d8] sm:$0xf]
        %v5534 = vld [vmem:[#allocation10 + $0x1dc] sm:$0xf]
        %v5535 = vld [vmem:[#allocation10 + $0x1e0] sm:$0xf]
        %v5536 = vld [vmem:[#allocation10 + $0x1e4] sm:$0xf]
        %v5537 = vld [vmem:[#allocation10 + $0x1e8] sm:$0xf]
        %v5538 = vld [vmem:[#allocation10 + $0x1ec] sm:$0xf]
        %v5539 = vld [vmem:[#allocation10 + $0x1f0] sm:$0xf]
        %v5540 = vld [vmem:[#allocation10 + $0x1f4] sm:$0xf]
        %v5541 = vld [vmem:[#allocation10 + $0x1f8] sm:$0xf]
        %v5542 = vld [vmem:[#allocation10 + $0x1fc] sm:$0xf]
        %v5543 = vld [vmem:[%s11] sm:$0x1]
        %v5545 = vlaneseq
        %v5546 = vshrl.u32 %v5545, 7
        %v5547 = vsub.s32 0, %v5546
        %v5548 = vrot.slane %v5543, %v5547
        %v5678 = vunpack.c.l.b16 %v5415
        %v5679 = vunpack.c.l.b16 %v5416
        %v5680 = vunpack.c.l.b16 %v5417
        %v5681 = vunpack.c.l.b16 %v5418
        %v5682 = vunpack.c.l.b16 %v5419
        %v5683 = vunpack.c.l.b16 %v5420
        %v5684 = vunpack.c.l.b16 %v5421
        %v5685 = vunpack.c.l.b16 %v5422
        %v5686 = vunpack.c.l.b16 %v5423
        %v5687 = vunpack.c.l.b16 %v5424
        %v5688 = vunpack.c.l.b16 %v5425
        %v5689 = vunpack.c.l.b16 %v5426
        %v5690 = vunpack.c.l.b16 %v5427
        %v5691 = vunpack.c.l.b16 %v5428
        %v5692 = vunpack.c.l.b16 %v5429
        %v5693 = vunpack.c.l.b16 %v5430
        %v5694 = vunpack.c.l.b16 %v5431
        %v5695 = vunpack.c.l.b16 %v5432
        %v5696 = vunpack.c.l.b16 %v5433
        %v5697 = vunpack.c.l.b16 %v5434
        %v5698 = vunpack.c.l.b16 %v5435
        %v5699 = vunpack.c.l.b16 %v5436
        %v5700 = vunpack.c.l.b16 %v5437
        %v5701 = vunpack.c.l.b16 %v5438
        %v5702 = vunpack.c.l.b16 %v5439
        %v5703 = vunpack.c.l.b16 %v5440
        %v5704 = vunpack.c.l.b16 %v5441
        %v5705 = vunpack.c.l.b16 %v5442
        %v5706 = vunpack.c.l.b16 %v5443
        %v5707 = vunpack.c.l.b16 %v5444
        %v5708 = vunpack.c.l.b16 %v5445
        %v5709 = vunpack.c.l.b16 %v5446
        %v5710 = vunpack.c.l.b16 %v5447
        %v5711 = vunpack.c.l.b16 %v5448
        %v5712 = vunpack.c.l.b16 %v5449
        %v5713 = vunpack.c.l.b16 %v5450
        %v5714 = vunpack.c.l.b16 %v5451
        %v5715 = vunpack.c.l.b16 %v5452
        %v5716 = vunpack.c.l.b16 %v5453
        %v5717 = vunpack.c.l.b16 %v5454
        %v5718 = vunpack.c.l.b16 %v5455
        %v5719 = vunpack.c.l.b16 %v5456
        %v5720 = vunpack.c.l.b16 %v5457
        %v5721 = vunpack.c.l.b16 %v5458
        %v5722 = vunpack.c.l.b16 %v5459
        %v5723 = vunpack.c.l.b16 %v5460
        %v5724 = vunpack.c.l.b16 %v5461
        %v5725 = vunpack.c.l.b16 %v5462
        %v5726 = vunpack.c.l.b16 %v5463
        %v5727 = vunpack.c.l.b16 %v5464
        %v5728 = vunpack.c.l.b16 %v5465
        %v5729 = vunpack.c.l.b16 %v5466
        %v5730 = vunpack.c.l.b16 %v5467
        %v5731 = vunpack.c.l.b16 %v5468
        %v5732 = vunpack.c.l.b16 %v5469
        %v5733 = vunpack.c.l.b16 %v5470
        %v5734 = vunpack.c.l.b16 %v5471
        %v5735 = vunpack.c.l.b16 %v5472
        %v5736 = vunpack.c.l.b16 %v5473
        %v5737 = vunpack.c.l.b16 %v5474
        %v5738 = vunpack.c.l.b16 %v5475
        %v5739 = vunpack.c.l.b16 %v5476
        %v5740 = vunpack.c.l.b16 %v5477
        %v5741 = vunpack.c.l.b16 %v5478
        %v5742 = vunpack.c.l.b16 %v5479
        %v5743 = vunpack.c.l.b16 %v5480
        %v5744 = vunpack.c.l.b16 %v5481
        %v5745 = vunpack.c.l.b16 %v5482
        %v5746 = vunpack.c.l.b16 %v5483
        %v5747 = vunpack.c.l.b16 %v5484
        %v5748 = vunpack.c.l.b16 %v5485
        %v5749 = vunpack.c.l.b16 %v5486
        %v5750 = vunpack.c.l.b16 %v5487
        %v5751 = vunpack.c.l.b16 %v5488
        %v5752 = vunpack.c.l.b16 %v5489
        %v5753 = vunpack.c.l.b16 %v5490
        %v5754 = vunpack.c.l.b16 %v5491
        %v5755 = vunpack.c.l.b16 %v5492
        %v5756 = vunpack.c.l.b16 %v5493
        %v5757 = vunpack.c.l.b16 %v5494
        %v5758 = vunpack.c.l.b16 %v5495
        %v5759 = vunpack.c.l.b16 %v5496
        %v5760 = vunpack.c.l.b16 %v5497
        %v5761 = vunpack.c.l.b16 %v5498
        %v5762 = vunpack.c.l.b16 %v5499
        %v5763 = vunpack.c.l.b16 %v5500
        %v5764 = vunpack.c.l.b16 %v5501
        %v5765 = vunpack.c.l.b16 %v5502
        %v5766 = vunpack.c.l.b16 %v5503
        %v5767 = vunpack.c.l.b16 %v5504
        %v5768 = vunpack.c.l.b16 %v5505
        %v5769 = vunpack.c.l.b16 %v5506
        %v5770 = vunpack.c.l.b16 %v5507
        %v5771 = vunpack.c.l.b16 %v5508
        %v5772 = vunpack.c.l.b16 %v5509
        %v5773 = vunpack.c.l.b16 %v5510
        %v5774 = vunpack.c.l.b16 %v5511
        %v5775 = vunpack.c.l.b16 %v5512
        %v5776 = vunpack.c.l.b16 %v5513
        %v5777 = vunpack.c.l.b16 %v5514
        %v5778 = vunpack.c.l.b16 %v5515
        %v5779 = vunpack.c.l.b16 %v5516
        %v5780 = vunpack.c.l.b16 %v5517
        %v5781 = vunpack.c.l.b16 %v5518
        %v5782 = vunpack.c.l.b16 %v5519
        %v5783 = vunpack.c.l.b16 %v5520
        %v5784 = vunpack.c.l.b16 %v5521
        %v5785 = vunpack.c.l.b16 %v5522
        %v5786 = vunpack.c.l.b16 %v5523
        %v5787 = vunpack.c.l.b16 %v5524
        %v5788 = vunpack.c.l.b16 %v5525
        %v5789 = vunpack.c.l.b16 %v5526
        %v5790 = vunpack.c.l.b16 %v5527
        %v5791 = vunpack.c.l.b16 %v5528
        %v5792 = vunpack.c.l.b16 %v5529
        %v5793 = vunpack.c.l.b16 %v5530
        %v5794 = vunpack.c.l.b16 %v5531
        %v5795 = vunpack.c.l.b16 %v5532
        %v5796 = vunpack.c.l.b16 %v5533
        %v5797 = vunpack.c.l.b16 %v5534
        %v5798 = vunpack.c.l.b16 %v5535
        %v5799 = vunpack.c.l.b16 %v5536
        %v5800 = vunpack.c.l.b16 %v5537
        %v5801 = vunpack.c.l.b16 %v5538
        %v5802 = vunpack.c.l.b16 %v5539
        %v5803 = vunpack.c.l.b16 %v5540
        %v5804 = vunpack.c.l.b16 %v5541
        %v5805 = vunpack.c.l.b16 %v5542
        %v5806 = vpack.c.b16 %v5679, %v5678
        %v5807 = vpack.c.b16 %v5681, %v5680
        %v5808 = vpack.c.b16 %v5683, %v5682
        %v5809 = vpack.c.b16 %v5685, %v5684
        %v5810 = vpack.c.b16 %v5687, %v5686
        %v5811 = vpack.c.b16 %v5689, %v5688
        %v5812 = vpack.c.b16 %v5691, %v5690
        %v5813 = vpack.c.b16 %v5693, %v5692
        %v5814 = vpack.c.b16 %v5695, %v5694
        %v5815 = vpack.c.b16 %v5697, %v5696
        %v5816 = vpack.c.b16 %v5699, %v5698
        %v5817 = vpack.c.b16 %v5701, %v5700
        %v5818 = vpack.c.b16 %v5703, %v5702
        %v5819 = vpack.c.b16 %v5705, %v5704
        %v5820 = vpack.c.b16 %v5707, %v5706
        %v5821 = vpack.c.b16 %v5709, %v5708
        %v5822 = vpack.c.b16 %v5711, %v5710
        %v5823 = vpack.c.b16 %v5713, %v5712
        %v5824 = vpack.c.b16 %v5715, %v5714
        %v5825 = vpack.c.b16 %v5717, %v5716
        %v5826 = vpack.c.b16 %v5719, %v5718
        %v5827 = vpack.c.b16 %v5721, %v5720
        %v5828 = vpack.c.b16 %v5723, %v5722
        %v5829 = vpack.c.b16 %v5725, %v5724
        %v5830 = vpack.c.b16 %v5727, %v5726
        %v5831 = vpack.c.b16 %v5729, %v5728
        %v5832 = vpack.c.b16 %v5731, %v5730
        %v5833 = vpack.c.b16 %v5733, %v5732
        %v5834 = vpack.c.b16 %v5735, %v5734
        %v5835 = vpack.c.b16 %v5737, %v5736
        %v5836 = vpack.c.b16 %v5739, %v5738
        %v5837 = vpack.c.b16 %v5741, %v5740
        %v5838 = vpack.c.b16 %v5743, %v5742
        %v5839 = vpack.c.b16 %v5745, %v5744
        %v5840 = vpack.c.b16 %v5747, %v5746
        %v5841 = vpack.c.b16 %v5749, %v5748
        %v5842 = vpack.c.b16 %v5751, %v5750
        %v5843 = vpack.c.b16 %v5753, %v5752
        %v5844 = vpack.c.b16 %v5755, %v5754
        %v5845 = vpack.c.b16 %v5757, %v5756
        %v5846 = vpack.c.b16 %v5759, %v5758
        %v5847 = vpack.c.b16 %v5761, %v5760
        %v5848 = vpack.c.b16 %v5763, %v5762
        %v5849 = vpack.c.b16 %v5765, %v5764
        %v5850 = vpack.c.b16 %v5767, %v5766
        %v5851 = vpack.c.b16 %v5769, %v5768
        %v5852 = vpack.c.b16 %v5771, %v5770
        %v5853 = vpack.c.b16 %v5773, %v5772
        %v5854 = vpack.c.b16 %v5775, %v5774
        %v5855 = vpack.c.b16 %v5777, %v5776
        %v5856 = vpack.c.b16 %v5779, %v5778
        %v5857 = vpack.c.b16 %v5781, %v5780
        %v5858 = vpack.c.b16 %v5783, %v5782
        %v5859 = vpack.c.b16 %v5785, %v5784
        %v5860 = vpack.c.b16 %v5787, %v5786
        %v5861 = vpack.c.b16 %v5789, %v5788
        %v5862 = vpack.c.b16 %v5791, %v5790
        %v5863 = vpack.c.b16 %v5793, %v5792
        %v5864 = vpack.c.b16 %v5795, %v5794
        %v5865 = vpack.c.b16 %v5797, %v5796
        %v5866 = vpack.c.b16 %v5799, %v5798
        %v5867 = vpack.c.b16 %v5801, %v5800
        %v5868 = vpack.c.b16 %v5803, %v5802
        %v5869 = vpack.c.b16 %v5805, %v5804
        %5934 = vmatprep.subr.bf16.mxu0 0
        %5935 = vmatpush1.bf16.msra.mxu0 %v5813
        %5936 = vmatprep.subr.bf16.mxu0 0
        %5937 = vmatpush1.bf16.msra.mxu0 %v5812
        %5938 = vmatprep.subr.bf16.mxu0 0
        %5939 = vmatpush1.bf16.msra.mxu0 %v5811
        %5940 = vmatprep.subr.bf16.mxu0 0
        %5941 = vmatpush1.bf16.msra.mxu0 %v5810
        %5942 = vmatprep.subr.bf16.mxu0 0
        %5943 = vmatpush1.bf16.msra.mxu0 %v5809
        %5944 = vmatprep.subr.bf16.mxu0 0
        %5945 = vmatpush1.bf16.msra.mxu0 %v5808
        %5946 = vmatprep.subr.bf16.mxu0 0
        %5947 = vmatpush1.bf16.msra.mxu0 %v5807
        %5948 = vmatprep.subr.bf16.mxu0 0
        %5949 = vmatpush1.bf16.msra.mxu0 %v5806
        %5950 = vmatprep.subr.bf16.mxu0 0
        %5951 = vmatpush2.bf16.msra.mxu0 %v5821
        %5952 = vmatprep.subr.bf16.mxu0 0
        %5953 = vmatpush2.bf16.msra.mxu0 %v5820
        %5954 = vmatprep.subr.bf16.mxu0 0
        %5955 = vmatpush2.bf16.msra.mxu0 %v5819
        %5956 = vmatprep.subr.bf16.mxu0 0
        %5957 = vmatpush2.bf16.msra.mxu0 %v5818
        %5958 = vmatprep.subr.bf16.mxu0 0
        %5959 = vmatpush2.bf16.msra.mxu0 %v5817
        %5960 = vmatprep.subr.bf16.mxu0 0
        %5961 = vmatpush2.bf16.msra.mxu0 %v5816
        %5962 = vmatprep.subr.bf16.mxu0 0
        %5963 = vmatpush2.bf16.msra.mxu0 %v5815
        %5964 = vmatprep.subr.bf16.mxu0 0
        %5965 = vmatpush2.bf16.msra.mxu0 %v5814
        %5966 = vmatprep.mubr.bf16.mxu0 %v5400
        %5967 = vmatmul.mubr.bf16.gmra.mxu0 %v5399
        %v5968 = vpop.f32.mrf.mxu0
        %v5969 = vadd.f32 %v5548, %v5968
        %v5970 = vpop.f32.mrf.mxu0
        %v5971 = vpop.f32.mrf.mxu0
        %v5972 = vadd.f32 %v5548, %v5971
        %v5973 = vpop.f32.mrf.mxu0
        %5974 = vmatprep.mubr.bf16.mxu0 %v5408
        %5975 = vmatmul.mubr.bf16.gmra.mxu0 %v5407
        %v5976 = vpop.f32.mrf.mxu0
        %v5977 = vadd.f32 %v5548, %v5976
        %v5978 = vpop.f32.mrf.mxu0
        %v5979 = vpop.f32.mrf.mxu0
        %v5980 = vadd.f32 %v5548, %v5979
        %v5981 = vpop.f32.mrf.mxu0
        %5982 = vdwg.mxu0
        %5983 = vmatprep.subr.bf16.mxu0 0
        %5984 = vmatpush1.bf16.msra.mxu0 %v5829
        %5985 = vmatprep.subr.bf16.mxu0 0
        %5986 = vmatpush1.bf16.msra.mxu0 %v5828
        %5987 = vmatprep.subr.bf16.mxu0 0
        %5988 = vmatpush1.bf16.msra.mxu0 %v5827
        %5989 = vmatprep.subr.bf16.mxu0 0
        %5990 = vmatpush1.bf16.msra.mxu0 %v5826
        %5991 = vmatprep.subr.bf16.mxu0 0
        %5992 = vmatpush1.bf16.msra.mxu0 %v5825
        %5993 = vmatprep.subr.bf16.mxu0 0
        %5994 = vmatpush1.bf16.msra.mxu0 %v5824
        %5995 = vmatprep.subr.bf16.mxu0 0
        %5996 = vmatpush1.bf16.msra.mxu0 %v5823
        %5997 = vmatprep.subr.bf16.mxu0 0
        %5998 = vmatpush1.bf16.msra.mxu0 %v5822
        %5999 = vmatprep.subr.bf16.mxu0 0
        %6000 = vmatpush2.bf16.msra.mxu0 %v5837
        %6001 = vmatprep.subr.bf16.mxu0 0
        %6002 = vmatpush2.bf16.msra.mxu0 %v5836
        %6003 = vmatprep.subr.bf16.mxu0 0
        %6004 = vmatpush2.bf16.msra.mxu0 %v5835
        %6005 = vmatprep.subr.bf16.mxu0 0
        %6006 = vmatpush2.bf16.msra.mxu0 %v5834
        %6007 = vmatprep.subr.bf16.mxu0 0
        %6008 = vmatpush2.bf16.msra.mxu0 %v5833
        %6009 = vmatprep.subr.bf16.mxu0 0
        %6010 = vmatpush2.bf16.msra.mxu0 %v5832
        %6011 = vmatprep.subr.bf16.mxu0 0
        %6012 = vmatpush2.bf16.msra.mxu0 %v5831
        %6013 = vmatprep.subr.bf16.mxu0 0
        %6014 = vmatpush2.bf16.msra.mxu0 %v5830
        %6015 = vmatprep.mubr.bf16.mxu0 %v5402
        %6016 = vmatmul.mubr.bf16.gmra.mxu0 %v5401
        %v6017 = vpop.f32.mrf.mxu0
        %v6018 = vadd.f32 %v5969, %v6017
        %v6019 = vpop.f32.mrf.mxu0
        %v6020 = vpop.f32.mrf.mxu0
        %v6021 = vadd.f32 %v5972, %v6020
        %v6022 = vpop.f32.mrf.mxu0
        %6023 = vmatprep.mubr.bf16.mxu0 %v5410
        %6024 = vmatmul.mubr.bf16.gmra.mxu0 %v5409
        %v6025 = vpop.f32.mrf.mxu0
        %v6026 = vadd.f32 %v5977, %v6025
        %v6027 = vpop.f32.mrf.mxu0
        %v6028 = vpop.f32.mrf.mxu0
        %v6029 = vadd.f32 %v5980, %v6028
        %v6030 = vpop.f32.mrf.mxu0
        %6031 = vdwg.mxu0
        %6032 = vmatprep.subr.bf16.mxu0 0
        %6033 = vmatpush1.bf16.msra.mxu0 %v5845
        %6034 = vmatprep.subr.bf16.mxu0 0
        %6035 = vmatpush1.bf16.msra.mxu0 %v5844
        %6036 = vmatprep.subr.bf16.mxu0 0
        %6037 = vmatpush1.bf16.msra.mxu0 %v5843
        %6038 = vmatprep.subr.bf16.mxu0 0
        %6039 = vmatpush1.bf16.msra.mxu0 %v5842
        %6040 = vmatprep.subr.bf16.mxu0 0
        %6041 = vmatpush1.bf16.msra.mxu0 %v5841
        %6042 = vmatprep.subr.bf16.mxu0 0
        %6043 = vmatpush1.bf16.msra.mxu0 %v5840
        %6044 = vmatprep.subr.bf16.mxu0 0
        %6045 = vmatpush1.bf16.msra.mxu0 %v5839
        %6046 = vmatprep.subr.bf16.mxu0 0
        %6047 = vmatpush1.bf16.msra.mxu0 %v5838
        %6048 = vmatprep.subr.bf16.mxu0 0
        %6049 = vmatpush2.bf16.msra.mxu0 %v5853
        %6050 = vmatprep.subr.bf16.mxu0 0
        %6051 = vmatpush2.bf16.msra.mxu0 %v5852
        %6052 = vmatprep.subr.bf16.mxu0 0
        %6053 = vmatpush2.bf16.msra.mxu0 %v5851
        %6054 = vmatprep.subr.bf16.mxu0 0
        %6055 = vmatpush2.bf16.msra.mxu0 %v5850
        %6056 = vmatprep.subr.bf16.mxu0 0
        %6057 = vmatpush2.bf16.msra.mxu0 %v5849
        %6058 = vmatprep.subr.bf16.mxu0 0
        %6059 = vmatpush2.bf16.msra.mxu0 %v5848
        %6060 = vmatprep.subr.bf16.mxu0 0
        %6061 = vmatpush2.bf16.msra.mxu0 %v5847
        %6062 = vmatprep.subr.bf16.mxu0 0
        %6063 = vmatpush2.bf16.msra.mxu0 %v5846
        %6064 = vmatprep.mubr.bf16.mxu0 %v5404
        %6065 = vmatmul.mubr.bf16.gmra.mxu0 %v5403
        %v6066 = vpop.f32.mrf.mxu0
        %v6067 = vadd.f32 %v6018, %v6066
        %v6068 = vpop.f32.mrf.mxu0
        %v6069 = vpop.f32.mrf.mxu0
        %v6070 = vadd.f32 %v6021, %v6069
        %v6071 = vpop.f32.mrf.mxu0
        %6072 = vmatprep.mubr.bf16.mxu0 %v5412
        %6073 = vmatmul.mubr.bf16.gmra.mxu0 %v5411
        %v6074 = vpop.f32.mrf.mxu0
        %v6075 = vadd.f32 %v6026, %v6074
        %v6076 = vpop.f32.mrf.mxu0
        %v6077 = vpop.f32.mrf.mxu0
        %v6078 = vadd.f32 %v6029, %v6077
        %v6079 = vpop.f32.mrf.mxu0
        %6080 = vdwg.mxu0
        %6081 = vmatprep.subr.bf16.mxu0 0
        %6082 = vmatpush1.bf16.msra.mxu0 %v5861
        %6083 = vmatprep.subr.bf16.mxu0 0
        %6084 = vmatpush1.bf16.msra.mxu0 %v5860
        %6085 = vmatprep.subr.bf16.mxu0 0
        %6086 = vmatpush1.bf16.msra.mxu0 %v5859
        %6087 = vmatprep.subr.bf16.mxu0 0
        %6088 = vmatpush1.bf16.msra.mxu0 %v5858
        %6089 = vmatprep.subr.bf16.mxu0 0
        %6090 = vmatpush1.bf16.msra.mxu0 %v5857
        %6091 = vmatprep.subr.bf16.mxu0 0
        %6092 = vmatpush1.bf16.msra.mxu0 %v5856
        %6093 = vmatprep.subr.bf16.mxu0 0
        %6094 = vmatpush1.bf16.msra.mxu0 %v5855
        %6095 = vmatprep.subr.bf16.mxu0 0
        %6096 = vmatpush1.bf16.msra.mxu0 %v5854
        %6097 = vmatprep.subr.bf16.mxu0 0
        %6098 = vmatpush2.bf16.msra.mxu0 %v5869
        %6099 = vmatprep.subr.bf16.mxu0 0
        %6100 = vmatpush2.bf16.msra.mxu0 %v5868
        %6101 = vmatprep.subr.bf16.mxu0 0
        %6102 = vmatpush2.bf16.msra.mxu0 %v5867
        %6103 = vmatprep.subr.bf16.mxu0 0
        %6104 = vmatpush2.bf16.msra.mxu0 %v5866
        %6105 = vmatprep.subr.bf16.mxu0 0
        %6106 = vmatpush2.bf16.msra.mxu0 %v5865
        %6107 = vmatprep.subr.bf16.mxu0 0
        %6108 = vmatpush2.bf16.msra.mxu0 %v5864
        %6109 = vmatprep.subr.bf16.mxu0 0
        %6110 = vmatpush2.bf16.msra.mxu0 %v5863
        %6111 = vmatprep.subr.bf16.mxu0 0
        %6112 = vmatpush2.bf16.msra.mxu0 %v5862
        %6113 = vmatprep.mubr.bf16.mxu0 %v5406
        %6114 = vmatmul.mubr.bf16.gmra.mxu0 %v5405
        %v6115 = vpop.f32.mrf.mxu0
        %v6116 = vadd.f32 %v6067, %v6115
        %v6117 = vpop.f32.mrf.mxu0
        %v6118 = vpop.f32.mrf.mxu0
        %v6119 = vadd.f32 %v6070, %v6118
        %v6120 = vpop.f32.mrf.mxu0
        %6121 = vmatprep.mubr.bf16.mxu0 %v5414
        %6122 = vmatmul.mubr.bf16.gmra.mxu0 %v5413
        %v6123 = vpop.f32.mrf.mxu0
        %v6124 = vadd.f32 %v6075, %v6123
        %v6125 = vpop.f32.mrf.mxu0
        %v6126 = vpop.f32.mrf.mxu0
        %v6127 = vadd.f32 %v6078, %v6126
        %v6128 = vpop.f32.mrf.mxu0
        %6129 = vdwg.mxu0
        %v6130 = vadd.f32 %v6116, %v4401
        %v6131 = vadd.f32 %v6119, %v4402
        %v6132 = vadd.f32 %v6124, %v4403
        %v6133 = vadd.f32 %v6127, %v4404
        %6134 = vst [vmem:[%s489] sm:$0xff] %v6130
        %6135 = vst [vmem:[%s489 + $0x8] sm:$0xff] %v6131
        %6136 = vst [vmem:[%s489 + $0x10] sm:$0xff] %v6132
        %6137 = vst [vmem:[%s489 + $0x18] sm:$0xff] %v6133
        %s6138 = sand.u32 %s296, 1
        %s6139 = scalar_lea.sflag [#allocation4], %s6138
        %s6140 = sand.u32 %s296, 1
        %s6141 = smul.addr %s6140, 32
        %s6142 = scalar_lea.vmem [#allocation11], %s6141
        // Predicated region
        $region89: #{tpu_custom_call.1} parent=67 // pred_check
          %p6143 = pneg %p306
        $region90: #{tpu_custom_call.1} parent=67 // pred_check_branch
          %6145 = sbr.rel (%p6143) target = $region92
        $region91: #{tpu_custom_call.1} parent=67 // pred_region
          %s6146 = smul.u32 4, %s31
          %s6148 = ssub.s32 512, 512
          %6149 = vsyncadd %s6139, %s6148
          %s6150 = smul.addr %s6146, 128
          %s6151 = scalar_lea.hbm %s12, %s6150
          %s6152 = sshll.u32 %s6142, 4
          %s6153 = int_to_ptr.vmem [resolvable:$true] %s6152
          %6158 = dma.vmem_to_hbm [thread:$0]  %s6153, 512, %s6151, %s6139, 128, 128, 8
        $region92: #{tpu_custom_call.1} parent=67 // pred_fallthru
          _
      $region68: #{tpu_custom_call.1} parent=5 // pred_fallthru
        _
      %p6159 = scmp.le.s32.totalorder 2, %s26
      // Predicated region
      $region93: #{tpu_custom_call.1} parent=5 // pred_check
        %p6160 = pneg %p6159
      $region94: #{tpu_custom_call.1} parent=5 // pred_check_branch
        %6162 = sbr.rel (%p6160) target = $region96
      $region95: #{tpu_custom_call.1} parent=5 // pred_region
        %s6163 = ssub.s32 %s26, 2
        // Predicated region
        $region97: #{tpu_custom_call.1} parent=95 // pred_check
          %p6164 = pneg %p312
        $region98: #{tpu_custom_call.1} parent=95 // pred_check_branch
          %6166 = sbr.rel (%p6164) target = $region100
        $region99: #{tpu_custom_call.1} parent=95 // pred_region
          %s6167 = sand.u32 %s297, 1
          %s6168 = scalar_lea.sflag [#allocation4], %s6167
          %s6169 = sand.u32 %s297, 1
          %s6170 = smul.addr %s6169, 32
          %s6171 = scalar_lea.vmem [#allocation11], %s6170
          %6172 = dma.done %s6168, 512
        $region100: #{tpu_custom_call.1} parent=95 // pred_fallthru
          _
      $region96: #{tpu_custom_call.1} parent=5 // pred_fallthru
        _
    $region6: #{tpu_custom_call.1} parent=1 // loop_footer
      %s30 = sadd.s32 1, %s26
    $region7: #{tpu_custom_call.1} parent=1 // loop_footer_branch
      %25 = sbr.rel target = $region3
    $region8: #{tpu_custom_call.1} parent=1 // loop_exit
      _
    %6173 = vsyncpa [#allocation3], 1
    %s6174 = scalar_lea.sflag [#allocation3], 1
    %6175 = vsyncpa %s6174, 1
    %6176 = vsyncpa [#allocation6], 1
    %6177 = vsyncpa [#allocation9], 1
    %6178 = vsyncpa [#allocation4], 1
    %s6179 = scalar_lea.sflag [#allocation4], 1
    %6180 = vsyncpa %s6179, 1

</llo_original>
